<compile_context>
chip_gen: v5e
topology: v5e:2x2
jax: 0.10.0
libtpu: 0.0.40
codegen_flags: <defaults>
</compile_context>

<pallas_src>
import functools

import jax
import jax.numpy as jnp
from jax.experimental import pallas as pl
from jax.experimental.pallas import tpu as pltpu


# --------------------------------------------------------------------------
# Pallas kernels
# --------------------------------------------------------------------------

def _conv_s2_kernel(x_ref, w_ref, *out_refs, nb, oh, ow, act_alpha,
                    with_stats):
    """`nb` images of a 4x4 / stride-2 / pad-1 conv, as 2 row-phase matmuls.

    x_ref : (nb, (oh+1)*ow, 8*Cin) bf16  width-im2col'd input (row-phase kept)
    w_ref : (2, 8*Cin, Cout)       bf16  per-row-phase weight slab
    z_ref : (nb*oh*ow, Cout)       bf16  conv output (pre-BN for BN layers)
    s_ref, ss_ref : (1, 1, Cout)   f32   per-block sum / sum-of-squares (BN)
    """
    m = oh * ow
    k = x_ref.shape[-1]
    if nb == 1:
        xa = x_ref[0, 0:m, :]
        xb = x_ref[0, ow:ow + m, :]
    else:
        # m % 16 == 0 is guaranteed by the wrapper -> slab-merge reshape is a
        # layout no-op for bf16 (16,128) tiling.
        xa = x_ref[:, 0:m, :].reshape(nb * m, k)
        xb = x_ref[:, ow:ow + m, :].reshape(nb * m, k)
    acc = jnp.dot(xa, w_ref[0], preferred_element_type=jnp.float32)
    acc = acc + jnp.dot(xb, w_ref[1], preferred_element_type=jnp.float32)
    if with_stats:
        z_ref, s_ref, ss_ref = out_refs
        # Per-channel BatchNorm partial statistics from the f32 accumulator
        # (no extra HBM pass over the activation later).
        s_ref[0, :, :] = jnp.sum(acc, axis=0, keepdims=True)
        ss_ref[0, :, :] = jnp.sum(acc * acc, axis=0, keepdims=True)
    else:
        (z_ref,) = out_refs
    if act_alpha is not None:                       # layer 1: fused LeakyReLU
        acc = jnp.where(acc >= 0, acc, act_alpha * acc)
    z_ref[...] = acc.astype(z_ref.dtype)


def conv4x4_s2(xprep, w_ps, oh, ow, act_alpha=None, with_stats=False):
    """4x4/stride-2/pad-1 conv over a batch; grid is parallel over image blocks."""
    n, rows, k = xprep.shape
    cout = w_ps.shape[-1]
    m = oh * ow

    # Images per grid step: amortize per-step overhead and give the MXU a tall
    # M, bounded by a VMEM budget and divisibility of the batch.
    nb = 1
    if m % 16 == 0:
        per_img_bytes = 2 * (rows * k + m * cout)           # bf16 in + out
        budget = 4 * 1024 * 1024
        want = min(n, max(1, 1024 // m), max(1, budget // per_img_bytes))
        for cand in range(want, 1, -1):
            if n % cand == 0:
                nb = cand
                break
    grid_n = n // nb

    kernel = functools.partial(_conv_s2_kernel, nb=nb, oh=oh, ow=ow,
                               act_alpha=act_alpha, with_stats=with_stats)

    z_shape = jax.ShapeDtypeStruct((n * m, cout), jnp.bfloat16)
    z_spec = pl.BlockSpec((nb * m, cout), lambda i: (i, 0))
    if with_stats:
        st_shape = jax.ShapeDtypeStruct((grid_n, 1, cout), jnp.float32)
        st_spec = pl.BlockSpec((1, 1, cout), lambda i: (i, 0, 0))
        out_shape = (z_shape, st_shape, st_shape)
        out_specs = (z_spec, st_spec, st_spec)
    else:
        out_shape = z_shape
        out_specs = z_spec

    stats_bytes = 8 * grid_n * cout if with_stats else 0
    return pl.pallas_call(
        kernel,
        out_shape=out_shape,
        grid=(grid_n,),
        in_specs=[pl.BlockSpec((nb, rows, k), lambda i: (i, 0, 0)),
                  pl.BlockSpec((2, k, cout), lambda i: (0, 0, 0))],
        out_specs=out_specs,
        compiler_params=pltpu.CompilerParams(
            dimension_semantics=("parallel",),
            vmem_limit_bytes=48 * 1024 * 1024),
        cost_estimate=pl.CostEstimate(
            flops=4 * n * m * k * cout,
            transcendentals=0,
            bytes_accessed=2 * (xprep.size + w_ps.size + n * m * cout)
                           + stats_bytes),
    )(xprep, w_ps)


def _tail_kernel(x_ref, w5_ref, w1_ref, b1_ref, w2_ref, b2_ref, o_ref):
    """conv5 (as matmul) + LeakyReLU + fc1 + LeakyReLU + fc2 + sigmoid."""
    h = jnp.dot(x_ref[...], w5_ref[...], preferred_element_type=jnp.float32)
    h = jnp.where(h >= 0, h, 0.01 * h)              # conv5 LeakyReLU (default)
    # TODO(synk): nn.Dropout(0.5) implemented as identity (eval-mode).
    h = jnp.dot(h.astype(jnp.bfloat16), w1_ref[...],
                preferred_element_type=jnp.float32) + b1_ref[...]
    h = jnp.where(h >= 0, h, 0.01 * h)              # fc1 LeakyReLU (default)
    # TODO(synk): second nn.Dropout(0.5) implemented as identity (eval-mode).
    y = jnp.dot(h.astype(jnp.bfloat16), w2_ref[...],
                preferred_element_type=jnp.float32) + b2_ref[...]
    o_ref[...] = jax.nn.sigmoid(y).astype(o_ref.dtype)


def tail_head(x, w5, w1, b1, w2, b2):
    n, k5 = x.shape
    tm = n
    for cand in (256, 128, 64, 32, 16, 8):          # M tile that divides n
        if n % cand == 0:
            tm = cand
            break
    return pl.pallas_call(
        _tail_kernel,
        out_shape=jax.ShapeDtypeStruct((n, 1), jnp.float32),
        grid=(n // tm,),
        in_specs=[pl.BlockSpec((tm, k5), lambda i: (i, 0)),
                  pl.BlockSpec((k5, 1024), lambda i: (0, 0)),
                  pl.BlockSpec((1024, 1024), lambda i: (0, 0)),
                  pl.BlockSpec((1, 1024), lambda i: (0, 0)),
                  pl.BlockSpec((1024, 1), lambda i: (0, 0)),
                  pl.BlockSpec((1, 1), lambda i: (0, 0))],
        out_specs=pl.BlockSpec((tm, 1), lambda i: (i, 0)),
        compiler_params=pltpu.CompilerParams(
            dimension_semantics=("parallel",),
            vmem_limit_bytes=48 * 1024 * 1024),     # headroom for v7x 64 MiB
        cost_estimate=pl.CostEstimate(
            flops=2 * n * (k5 * 1024 + 1024 * 1024 + 1024),
            transcendentals=n,
            bytes_accessed=2 * (x.size + w5.size + w1.size) + 4 * n),
    )(x, w5, w1, b1, w2, b2)


# --------------------------------------------------------------------------
# XLA glue (layout prep + BN finalize; one fused elementwise pass per layer)
# --------------------------------------------------------------------------

def _prep_conv_input(y_nhwc, pad=1):
    """(N,H,W,C) -> (N,(OH+1)*OW, 8*C) for the 2-tap conv kernel.

    Only the kernel-width direction is unrolled (2x data, not 16x); the two
    kernel-row phases are resolved inside the Pallas kernel via row offsets.
    Channel order of the last dim: (row-phase p, kernel col j, ci).
    """
    if pad:
        y_nhwc = jnp.pad(y_nhwc, ((0, 0), (pad, pad), (pad, pad), (0, 0)))
    n, hp, wp, c = y_nhwc.shape
    oh = (hp - 4) // 2 + 1
    ow = (wp - 4) // 2 + 1
    hq = hp // 2                                    # = oh + 1
    cols = [y_nhwc[:, :, j:j + 2 * ow:2, :] for j in range(4)]
    xw = jnp.stack(cols, axis=3)                    # (n, hp, ow, 4, c)
    xw = xw.reshape(n, hq, 2, ow, 4, c)             # split rows -> (hq, p)
    xw = jnp.transpose(xw, (0, 1, 3, 2, 4, 5))      # (n, hq, ow, p, 4, c)
    xw = xw.reshape(n, hq * ow, 8 * c)
    return xw.astype(jnp.bfloat16), oh, ow


def _conv_weight_rowphase(w_torch):
    """(Cout, Cin, 4, 4) torch layout -> (2, 8*Cin, Cout), inner (p, j, ci)."""
    cout, cin = w_torch.shape[0], w_torch.shape[1]
    wt = jnp.transpose(w_torch, (2, 3, 1, 0))       # (kh, kw, ci, co)
    wt = wt.reshape(2, 2, 4, cin, cout)             # (a, p, j, ci, co)
    return wt.reshape(2, 8 * cin, cout).astype(jnp.bfloat16)


def _bn_affine(s, ss, count, gamma, beta, eps=1e-5):
    mean = jnp.sum(s[:, 0, :], axis=0) / count
    ex2 = jnp.sum(ss[:, 0, :], axis=0) / count
    var = jnp.maximum(ex2 - mean * mean, 0.0)       # biased var (BN normalize)
    scale = gamma * jax.lax.rsqrt(var + eps)
    shift = beta - mean * scale
    return scale, shift


def init_params(key, nc, ndf):
    ks = jax.random.split(key, 8)

    def w(k, shape, scale=0.05):
        return scale * jax.random.normal(k, shape, jnp.float32)

    return {
        "w1": w(ks[0], (ndf, nc, 4, 4)),
        "w2": w(ks[1], (ndf * 2, ndf, 4, 4)),
        "g2": jnp.ones((ndf * 2,), jnp.float32),
        "b2": jnp.zeros((ndf * 2,), jnp.float32),
        "w3": w(ks[2], (ndf * 4, ndf * 2, 4, 4)),
        "g3": jnp.ones((ndf * 4,), jnp.float32),
        "b3": jnp.zeros((ndf * 4,), jnp.float32),
        "w4": w(ks[3], (ndf * 8, ndf * 4, 4, 4)),
        "g4": jnp.ones((ndf * 8,), jnp.float32),
        "b4": jnp.zeros((ndf * 8,), jnp.float32),
        "w5": w(ks[4], (1024, ndf * 8, 4, 4)),
        "fc1_w": w(ks[5], (1024, 1024)),            # stored (in, out)
        "fc1_b": jnp.zeros((1024,), jnp.float32),
        "fc2_w": w(ks[6], (1024, 1)),
        "fc2_b": jnp.zeros((1,), jnp.float32),
    }


@jax.jit
def netD2_forward(x_nchw, params):
    x = jnp.transpose(x_nchw, (0, 2, 3, 1)).astype(jnp.float32)
    n = x.shape[0]

    # conv1 (nc -> ndf) + LeakyReLU(0.2), activation fused in the kernel.
    xp, oh, ow = _prep_conv_input(x, pad=1)
    z = conv4x4_s2(xp, _conv_weight_rowphase(params["w1"]), oh, ow,
                   act_alpha=0.2, with_stats=False)
    y = z.astype(jnp.float32).reshape(n, oh, ow, -1)

    # conv2..conv4: conv (+ fused batch stats) then BN normalize + LeakyReLU,
    # applied in the same XLA pass that builds the next layer's input layout.
    for wname, gname, bname in (("w2", "g2", "b2"),
                                ("w3", "g3", "b3"),
                                ("w4", "g4", "b4")):
        xp, oh, ow = _prep_conv_input(y, pad=1)
        z, s, ss = conv4x4_s2(xp, _conv_weight_rowphase(params[wname]),
                              oh, ow, act_alpha=None, with_stats=True)
        scale, shift = _bn_affine(s, ss, n * oh * ow,
                                  params[gname], params[bname])
        y = z.astype(jnp.float32).reshape(n, oh, ow, -1) * scale + shift
        y = jnp.where(y >= 0, y, 0.2 * y)

    # conv5 (4x4, s1, p0 on a 4x4 map == plain matmul) + fc1 + fc2 + sigmoid,
    # all fused into one Pallas kernel.
    k5 = y.shape[1] * y.shape[2] * y.shape[3]
    a = y.reshape(n, k5).astype(jnp.bfloat16)
    w5 = jnp.transpose(params["w5"], (2, 3, 1, 0)).reshape(k5, 1024)
    out = tail_head(a, w5.astype(jnp.bfloat16),
                    params["fc1_w"].astype(jnp.bfloat16),
                    params["fc1_b"][None, :],
                    params["fc2_w"].astype(jnp.bfloat16),
                    params["fc2_b"][None, :])
    return out                                       # (N, 1)


if __name__ == "__main__":
    key = jax.random.PRNGKey(0)
    k_x, k_p = jax.random.split(key)

    batch, nc, ndf = 2, 3, 8      # 64x64 spatial required by the conv stack
    x = jax.random.normal(k_x, (batch, nc, 64, 64), jnp.float32)
    params = init_params(k_p, nc, ndf)

    out = netD2_forward(x, params)
    out = jax.block_until_ready(out)
    assert out.shape == (batch, 1)
    assert bool(jnp.all(jnp.isfinite(out)))
    assert bool(jnp.all((out >= 0.0) & (out <= 1.0)))
    print("KERNEL_OK")
</pallas_src>

<mosaic_0001>
module attributes {stable_mosaic.version = 11 : i64} {
  func.func @_conv_s2_kernel(%arg0: i32, %arg1: memref<1x1056x24xbf16, #tpu.memory_space<vmem>>, %arg2: memref<2x24x8xbf16, #tpu.memory_space<vmem>>, %arg3: memref<1024x8xbf16, #tpu.memory_space<vmem>>) attributes {dimension_semantics = [#tpu.dimension_semantics<parallel>], iteration_bounds = array<i64: 2>, scalar_prefetch = 0 : i64, scratch_operands = 0 : i64, tpu.core_type = #tpu.core_type<tc>, window_params = [{transform_indices = @transform_0, window_bounds = array<i64: 1, 1056, 24>}, {pipeline_mode = #tpu.pipeline_mode<synchronous>, transform_indices = @transform_1, window_bounds = array<i64: 2, 24, 8>}, {transform_indices = @transform_2, window_bounds = array<i64: 1024, 8>}]} {
    %c0 = arith.constant 0 : index
    %c0_0 = arith.constant 0 : index
    %c0_1 = arith.constant 0 : index
    %0 = vector.load %arg1[%c0, %c0_0, %c0_1] : memref<1x1056x24xbf16, #tpu.memory_space<vmem>>, vector<1x1024x24xbf16>
    %1 = vector.shape_cast %0 : vector<1x1024x24xbf16> to vector<1024x24xbf16>
    %c0_2 = arith.constant 0 : index
    %c32 = arith.constant 32 : index
    %c0_3 = arith.constant 0 : index
    %2 = vector.load %arg1[%c0_2, %c32, %c0_3] : memref<1x1056x24xbf16, #tpu.memory_space<vmem>>, vector<1x1024x24xbf16>
    %3 = vector.shape_cast %2 : vector<1x1024x24xbf16> to vector<1024x24xbf16>
    %c0_4 = arith.constant 0 : index
    %c0_5 = arith.constant 0 : index
    %c0_6 = arith.constant 0 : index
    %4 = vector.load %arg2[%c0_4, %c0_5, %c0_6] : memref<2x24x8xbf16, #tpu.memory_space<vmem>>, vector<1x24x8xbf16>
    %5 = vector.shape_cast %4 : vector<1x24x8xbf16> to vector<24x8xbf16>
    %cst = arith.constant dense<0.000000e+00> : vector<1024x8xf32>
    %6 = tpu.matmul %1, %5, %cst {dimension_numbers = #tpu.dot_dimension_numbers<[1], [0], [0], [1], [0, 0, 1, 1], [], []>} : vector<1024x24xbf16>, vector<24x8xbf16>, vector<1024x8xf32> -> vector<1024x8xf32>
    %c1 = arith.constant 1 : index
    %c0_7 = arith.constant 0 : index
    %c0_8 = arith.constant 0 : index
    %7 = vector.load %arg2[%c1, %c0_7, %c0_8] : memref<2x24x8xbf16, #tpu.memory_space<vmem>>, vector<1x24x8xbf16>
    %8 = vector.shape_cast %7 : vector<1x24x8xbf16> to vector<24x8xbf16>
    %cst_9 = arith.constant dense<0.000000e+00> : vector<1024x8xf32>
    %9 = tpu.matmul %3, %8, %cst_9 {dimension_numbers = #tpu.dot_dimension_numbers<[1], [0], [0], [1], [0, 0, 1, 1], [], []>} : vector<1024x24xbf16>, vector<24x8xbf16>, vector<1024x8xf32> -> vector<1024x8xf32>
    %10 = arith.addf %6, %9 : vector<1024x8xf32>
    %cst_10 = arith.constant 0.000000e+00 : f32
    %11 = vector.broadcast %cst_10 : f32 to vector<1024x8xf32>
    %12 = arith.cmpf oge, %10, %11 : vector<1024x8xf32>
    %cst_11 = arith.constant 2.000000e-01 : f32
    %13 = vector.broadcast %cst_11 : f32 to vector<1024x8xf32>
    %14 = arith.mulf %13, %10 : vector<1024x8xf32>
    %15 = arith.select %12, %10, %14 : vector<1024x8xi1>, vector<1024x8xf32>
    %16 = arith.truncf %15 : vector<1024x8xf32> to vector<1024x8xbf16>
    %c0_12 = arith.constant 0 : index
    %c0_13 = arith.constant 0 : index
    %17 = vector.load %arg3[%c0_12, %c0_13] : memref<1024x8xbf16, #tpu.memory_space<vmem>>, vector<1024x8xbf16>
    tpu.vector_store %arg3[%c0_12, %c0_13], %16 {strides = array<i32>} : memref<1024x8xbf16, #tpu.memory_space<vmem>>, vector<1024x8xbf16>,
    return
  }
  func.func @transform_0(%arg0: i32) -> (i32, i32, i32) {
    %c0_i32 = arith.constant 0 : i32
    %c0_i32_0 = arith.constant 0 : i32
    %c0_i32_1 = arith.constant 0 : i32
    return %arg0, %c0_i32, %c0_i32_0 : i32, i32, i32
  }
  func.func @transform_1(%arg0: i32) -> (i32, i32, i32) {
    %c0_i32 = arith.constant 0 : i32
    %c0_i32_0 = arith.constant 0 : i32
    %c0_i32_1 = arith.constant 0 : i32
    %c0_i32_2 = arith.constant 0 : i32
    return %c0_i32, %c0_i32_0, %c0_i32_1 : i32, i32, i32
  }
  func.func @transform_2(%arg0: i32) -> (i32, i32) {
    %c0_i32 = arith.constant 0 : i32
    %c0_i32_0 = arith.constant 0 : i32
    return %arg0, %c0_i32 : i32, i32
  }
}

module attributes {stable_mosaic.version = 11 : i64} {
  func.func @_conv_s2_kernel(%arg0: i32, %arg1: memref<2x272x64xbf16, #tpu.memory_space<vmem>>, %arg2: memref<2x64x16xbf16, #tpu.memory_space<vmem>>, %arg3: memref<512x16xbf16, #tpu.memory_space<vmem>>, %arg4: memref<1x1x16xf32, #tpu.memory_space<vmem>>, %arg5: memref<1x1x16xf32, #tpu.memory_space<vmem>>) attributes {dimension_semantics = [#tpu.dimension_semantics<parallel>], iteration_bounds = array<i64: 1>, scalar_prefetch = 0 : i64, scratch_operands = 0 : i64, tpu.core_type = #tpu.core_type<tc>, window_params = [{transform_indices = @transform_0, window_bounds = array<i64: 2, 272, 64>}, {pipeline_mode = #tpu.pipeline_mode<synchronous>, transform_indices = @transform_1, window_bounds = array<i64: 2, 64, 16>}, {transform_indices = @transform_2, window_bounds = array<i64: 512, 16>}, {transform_indices = @transform_3, window_bounds = array<i64: 1, 1, 16>}, {transform_indices = @transform_4, window_bounds = array<i64: 1, 1, 16>}]} {
    %c0 = arith.constant 0 : index
    %c0_0 = arith.constant 0 : index
    %c0_1 = arith.constant 0 : index
    %0 = vector.load %arg1[%c0, %c0_0, %c0_1] : memref<2x272x64xbf16, #tpu.memory_space<vmem>>, vector<2x256x64xbf16>
    %1 = vector.shape_cast %0 : vector<2x256x64xbf16> to vector<512x64xbf16>
    %c0_2 = arith.constant 0 : index
    %c16 = arith.constant 16 : index
    %c0_3 = arith.constant 0 : index
    %2 = vector.load %arg1[%c0_2, %c16, %c0_3] : memref<2x272x64xbf16, #tpu.memory_space<vmem>>, vector<2x256x64xbf16>
    %3 = vector.shape_cast %2 : vector<2x256x64xbf16> to vector<512x64xbf16>
    %c0_4 = arith.constant 0 : index
    %c0_5 = arith.constant 0 : index
    %c0_6 = arith.constant 0 : index
    %4 = vector.load %arg2[%c0_4, %c0_5, %c0_6] : memref<2x64x16xbf16, #tpu.memory_space<vmem>>, vector<1x64x16xbf16>
    %5 = vector.shape_cast %4 : vector<1x64x16xbf16> to vector<64x16xbf16>
    %cst = arith.constant dense<0.000000e+00> : vector<512x16xf32>
    %6 = tpu.matmul %1, %5, %cst {dimension_numbers = #tpu.dot_dimension_numbers<[1], [0], [0], [1], [0, 0, 1, 1], [], []>} : vector<512x64xbf16>, vector<64x16xbf16>, vector<512x16xf32> -> vector<512x16xf32>
    %c1 = arith.constant 1 : index
    %c0_7 = arith.constant 0 : index
    %c0_8 = arith.constant 0 : index
    %7 = vector.load %arg2[%c1, %c0_7, %c0_8] : memref<2x64x16xbf16, #tpu.memory_space<vmem>>, vector<1x64x16xbf16>
    %8 = vector.shape_cast %7 : vector<1x64x16xbf16> to vector<64x16xbf16>
    %cst_9 = arith.constant dense<0.000000e+00> : vector<512x16xf32>
    %9 = tpu.matmul %3, %8, %cst_9 {dimension_numbers = #tpu.dot_dimension_numbers<[1], [0], [0], [1], [0, 0, 1, 1], [], []>} : vector<512x64xbf16>, vector<64x16xbf16>, vector<512x16xf32> -> vector<512x16xf32>
    %10 = arith.addf %6, %9 : vector<512x16xf32>
    %cst_10 = arith.constant dense<0.000000e+00> : vector<16xf32>
    %11 = vector.multi_reduction <add>, %10, %cst_10 [0] : vector<512x16xf32> to vector<16xf32>
    %12 = vector.shape_cast %11 : vector<16xf32> to vector<1x16xf32>
    %c0_11 = arith.constant 0 : index
    %c0_12 = arith.constant 0 : index
    %c0_13 = arith.constant 0 : index
    %13 = vector.load %arg4[%c0_11, %c0_12, %c0_13] : memref<1x1x16xf32, #tpu.memory_space<vmem>>, vector<1x1x16xf32>
    %14 = vector.shape_cast %13 : vector<1x1x16xf32> to vector<1x16xf32>
    %15 = vector.shape_cast %12 : vector<1x16xf32> to vector<1x1x16xf32>
    tpu.vector_store %arg4[%c0_11, %c0_12, %c0_13], %15 {strides = array<i32>} : memref<1x1x16xf32, #tpu.memory_space<vmem>>, vector<1x1x16xf32>,
    %16 = arith.mulf %10, %10 : vector<512x16xf32>
    %cst_14 = arith.constant dense<0.000000e+00> : vector<16xf32>
    %17 = vector.multi_reduction <add>, %16, %cst_14 [0] : vector<512x16xf32> to vector<16xf32>
    %18 = vector.shape_cast %17 : vector<16xf32> to vector<1x16xf32>
    %c0_15 = arith.constant 0 : index
    %c0_16 = arith.constant 0 : index
    %c0_17 = arith.constant 0 : index
    %19 = vector.load %arg5[%c0_15, %c0_16, %c0_17] : memref<1x1x16xf32, #tpu.memory_space<vmem>>, vector<1x1x16xf32>
    %20 = vector.shape_cast %19 : vector<1x1x16xf32> to vector<1x16xf32>
    %21 = vector.shape_cast %18 : vector<1x16xf32> to vector<1x1x16xf32>
    tpu.vector_store %arg5[%c0_15, %c0_16, %c0_17], %21 {strides = array<i32>} : memref<1x1x16xf32, #tpu.memory_space<vmem>>, vector<1x1x16xf32>,
    %22 = arith.truncf %10 : vector<512x16xf32> to vector<512x16xbf16>
    %c0_18 = arith.constant 0 : index
    %c0_19 = arith.constant 0 : index
    %23 = vector.load %arg3[%c0_18, %c0_19] : memref<512x16xbf16, #tpu.memory_space<vmem>>, vector<512x16xbf16>
    tpu.vector_store %arg3[%c0_18, %c0_19], %22 {strides = array<i32>} : memref<512x16xbf16, #tpu.memory_space<vmem>>, vector<512x16xbf16>,
    return
  }
  func.func @transform_0(%arg0: i32) -> (i32, i32, i32) {
    %c0_i32 = arith.constant 0 : i32
    %c0_i32_0 = arith.constant 0 : i32
    %c0_i32_1 = arith.constant 0 : i32
    return %arg0, %c0_i32, %c0_i32_0 : i32, i32, i32
  }
  func.func @transform_1(%arg0: i32) -> (i32, i32, i32) {
    %c0_i32 = arith.constant 0 : i32
    %c0_i32_0 = arith.constant 0 : i32
    %c0_i32_1 = arith.constant 0 : i32
    %c0_i32_2 = arith.constant 0 : i32
    return %c0_i32, %c0_i32_0, %c0_i32_1 : i32, i32, i32
  }
  func.func @transform_2(%arg0: i32) -> (i32, i32) {
    %c0_i32 = arith.constant 0 : i32
    %c0_i32_0 = arith.constant 0 : i32
    return %arg0, %c0_i32 : i32, i32
  }
  func.func @transform_3(%arg0: i32) -> (i32, i32, i32) {
    %c0_i32 = arith.constant 0 : i32
    %c0_i32_0 = arith.constant 0 : i32
    %c0_i32_1 = arith.constant 0 : i32
    return %arg0, %c0_i32, %c0_i32_0 : i32, i32, i32
  }
  func.func @transform_4(%arg0: i32) -> (i32, i32, i32) {
    %c0_i32 = arith.constant 0 : i32
    %c0_i32_0 = arith.constant 0 : i32
    %c0_i32_1 = arith.constant 0 : i32
    return %arg0, %c0_i32, %c0_i32_0 : i32, i32, i32
  }
}

module attributes {stable_mosaic.version = 11 : i64} {
  func.func @_conv_s2_kernel(%arg0: i32, %arg1: memref<2x72x128xbf16, #tpu.memory_space<vmem>>, %arg2: memref<2x128x32xbf16, #tpu.memory_space<vmem>>, %arg3: memref<128x32xbf16, #tpu.memory_space<vmem>>, %arg4: memref<1x1x32xf32, #tpu.memory_space<vmem>>, %arg5: memref<1x1x32xf32, #tpu.memory_space<vmem>>) attributes {dimension_semantics = [#tpu.dimension_semantics<parallel>], iteration_bounds = array<i64: 1>, scalar_prefetch = 0 : i64, scratch_operands = 0 : i64, tpu.core_type = #tpu.core_type<tc>, window_params = [{transform_indices = @transform_0, window_bounds = array<i64: 2, 72, 128>}, {pipeline_mode = #tpu.pipeline_mode<synchronous>, transform_indices = @transform_1, window_bounds = array<i64: 2, 128, 32>}, {transform_indices = @transform_2, window_bounds = array<i64: 128, 32>}, {transform_indices = @transform_3, window_bounds = array<i64: 1, 1, 32>}, {transform_indices = @transform_4, window_bounds = array<i64: 1, 1, 32>}]} {
    %c0 = arith.constant 0 : index
    %c0_0 = arith.constant 0 : index
    %c0_1 = arith.constant 0 : index
    %0 = vector.load %arg1[%c0, %c0_0, %c0_1] : memref<2x72x128xbf16, #tpu.memory_space<vmem>>, vector<2x64x128xbf16>
    %1 = vector.shape_cast %0 : vector<2x64x128xbf16> to vector<128x128xbf16>
    %c0_2 = arith.constant 0 : index
    %c8 = arith.constant 8 : index
    %c0_3 = arith.constant 0 : index
    %2 = vector.load %arg1[%c0_2, %c8, %c0_3] : memref<2x72x128xbf16, #tpu.memory_space<vmem>>, vector<2x64x128xbf16>
    %3 = vector.shape_cast %2 : vector<2x64x128xbf16> to vector<128x128xbf16>
    %c0_4 = arith.constant 0 : index
    %c0_5 = arith.constant 0 : index
    %c0_6 = arith.constant 0 : index
    %4 = vector.load %arg2[%c0_4, %c0_5, %c0_6] : memref<2x128x32xbf16, #tpu.memory_space<vmem>>, vector<1x128x32xbf16>
    %5 = vector.shape_cast %4 : vector<1x128x32xbf16> to vector<128x32xbf16>
    %cst = arith.constant dense<0.000000e+00> : vector<128x32xf32>
    %6 = tpu.matmul %1, %5, %cst {dimension_numbers = #tpu.dot_dimension_numbers<[1], [0], [0], [1], [0, 0, 1, 1], [], []>} : vector<128x128xbf16>, vector<128x32xbf16>, vector<128x32xf32> -> vector<128x32xf32>
    %c1 = arith.constant 1 : index
    %c0_7 = arith.constant 0 : index
    %c0_8 = arith.constant 0 : index
    %7 = vector.load %arg2[%c1, %c0_7, %c0_8] : memref<2x128x32xbf16, #tpu.memory_space<vmem>>, vector<1x128x32xbf16>
    %8 = vector.shape_cast %7 : vector<1x128x32xbf16> to vector<128x32xbf16>
    %cst_9 = arith.constant dense<0.000000e+00> : vector<128x32xf32>
    %9 = tpu.matmul %3, %8, %cst_9 {dimension_numbers = #tpu.dot_dimension_numbers<[1], [0], [0], [1], [0, 0, 1, 1], [], []>} : vector<128x128xbf16>, vector<128x32xbf16>, vector<128x32xf32> -> vector<128x32xf32>
    %10 = arith.addf %6, %9 : vector<128x32xf32>
    %cst_10 = arith.constant dense<0.000000e+00> : vector<32xf32>
    %11 = vector.multi_reduction <add>, %10, %cst_10 [0] : vector<128x32xf32> to vector<32xf32>
    %12 = vector.shape_cast %11 : vector<32xf32> to vector<1x32xf32>
    %c0_11 = arith.constant 0 : index
    %c0_12 = arith.constant 0 : index
    %c0_13 = arith.constant 0 : index
    %13 = vector.load %arg4[%c0_11, %c0_12, %c0_13] : memref<1x1x32xf32, #tpu.memory_space<vmem>>, vector<1x1x32xf32>
    %14 = vector.shape_cast %13 : vector<1x1x32xf32> to vector<1x32xf32>
    %15 = vector.shape_cast %12 : vector<1x32xf32> to vector<1x1x32xf32>
    tpu.vector_store %arg4[%c0_11, %c0_12, %c0_13], %15 {strides = array<i32>} : memref<1x1x32xf32, #tpu.memory_space<vmem>>, vector<1x1x32xf32>,
    %16 = arith.mulf %10, %10 : vector<128x32xf32>
    %cst_14 = arith.constant dense<0.000000e+00> : vector<32xf32>
    %17 = vector.multi_reduction <add>, %16, %cst_14 [0] : vector<128x32xf32> to vector<32xf32>
    %18 = vector.shape_cast %17 : vector<32xf32> to vector<1x32xf32>
    %c0_15 = arith.constant 0 : index
    %c0_16 = arith.constant 0 : index
    %c0_17 = arith.constant 0 : index
    %19 = vector.load %arg5[%c0_15, %c0_16, %c0_17] : memref<1x1x32xf32, #tpu.memory_space<vmem>>, vector<1x1x32xf32>
    %20 = vector.shape_cast %19 : vector<1x1x32xf32> to vector<1x32xf32>
    %21 = vector.shape_cast %18 : vector<1x32xf32> to vector<1x1x32xf32>
    tpu.vector_store %arg5[%c0_15, %c0_16, %c0_17], %21 {strides = array<i32>} : memref<1x1x32xf32, #tpu.memory_space<vmem>>, vector<1x1x32xf32>,
    %22 = arith.truncf %10 : vector<128x32xf32> to vector<128x32xbf16>
    %c0_18 = arith.constant 0 : index
    %c0_19 = arith.constant 0 : index
    %23 = vector.load %arg3[%c0_18, %c0_19] : memref<128x32xbf16, #tpu.memory_space<vmem>>, vector<128x32xbf16>
    tpu.vector_store %arg3[%c0_18, %c0_19], %22 {strides = array<i32>} : memref<128x32xbf16, #tpu.memory_space<vmem>>, vector<128x32xbf16>,
    return
  }
  func.func @transform_0(%arg0: i32) -> (i32, i32, i32) {
    %c0_i32 = arith.constant 0 : i32
    %c0_i32_0 = arith.constant 0 : i32
    %c0_i32_1 = arith.constant 0 : i32
    return %arg0, %c0_i32, %c0_i32_0 : i32, i32, i32
  }
  func.func @transform_1(%arg0: i32) -> (i32, i32, i32) {
    %c0_i32 = arith.constant 0 : i32
    %c0_i32_0 = arith.constant 0 : i32
    %c0_i32_1 = arith.constant 0 : i32
    %c0_i32_2 = arith.constant 0 : i32
    return %c0_i32, %c0_i32_0, %c0_i32_1 : i32, i32, i32
  }
  func.func @transform_2(%arg0: i32) -> (i32, i32) {
    %c0_i32 = arith.constant 0 : i32
    %c0_i32_0 = arith.constant 0 : i32
    return %arg0, %c0_i32 : i32, i32
  }
  func.func @transform_3(%arg0: i32) -> (i32, i32, i32) {
    %c0_i32 = arith.constant 0 : i32
    %c0_i32_0 = arith.constant 0 : i32
    %c0_i32_1 = arith.constant 0 : i32
    return %arg0, %c0_i32, %c0_i32_0 : i32, i32, i32
  }
  func.func @transform_4(%arg0: i32) -> (i32, i32, i32) {
    %c0_i32 = arith.constant 0 : i32
    %c0_i32_0 = arith.constant 0 : i32
    %c0_i32_1 = arith.constant 0 : i32
    return %arg0, %c0_i32, %c0_i32_0 : i32, i32, i32
  }
}

module attributes {stable_mosaic.version = 11 : i64} {
  func.func @_conv_s2_kernel(%arg0: i32, %arg1: memref<2x20x256xbf16, #tpu.memory_space<vmem>>, %arg2: memref<2x256x64xbf16, #tpu.memory_space<vmem>>, %arg3: memref<32x64xbf16, #tpu.memory_space<vmem>>, %arg4: memref<1x1x64xf32, #tpu.memory_space<vmem>>, %arg5: memref<1x1x64xf32, #tpu.memory_space<vmem>>) attributes {dimension_semantics = [#tpu.dimension_semantics<parallel>], iteration_bounds = array<i64: 1>, scalar_prefetch = 0 : i64, scratch_operands = 0 : i64, tpu.core_type = #tpu.core_type<tc>, window_params = [{transform_indices = @transform_0, window_bounds = array<i64: 2, 20, 256>}, {pipeline_mode = #tpu.pipeline_mode<synchronous>, transform_indices = @transform_1, window_bounds = array<i64: 2, 256, 64>}, {transform_indices = @transform_2, window_bounds = array<i64: 32, 64>}, {transform_indices = @transform_3, window_bounds = array<i64: 1, 1, 64>}, {transform_indices = @transform_4, window_bounds = array<i64: 1, 1, 64>}]} {
    %c0 = arith.constant 0 : index
    %c0_0 = arith.constant 0 : index
    %c0_1 = arith.constant 0 : index
    %0 = vector.load %arg1[%c0, %c0_0, %c0_1] : memref<2x20x256xbf16, #tpu.memory_space<vmem>>, vector<2x16x256xbf16>
    %1 = vector.shape_cast %0 : vector<2x16x256xbf16> to vector<32x256xbf16>
    %c0_2 = arith.constant 0 : index
    %c4 = arith.constant 4 : index
    %c0_3 = arith.constant 0 : index
    %2 = vector.load %arg1[%c0_2, %c4, %c0_3] : memref<2x20x256xbf16, #tpu.memory_space<vmem>>, vector<2x16x256xbf16>
    %3 = vector.shape_cast %2 : vector<2x16x256xbf16> to vector<32x256xbf16>
    %c0_4 = arith.constant 0 : index
    %c0_5 = arith.constant 0 : index
    %c0_6 = arith.constant 0 : index
    %4 = vector.load %arg2[%c0_4, %c0_5, %c0_6] : memref<2x256x64xbf16, #tpu.memory_space<vmem>>, vector<1x256x64xbf16>
    %5 = vector.shape_cast %4 : vector<1x256x64xbf16> to vector<256x64xbf16>
    %cst = arith.constant dense<0.000000e+00> : vector<32x64xf32>
    %6 = tpu.matmul %1, %5, %cst {dimension_numbers = #tpu.dot_dimension_numbers<[1], [0], [0], [1], [0, 0, 1, 1], [], []>} : vector<32x256xbf16>, vector<256x64xbf16>, vector<32x64xf32> -> vector<32x64xf32>
    %c1 = arith.constant 1 : index
    %c0_7 = arith.constant 0 : index
    %c0_8 = arith.constant 0 : index
    %7 = vector.load %arg2[%c1, %c0_7, %c0_8] : memref<2x256x64xbf16, #tpu.memory_space<vmem>>, vector<1x256x64xbf16>
    %8 = vector.shape_cast %7 : vector<1x256x64xbf16> to vector<256x64xbf16>
    %cst_9 = arith.constant dense<0.000000e+00> : vector<32x64xf32>
    %9 = tpu.matmul %3, %8, %cst_9 {dimension_numbers = #tpu.dot_dimension_numbers<[1], [0], [0], [1], [0, 0, 1, 1], [], []>} : vector<32x256xbf16>, vector<256x64xbf16>, vector<32x64xf32> -> vector<32x64xf32>
    %10 = arith.addf %6, %9 : vector<32x64xf32>
    %cst_10 = arith.constant dense<0.000000e+00> : vector<64xf32>
    %11 = vector.multi_reduction <add>, %10, %cst_10 [0] : vector<32x64xf32> to vector<64xf32>
    %12 = vector.shape_cast %11 : vector<64xf32> to vector<1x64xf32>
    %c0_11 = arith.constant 0 : index
    %c0_12 = arith.constant 0 : index
    %c0_13 = arith.constant 0 : index
    %13 = vector.load %arg4[%c0_11, %c0_12, %c0_13] : memref<1x1x64xf32, #tpu.memory_space<vmem>>, vector<1x1x64xf32>
    %14 = vector.shape_cast %13 : vector<1x1x64xf32> to vector<1x64xf32>
    %15 = vector.shape_cast %12 : vector<1x64xf32> to vector<1x1x64xf32>
    tpu.vector_store %arg4[%c0_11, %c0_12, %c0_13], %15 {strides = array<i32>} : memref<1x1x64xf32, #tpu.memory_space<vmem>>, vector<1x1x64xf32>,
    %16 = arith.mulf %10, %10 : vector<32x64xf32>
    %cst_14 = arith.constant dense<0.000000e+00> : vector<64xf32>
    %17 = vector.multi_reduction <add>, %16, %cst_14 [0] : vector<32x64xf32> to vector<64xf32>
    %18 = vector.shape_cast %17 : vector<64xf32> to vector<1x64xf32>
    %c0_15 = arith.constant 0 : index
    %c0_16 = arith.constant 0 : index
    %c0_17 = arith.constant 0 : index
    %19 = vector.load %arg5[%c0_15, %c0_16, %c0_17] : memref<1x1x64xf32, #tpu.memory_space<vmem>>, vector<1x1x64xf32>
    %20 = vector.shape_cast %19 : vector<1x1x64xf32> to vector<1x64xf32>
    %21 = vector.shape_cast %18 : vector<1x64xf32> to vector<1x1x64xf32>
    tpu.vector_store %arg5[%c0_15, %c0_16, %c0_17], %21 {strides = array<i32>} : memref<1x1x64xf32, #tpu.memory_space<vmem>>, vector<1x1x64xf32>,
    %22 = arith.truncf %10 : vector<32x64xf32> to vector<32x64xbf16>
    %c0_18 = arith.constant 0 : index
    %c0_19 = arith.constant 0 : index
    %23 = vector.load %arg3[%c0_18, %c0_19] : memref<32x64xbf16, #tpu.memory_space<vmem>>, vector<32x64xbf16>
    tpu.vector_store %arg3[%c0_18, %c0_19], %22 {strides = array<i32>} : memref<32x64xbf16, #tpu.memory_space<vmem>>, vector<32x64xbf16>,
    return
  }
  func.func @transform_0(%arg0: i32) -> (i32, i32, i32) {
    %c0_i32 = arith.constant 0 : i32
    %c0_i32_0 = arith.constant 0 : i32
    %c0_i32_1 = arith.constant 0 : i32
    return %arg0, %c0_i32, %c0_i32_0 : i32, i32, i32
  }
  func.func @transform_1(%arg0: i32) -> (i32, i32, i32) {
    %c0_i32 = arith.constant 0 : i32
    %c0_i32_0 = arith.constant 0 : i32
    %c0_i32_1 = arith.constant 0 : i32
    %c0_i32_2 = arith.constant 0 : i32
    return %c0_i32, %c0_i32_0, %c0_i32_1 : i32, i32, i32
  }
  func.func @transform_2(%arg0: i32) -> (i32, i32) {
    %c0_i32 = arith.constant 0 : i32
    %c0_i32_0 = arith.constant 0 : i32
    return %arg0, %c0_i32 : i32, i32
  }
  func.func @transform_3(%arg0: i32) -> (i32, i32, i32) {
    %c0_i32 = arith.constant 0 : i32
    %c0_i32_0 = arith.constant 0 : i32
    %c0_i32_1 = arith.constant 0 : i32
    return %arg0, %c0_i32, %c0_i32_0 : i32, i32, i32
  }
  func.func @transform_4(%arg0: i32) -> (i32, i32, i32) {
    %c0_i32 = arith.constant 0 : i32
    %c0_i32_0 = arith.constant 0 : i32
    %c0_i32_1 = arith.constant 0 : i32
    return %arg0, %c0_i32, %c0_i32_0 : i32, i32, i32
  }
}

module attributes {stable_mosaic.version = 11 : i64} {
  func.func @_tail_kernel(%arg0: i32, %arg1: memref<2x1024xbf16, #tpu.memory_space<vmem>>, %arg2: memref<1024x1024xbf16, #tpu.memory_space<vmem>>, %arg3: memref<1024x1024xbf16, #tpu.memory_space<vmem>>, %arg4: memref<1x1024xf32, #tpu.memory_space<vmem>>, %arg5: memref<1024x1xbf16, #tpu.memory_space<vmem>>, %arg6: memref<1x1xf32, #tpu.memory_space<vmem>>, %arg7: memref<2x1xf32, #tpu.memory_space<vmem>>) attributes {dimension_semantics = [#tpu.dimension_semantics<parallel>], iteration_bounds = array<i64: 1>, scalar_prefetch = 0 : i64, scratch_operands = 0 : i64, tpu.core_type = #tpu.core_type<tc>, window_params = [{transform_indices = @transform_0, window_bounds = array<i64: 2, 1024>}, {pipeline_mode = #tpu.pipeline_mode<synchronous>, transform_indices = @transform_1, window_bounds = array<i64: 1024, 1024>}, {pipeline_mode = #tpu.pipeline_mode<synchronous>, transform_indices = @transform_2, window_bounds = array<i64: 1024, 1024>}, {pipeline_mode = #tpu.pipeline_mode<synchronous>, transform_indices = @transform_3, window_bounds = array<i64: 1, 1024>}, {pipeline_mode = #tpu.pipeline_mode<synchronous>, transform_indices = @transform_4, window_bounds = array<i64: 1024, 1>}, {pipeline_mode = #tpu.pipeline_mode<synchronous>, transform_indices = @transform_5, window_bounds = array<i64: 1, 1>}, {transform_indices = @transform_6, window_bounds = array<i64: 2, 1>}]} {
    %c0 = arith.constant 0 : index
    %c0_0 = arith.constant 0 : index
    %0 = vector.load %arg1[%c0, %c0_0] : memref<2x1024xbf16, #tpu.memory_space<vmem>>, vector<2x1024xbf16>
    %c0_1 = arith.constant 0 : index
    %c0_2 = arith.constant 0 : index
    %1 = vector.load %arg2[%c0_1, %c0_2] : memref<1024x1024xbf16, #tpu.memory_space<vmem>>, vector<1024x1024xbf16>
    %cst = arith.constant dense<0.000000e+00> : vector<2x1024xf32>
    %2 = tpu.matmul %0, %1, %cst {dimension_numbers = #tpu.dot_dimension_numbers<[1], [0], [0], [1], [0, 0, 1, 1], [], []>} : vector<2x1024xbf16>, vector<1024x1024xbf16>, vector<2x1024xf32> -> vector<2x1024xf32>
    %cst_3 = arith.constant 0.000000e+00 : f32
    %3 = vector.broadcast %cst_3 : f32 to vector<2x1024xf32>
    %4 = arith.cmpf oge, %2, %3 : vector<2x1024xf32>
    %cst_4 = arith.constant 0.00999999977 : f32
    %5 = vector.broadcast %cst_4 : f32 to vector<2x1024xf32>
    %6 = arith.mulf %5, %2 : vector<2x1024xf32>
    %7 = arith.select %4, %2, %6 : vector<2x1024xi1>, vector<2x1024xf32>
    %8 = arith.truncf %7 : vector<2x1024xf32> to vector<2x1024xbf16>
    %c0_5 = arith.constant 0 : index
    %c0_6 = arith.constant 0 : index
    %9 = vector.load %arg3[%c0_5, %c0_6] : memref<1024x1024xbf16, #tpu.memory_space<vmem>>, vector<1024x1024xbf16>
    %cst_7 = arith.constant dense<0.000000e+00> : vector<2x1024xf32>
    %10 = tpu.matmul %8, %9, %cst_7 {dimension_numbers = #tpu.dot_dimension_numbers<[1], [0], [0], [1], [0, 0, 1, 1], [], []>} : vector<2x1024xbf16>, vector<1024x1024xbf16>, vector<2x1024xf32> -> vector<2x1024xf32>
    %c0_8 = arith.constant 0 : index
    %c0_9 = arith.constant 0 : index
    %11 = vector.load %arg4[%c0_8, %c0_9] : memref<1x1024xf32, #tpu.memory_space<vmem>>, vector<1x1024xf32>
    %12 = vector.broadcast %11 : vector<1x1024xf32> to vector<2x1024xf32>
    %13 = arith.addf %10, %12 : vector<2x1024xf32>
    %cst_10 = arith.constant 0.000000e+00 : f32
    %14 = vector.broadcast %cst_10 : f32 to vector<2x1024xf32>
    %15 = arith.cmpf oge, %13, %14 : vector<2x1024xf32>
    %cst_11 = arith.constant 0.00999999977 : f32
    %16 = vector.broadcast %cst_11 : f32 to vector<2x1024xf32>
    %17 = arith.mulf %16, %13 : vector<2x1024xf32>
    %18 = arith.select %15, %13, %17 : vector<2x1024xi1>, vector<2x1024xf32>
    %19 = arith.truncf %18 : vector<2x1024xf32> to vector<2x1024xbf16>
    %c0_12 = arith.constant 0 : index
    %c0_13 = arith.constant 0 : index
    %20 = vector.load %arg5[%c0_12, %c0_13] : memref<1024x1xbf16, #tpu.memory_space<vmem>>, vector<1024x1xbf16>
    %cst_14 = arith.constant dense<0.000000e+00> : vector<2x1xf32>
    %21 = tpu.matmul %19, %20, %cst_14 {dimension_numbers = #tpu.dot_dimension_numbers<[1], [0], [0], [1], [0, 0, 1, 1], [], []>} : vector<2x1024xbf16>, vector<1024x1xbf16>, vector<2x1xf32> -> vector<2x1xf32>
    %c0_15 = arith.constant 0 : index
    %c0_16 = arith.constant 0 : index
    %22 = vector.load %arg6[%c0_15, %c0_16] : memref<1x1xf32, #tpu.memory_space<vmem>>, vector<1x1xf32>
    %23 = vector.broadcast %22 : vector<1x1xf32> to vector<2x1xf32>
    %24 = arith.addf %21, %23 : vector<2x1xf32>
    %25 = arith.negf %24 : vector<2x1xf32>
    %26 = math.exp %25 : vector<2x1xf32>
    %cst_17 = arith.constant 1.000000e+00 : f32
    %27 = vector.broadcast %cst_17 : f32 to vector<2x1xf32>
    %28 = arith.addf %27, %26 : vector<2x1xf32>
    %29 = arith.divf %27, %28 : vector<2x1xf32>
    %c0_18 = arith.constant 0 : index
    %c0_19 = arith.constant 0 : index
    %30 = vector.load %arg7[%c0_18, %c0_19] : memref<2x1xf32, #tpu.memory_space<vmem>>, vector<2x1xf32>
    tpu.vector_store %arg7[%c0_18, %c0_19], %29 {strides = array<i32>} : memref<2x1xf32, #tpu.memory_space<vmem>>, vector<2x1xf32>,
    return
  }
  func.func @transform_0(%arg0: i32) -> (i32, i32) {
    %c0_i32 = arith.constant 0 : i32
    %c0_i32_0 = arith.constant 0 : i32
    return %arg0, %c0_i32 : i32, i32
  }
  func.func @transform_1(%arg0: i32) -> (i32, i32) {
    %c0_i32 = arith.constant 0 : i32
    %c0_i32_0 = arith.constant 0 : i32
    %c0_i32_1 = arith.constant 0 : i32
    return %c0_i32, %c0_i32_0 : i32, i32
  }
  func.func @transform_2(%arg0: i32) -> (i32, i32) {
    %c0_i32 = arith.constant 0 : i32
    %c0_i32_0 = arith.constant 0 : i32
    %c0_i32_1 = arith.constant 0 : i32
    return %c0_i32, %c0_i32_0 : i32, i32
  }
  func.func @transform_3(%arg0: i32) -> (i32, i32) {
    %c0_i32 = arith.constant 0 : i32
    %c0_i32_0 = arith.constant 0 : i32
    %c0_i32_1 = arith.constant 0 : i32
    return %c0_i32, %c0_i32_0 : i32, i32
  }
  func.func @transform_4(%arg0: i32) -> (i32, i32) {
    %c0_i32 = arith.constant 0 : i32
    %c0_i32_0 = arith.constant 0 : i32
    %c0_i32_1 = arith.constant 0 : i32
    return %c0_i32, %c0_i32_0 : i32, i32
  }
  func.func @transform_5(%arg0: i32) -> (i32, i32) {
    %c0_i32 = arith.constant 0 : i32
    %c0_i32_0 = arith.constant 0 : i32
    %c0_i32_1 = arith.constant 0 : i32
    return %c0_i32, %c0_i32_0 : i32, i32
  }
  func.func @transform_6(%arg0: i32) -> (i32, i32) {
    %c0_i32 = arith.constant 0 : i32
    %c0_i32_0 = arith.constant 0 : i32
    return %arg0, %c0_i32 : i32, i32
  }
}

</mosaic_0001>

<llo_original>
// kernel: netD2_forward.5
$region0: #{netD2_forward.5}
  #allocation0 [shape = 'u32[]', space=smem, size = 0x4, offset = 0x4, fixed_abs, tag = 'smem constant byte address 0x4 - core index']
  #allocation1 [shape = 'u32[72,128]{1,0:T(1,128)}', space=vmem, size = 0x9000, scoped, tag = 'internal scratch']
  %s0 = inlined_call_operand.vmem [shape: bf16[2,1056,24], index: 0, kind: input, shape index: {}]
  %s1 = inlined_call_operand.vmem [shape: bf16[2,24,8], index: 1, kind: input, shape index: {}]
  %s2 = inlined_call_operand.vmem [shape: bf16[2048,8], index: 2, kind: output, shape index: {}]
  %s3 = sld [smem:[#allocation0]]
  $region41: #{netD2_forward.5} parent=0
    _
  %s5 = ssub.s32 1, %s3
  %s6 = scalar_select 0, %s5, %s3
  loop: start=0, step=1, limit=4
  $region2: #{netD2_forward.5} parent=0 // loop_pre_header
    _
  $region3: #{netD2_forward.5} parent=0 // loop_header
    %s8 = sphi 0, %s12
    %p9 = scmp.ge.s32.totalorder %s8, 4
    %s18 = sphi 0, %s20
    %s21 = sphi 0, %s18
    %s22 = sphi 0, %s21
    %s38 = sphi 0, %s22
    %s42 = sphi 0, %s42
    %s44 = sphi 0, %s42
    %s45 = sphi 0, %s44
    %s59 = sphi 0, %s45
    %s65 = sphi 0, %s67
    %s68 = sphi 0, %s65
    %s69 = sphi 0, %s68
    %s85 = sphi 0, %s69
  $region4: #{netD2_forward.5} parent=0 // loop_header_branch
    %11 = sbr.rel (%p9) target = $region8
  $region5: #{netD2_forward.5} parent=0 // loop_body
    %s13 = ssub.s32 %s8, 1
    %s14 = ssub.s32 %s8, 2
    %s15 = sadd.s32 %s8, 1
    %s16 = ssub.s32 %s8, %s15
    %p17 = scmp.eq.s32.totalorder %s16, 0
    %s19 = sadd.s32 %s18, 1
    %s20 = scalar_select %p17, %s18, %s19
    %p23 = pneg %p17
    %p24 = scmp.eq.s32.totalorder %s8, 1
    %p25 = por %p23, %p24
    %p26 = scmp.ne.s32.totalorder %s18, %s21
    %p27 = scmp.eq.s32.totalorder %s8, 0
    %p28 = por %p26, %p27
    %p29 = scmp.ne.s32.totalorder %s18, %s21
    %p30 = scmp.eq.s32.totalorder %s13, 1
    %p31 = por %p29, %p30
    %p32 = scmp.ne.s32.totalorder %s21, %s22
    %p33 = scmp.eq.s32.totalorder %s13, 0
    %p34 = por %p32, %p33
    %p35 = scmp.ne.s32.totalorder %s21, %s22
    %p36 = scmp.eq.s32.totalorder %s14, 1
    %p37 = por %p35, %p36
    %p39 = scmp.ne.s32.totalorder %s22, %s38
    %p40 = scmp.eq.s32.totalorder %s14, 0
    %p41 = por %p39, %p40
    %s43 = sadd.s32 %s42, 1
    %p46 = scmp.eq.s32.totalorder %s8, 1
    %p47 = scmp.ne.s32.totalorder %s42, %s44
    %p48 = scmp.eq.s32.totalorder %s8, 0
    %p49 = por %p47, %p48
    %p50 = scmp.ne.s32.totalorder %s42, %s44
    %p51 = scmp.eq.s32.totalorder %s13, 1
    %p52 = por %p50, %p51
    %p53 = scmp.ne.s32.totalorder %s44, %s45
    %p54 = scmp.eq.s32.totalorder %s13, 0
    %p55 = por %p53, %p54
    %p56 = scmp.ne.s32.totalorder %s44, %s45
    %p57 = scmp.eq.s32.totalorder %s14, 1
    %p58 = por %p56, %p57
    %p60 = scmp.ne.s32.totalorder %s45, %s59
    %p61 = scmp.eq.s32.totalorder %s14, 0
    %p62 = por %p60, %p61
    %s63 = ssub.s32 %s8, %s15
    %p64 = scmp.eq.s32.totalorder %s63, 0
    %s66 = sadd.s32 %s65, 1
    %s67 = scalar_select %p64, %s65, %s66
    %p70 = pneg %p64
    %p71 = scmp.eq.s32.totalorder %s8, 1
    %p72 = por %p70, %p71
    %p73 = scmp.ne.s32.totalorder %s65, %s68
    %p74 = scmp.eq.s32.totalorder %s8, 0
    %p75 = por %p73, %p74
    %p76 = scmp.ne.s32.totalorder %s65, %s68
    %p77 = scmp.eq.s32.totalorder %s13, 1
    %p78 = por %p76, %p77
    %p79 = scmp.ne.s32.totalorder %s68, %s69
    %p80 = scmp.eq.s32.totalorder %s13, 0
    %p81 = por %p79, %p80
    %p82 = scmp.ne.s32.totalorder %s68, %s69
    %p83 = scmp.eq.s32.totalorder %s14, 1
    %p84 = por %p82, %p83
    %p86 = scmp.ne.s32.totalorder %s69, %s85
    %p87 = scmp.eq.s32.totalorder %s14, 0
    %p88 = por %p86, %p87
    %p89 = scmp.le.s32.totalorder 1, %s8
    %p90 = scmp.lt.s32.totalorder %s8, 3
    %p91 = pnand %p89, %p90
    %p92 = pneg %p91
    // Predicated region
    $region9: #{netD2_forward.5} parent=5 // pred_check
      _
    $region10: #{netD2_forward.5} parent=5 // pred_check_branch
      %94 = sbr.rel (%p91) target = $region12
    $region11: #{netD2_forward.5} parent=5 // pred_region
      %s95 = ssub.s32 %s8, 1
      // Predicated region
      $region13: #{netD2_forward.5} parent=11 // pred_check
        %p96 = pneg %p55
      $region14: #{netD2_forward.5} parent=11 // pred_check_branch
        %98 = sbr.rel (%p96) target = $region16
      $region15: #{netD2_forward.5} parent=11 // pred_region
        _
      $region16: #{netD2_forward.5} parent=11 // pred_fallthru
        _
    $region12: #{netD2_forward.5} parent=5 // pred_fallthru
      _
    %p99 = scmp.lt.s32.totalorder %s8, 2
    // Predicated region
    $region17: #{netD2_forward.5} parent=5 // pred_check
      %p100 = pneg %p99
    $region18: #{netD2_forward.5} parent=5 // pred_check_branch
      %102 = sbr.rel (%p100) target = $region20
    $region19: #{netD2_forward.5} parent=5 // pred_region
      // Predicated region
      $region21: #{netD2_forward.5} parent=19 // pred_check
        %p103 = pneg %p28
      $region22: #{netD2_forward.5} parent=19 // pred_check_branch
        %105 = sbr.rel (%p103) target = $region24
      $region23: #{netD2_forward.5} parent=19 // pred_region
        %p106 = scmp.lt.s32.totalorder %s8, 1
        %s107 = scalar_select %p106, %s8, 1
        %s108 = smul.addr %s107, 132
        %s109 = smul.addr %s108, 4
        %s110 = scalar_lea.vmem %s0, %s109
      $region24: #{netD2_forward.5} parent=19 // pred_fallthru
        _
    $region20: #{netD2_forward.5} parent=5 // pred_fallthru
      _
    %p111 = scmp.le.s32.totalorder 1, %s8
    %p112 = scmp.lt.s32.totalorder %s8, 3
    %p113 = pnand %p111, %p112
    %p114 = pneg %p113
    // Predicated region
    $region25: #{netD2_forward.5} parent=5 // pred_check
      _
    $region26: #{netD2_forward.5} parent=5 // pred_check_branch
      %116 = sbr.rel (%p113) target = $region28
    $region27: #{netD2_forward.5} parent=5 // pred_region
      %s117 = ssub.s32 %s8, 1
      %p118 = scmp.lt.s32.totalorder %s13, 1
      %s119 = scalar_select %p118, %s13, 1
      %s120 = smul.addr %s119, 132
      %s121 = smul.addr %s120, 4
      %s122 = scalar_lea.vmem %s0, %s121
      %p123 = pneg %p34
      %p124 = pneg %p31
      %p125 = pneg %p55
      %p126 = pneg %p52
      %p127 = pneg %p81
      %p128 = pneg %p78
      %s129 = smul.u32 128, %s13
      %p130 = scmp.lt.s32.totalorder %s129, 255
      %s131 = scalar_select %p130, %s129, 255
      %s132 = smul.addr %s131, 4
      %s133 = scalar_lea.vmem %s2, %s132
      %p134 = scmp.lt.s32.totalorder %s13, 1
      %s135 = scalar_select %p134, %s13, 1
      %s136 = smul.addr %s135, 132
      %s137 = smul.addr %s136, 4
      %s138 = scalar_lea.vmem %s0, %s137
      %s139 = smul.u32 128, %s13
      %p140 = scmp.lt.s32.totalorder %s139, 255
      %s141 = scalar_select %p140, %s139, 255
      %s142 = smul.addr %s141, 4
      %s143 = scalar_lea.vmem %s2, %s142
      %s144 = smul.u32 128, %s13
      %v146 = vld [vmem:[%s138] sm:$0xf]
      %v147 = vld [vmem:[%s138 + $0x4] sm:$0xf]
      %v148 = vld [vmem:[%s138 + $0x8] sm:$0xf]
      %v149 = vld [vmem:[%s138 + $0xc] sm:$0xf]
      %v150 = vld [vmem:[%s138 + $0x10] sm:$0xf]
      %v151 = vld [vmem:[%s138 + $0x14] sm:$0xf]
      %v152 = vld [vmem:[%s138 + $0x18] sm:$0xf]
      %v153 = vld [vmem:[%s138 + $0x1c] sm:$0xf]
      %v154 = vld [vmem:[%s138 + $0x20] sm:$0xf]
      %v155 = vld [vmem:[%s138 + $0x24] sm:$0xf]
      %v156 = vld [vmem:[%s138 + $0x28] sm:$0xf]
      %v157 = vld [vmem:[%s138 + $0x2c] sm:$0xf]
      %v158 = vld [vmem:[%s138 + $0x30] sm:$0xf]
      %v159 = vld [vmem:[%s138 + $0x34] sm:$0xf]
      %v160 = vld [vmem:[%s138 + $0x38] sm:$0xf]
      %v161 = vld [vmem:[%s138 + $0x3c] sm:$0xf]
      %v162 = vld [vmem:[%s138 + $0x40] sm:$0xf]
      %v163 = vld [vmem:[%s138 + $0x44] sm:$0xf]
      %v164 = vld [vmem:[%s138 + $0x48] sm:$0xf]
      %v165 = vld [vmem:[%s138 + $0x4c] sm:$0xf]
      %v166 = vld [vmem:[%s138 + $0x50] sm:$0xf]
      %v167 = vld [vmem:[%s138 + $0x54] sm:$0xf]
      %v168 = vld [vmem:[%s138 + $0x58] sm:$0xf]
      %v169 = vld [vmem:[%s138 + $0x5c] sm:$0xf]
      %v170 = vld [vmem:[%s138 + $0x60] sm:$0xf]
      %v171 = vld [vmem:[%s138 + $0x64] sm:$0xf]
      %v172 = vld [vmem:[%s138 + $0x68] sm:$0xf]
      %v173 = vld [vmem:[%s138 + $0x6c] sm:$0xf]
      %v174 = vld [vmem:[%s138 + $0x70] sm:$0xf]
      %v175 = vld [vmem:[%s138 + $0x74] sm:$0xf]
      %v176 = vld [vmem:[%s138 + $0x78] sm:$0xf]
      %v177 = vld [vmem:[%s138 + $0x7c] sm:$0xf]
      %v178 = vld [vmem:[%s138 + $0x80] sm:$0xf]
      %v179 = vld [vmem:[%s138 + $0x84] sm:$0xf]
      %v180 = vld [vmem:[%s138 + $0x88] sm:$0xf]
      %v181 = vld [vmem:[%s138 + $0x8c] sm:$0xf]
      %v182 = vld [vmem:[%s138 + $0x90] sm:$0xf]
      %v183 = vld [vmem:[%s138 + $0x94] sm:$0xf]
      %v184 = vld [vmem:[%s138 + $0x98] sm:$0xf]
      %v185 = vld [vmem:[%s138 + $0x9c] sm:$0xf]
      %v186 = vld [vmem:[%s138 + $0xa0] sm:$0xf]
      %v187 = vld [vmem:[%s138 + $0xa4] sm:$0xf]
      %v188 = vld [vmem:[%s138 + $0xa8] sm:$0xf]
      %v189 = vld [vmem:[%s138 + $0xac] sm:$0xf]
      %v190 = vld [vmem:[%s138 + $0xb0] sm:$0xf]
      %v191 = vld [vmem:[%s138 + $0xb4] sm:$0xf]
      %v192 = vld [vmem:[%s138 + $0xb8] sm:$0xf]
      %v193 = vld [vmem:[%s138 + $0xbc] sm:$0xf]
      %v194 = vld [vmem:[%s138 + $0xc0] sm:$0xf]
      %v195 = vld [vmem:[%s138 + $0xc4] sm:$0xf]
      %v196 = vld [vmem:[%s138 + $0xc8] sm:$0xf]
      %v197 = vld [vmem:[%s138 + $0xcc] sm:$0xf]
      %v198 = vld [vmem:[%s138 + $0xd0] sm:$0xf]
      %v199 = vld [vmem:[%s138 + $0xd4] sm:$0xf]
      %v200 = vld [vmem:[%s138 + $0xd8] sm:$0xf]
      %v201 = vld [vmem:[%s138 + $0xdc] sm:$0xf]
      %v202 = vld [vmem:[%s138 + $0xe0] sm:$0xf]
      %v203 = vld [vmem:[%s138 + $0xe4] sm:$0xf]
      %v204 = vld [vmem:[%s138 + $0xe8] sm:$0xf]
      %v205 = vld [vmem:[%s138 + $0xec] sm:$0xf]
      %v206 = vld [vmem:[%s138 + $0xf0] sm:$0xf]
      %v207 = vld [vmem:[%s138 + $0xf4] sm:$0xf]
      %v208 = vld [vmem:[%s138 + $0xf8] sm:$0xf]
      %v209 = vld [vmem:[%s138 + $0xfc] sm:$0xf]
      %v210 = vld [vmem:[%s138 + $0x100] sm:$0xf]
      %v211 = vld [vmem:[%s138 + $0x104] sm:$0xf]
      %v212 = vld [vmem:[%s138 + $0x108] sm:$0xf]
      %v213 = vld [vmem:[%s138 + $0x10c] sm:$0xf]
      %v214 = vld [vmem:[%s138 + $0x110] sm:$0xf]
      %v215 = vld [vmem:[%s138 + $0x114] sm:$0xf]
      %v216 = vld [vmem:[%s138 + $0x118] sm:$0xf]
      %v217 = vld [vmem:[%s138 + $0x11c] sm:$0xf]
      %v218 = vld [vmem:[%s138 + $0x120] sm:$0xf]
      %v219 = vld [vmem:[%s138 + $0x124] sm:$0xf]
      %v220 = vld [vmem:[%s138 + $0x128] sm:$0xf]
      %v221 = vld [vmem:[%s138 + $0x12c] sm:$0xf]
      %v222 = vld [vmem:[%s138 + $0x130] sm:$0xf]
      %v223 = vld [vmem:[%s138 + $0x134] sm:$0xf]
      %v224 = vld [vmem:[%s138 + $0x138] sm:$0xf]
      %v225 = vld [vmem:[%s138 + $0x13c] sm:$0xf]
      %v226 = vld [vmem:[%s138 + $0x140] sm:$0xf]
      %v227 = vld [vmem:[%s138 + $0x144] sm:$0xf]
      %v228 = vld [vmem:[%s138 + $0x148] sm:$0xf]
      %v229 = vld [vmem:[%s138 + $0x14c] sm:$0xf]
      %v230 = vld [vmem:[%s138 + $0x150] sm:$0xf]
      %v231 = vld [vmem:[%s138 + $0x154] sm:$0xf]
      %v232 = vld [vmem:[%s138 + $0x158] sm:$0xf]
      %v233 = vld [vmem:[%s138 + $0x15c] sm:$0xf]
      %v234 = vld [vmem:[%s138 + $0x160] sm:$0xf]
      %v235 = vld [vmem:[%s138 + $0x164] sm:$0xf]
      %v236 = vld [vmem:[%s138 + $0x168] sm:$0xf]
      %v237 = vld [vmem:[%s138 + $0x16c] sm:$0xf]
      %v238 = vld [vmem:[%s138 + $0x170] sm:$0xf]
      %v239 = vld [vmem:[%s138 + $0x174] sm:$0xf]
      %v240 = vld [vmem:[%s138 + $0x178] sm:$0xf]
      %v241 = vld [vmem:[%s138 + $0x17c] sm:$0xf]
      %v242 = vld [vmem:[%s138 + $0x180] sm:$0xf]
      %v243 = vld [vmem:[%s138 + $0x184] sm:$0xf]
      %v244 = vld [vmem:[%s138 + $0x188] sm:$0xf]
      %v245 = vld [vmem:[%s138 + $0x18c] sm:$0xf]
      %v246 = vld [vmem:[%s138 + $0x190] sm:$0xf]
      %v247 = vld [vmem:[%s138 + $0x194] sm:$0xf]
      %v248 = vld [vmem:[%s138 + $0x198] sm:$0xf]
      %v249 = vld [vmem:[%s138 + $0x19c] sm:$0xf]
      %v250 = vld [vmem:[%s138 + $0x1a0] sm:$0xf]
      %v251 = vld [vmem:[%s138 + $0x1a4] sm:$0xf]
      %v252 = vld [vmem:[%s138 + $0x1a8] sm:$0xf]
      %v253 = vld [vmem:[%s138 + $0x1ac] sm:$0xf]
      %v254 = vld [vmem:[%s138 + $0x1b0] sm:$0xf]
      %v255 = vld [vmem:[%s138 + $0x1b4] sm:$0xf]
      %v256 = vld [vmem:[%s138 + $0x1b8] sm:$0xf]
      %v257 = vld [vmem:[%s138 + $0x1bc] sm:$0xf]
      %v258 = vld [vmem:[%s138 + $0x1c0] sm:$0xf]
      %v259 = vld [vmem:[%s138 + $0x1c4] sm:$0xf]
      %v260 = vld [vmem:[%s138 + $0x1c8] sm:$0xf]
      %v261 = vld [vmem:[%s138 + $0x1cc] sm:$0xf]
      %v262 = vld [vmem:[%s138 + $0x1d0] sm:$0xf]
      %v263 = vld [vmem:[%s138 + $0x1d4] sm:$0xf]
      %v264 = vld [vmem:[%s138 + $0x1d8] sm:$0xf]
      %v265 = vld [vmem:[%s138 + $0x1dc] sm:$0xf]
      %v266 = vld [vmem:[%s138 + $0x1e0] sm:$0xf]
      %v267 = vld [vmem:[%s138 + $0x1e4] sm:$0xf]
      %v268 = vld [vmem:[%s138 + $0x1e8] sm:$0xf]
      %v269 = vld [vmem:[%s138 + $0x1ec] sm:$0xf]
      %v270 = vld [vmem:[%s138 + $0x1f0] sm:$0xf]
      %v271 = vld [vmem:[%s138 + $0x1f4] sm:$0xf]
      %v272 = vld [vmem:[%s138 + $0x1f8] sm:$0xf]
      %v273 = vld [vmem:[%s138 + $0x1fc] sm:$0xf]
      %v274 = vld [vmem:[%s138 + $0x200] sm:$0xf]
      %v275 = vld [vmem:[%s138 + $0x204] sm:$0xf]
      %v276 = vld [vmem:[%s138 + $0x208] sm:$0xf]
      %v277 = vld [vmem:[%s138 + $0x20c] sm:$0xf]
      %v278 = vld [vmem:[%s1] sm:$0xf]
      %v279 = vld [vmem:[%s1 + $0x4] sm:$0xf]
      %v280 = vld [vmem:[%s1 + $0x8] sm:$0xf]
      %s281 = scalar_lea.vmem %s1, 12
      %v282 = vld [vmem:[%s281] sm:$0xf]
      %v283 = vld [vmem:[%s281 + $0x4] sm:$0xf]
      %v284 = vld [vmem:[%s281 + $0x8] sm:$0xf]
      %v413 = vunpack.c.l.b16 %v150
      %v414 = vunpack.c.l.b16 %v151
      %v415 = vunpack.c.l.b16 %v152
      %v416 = vunpack.c.l.b16 %v153
      %v417 = vunpack.c.l.b16 %v154
      %v418 = vunpack.c.l.b16 %v155
      %v419 = vunpack.c.l.b16 %v156
      %v420 = vunpack.c.l.b16 %v157
      %v421 = vunpack.c.l.b16 %v158
      %v422 = vunpack.c.l.b16 %v159
      %v423 = vunpack.c.l.b16 %v160
      %v424 = vunpack.c.l.b16 %v161
      %v425 = vunpack.c.l.b16 %v162
      %v426 = vunpack.c.l.b16 %v163
      %v427 = vunpack.c.l.b16 %v164
      %v428 = vunpack.c.l.b16 %v165
      %v429 = vunpack.c.l.b16 %v166
      %v430 = vunpack.c.l.b16 %v167
      %v431 = vunpack.c.l.b16 %v168
      %v432 = vunpack.c.l.b16 %v169
      %v433 = vunpack.c.l.b16 %v170
      %v434 = vunpack.c.l.b16 %v171
      %v435 = vunpack.c.l.b16 %v172
      %v436 = vunpack.c.l.b16 %v173
      %v437 = vunpack.c.l.b16 %v174
      %v438 = vunpack.c.l.b16 %v175
      %v439 = vunpack.c.l.b16 %v176
      %v440 = vunpack.c.l.b16 %v177
      %v441 = vunpack.c.l.b16 %v178
      %v442 = vunpack.c.l.b16 %v179
      %v443 = vunpack.c.l.b16 %v180
      %v444 = vunpack.c.l.b16 %v181
      %v445 = vunpack.c.l.b16 %v182
      %v446 = vunpack.c.l.b16 %v183
      %v447 = vunpack.c.l.b16 %v184
      %v448 = vunpack.c.l.b16 %v185
      %v449 = vunpack.c.l.b16 %v186
      %v450 = vunpack.c.l.b16 %v187
      %v451 = vunpack.c.l.b16 %v188
      %v452 = vunpack.c.l.b16 %v189
      %v453 = vunpack.c.l.b16 %v190
      %v454 = vunpack.c.l.b16 %v191
      %v455 = vunpack.c.l.b16 %v192
      %v456 = vunpack.c.l.b16 %v193
      %v457 = vunpack.c.l.b16 %v194
      %v458 = vunpack.c.l.b16 %v195
      %v459 = vunpack.c.l.b16 %v196
      %v460 = vunpack.c.l.b16 %v197
      %v461 = vunpack.c.l.b16 %v198
      %v462 = vunpack.c.l.b16 %v199
      %v463 = vunpack.c.l.b16 %v200
      %v464 = vunpack.c.l.b16 %v201
      %v465 = vunpack.c.l.b16 %v202
      %v466 = vunpack.c.l.b16 %v203
      %v467 = vunpack.c.l.b16 %v204
      %v468 = vunpack.c.l.b16 %v205
      %v469 = vunpack.c.l.b16 %v206
      %v470 = vunpack.c.l.b16 %v207
      %v471 = vunpack.c.l.b16 %v208
      %v472 = vunpack.c.l.b16 %v209
      %v473 = vunpack.c.l.b16 %v210
      %v474 = vunpack.c.l.b16 %v211
      %v475 = vunpack.c.l.b16 %v212
      %v476 = vunpack.c.l.b16 %v213
      %v477 = vunpack.c.l.b16 %v214
      %v478 = vunpack.c.l.b16 %v215
      %v479 = vunpack.c.l.b16 %v216
      %v480 = vunpack.c.l.b16 %v217
      %v481 = vunpack.c.l.b16 %v218
      %v482 = vunpack.c.l.b16 %v219
      %v483 = vunpack.c.l.b16 %v220
      %v484 = vunpack.c.l.b16 %v221
      %v485 = vunpack.c.l.b16 %v222
      %v486 = vunpack.c.l.b16 %v223
      %v487 = vunpack.c.l.b16 %v224
      %v488 = vunpack.c.l.b16 %v225
      %v489 = vunpack.c.l.b16 %v226
      %v490 = vunpack.c.l.b16 %v227
      %v491 = vunpack.c.l.b16 %v228
      %v492 = vunpack.c.l.b16 %v229
      %v493 = vunpack.c.l.b16 %v230
      %v494 = vunpack.c.l.b16 %v231
      %v495 = vunpack.c.l.b16 %v232
      %v496 = vunpack.c.l.b16 %v233
      %v497 = vunpack.c.l.b16 %v234
      %v498 = vunpack.c.l.b16 %v235
      %v499 = vunpack.c.l.b16 %v236
      %v500 = vunpack.c.l.b16 %v237
      %v501 = vunpack.c.l.b16 %v238
      %v502 = vunpack.c.l.b16 %v239
      %v503 = vunpack.c.l.b16 %v240
      %v504 = vunpack.c.l.b16 %v241
      %v505 = vunpack.c.l.b16 %v242
      %v506 = vunpack.c.l.b16 %v243
      %v507 = vunpack.c.l.b16 %v244
      %v508 = vunpack.c.l.b16 %v245
      %v509 = vunpack.c.l.b16 %v246
      %v510 = vunpack.c.l.b16 %v247
      %v511 = vunpack.c.l.b16 %v248
      %v512 = vunpack.c.l.b16 %v249
      %v513 = vunpack.c.l.b16 %v250
      %v514 = vunpack.c.l.b16 %v251
      %v515 = vunpack.c.l.b16 %v252
      %v516 = vunpack.c.l.b16 %v253
      %v517 = vunpack.c.l.b16 %v254
      %v518 = vunpack.c.l.b16 %v255
      %v519 = vunpack.c.l.b16 %v256
      %v520 = vunpack.c.l.b16 %v257
      %v521 = vunpack.c.l.b16 %v258
      %v522 = vunpack.c.l.b16 %v259
      %v523 = vunpack.c.l.b16 %v260
      %v524 = vunpack.c.l.b16 %v261
      %v525 = vunpack.c.l.b16 %v262
      %v526 = vunpack.c.l.b16 %v263
      %v527 = vunpack.c.l.b16 %v264
      %v528 = vunpack.c.l.b16 %v265
      %v529 = vunpack.c.l.b16 %v266
      %v530 = vunpack.c.l.b16 %v267
      %v531 = vunpack.c.l.b16 %v268
      %v532 = vunpack.c.l.b16 %v269
      %v533 = vunpack.c.l.b16 %v270
      %v534 = vunpack.c.l.b16 %v271
      %v535 = vunpack.c.l.b16 %v272
      %v536 = vunpack.c.l.b16 %v273
      %v537 = vunpack.c.l.b16 %v274
      %v538 = vunpack.c.l.b16 %v275
      %v539 = vunpack.c.l.b16 %v276
      %v540 = vunpack.c.l.b16 %v277
      %v541 = vpack.c.b16 %v414, %v413
      %v542 = vpack.c.b16 %v416, %v415
      %v543 = vpack.c.b16 %v418, %v417
      %v544 = vpack.c.b16 %v420, %v419
      %v545 = vpack.c.b16 %v422, %v421
      %v546 = vpack.c.b16 %v424, %v423
      %v547 = vpack.c.b16 %v426, %v425
      %v548 = vpack.c.b16 %v428, %v427
      %v549 = vpack.c.b16 %v430, %v429
      %v550 = vpack.c.b16 %v432, %v431
      %v551 = vpack.c.b16 %v434, %v433
      %v552 = vpack.c.b16 %v436, %v435
      %v553 = vpack.c.b16 %v438, %v437
      %v554 = vpack.c.b16 %v440, %v439
      %v555 = vpack.c.b16 %v442, %v441
      %v556 = vpack.c.b16 %v444, %v443
      %v557 = vpack.c.b16 %v446, %v445
      %v558 = vpack.c.b16 %v448, %v447
      %v559 = vpack.c.b16 %v450, %v449
      %v560 = vpack.c.b16 %v452, %v451
      %v561 = vpack.c.b16 %v454, %v453
      %v562 = vpack.c.b16 %v456, %v455
      %v563 = vpack.c.b16 %v458, %v457
      %v564 = vpack.c.b16 %v460, %v459
      %v565 = vpack.c.b16 %v462, %v461
      %v566 = vpack.c.b16 %v464, %v463
      %v567 = vpack.c.b16 %v466, %v465
      %v568 = vpack.c.b16 %v468, %v467
      %v569 = vpack.c.b16 %v470, %v469
      %v570 = vpack.c.b16 %v472, %v471
      %v571 = vpack.c.b16 %v474, %v473
      %v572 = vpack.c.b16 %v476, %v475
      %v573 = vpack.c.b16 %v478, %v477
      %v574 = vpack.c.b16 %v480, %v479
      %v575 = vpack.c.b16 %v482, %v481
      %v576 = vpack.c.b16 %v484, %v483
      %v577 = vpack.c.b16 %v486, %v485
      %v578 = vpack.c.b16 %v488, %v487
      %v579 = vpack.c.b16 %v490, %v489
      %v580 = vpack.c.b16 %v492, %v491
      %v581 = vpack.c.b16 %v494, %v493
      %v582 = vpack.c.b16 %v496, %v495
      %v583 = vpack.c.b16 %v498, %v497
      %v584 = vpack.c.b16 %v500, %v499
      %v585 = vpack.c.b16 %v502, %v501
      %v586 = vpack.c.b16 %v504, %v503
      %v587 = vpack.c.b16 %v506, %v505
      %v588 = vpack.c.b16 %v508, %v507
      %v589 = vpack.c.b16 %v510, %v509
      %v590 = vpack.c.b16 %v512, %v511
      %v591 = vpack.c.b16 %v514, %v513
      %v592 = vpack.c.b16 %v516, %v515
      %v593 = vpack.c.b16 %v518, %v517
      %v594 = vpack.c.b16 %v520, %v519
      %v595 = vpack.c.b16 %v522, %v521
      %v596 = vpack.c.b16 %v524, %v523
      %v597 = vpack.c.b16 %v526, %v525
      %v598 = vpack.c.b16 %v528, %v527
      %v599 = vpack.c.b16 %v530, %v529
      %v600 = vpack.c.b16 %v532, %v531
      %v601 = vpack.c.b16 %v534, %v533
      %v602 = vpack.c.b16 %v536, %v535
      %v603 = vpack.c.b16 %v538, %v537
      %v604 = vpack.c.b16 %v540, %v539
      %v608 = vunpack.c.l.b16 %v282
      %v609 = vunpack.c.l.b16 %v283
      %v610 = vunpack.c.l.b16 %v284
      %v611 = vpack.c.b16 %v609, %v608
      %v612 = vpack.c.b16 %v610, %v610
      %vm614 = vcmask 195584
      %v616 = vsel %vm614, %v541, 0
      %v619 = vsel %vm614, %v542, 0
      %v622 = vsel %vm614, %v543, 0
      %v625 = vsel %vm614, %v544, 0
      %v628 = vsel %vm614, %v545, 0
      %v631 = vsel %vm614, %v546, 0
      %v634 = vsel %vm614, %v547, 0
      %v637 = vsel %vm614, %v548, 0
      %v640 = vsel %vm614, %v549, 0
      %v643 = vsel %vm614, %v550, 0
      %v646 = vsel %vm614, %v551, 0
      %v649 = vsel %vm614, %v552, 0
      %v652 = vsel %vm614, %v553, 0
      %v655 = vsel %vm614, %v554, 0
      %v658 = vsel %vm614, %v555, 0
      %v661 = vsel %vm614, %v556, 0
      %v664 = vsel %vm614, %v557, 0
      %v667 = vsel %vm614, %v558, 0
      %v670 = vsel %vm614, %v559, 0
      %v673 = vsel %vm614, %v560, 0
      %v676 = vsel %vm614, %v561, 0
      %v679 = vsel %vm614, %v562, 0
      %v682 = vsel %vm614, %v563, 0
      %v685 = vsel %vm614, %v564, 0
      %v688 = vsel %vm614, %v565, 0
      %v691 = vsel %vm614, %v566, 0
      %v694 = vsel %vm614, %v567, 0
      %v697 = vsel %vm614, %v568, 0
      %v700 = vsel %vm614, %v569, 0
      %v703 = vsel %vm614, %v570, 0
      %v706 = vsel %vm614, %v571, 0
      %v709 = vsel %vm614, %v572, 0
      %v712 = vsel %vm614, %v573, 0
      %v715 = vsel %vm614, %v574, 0
      %v718 = vsel %vm614, %v575, 0
      %v721 = vsel %vm614, %v576, 0
      %v724 = vsel %vm614, %v577, 0
      %v727 = vsel %vm614, %v578, 0
      %v730 = vsel %vm614, %v579, 0
      %v733 = vsel %vm614, %v580, 0
      %v736 = vsel %vm614, %v581, 0
      %v739 = vsel %vm614, %v582, 0
      %v742 = vsel %vm614, %v583, 0
      %v745 = vsel %vm614, %v584, 0
      %v748 = vsel %vm614, %v585, 0
      %v751 = vsel %vm614, %v586, 0
      %v754 = vsel %vm614, %v587, 0
      %v757 = vsel %vm614, %v588, 0
      %v760 = vsel %vm614, %v589, 0
      %v763 = vsel %vm614, %v590, 0
      %v766 = vsel %vm614, %v591, 0
      %v769 = vsel %vm614, %v592, 0
      %v772 = vsel %vm614, %v593, 0
      %v775 = vsel %vm614, %v594, 0
      %v778 = vsel %vm614, %v595, 0
      %v781 = vsel %vm614, %v596, 0
      %v784 = vsel %vm614, %v597, 0
      %v787 = vsel %vm614, %v598, 0
      %v790 = vsel %vm614, %v599, 0
      %v793 = vsel %vm614, %v600, 0
      %v796 = vsel %vm614, %v601, 0
      %v799 = vsel %vm614, %v602, 0
      %v802 = vsel %vm614, %v603, 0
      %v805 = vsel %vm614, %v604, 0
      %vm807 = vcmask 1043456
      %v809 = vsel %vm807, %v612, 0
      %811 = vmatpush.bf16.msra.mxu0 0
      %812 = vmatpush.bf16.msra.mxu0 0
      %813 = vmatpush.bf16.msra.mxu0 0
      %814 = vmatpush.bf16.msra.mxu0 0
      %815 = vmatpush.bf16.msra.mxu0 0
      %816 = vmatpush.bf16.msra.mxu0 0
      %817 = vmatpush.bf16.msra.mxu0 %v809
      %818 = vmatpush.bf16.msra.mxu0 %v611
      %819 = vmatmul.bf16.gmra.mxu0 %v616
      %v820 = vpop.f32.mrf.mxu0
      %v821 = vadd.f32 0.0, %v820
      %v822 = vpop.f32.mrf.mxu0
      %v823 = vadd.f32 0.0, %v822
      %824 = vmatmul.bf16.gmra.mxu0 %v619
      %v825 = vpop.f32.mrf.mxu0
      %v826 = vadd.f32 0.0, %v825
      %v827 = vpop.f32.mrf.mxu0
      %v828 = vadd.f32 0.0, %v827
      %829 = vmatmul.bf16.gmra.mxu0 %v622
      %v830 = vpop.f32.mrf.mxu0
      %v831 = vadd.f32 0.0, %v830
      %v832 = vpop.f32.mrf.mxu0
      %v833 = vadd.f32 0.0, %v832
      %834 = vmatmul.bf16.gmra.mxu0 %v625
      %v835 = vpop.f32.mrf.mxu0
      %v836 = vadd.f32 0.0, %v835
      %v837 = vpop.f32.mrf.mxu0
      %v838 = vadd.f32 0.0, %v837
      %839 = vmatmul.bf16.gmra.mxu0 %v628
      %v840 = vpop.f32.mrf.mxu0
      %v841 = vadd.f32 0.0, %v840
      %v842 = vpop.f32.mrf.mxu0
      %v843 = vadd.f32 0.0, %v842
      %844 = vmatmul.bf16.gmra.mxu0 %v631
      %v845 = vpop.f32.mrf.mxu0
      %v846 = vadd.f32 0.0, %v845
      %v847 = vpop.f32.mrf.mxu0
      %v848 = vadd.f32 0.0, %v847
      %849 = vmatmul.bf16.gmra.mxu0 %v634
      %v850 = vpop.f32.mrf.mxu0
      %v851 = vadd.f32 0.0, %v850
      %v852 = vpop.f32.mrf.mxu0
      %v853 = vadd.f32 0.0, %v852
      %854 = vmatmul.bf16.gmra.mxu0 %v637
      %v855 = vpop.f32.mrf.mxu0
      %v856 = vadd.f32 0.0, %v855
      %v857 = vpop.f32.mrf.mxu0
      %v858 = vadd.f32 0.0, %v857
      %859 = vmatmul.bf16.gmra.mxu0 %v640
      %v860 = vpop.f32.mrf.mxu0
      %v861 = vadd.f32 0.0, %v860
      %v862 = vpop.f32.mrf.mxu0
      %v863 = vadd.f32 0.0, %v862
      %864 = vmatmul.bf16.gmra.mxu0 %v643
      %v865 = vpop.f32.mrf.mxu0
      %v866 = vadd.f32 0.0, %v865
      %v867 = vpop.f32.mrf.mxu0
      %v868 = vadd.f32 0.0, %v867
      %869 = vmatmul.bf16.gmra.mxu0 %v646
      %v870 = vpop.f32.mrf.mxu0
      %v871 = vadd.f32 0.0, %v870
      %v872 = vpop.f32.mrf.mxu0
      %v873 = vadd.f32 0.0, %v872
      %874 = vmatmul.bf16.gmra.mxu0 %v649
      %v875 = vpop.f32.mrf.mxu0
      %v876 = vadd.f32 0.0, %v875
      %v877 = vpop.f32.mrf.mxu0
      %v878 = vadd.f32 0.0, %v877
      %879 = vmatmul.bf16.gmra.mxu0 %v652
      %v880 = vpop.f32.mrf.mxu0
      %v881 = vadd.f32 0.0, %v880
      %v882 = vpop.f32.mrf.mxu0
      %v883 = vadd.f32 0.0, %v882
      %884 = vmatmul.bf16.gmra.mxu0 %v655
      %v885 = vpop.f32.mrf.mxu0
      %v886 = vadd.f32 0.0, %v885
      %v887 = vpop.f32.mrf.mxu0
      %v888 = vadd.f32 0.0, %v887
      %889 = vmatmul.bf16.gmra.mxu0 %v658
      %v890 = vpop.f32.mrf.mxu0
      %v891 = vadd.f32 0.0, %v890
      %v892 = vpop.f32.mrf.mxu0
      %v893 = vadd.f32 0.0, %v892
      %894 = vmatmul.bf16.gmra.mxu0 %v661
      %v895 = vpop.f32.mrf.mxu0
      %v896 = vadd.f32 0.0, %v895
      %v897 = vpop.f32.mrf.mxu0
      %v898 = vadd.f32 0.0, %v897
      %899 = vmatmul.bf16.gmra.mxu0 %v664
      %v900 = vpop.f32.mrf.mxu0
      %v901 = vadd.f32 0.0, %v900
      %v902 = vpop.f32.mrf.mxu0
      %v903 = vadd.f32 0.0, %v902
      %904 = vmatmul.bf16.gmra.mxu0 %v667
      %v905 = vpop.f32.mrf.mxu0
      %v906 = vadd.f32 0.0, %v905
      %v907 = vpop.f32.mrf.mxu0
      %v908 = vadd.f32 0.0, %v907
      %909 = vmatmul.bf16.gmra.mxu0 %v670
      %v910 = vpop.f32.mrf.mxu0
      %v911 = vadd.f32 0.0, %v910
      %v912 = vpop.f32.mrf.mxu0
      %v913 = vadd.f32 0.0, %v912
      %914 = vmatmul.bf16.gmra.mxu0 %v673
      %v915 = vpop.f32.mrf.mxu0
      %v916 = vadd.f32 0.0, %v915
      %v917 = vpop.f32.mrf.mxu0
      %v918 = vadd.f32 0.0, %v917
      %919 = vmatmul.bf16.gmra.mxu0 %v676
      %v920 = vpop.f32.mrf.mxu0
      %v921 = vadd.f32 0.0, %v920
      %v922 = vpop.f32.mrf.mxu0
      %v923 = vadd.f32 0.0, %v922
      %924 = vmatmul.bf16.gmra.mxu0 %v679
      %v925 = vpop.f32.mrf.mxu0
      %v926 = vadd.f32 0.0, %v925
      %v927 = vpop.f32.mrf.mxu0
      %v928 = vadd.f32 0.0, %v927
      %929 = vmatmul.bf16.gmra.mxu0 %v682
      %v930 = vpop.f32.mrf.mxu0
      %v931 = vadd.f32 0.0, %v930
      %v932 = vpop.f32.mrf.mxu0
      %v933 = vadd.f32 0.0, %v932
      %934 = vmatmul.bf16.gmra.mxu0 %v685
      %v935 = vpop.f32.mrf.mxu0
      %v936 = vadd.f32 0.0, %v935
      %v937 = vpop.f32.mrf.mxu0
      %v938 = vadd.f32 0.0, %v937
      %939 = vmatmul.bf16.gmra.mxu0 %v688
      %v940 = vpop.f32.mrf.mxu0
      %v941 = vadd.f32 0.0, %v940
      %v942 = vpop.f32.mrf.mxu0
      %v943 = vadd.f32 0.0, %v942
      %944 = vmatmul.bf16.gmra.mxu0 %v691
      %v945 = vpop.f32.mrf.mxu0
      %v946 = vadd.f32 0.0, %v945
      %v947 = vpop.f32.mrf.mxu0
      %v948 = vadd.f32 0.0, %v947
      %949 = vmatmul.bf16.gmra.mxu0 %v694
      %v950 = vpop.f32.mrf.mxu0
      %v951 = vadd.f32 0.0, %v950
      %v952 = vpop.f32.mrf.mxu0
      %v953 = vadd.f32 0.0, %v952
      %954 = vmatmul.bf16.gmra.mxu0 %v697
      %v955 = vpop.f32.mrf.mxu0
      %v956 = vadd.f32 0.0, %v955
      %v957 = vpop.f32.mrf.mxu0
      %v958 = vadd.f32 0.0, %v957
      %959 = vmatmul.bf16.gmra.mxu0 %v700
      %v960 = vpop.f32.mrf.mxu0
      %v961 = vadd.f32 0.0, %v960
      %v962 = vpop.f32.mrf.mxu0
      %v963 = vadd.f32 0.0, %v962
      %964 = vmatmul.bf16.gmra.mxu0 %v703
      %v965 = vpop.f32.mrf.mxu0
      %v966 = vadd.f32 0.0, %v965
      %v967 = vpop.f32.mrf.mxu0
      %v968 = vadd.f32 0.0, %v967
      %969 = vmatmul.bf16.gmra.mxu0 %v706
      %v970 = vpop.f32.mrf.mxu0
      %v971 = vadd.f32 0.0, %v970
      %v972 = vpop.f32.mrf.mxu0
      %v973 = vadd.f32 0.0, %v972
      %974 = vmatmul.bf16.gmra.mxu0 %v709
      %v975 = vpop.f32.mrf.mxu0
      %v976 = vadd.f32 0.0, %v975
      %v977 = vpop.f32.mrf.mxu0
      %v978 = vadd.f32 0.0, %v977
      %979 = vmatmul.bf16.gmra.mxu0 %v712
      %v980 = vpop.f32.mrf.mxu0
      %v981 = vadd.f32 0.0, %v980
      %v982 = vpop.f32.mrf.mxu0
      %v983 = vadd.f32 0.0, %v982
      %984 = vmatmul.bf16.gmra.mxu0 %v715
      %v985 = vpop.f32.mrf.mxu0
      %v986 = vadd.f32 0.0, %v985
      %v987 = vpop.f32.mrf.mxu0
      %v988 = vadd.f32 0.0, %v987
      %989 = vmatmul.bf16.gmra.mxu0 %v718
      %v990 = vpop.f32.mrf.mxu0
      %v991 = vadd.f32 0.0, %v990
      %v992 = vpop.f32.mrf.mxu0
      %v993 = vadd.f32 0.0, %v992
      %994 = vmatmul.bf16.gmra.mxu0 %v721
      %v995 = vpop.f32.mrf.mxu0
      %v996 = vadd.f32 0.0, %v995
      %v997 = vpop.f32.mrf.mxu0
      %v998 = vadd.f32 0.0, %v997
      %999 = vmatmul.bf16.gmra.mxu0 %v724
      %v1000 = vpop.f32.mrf.mxu0
      %v1001 = vadd.f32 0.0, %v1000
      %v1002 = vpop.f32.mrf.mxu0
      %v1003 = vadd.f32 0.0, %v1002
      %1004 = vmatmul.bf16.gmra.mxu0 %v727
      %v1005 = vpop.f32.mrf.mxu0
      %v1006 = vadd.f32 0.0, %v1005
      %v1007 = vpop.f32.mrf.mxu0
      %v1008 = vadd.f32 0.0, %v1007
      %1009 = vmatmul.bf16.gmra.mxu0 %v730
      %v1010 = vpop.f32.mrf.mxu0
      %v1011 = vadd.f32 0.0, %v1010
      %v1012 = vpop.f32.mrf.mxu0
      %v1013 = vadd.f32 0.0, %v1012
      %1014 = vmatmul.bf16.gmra.mxu0 %v733
      %v1015 = vpop.f32.mrf.mxu0
      %v1016 = vadd.f32 0.0, %v1015
      %v1017 = vpop.f32.mrf.mxu0
      %v1018 = vadd.f32 0.0, %v1017
      %1019 = vmatmul.bf16.gmra.mxu0 %v736
      %v1020 = vpop.f32.mrf.mxu0
      %v1021 = vadd.f32 0.0, %v1020
      %v1022 = vpop.f32.mrf.mxu0
      %v1023 = vadd.f32 0.0, %v1022
      %1024 = vmatmul.bf16.gmra.mxu0 %v739
      %v1025 = vpop.f32.mrf.mxu0
      %v1026 = vadd.f32 0.0, %v1025
      %v1027 = vpop.f32.mrf.mxu0
      %v1028 = vadd.f32 0.0, %v1027
      %1029 = vmatmul.bf16.gmra.mxu0 %v742
      %v1030 = vpop.f32.mrf.mxu0
      %v1031 = vadd.f32 0.0, %v1030
      %v1032 = vpop.f32.mrf.mxu0
      %v1033 = vadd.f32 0.0, %v1032
      %1034 = vmatmul.bf16.gmra.mxu0 %v745
      %v1035 = vpop.f32.mrf.mxu0
      %v1036 = vadd.f32 0.0, %v1035
      %v1037 = vpop.f32.mrf.mxu0
      %v1038 = vadd.f32 0.0, %v1037
      %1039 = vmatmul.bf16.gmra.mxu0 %v748
      %v1040 = vpop.f32.mrf.mxu0
      %v1041 = vadd.f32 0.0, %v1040
      %v1042 = vpop.f32.mrf.mxu0
      %v1043 = vadd.f32 0.0, %v1042
      %1044 = vmatmul.bf16.gmra.mxu0 %v751
      %v1045 = vpop.f32.mrf.mxu0
      %v1046 = vadd.f32 0.0, %v1045
      %v1047 = vpop.f32.mrf.mxu0
      %v1048 = vadd.f32 0.0, %v1047
      %1049 = vmatmul.bf16.gmra.mxu0 %v754
      %v1050 = vpop.f32.mrf.mxu0
      %v1051 = vadd.f32 0.0, %v1050
      %v1052 = vpop.f32.mrf.mxu0
      %v1053 = vadd.f32 0.0, %v1052
      %1054 = vmatmul.bf16.gmra.mxu0 %v757
      %v1055 = vpop.f32.mrf.mxu0
      %v1056 = vadd.f32 0.0, %v1055
      %v1057 = vpop.f32.mrf.mxu0
      %v1058 = vadd.f32 0.0, %v1057
      %1059 = vmatmul.bf16.gmra.mxu0 %v760
      %v1060 = vpop.f32.mrf.mxu0
      %v1061 = vadd.f32 0.0, %v1060
      %v1062 = vpop.f32.mrf.mxu0
      %v1063 = vadd.f32 0.0, %v1062
      %1064 = vmatmul.bf16.gmra.mxu0 %v763
      %v1065 = vpop.f32.mrf.mxu0
      %v1066 = vadd.f32 0.0, %v1065
      %v1067 = vpop.f32.mrf.mxu0
      %v1068 = vadd.f32 0.0, %v1067
      %1069 = vmatmul.bf16.gmra.mxu0 %v766
      %v1070 = vpop.f32.mrf.mxu0
      %v1071 = vadd.f32 0.0, %v1070
      %v1072 = vpop.f32.mrf.mxu0
      %v1073 = vadd.f32 0.0, %v1072
      %1074 = vmatmul.bf16.gmra.mxu0 %v769
      %v1075 = vpop.f32.mrf.mxu0
      %v1076 = vadd.f32 0.0, %v1075
      %v1077 = vpop.f32.mrf.mxu0
      %v1078 = vadd.f32 0.0, %v1077
      %1079 = vmatmul.bf16.gmra.mxu0 %v772
      %v1080 = vpop.f32.mrf.mxu0
      %v1081 = vadd.f32 0.0, %v1080
      %v1082 = vpop.f32.mrf.mxu0
      %v1083 = vadd.f32 0.0, %v1082
      %1084 = vmatmul.bf16.gmra.mxu0 %v775
      %v1085 = vpop.f32.mrf.mxu0
      %v1086 = vadd.f32 0.0, %v1085
      %v1087 = vpop.f32.mrf.mxu0
      %v1088 = vadd.f32 0.0, %v1087
      %1089 = vmatmul.bf16.gmra.mxu0 %v778
      %v1090 = vpop.f32.mrf.mxu0
      %v1091 = vadd.f32 0.0, %v1090
      %v1092 = vpop.f32.mrf.mxu0
      %v1093 = vadd.f32 0.0, %v1092
      %1094 = vmatmul.bf16.gmra.mxu0 %v781
      %v1095 = vpop.f32.mrf.mxu0
      %v1096 = vadd.f32 0.0, %v1095
      %v1097 = vpop.f32.mrf.mxu0
      %v1098 = vadd.f32 0.0, %v1097
      %1099 = vmatmul.bf16.gmra.mxu0 %v784
      %v1100 = vpop.f32.mrf.mxu0
      %v1101 = vadd.f32 0.0, %v1100
      %v1102 = vpop.f32.mrf.mxu0
      %v1103 = vadd.f32 0.0, %v1102
      %1104 = vmatmul.bf16.gmra.mxu0 %v787
      %v1105 = vpop.f32.mrf.mxu0
      %v1106 = vadd.f32 0.0, %v1105
      %v1107 = vpop.f32.mrf.mxu0
      %v1108 = vadd.f32 0.0, %v1107
      %1109 = vmatmul.bf16.gmra.mxu0 %v790
      %v1110 = vpop.f32.mrf.mxu0
      %v1111 = vadd.f32 0.0, %v1110
      %v1112 = vpop.f32.mrf.mxu0
      %v1113 = vadd.f32 0.0, %v1112
      %1114 = vmatmul.bf16.gmra.mxu0 %v793
      %v1115 = vpop.f32.mrf.mxu0
      %v1116 = vadd.f32 0.0, %v1115
      %v1117 = vpop.f32.mrf.mxu0
      %v1118 = vadd.f32 0.0, %v1117
      %1119 = vmatmul.bf16.gmra.mxu0 %v796
      %v1120 = vpop.f32.mrf.mxu0
      %v1121 = vadd.f32 0.0, %v1120
      %v1122 = vpop.f32.mrf.mxu0
      %v1123 = vadd.f32 0.0, %v1122
      %1124 = vmatmul.bf16.gmra.mxu0 %v799
      %v1125 = vpop.f32.mrf.mxu0
      %v1126 = vadd.f32 0.0, %v1125
      %v1127 = vpop.f32.mrf.mxu0
      %v1128 = vadd.f32 0.0, %v1127
      %1129 = vmatmul.bf16.gmra.mxu0 %v802
      %v1130 = vpop.f32.mrf.mxu0
      %v1131 = vadd.f32 0.0, %v1130
      %v1132 = vpop.f32.mrf.mxu0
      %v1133 = vadd.f32 0.0, %v1132
      %1134 = vmatmul.bf16.gmra.mxu0 %v805
      %v1135 = vpop.f32.mrf.mxu0
      %v1136 = vadd.f32 0.0, %v1135
      %v1137 = vpop.f32.mrf.mxu0
      %v1138 = vadd.f32 0.0, %v1137
      %1139 = vdwg.mxu0
      %v1144 = vunpack.c.l.b16 %v146
      %v1145 = vunpack.c.l.b16 %v147
      %v1146 = vunpack.c.l.b16 %v148
      %v1147 = vunpack.c.l.b16 %v149
      %v1148 = vpack.c.b16 %v1145, %v1144
      %v1149 = vpack.c.b16 %v1147, %v1146
      %v1153 = vunpack.c.l.b16 %v278
      %v1154 = vunpack.c.l.b16 %v279
      %v1155 = vunpack.c.l.b16 %v280
      %v1156 = vpack.c.b16 %v1154, %v1153
      %v1157 = vpack.c.b16 %v1155, %v1155
      %v1160 = vsel %vm614, %v1148, 0
      %v1163 = vsel %vm614, %v1149, 0
      %v1166 = vsel %vm807, %v1157, 0
      %1168 = vmatpush.bf16.msra.mxu0 0
      %1169 = vmatpush.bf16.msra.mxu0 0
      %1170 = vmatpush.bf16.msra.mxu0 0
      %1171 = vmatpush.bf16.msra.mxu0 0
      %1172 = vmatpush.bf16.msra.mxu0 0
      %1173 = vmatpush.bf16.msra.mxu0 0
      %1174 = vmatpush.bf16.msra.mxu0 %v1166
      %1175 = vmatpush.bf16.msra.mxu0 %v1156
      %1176 = vmatmul.bf16.gmra.mxu0 %v1160
      %v1177 = vpop.f32.mrf.mxu0
      %v1178 = vadd.f32 %v821, %v1177
      %v1179 = vpop.f32.mrf.mxu0
      %v1180 = vadd.f32 %v823, %v1179
      %1181 = vmatmul.bf16.gmra.mxu0 %v1163
      %v1182 = vpop.f32.mrf.mxu0
      %v1183 = vadd.f32 %v826, %v1182
      %v1184 = vpop.f32.mrf.mxu0
      %v1185 = vadd.f32 %v828, %v1184
      %1186 = vmatmul.bf16.gmra.mxu0 %v616
      %v1187 = vpop.f32.mrf.mxu0
      %v1188 = vadd.f32 %v831, %v1187
      %v1189 = vpop.f32.mrf.mxu0
      %v1190 = vadd.f32 %v833, %v1189
      %1191 = vmatmul.bf16.gmra.mxu0 %v619
      %v1192 = vpop.f32.mrf.mxu0
      %v1193 = vadd.f32 %v836, %v1192
      %v1194 = vpop.f32.mrf.mxu0
      %v1195 = vadd.f32 %v838, %v1194
      %1196 = vmatmul.bf16.gmra.mxu0 %v622
      %v1197 = vpop.f32.mrf.mxu0
      %v1198 = vadd.f32 %v841, %v1197
      %v1199 = vpop.f32.mrf.mxu0
      %v1200 = vadd.f32 %v843, %v1199
      %1201 = vmatmul.bf16.gmra.mxu0 %v625
      %v1202 = vpop.f32.mrf.mxu0
      %v1203 = vadd.f32 %v846, %v1202
      %v1204 = vpop.f32.mrf.mxu0
      %v1205 = vadd.f32 %v848, %v1204
      %1206 = vmatmul.bf16.gmra.mxu0 %v628
      %v1207 = vpop.f32.mrf.mxu0
      %v1208 = vadd.f32 %v851, %v1207
      %v1209 = vpop.f32.mrf.mxu0
      %v1210 = vadd.f32 %v853, %v1209
      %1211 = vmatmul.bf16.gmra.mxu0 %v631
      %v1212 = vpop.f32.mrf.mxu0
      %v1213 = vadd.f32 %v856, %v1212
      %v1214 = vpop.f32.mrf.mxu0
      %v1215 = vadd.f32 %v858, %v1214
      %1216 = vmatmul.bf16.gmra.mxu0 %v634
      %v1217 = vpop.f32.mrf.mxu0
      %v1218 = vadd.f32 %v861, %v1217
      %v1219 = vpop.f32.mrf.mxu0
      %v1220 = vadd.f32 %v863, %v1219
      %1221 = vmatmul.bf16.gmra.mxu0 %v637
      %v1222 = vpop.f32.mrf.mxu0
      %v1223 = vadd.f32 %v866, %v1222
      %v1224 = vpop.f32.mrf.mxu0
      %v1225 = vadd.f32 %v868, %v1224
      %1226 = vmatmul.bf16.gmra.mxu0 %v640
      %v1227 = vpop.f32.mrf.mxu0
      %v1228 = vadd.f32 %v871, %v1227
      %v1229 = vpop.f32.mrf.mxu0
      %v1230 = vadd.f32 %v873, %v1229
      %1231 = vmatmul.bf16.gmra.mxu0 %v643
      %v1232 = vpop.f32.mrf.mxu0
      %v1233 = vadd.f32 %v876, %v1232
      %v1234 = vpop.f32.mrf.mxu0
      %v1235 = vadd.f32 %v878, %v1234
      %1236 = vmatmul.bf16.gmra.mxu0 %v646
      %v1237 = vpop.f32.mrf.mxu0
      %v1238 = vadd.f32 %v881, %v1237
      %v1239 = vpop.f32.mrf.mxu0
      %v1240 = vadd.f32 %v883, %v1239
      %1241 = vmatmul.bf16.gmra.mxu0 %v649
      %v1242 = vpop.f32.mrf.mxu0
      %v1243 = vadd.f32 %v886, %v1242
      %v1244 = vpop.f32.mrf.mxu0
      %v1245 = vadd.f32 %v888, %v1244
      %1246 = vmatmul.bf16.gmra.mxu0 %v652
      %v1247 = vpop.f32.mrf.mxu0
      %v1248 = vadd.f32 %v891, %v1247
      %v1249 = vpop.f32.mrf.mxu0
      %v1250 = vadd.f32 %v893, %v1249
      %1251 = vmatmul.bf16.gmra.mxu0 %v655
      %v1252 = vpop.f32.mrf.mxu0
      %v1253 = vadd.f32 %v896, %v1252
      %v1254 = vpop.f32.mrf.mxu0
      %v1255 = vadd.f32 %v898, %v1254
      %1256 = vmatmul.bf16.gmra.mxu0 %v658
      %v1257 = vpop.f32.mrf.mxu0
      %v1258 = vadd.f32 %v901, %v1257
      %v1259 = vpop.f32.mrf.mxu0
      %v1260 = vadd.f32 %v903, %v1259
      %1261 = vmatmul.bf16.gmra.mxu0 %v661
      %v1262 = vpop.f32.mrf.mxu0
      %v1263 = vadd.f32 %v906, %v1262
      %v1264 = vpop.f32.mrf.mxu0
      %v1265 = vadd.f32 %v908, %v1264
      %1266 = vmatmul.bf16.gmra.mxu0 %v664
      %v1267 = vpop.f32.mrf.mxu0
      %v1268 = vadd.f32 %v911, %v1267
      %v1269 = vpop.f32.mrf.mxu0
      %v1270 = vadd.f32 %v913, %v1269
      %1271 = vmatmul.bf16.gmra.mxu0 %v667
      %v1272 = vpop.f32.mrf.mxu0
      %v1273 = vadd.f32 %v916, %v1272
      %v1274 = vpop.f32.mrf.mxu0
      %v1275 = vadd.f32 %v918, %v1274
      %1276 = vmatmul.bf16.gmra.mxu0 %v670
      %v1277 = vpop.f32.mrf.mxu0
      %v1278 = vadd.f32 %v921, %v1277
      %v1279 = vpop.f32.mrf.mxu0
      %v1280 = vadd.f32 %v923, %v1279
      %1281 = vmatmul.bf16.gmra.mxu0 %v673
      %v1282 = vpop.f32.mrf.mxu0
      %v1283 = vadd.f32 %v926, %v1282
      %v1284 = vpop.f32.mrf.mxu0
      %v1285 = vadd.f32 %v928, %v1284
      %1286 = vmatmul.bf16.gmra.mxu0 %v676
      %v1287 = vpop.f32.mrf.mxu0
      %v1288 = vadd.f32 %v931, %v1287
      %v1289 = vpop.f32.mrf.mxu0
      %v1290 = vadd.f32 %v933, %v1289
      %1291 = vmatmul.bf16.gmra.mxu0 %v679
      %v1292 = vpop.f32.mrf.mxu0
      %v1293 = vadd.f32 %v936, %v1292
      %v1294 = vpop.f32.mrf.mxu0
      %v1295 = vadd.f32 %v938, %v1294
      %1296 = vmatmul.bf16.gmra.mxu0 %v682
      %v1297 = vpop.f32.mrf.mxu0
      %v1298 = vadd.f32 %v941, %v1297
      %v1299 = vpop.f32.mrf.mxu0
      %v1300 = vadd.f32 %v943, %v1299
      %1301 = vmatmul.bf16.gmra.mxu0 %v685
      %v1302 = vpop.f32.mrf.mxu0
      %v1303 = vadd.f32 %v946, %v1302
      %v1304 = vpop.f32.mrf.mxu0
      %v1305 = vadd.f32 %v948, %v1304
      %1306 = vmatmul.bf16.gmra.mxu0 %v688
      %v1307 = vpop.f32.mrf.mxu0
      %v1308 = vadd.f32 %v951, %v1307
      %v1309 = vpop.f32.mrf.mxu0
      %v1310 = vadd.f32 %v953, %v1309
      %1311 = vmatmul.bf16.gmra.mxu0 %v691
      %v1312 = vpop.f32.mrf.mxu0
      %v1313 = vadd.f32 %v956, %v1312
      %v1314 = vpop.f32.mrf.mxu0
      %v1315 = vadd.f32 %v958, %v1314
      %1316 = vmatmul.bf16.gmra.mxu0 %v694
      %v1317 = vpop.f32.mrf.mxu0
      %v1318 = vadd.f32 %v961, %v1317
      %v1319 = vpop.f32.mrf.mxu0
      %v1320 = vadd.f32 %v963, %v1319
      %1321 = vmatmul.bf16.gmra.mxu0 %v697
      %v1322 = vpop.f32.mrf.mxu0
      %v1323 = vadd.f32 %v966, %v1322
      %v1324 = vpop.f32.mrf.mxu0
      %v1325 = vadd.f32 %v968, %v1324
      %1326 = vmatmul.bf16.gmra.mxu0 %v700
      %v1327 = vpop.f32.mrf.mxu0
      %v1328 = vadd.f32 %v971, %v1327
      %v1329 = vpop.f32.mrf.mxu0
      %v1330 = vadd.f32 %v973, %v1329
      %1331 = vmatmul.bf16.gmra.mxu0 %v703
      %v1332 = vpop.f32.mrf.mxu0
      %v1333 = vadd.f32 %v976, %v1332
      %v1334 = vpop.f32.mrf.mxu0
      %v1335 = vadd.f32 %v978, %v1334
      %1336 = vmatmul.bf16.gmra.mxu0 %v706
      %v1337 = vpop.f32.mrf.mxu0
      %v1338 = vadd.f32 %v981, %v1337
      %v1339 = vpop.f32.mrf.mxu0
      %v1340 = vadd.f32 %v983, %v1339
      %1341 = vmatmul.bf16.gmra.mxu0 %v709
      %v1342 = vpop.f32.mrf.mxu0
      %v1343 = vadd.f32 %v986, %v1342
      %v1344 = vpop.f32.mrf.mxu0
      %v1345 = vadd.f32 %v988, %v1344
      %1346 = vmatmul.bf16.gmra.mxu0 %v712
      %v1347 = vpop.f32.mrf.mxu0
      %v1348 = vadd.f32 %v991, %v1347
      %v1349 = vpop.f32.mrf.mxu0
      %v1350 = vadd.f32 %v993, %v1349
      %1351 = vmatmul.bf16.gmra.mxu0 %v715
      %v1352 = vpop.f32.mrf.mxu0
      %v1353 = vadd.f32 %v996, %v1352
      %v1354 = vpop.f32.mrf.mxu0
      %v1355 = vadd.f32 %v998, %v1354
      %1356 = vmatmul.bf16.gmra.mxu0 %v718
      %v1357 = vpop.f32.mrf.mxu0
      %v1358 = vadd.f32 %v1001, %v1357
      %v1359 = vpop.f32.mrf.mxu0
      %v1360 = vadd.f32 %v1003, %v1359
      %1361 = vmatmul.bf16.gmra.mxu0 %v721
      %v1362 = vpop.f32.mrf.mxu0
      %v1363 = vadd.f32 %v1006, %v1362
      %v1364 = vpop.f32.mrf.mxu0
      %v1365 = vadd.f32 %v1008, %v1364
      %1366 = vmatmul.bf16.gmra.mxu0 %v724
      %v1367 = vpop.f32.mrf.mxu0
      %v1368 = vadd.f32 %v1011, %v1367
      %v1369 = vpop.f32.mrf.mxu0
      %v1370 = vadd.f32 %v1013, %v1369
      %1371 = vmatmul.bf16.gmra.mxu0 %v727
      %v1372 = vpop.f32.mrf.mxu0
      %v1373 = vadd.f32 %v1016, %v1372
      %v1374 = vpop.f32.mrf.mxu0
      %v1375 = vadd.f32 %v1018, %v1374
      %1376 = vmatmul.bf16.gmra.mxu0 %v730
      %v1377 = vpop.f32.mrf.mxu0
      %v1378 = vadd.f32 %v1021, %v1377
      %v1379 = vpop.f32.mrf.mxu0
      %v1380 = vadd.f32 %v1023, %v1379
      %1381 = vmatmul.bf16.gmra.mxu0 %v733
      %v1382 = vpop.f32.mrf.mxu0
      %v1383 = vadd.f32 %v1026, %v1382
      %v1384 = vpop.f32.mrf.mxu0
      %v1385 = vadd.f32 %v1028, %v1384
      %1386 = vmatmul.bf16.gmra.mxu0 %v736
      %v1387 = vpop.f32.mrf.mxu0
      %v1388 = vadd.f32 %v1031, %v1387
      %v1389 = vpop.f32.mrf.mxu0
      %v1390 = vadd.f32 %v1033, %v1389
      %1391 = vmatmul.bf16.gmra.mxu0 %v739
      %v1392 = vpop.f32.mrf.mxu0
      %v1393 = vadd.f32 %v1036, %v1392
      %v1394 = vpop.f32.mrf.mxu0
      %v1395 = vadd.f32 %v1038, %v1394
      %1396 = vmatmul.bf16.gmra.mxu0 %v742
      %v1397 = vpop.f32.mrf.mxu0
      %v1398 = vadd.f32 %v1041, %v1397
      %v1399 = vpop.f32.mrf.mxu0
      %v1400 = vadd.f32 %v1043, %v1399
      %1401 = vmatmul.bf16.gmra.mxu0 %v745
      %v1402 = vpop.f32.mrf.mxu0
      %v1403 = vadd.f32 %v1046, %v1402
      %v1404 = vpop.f32.mrf.mxu0
      %v1405 = vadd.f32 %v1048, %v1404
      %1406 = vmatmul.bf16.gmra.mxu0 %v748
      %v1407 = vpop.f32.mrf.mxu0
      %v1408 = vadd.f32 %v1051, %v1407
      %v1409 = vpop.f32.mrf.mxu0
      %v1410 = vadd.f32 %v1053, %v1409
      %1411 = vmatmul.bf16.gmra.mxu0 %v751
      %v1412 = vpop.f32.mrf.mxu0
      %v1413 = vadd.f32 %v1056, %v1412
      %v1414 = vpop.f32.mrf.mxu0
      %v1415 = vadd.f32 %v1058, %v1414
      %1416 = vmatmul.bf16.gmra.mxu0 %v754
      %v1417 = vpop.f32.mrf.mxu0
      %v1418 = vadd.f32 %v1061, %v1417
      %v1419 = vpop.f32.mrf.mxu0
      %v1420 = vadd.f32 %v1063, %v1419
      %1421 = vmatmul.bf16.gmra.mxu0 %v757
      %v1422 = vpop.f32.mrf.mxu0
      %v1423 = vadd.f32 %v1066, %v1422
      %v1424 = vpop.f32.mrf.mxu0
      %v1425 = vadd.f32 %v1068, %v1424
      %1426 = vmatmul.bf16.gmra.mxu0 %v760
      %v1427 = vpop.f32.mrf.mxu0
      %v1428 = vadd.f32 %v1071, %v1427
      %v1429 = vpop.f32.mrf.mxu0
      %v1430 = vadd.f32 %v1073, %v1429
      %1431 = vmatmul.bf16.gmra.mxu0 %v763
      %v1432 = vpop.f32.mrf.mxu0
      %v1433 = vadd.f32 %v1076, %v1432
      %v1434 = vpop.f32.mrf.mxu0
      %v1435 = vadd.f32 %v1078, %v1434
      %1436 = vmatmul.bf16.gmra.mxu0 %v766
      %v1437 = vpop.f32.mrf.mxu0
      %v1438 = vadd.f32 %v1081, %v1437
      %v1439 = vpop.f32.mrf.mxu0
      %v1440 = vadd.f32 %v1083, %v1439
      %1441 = vmatmul.bf16.gmra.mxu0 %v769
      %v1442 = vpop.f32.mrf.mxu0
      %v1443 = vadd.f32 %v1086, %v1442
      %v1444 = vpop.f32.mrf.mxu0
      %v1445 = vadd.f32 %v1088, %v1444
      %1446 = vmatmul.bf16.gmra.mxu0 %v772
      %v1447 = vpop.f32.mrf.mxu0
      %v1448 = vadd.f32 %v1091, %v1447
      %v1449 = vpop.f32.mrf.mxu0
      %v1450 = vadd.f32 %v1093, %v1449
      %1451 = vmatmul.bf16.gmra.mxu0 %v775
      %v1452 = vpop.f32.mrf.mxu0
      %v1453 = vadd.f32 %v1096, %v1452
      %v1454 = vpop.f32.mrf.mxu0
      %v1455 = vadd.f32 %v1098, %v1454
      %1456 = vmatmul.bf16.gmra.mxu0 %v778
      %v1457 = vpop.f32.mrf.mxu0
      %v1458 = vadd.f32 %v1101, %v1457
      %v1459 = vpop.f32.mrf.mxu0
      %v1460 = vadd.f32 %v1103, %v1459
      %1461 = vmatmul.bf16.gmra.mxu0 %v781
      %v1462 = vpop.f32.mrf.mxu0
      %v1463 = vadd.f32 %v1106, %v1462
      %v1464 = vpop.f32.mrf.mxu0
      %v1465 = vadd.f32 %v1108, %v1464
      %1466 = vmatmul.bf16.gmra.mxu0 %v784
      %v1467 = vpop.f32.mrf.mxu0
      %v1468 = vadd.f32 %v1111, %v1467
      %v1469 = vpop.f32.mrf.mxu0
      %v1470 = vadd.f32 %v1113, %v1469
      %1471 = vmatmul.bf16.gmra.mxu0 %v787
      %v1472 = vpop.f32.mrf.mxu0
      %v1473 = vadd.f32 %v1116, %v1472
      %v1474 = vpop.f32.mrf.mxu0
      %v1475 = vadd.f32 %v1118, %v1474
      %1476 = vmatmul.bf16.gmra.mxu0 %v790
      %v1477 = vpop.f32.mrf.mxu0
      %v1478 = vadd.f32 %v1121, %v1477
      %v1479 = vpop.f32.mrf.mxu0
      %v1480 = vadd.f32 %v1123, %v1479
      %1481 = vmatmul.bf16.gmra.mxu0 %v793
      %v1482 = vpop.f32.mrf.mxu0
      %v1483 = vadd.f32 %v1126, %v1482
      %v1484 = vpop.f32.mrf.mxu0
      %v1485 = vadd.f32 %v1128, %v1484
      %1486 = vmatmul.bf16.gmra.mxu0 %v796
      %v1487 = vpop.f32.mrf.mxu0
      %v1488 = vadd.f32 %v1131, %v1487
      %v1489 = vpop.f32.mrf.mxu0
      %v1490 = vadd.f32 %v1133, %v1489
      %1491 = vmatmul.bf16.gmra.mxu0 %v799
      %v1492 = vpop.f32.mrf.mxu0
      %v1493 = vadd.f32 %v1136, %v1492
      %v1494 = vpop.f32.mrf.mxu0
      %v1495 = vadd.f32 %v1138, %v1494
      %1496 = vdwg.mxu0
      %vm1497 = vcmp.ge.f32.partialorder %v1178, 0.0
      %vm1498 = vcmp.ge.f32.partialorder %v1180, 0.0
      %vm1499 = vcmp.ge.f32.partialorder %v1183, 0.0
      %vm1500 = vcmp.ge.f32.partialorder %v1185, 0.0
      %vm1501 = vcmp.ge.f32.partialorder %v1188, 0.0
      %vm1502 = vcmp.ge.f32.partialorder %v1190, 0.0
      %vm1503 = vcmp.ge.f32.partialorder %v1193, 0.0
      %vm1504 = vcmp.ge.f32.partialorder %v1195, 0.0
      %vm1505 = vcmp.ge.f32.partialorder %v1198, 0.0
      %vm1506 = vcmp.ge.f32.partialorder %v1200, 0.0
      %vm1507 = vcmp.ge.f32.partialorder %v1203, 0.0
      %vm1508 = vcmp.ge.f32.partialorder %v1205, 0.0
      %vm1509 = vcmp.ge.f32.partialorder %v1208, 0.0
      %vm1510 = vcmp.ge.f32.partialorder %v1210, 0.0
      %vm1511 = vcmp.ge.f32.partialorder %v1213, 0.0
      %vm1512 = vcmp.ge.f32.partialorder %v1215, 0.0
      %vm1513 = vcmp.ge.f32.partialorder %v1218, 0.0
      %vm1514 = vcmp.ge.f32.partialorder %v1220, 0.0
      %vm1515 = vcmp.ge.f32.partialorder %v1223, 0.0
      %vm1516 = vcmp.ge.f32.partialorder %v1225, 0.0
      %vm1517 = vcmp.ge.f32.partialorder %v1228, 0.0
      %vm1518 = vcmp.ge.f32.partialorder %v1230, 0.0
      %vm1519 = vcmp.ge.f32.partialorder %v1233, 0.0
      %vm1520 = vcmp.ge.f32.partialorder %v1235, 0.0
      %vm1521 = vcmp.ge.f32.partialorder %v1238, 0.0
      %vm1522 = vcmp.ge.f32.partialorder %v1240, 0.0
      %vm1523 = vcmp.ge.f32.partialorder %v1243, 0.0
      %vm1524 = vcmp.ge.f32.partialorder %v1245, 0.0
      %vm1525 = vcmp.ge.f32.partialorder %v1248, 0.0
      %vm1526 = vcmp.ge.f32.partialorder %v1250, 0.0
      %vm1527 = vcmp.ge.f32.partialorder %v1253, 0.0
      %vm1528 = vcmp.ge.f32.partialorder %v1255, 0.0
      %vm1529 = vcmp.ge.f32.partialorder %v1258, 0.0
      %vm1530 = vcmp.ge.f32.partialorder %v1260, 0.0
      %vm1531 = vcmp.ge.f32.partialorder %v1263, 0.0
      %vm1532 = vcmp.ge.f32.partialorder %v1265, 0.0
      %vm1533 = vcmp.ge.f32.partialorder %v1268, 0.0
      %vm1534 = vcmp.ge.f32.partialorder %v1270, 0.0
      %vm1535 = vcmp.ge.f32.partialorder %v1273, 0.0
      %vm1536 = vcmp.ge.f32.partialorder %v1275, 0.0
      %vm1537 = vcmp.ge.f32.partialorder %v1278, 0.0
      %vm1538 = vcmp.ge.f32.partialorder %v1280, 0.0
      %vm1539 = vcmp.ge.f32.partialorder %v1283, 0.0
      %vm1540 = vcmp.ge.f32.partialorder %v1285, 0.0
      %vm1541 = vcmp.ge.f32.partialorder %v1288, 0.0
      %vm1542 = vcmp.ge.f32.partialorder %v1290, 0.0
      %vm1543 = vcmp.ge.f32.partialorder %v1293, 0.0
      %vm1544 = vcmp.ge.f32.partialorder %v1295, 0.0
      %vm1545 = vcmp.ge.f32.partialorder %v1298, 0.0
      %vm1546 = vcmp.ge.f32.partialorder %v1300, 0.0
      %vm1547 = vcmp.ge.f32.partialorder %v1303, 0.0
      %vm1548 = vcmp.ge.f32.partialorder %v1305, 0.0
      %vm1549 = vcmp.ge.f32.partialorder %v1308, 0.0
      %vm1550 = vcmp.ge.f32.partialorder %v1310, 0.0
      %vm1551 = vcmp.ge.f32.partialorder %v1313, 0.0
      %vm1552 = vcmp.ge.f32.partialorder %v1315, 0.0
      %vm1553 = vcmp.ge.f32.partialorder %v1318, 0.0
      %vm1554 = vcmp.ge.f32.partialorder %v1320, 0.0
      %vm1555 = vcmp.ge.f32.partialorder %v1323, 0.0
      %vm1556 = vcmp.ge.f32.partialorder %v1325, 0.0
      %vm1557 = vcmp.ge.f32.partialorder %v1328, 0.0
      %vm1558 = vcmp.ge.f32.partialorder %v1330, 0.0
      %vm1559 = vcmp.ge.f32.partialorder %v1333, 0.0
      %vm1560 = vcmp.ge.f32.partialorder %v1335, 0.0
      %vm1561 = vcmp.ge.f32.partialorder %v1338, 0.0
      %vm1562 = vcmp.ge.f32.partialorder %v1340, 0.0
      %vm1563 = vcmp.ge.f32.partialorder %v1343, 0.0
      %vm1564 = vcmp.ge.f32.partialorder %v1345, 0.0
      %vm1565 = vcmp.ge.f32.partialorder %v1348, 0.0
      %vm1566 = vcmp.ge.f32.partialorder %v1350, 0.0
      %vm1567 = vcmp.ge.f32.partialorder %v1353, 0.0
      %vm1568 = vcmp.ge.f32.partialorder %v1355, 0.0
      %vm1569 = vcmp.ge.f32.partialorder %v1358, 0.0
      %vm1570 = vcmp.ge.f32.partialorder %v1360, 0.0
      %vm1571 = vcmp.ge.f32.partialorder %v1363, 0.0
      %vm1572 = vcmp.ge.f32.partialorder %v1365, 0.0
      %vm1573 = vcmp.ge.f32.partialorder %v1368, 0.0
      %vm1574 = vcmp.ge.f32.partialorder %v1370, 0.0
      %vm1575 = vcmp.ge.f32.partialorder %v1373, 0.0
      %vm1576 = vcmp.ge.f32.partialorder %v1375, 0.0
      %vm1577 = vcmp.ge.f32.partialorder %v1378, 0.0
      %vm1578 = vcmp.ge.f32.partialorder %v1380, 0.0
      %vm1579 = vcmp.ge.f32.partialorder %v1383, 0.0
      %vm1580 = vcmp.ge.f32.partialorder %v1385, 0.0
      %vm1581 = vcmp.ge.f32.partialorder %v1388, 0.0
      %vm1582 = vcmp.ge.f32.partialorder %v1390, 0.0
      %vm1583 = vcmp.ge.f32.partialorder %v1393, 0.0
      %vm1584 = vcmp.ge.f32.partialorder %v1395, 0.0
      %vm1585 = vcmp.ge.f32.partialorder %v1398, 0.0
      %vm1586 = vcmp.ge.f32.partialorder %v1400, 0.0
      %vm1587 = vcmp.ge.f32.partialorder %v1403, 0.0
      %vm1588 = vcmp.ge.f32.partialorder %v1405, 0.0
      %vm1589 = vcmp.ge.f32.partialorder %v1408, 0.0
      %vm1590 = vcmp.ge.f32.partialorder %v1410, 0.0
      %vm1591 = vcmp.ge.f32.partialorder %v1413, 0.0
      %vm1592 = vcmp.ge.f32.partialorder %v1415, 0.0
      %vm1593 = vcmp.ge.f32.partialorder %v1418, 0.0
      %vm1594 = vcmp.ge.f32.partialorder %v1420, 0.0
      %vm1595 = vcmp.ge.f32.partialorder %v1423, 0.0
      %vm1596 = vcmp.ge.f32.partialorder %v1425, 0.0
      %vm1597 = vcmp.ge.f32.partialorder %v1428, 0.0
      %vm1598 = vcmp.ge.f32.partialorder %v1430, 0.0
      %vm1599 = vcmp.ge.f32.partialorder %v1433, 0.0
      %vm1600 = vcmp.ge.f32.partialorder %v1435, 0.0
      %vm1601 = vcmp.ge.f32.partialorder %v1438, 0.0
      %vm1602 = vcmp.ge.f32.partialorder %v1440, 0.0
      %vm1603 = vcmp.ge.f32.partialorder %v1443, 0.0
      %vm1604 = vcmp.ge.f32.partialorder %v1445, 0.0
      %vm1605 = vcmp.ge.f32.partialorder %v1448, 0.0
      %vm1606 = vcmp.ge.f32.partialorder %v1450, 0.0
      %vm1607 = vcmp.ge.f32.partialorder %v1453, 0.0
      %vm1608 = vcmp.ge.f32.partialorder %v1455, 0.0
      %vm1609 = vcmp.ge.f32.partialorder %v1458, 0.0
      %vm1610 = vcmp.ge.f32.partialorder %v1460, 0.0
      %vm1611 = vcmp.ge.f32.partialorder %v1463, 0.0
      %vm1612 = vcmp.ge.f32.partialorder %v1465, 0.0
      %vm1613 = vcmp.ge.f32.partialorder %v1468, 0.0
      %vm1614 = vcmp.ge.f32.partialorder %v1470, 0.0
      %vm1615 = vcmp.ge.f32.partialorder %v1473, 0.0
      %vm1616 = vcmp.ge.f32.partialorder %v1475, 0.0
      %vm1617 = vcmp.ge.f32.partialorder %v1478, 0.0
      %vm1618 = vcmp.ge.f32.partialorder %v1480, 0.0
      %vm1619 = vcmp.ge.f32.partialorder %v1483, 0.0
      %vm1620 = vcmp.ge.f32.partialorder %v1485, 0.0
      %vm1621 = vcmp.ge.f32.partialorder %v1488, 0.0
      %vm1622 = vcmp.ge.f32.partialorder %v1490, 0.0
      %vm1623 = vcmp.ge.f32.partialorder %v1493, 0.0
      %vm1624 = vcmp.ge.f32.partialorder %v1495, 0.0
      %v1625 = vmul.f32 %v1178, 0.2
      %v1626 = vmul.f32 %v1180, 0.2
      %v1627 = vmul.f32 %v1183, 0.2
      %v1628 = vmul.f32 %v1185, 0.2
      %v1629 = vmul.f32 %v1188, 0.2
      %v1630 = vmul.f32 %v1190, 0.2
      %v1631 = vmul.f32 %v1193, 0.2
      %v1632 = vmul.f32 %v1195, 0.2
      %v1633 = vmul.f32 %v1198, 0.2
      %v1634 = vmul.f32 %v1200, 0.2
      %v1635 = vmul.f32 %v1203, 0.2
      %v1636 = vmul.f32 %v1205, 0.2
      %v1637 = vmul.f32 %v1208, 0.2
      %v1638 = vmul.f32 %v1210, 0.2
      %v1639 = vmul.f32 %v1213, 0.2
      %v1640 = vmul.f32 %v1215, 0.2
      %v1641 = vmul.f32 %v1218, 0.2
      %v1642 = vmul.f32 %v1220, 0.2
      %v1643 = vmul.f32 %v1223, 0.2
      %v1644 = vmul.f32 %v1225, 0.2
      %v1645 = vmul.f32 %v1228, 0.2
      %v1646 = vmul.f32 %v1230, 0.2
      %v1647 = vmul.f32 %v1233, 0.2
      %v1648 = vmul.f32 %v1235, 0.2
      %v1649 = vmul.f32 %v1238, 0.2
      %v1650 = vmul.f32 %v1240, 0.2
      %v1651 = vmul.f32 %v1243, 0.2
      %v1652 = vmul.f32 %v1245, 0.2
      %v1653 = vmul.f32 %v1248, 0.2
      %v1654 = vmul.f32 %v1250, 0.2
      %v1655 = vmul.f32 %v1253, 0.2
      %v1656 = vmul.f32 %v1255, 0.2
      %v1657 = vmul.f32 %v1258, 0.2
      %v1658 = vmul.f32 %v1260, 0.2
      %v1659 = vmul.f32 %v1263, 0.2
      %v1660 = vmul.f32 %v1265, 0.2
      %v1661 = vmul.f32 %v1268, 0.2
      %v1662 = vmul.f32 %v1270, 0.2
      %v1663 = vmul.f32 %v1273, 0.2
      %v1664 = vmul.f32 %v1275, 0.2
      %v1665 = vmul.f32 %v1278, 0.2
      %v1666 = vmul.f32 %v1280, 0.2
      %v1667 = vmul.f32 %v1283, 0.2
      %v1668 = vmul.f32 %v1285, 0.2
      %v1669 = vmul.f32 %v1288, 0.2
      %v1670 = vmul.f32 %v1290, 0.2
      %v1671 = vmul.f32 %v1293, 0.2
      %v1672 = vmul.f32 %v1295, 0.2
      %v1673 = vmul.f32 %v1298, 0.2
      %v1674 = vmul.f32 %v1300, 0.2
      %v1675 = vmul.f32 %v1303, 0.2
      %v1676 = vmul.f32 %v1305, 0.2
      %v1677 = vmul.f32 %v1308, 0.2
      %v1678 = vmul.f32 %v1310, 0.2
      %v1679 = vmul.f32 %v1313, 0.2
      %v1680 = vmul.f32 %v1315, 0.2
      %v1681 = vmul.f32 %v1318, 0.2
      %v1682 = vmul.f32 %v1320, 0.2
      %v1683 = vmul.f32 %v1323, 0.2
      %v1684 = vmul.f32 %v1325, 0.2
      %v1685 = vmul.f32 %v1328, 0.2
      %v1686 = vmul.f32 %v1330, 0.2
      %v1687 = vmul.f32 %v1333, 0.2
      %v1688 = vmul.f32 %v1335, 0.2
      %v1689 = vmul.f32 %v1338, 0.2
      %v1690 = vmul.f32 %v1340, 0.2
      %v1691 = vmul.f32 %v1343, 0.2
      %v1692 = vmul.f32 %v1345, 0.2
      %v1693 = vmul.f32 %v1348, 0.2
      %v1694 = vmul.f32 %v1350, 0.2
      %v1695 = vmul.f32 %v1353, 0.2
      %v1696 = vmul.f32 %v1355, 0.2
      %v1697 = vmul.f32 %v1358, 0.2
      %v1698 = vmul.f32 %v1360, 0.2
      %v1699 = vmul.f32 %v1363, 0.2
      %v1700 = vmul.f32 %v1365, 0.2
      %v1701 = vmul.f32 %v1368, 0.2
      %v1702 = vmul.f32 %v1370, 0.2
      %v1703 = vmul.f32 %v1373, 0.2
      %v1704 = vmul.f32 %v1375, 0.2
      %v1705 = vmul.f32 %v1378, 0.2
      %v1706 = vmul.f32 %v1380, 0.2
      %v1707 = vmul.f32 %v1383, 0.2
      %v1708 = vmul.f32 %v1385, 0.2
      %v1709 = vmul.f32 %v1388, 0.2
      %v1710 = vmul.f32 %v1390, 0.2
      %v1711 = vmul.f32 %v1393, 0.2
      %v1712 = vmul.f32 %v1395, 0.2
      %v1713 = vmul.f32 %v1398, 0.2
      %v1714 = vmul.f32 %v1400, 0.2
      %v1715 = vmul.f32 %v1403, 0.2
      %v1716 = vmul.f32 %v1405, 0.2
      %v1717 = vmul.f32 %v1408, 0.2
      %v1718 = vmul.f32 %v1410, 0.2
      %v1719 = vmul.f32 %v1413, 0.2
      %v1720 = vmul.f32 %v1415, 0.2
      %v1721 = vmul.f32 %v1418, 0.2
      %v1722 = vmul.f32 %v1420, 0.2
      %v1723 = vmul.f32 %v1423, 0.2
      %v1724 = vmul.f32 %v1425, 0.2
      %v1725 = vmul.f32 %v1428, 0.2
      %v1726 = vmul.f32 %v1430, 0.2
      %v1727 = vmul.f32 %v1433, 0.2
      %v1728 = vmul.f32 %v1435, 0.2
      %v1729 = vmul.f32 %v1438, 0.2
      %v1730 = vmul.f32 %v1440, 0.2
      %v1731 = vmul.f32 %v1443, 0.2
      %v1732 = vmul.f32 %v1445, 0.2
      %v1733 = vmul.f32 %v1448, 0.2
      %v1734 = vmul.f32 %v1450, 0.2
      %v1735 = vmul.f32 %v1453, 0.2
      %v1736 = vmul.f32 %v1455, 0.2
      %v1737 = vmul.f32 %v1458, 0.2
      %v1738 = vmul.f32 %v1460, 0.2
      %v1739 = vmul.f32 %v1463, 0.2
      %v1740 = vmul.f32 %v1465, 0.2
      %v1741 = vmul.f32 %v1468, 0.2
      %v1742 = vmul.f32 %v1470, 0.2
      %v1743 = vmul.f32 %v1473, 0.2
      %v1744 = vmul.f32 %v1475, 0.2
      %v1745 = vmul.f32 %v1478, 0.2
      %v1746 = vmul.f32 %v1480, 0.2
      %v1747 = vmul.f32 %v1483, 0.2
      %v1748 = vmul.f32 %v1485, 0.2
      %v1749 = vmul.f32 %v1488, 0.2
      %v1750 = vmul.f32 %v1490, 0.2
      %v1751 = vmul.f32 %v1493, 0.2
      %v1752 = vmul.f32 %v1495, 0.2
      %v1753 = vsel %vm1497, %v1178, %v1625
      %v1754 = vsel %vm1498, %v1180, %v1626
      %v1755 = vsel %vm1499, %v1183, %v1627
      %v1756 = vsel %vm1500, %v1185, %v1628
      %v1757 = vsel %vm1501, %v1188, %v1629
      %v1758 = vsel %vm1502, %v1190, %v1630
      %v1759 = vsel %vm1503, %v1193, %v1631
      %v1760 = vsel %vm1504, %v1195, %v1632
      %v1761 = vsel %vm1505, %v1198, %v1633
      %v1762 = vsel %vm1506, %v1200, %v1634
      %v1763 = vsel %vm1507, %v1203, %v1635
      %v1764 = vsel %vm1508, %v1205, %v1636
      %v1765 = vsel %vm1509, %v1208, %v1637
      %v1766 = vsel %vm1510, %v1210, %v1638
      %v1767 = vsel %vm1511, %v1213, %v1639
      %v1768 = vsel %vm1512, %v1215, %v1640
      %v1769 = vsel %vm1513, %v1218, %v1641
      %v1770 = vsel %vm1514, %v1220, %v1642
      %v1771 = vsel %vm1515, %v1223, %v1643
      %v1772 = vsel %vm1516, %v1225, %v1644
      %v1773 = vsel %vm1517, %v1228, %v1645
      %v1774 = vsel %vm1518, %v1230, %v1646
      %v1775 = vsel %vm1519, %v1233, %v1647
      %v1776 = vsel %vm1520, %v1235, %v1648
      %v1777 = vsel %vm1521, %v1238, %v1649
      %v1778 = vsel %vm1522, %v1240, %v1650
      %v1779 = vsel %vm1523, %v1243, %v1651
      %v1780 = vsel %vm1524, %v1245, %v1652
      %v1781 = vsel %vm1525, %v1248, %v1653
      %v1782 = vsel %vm1526, %v1250, %v1654
      %v1783 = vsel %vm1527, %v1253, %v1655
      %v1784 = vsel %vm1528, %v1255, %v1656
      %v1785 = vsel %vm1529, %v1258, %v1657
      %v1786 = vsel %vm1530, %v1260, %v1658
      %v1787 = vsel %vm1531, %v1263, %v1659
      %v1788 = vsel %vm1532, %v1265, %v1660
      %v1789 = vsel %vm1533, %v1268, %v1661
      %v1790 = vsel %vm1534, %v1270, %v1662
      %v1791 = vsel %vm1535, %v1273, %v1663
      %v1792 = vsel %vm1536, %v1275, %v1664
      %v1793 = vsel %vm1537, %v1278, %v1665
      %v1794 = vsel %vm1538, %v1280, %v1666
      %v1795 = vsel %vm1539, %v1283, %v1667
      %v1796 = vsel %vm1540, %v1285, %v1668
      %v1797 = vsel %vm1541, %v1288, %v1669
      %v1798 = vsel %vm1542, %v1290, %v1670
      %v1799 = vsel %vm1543, %v1293, %v1671
      %v1800 = vsel %vm1544, %v1295, %v1672
      %v1801 = vsel %vm1545, %v1298, %v1673
      %v1802 = vsel %vm1546, %v1300, %v1674
      %v1803 = vsel %vm1547, %v1303, %v1675
      %v1804 = vsel %vm1548, %v1305, %v1676
      %v1805 = vsel %vm1549, %v1308, %v1677
      %v1806 = vsel %vm1550, %v1310, %v1678
      %v1807 = vsel %vm1551, %v1313, %v1679
      %v1808 = vsel %vm1552, %v1315, %v1680
      %v1809 = vsel %vm1553, %v1318, %v1681
      %v1810 = vsel %vm1554, %v1320, %v1682
      %v1811 = vsel %vm1555, %v1323, %v1683
      %v1812 = vsel %vm1556, %v1325, %v1684
      %v1813 = vsel %vm1557, %v1328, %v1685
      %v1814 = vsel %vm1558, %v1330, %v1686
      %v1815 = vsel %vm1559, %v1333, %v1687
      %v1816 = vsel %vm1560, %v1335, %v1688
      %v1817 = vsel %vm1561, %v1338, %v1689
      %v1818 = vsel %vm1562, %v1340, %v1690
      %v1819 = vsel %vm1563, %v1343, %v1691
      %v1820 = vsel %vm1564, %v1345, %v1692
      %v1821 = vsel %vm1565, %v1348, %v1693
      %v1822 = vsel %vm1566, %v1350, %v1694
      %v1823 = vsel %vm1567, %v1353, %v1695
      %v1824 = vsel %vm1568, %v1355, %v1696
      %v1825 = vsel %vm1569, %v1358, %v1697
      %v1826 = vsel %vm1570, %v1360, %v1698
      %v1827 = vsel %vm1571, %v1363, %v1699
      %v1828 = vsel %vm1572, %v1365, %v1700
      %v1829 = vsel %vm1573, %v1368, %v1701
      %v1830 = vsel %vm1574, %v1370, %v1702
      %v1831 = vsel %vm1575, %v1373, %v1703
      %v1832 = vsel %vm1576, %v1375, %v1704
      %v1833 = vsel %vm1577, %v1378, %v1705
      %v1834 = vsel %vm1578, %v1380, %v1706
      %v1835 = vsel %vm1579, %v1383, %v1707
      %v1836 = vsel %vm1580, %v1385, %v1708
      %v1837 = vsel %vm1581, %v1388, %v1709
      %v1838 = vsel %vm1582, %v1390, %v1710
      %v1839 = vsel %vm1583, %v1393, %v1711
      %v1840 = vsel %vm1584, %v1395, %v1712
      %v1841 = vsel %vm1585, %v1398, %v1713
      %v1842 = vsel %vm1586, %v1400, %v1714
      %v1843 = vsel %vm1587, %v1403, %v1715
      %v1844 = vsel %vm1588, %v1405, %v1716
      %v1845 = vsel %vm1589, %v1408, %v1717
      %v1846 = vsel %vm1590, %v1410, %v1718
      %v1847 = vsel %vm1591, %v1413, %v1719
      %v1848 = vsel %vm1592, %v1415, %v1720
      %v1849 = vsel %vm1593, %v1418, %v1721
      %v1850 = vsel %vm1594, %v1420, %v1722
      %v1851 = vsel %vm1595, %v1423, %v1723
      %v1852 = vsel %vm1596, %v1425, %v1724
      %v1853 = vsel %vm1597, %v1428, %v1725
      %v1854 = vsel %vm1598, %v1430, %v1726
      %v1855 = vsel %vm1599, %v1433, %v1727
      %v1856 = vsel %vm1600, %v1435, %v1728
      %v1857 = vsel %vm1601, %v1438, %v1729
      %v1858 = vsel %vm1602, %v1440, %v1730
      %v1859 = vsel %vm1603, %v1443, %v1731
      %v1860 = vsel %vm1604, %v1445, %v1732
      %v1861 = vsel %vm1605, %v1448, %v1733
      %v1862 = vsel %vm1606, %v1450, %v1734
      %v1863 = vsel %vm1607, %v1453, %v1735
      %v1864 = vsel %vm1608, %v1455, %v1736
      %v1865 = vsel %vm1609, %v1458, %v1737
      %v1866 = vsel %vm1610, %v1460, %v1738
      %v1867 = vsel %vm1611, %v1463, %v1739
      %v1868 = vsel %vm1612, %v1465, %v1740
      %v1869 = vsel %vm1613, %v1468, %v1741
      %v1870 = vsel %vm1614, %v1470, %v1742
      %v1871 = vsel %vm1615, %v1473, %v1743
      %v1872 = vsel %vm1616, %v1475, %v1744
      %v1873 = vsel %vm1617, %v1478, %v1745
      %v1874 = vsel %vm1618, %v1480, %v1746
      %v1875 = vsel %vm1619, %v1483, %v1747
      %v1876 = vsel %vm1620, %v1485, %v1748
      %v1877 = vsel %vm1621, %v1488, %v1749
      %v1878 = vsel %vm1622, %v1490, %v1750
      %v1879 = vsel %vm1623, %v1493, %v1751
      %v1880 = vsel %vm1624, %v1495, %v1752
      %v1881 = vpack.c.bf16 %v1753, %v1753
      %v1882 = vpack.c.bf16 %v1754, %v1754
      %v1883 = vpack.c.bf16 %v1755, %v1755
      %v1884 = vpack.c.bf16 %v1756, %v1756
      %v1885 = vpack.c.bf16 %v1757, %v1757
      %v1886 = vpack.c.bf16 %v1758, %v1758
      %v1887 = vpack.c.bf16 %v1759, %v1759
      %v1888 = vpack.c.bf16 %v1760, %v1760
      %v1889 = vpack.c.bf16 %v1761, %v1761
      %v1890 = vpack.c.bf16 %v1762, %v1762
      %v1891 = vpack.c.bf16 %v1763, %v1763
      %v1892 = vpack.c.bf16 %v1764, %v1764
      %v1893 = vpack.c.bf16 %v1765, %v1765
      %v1894 = vpack.c.bf16 %v1766, %v1766
      %v1895 = vpack.c.bf16 %v1767, %v1767
      %v1896 = vpack.c.bf16 %v1768, %v1768
      %v1897 = vpack.c.bf16 %v1769, %v1769
      %v1898 = vpack.c.bf16 %v1770, %v1770
      %v1899 = vpack.c.bf16 %v1771, %v1771
      %v1900 = vpack.c.bf16 %v1772, %v1772
      %v1901 = vpack.c.bf16 %v1773, %v1773
      %v1902 = vpack.c.bf16 %v1774, %v1774
      %v1903 = vpack.c.bf16 %v1775, %v1775
      %v1904 = vpack.c.bf16 %v1776, %v1776
      %v1905 = vpack.c.bf16 %v1777, %v1777
      %v1906 = vpack.c.bf16 %v1778, %v1778
      %v1907 = vpack.c.bf16 %v1779, %v1779
      %v1908 = vpack.c.bf16 %v1780, %v1780
      %v1909 = vpack.c.bf16 %v1781, %v1781
      %v1910 = vpack.c.bf16 %v1782, %v1782
      %v1911 = vpack.c.bf16 %v1783, %v1783
      %v1912 = vpack.c.bf16 %v1784, %v1784
      %v1913 = vpack.c.bf16 %v1785, %v1785
      %v1914 = vpack.c.bf16 %v1786, %v1786
      %v1915 = vpack.c.bf16 %v1787, %v1787
      %v1916 = vpack.c.bf16 %v1788, %v1788
      %v1917 = vpack.c.bf16 %v1789, %v1789
      %v1918 = vpack.c.bf16 %v1790, %v1790
      %v1919 = vpack.c.bf16 %v1791, %v1791
      %v1920 = vpack.c.bf16 %v1792, %v1792
      %v1921 = vpack.c.bf16 %v1793, %v1793
      %v1922 = vpack.c.bf16 %v1794, %v1794
      %v1923 = vpack.c.bf16 %v1795, %v1795
      %v1924 = vpack.c.bf16 %v1796, %v1796
      %v1925 = vpack.c.bf16 %v1797, %v1797
      %v1926 = vpack.c.bf16 %v1798, %v1798
      %v1927 = vpack.c.bf16 %v1799, %v1799
      %v1928 = vpack.c.bf16 %v1800, %v1800
      %v1929 = vpack.c.bf16 %v1801, %v1801
      %v1930 = vpack.c.bf16 %v1802, %v1802
      %v1931 = vpack.c.bf16 %v1803, %v1803
      %v1932 = vpack.c.bf16 %v1804, %v1804
      %v1933 = vpack.c.bf16 %v1805, %v1805
      %v1934 = vpack.c.bf16 %v1806, %v1806
      %v1935 = vpack.c.bf16 %v1807, %v1807
      %v1936 = vpack.c.bf16 %v1808, %v1808
      %v1937 = vpack.c.bf16 %v1809, %v1809
      %v1938 = vpack.c.bf16 %v1810, %v1810
      %v1939 = vpack.c.bf16 %v1811, %v1811
      %v1940 = vpack.c.bf16 %v1812, %v1812
      %v1941 = vpack.c.bf16 %v1813, %v1813
      %v1942 = vpack.c.bf16 %v1814, %v1814
      %v1943 = vpack.c.bf16 %v1815, %v1815
      %v1944 = vpack.c.bf16 %v1816, %v1816
      %v1945 = vpack.c.bf16 %v1817, %v1817
      %v1946 = vpack.c.bf16 %v1818, %v1818
      %v1947 = vpack.c.bf16 %v1819, %v1819
      %v1948 = vpack.c.bf16 %v1820, %v1820
      %v1949 = vpack.c.bf16 %v1821, %v1821
      %v1950 = vpack.c.bf16 %v1822, %v1822
      %v1951 = vpack.c.bf16 %v1823, %v1823
      %v1952 = vpack.c.bf16 %v1824, %v1824
      %v1953 = vpack.c.bf16 %v1825, %v1825
      %v1954 = vpack.c.bf16 %v1826, %v1826
      %v1955 = vpack.c.bf16 %v1827, %v1827
      %v1956 = vpack.c.bf16 %v1828, %v1828
      %v1957 = vpack.c.bf16 %v1829, %v1829
      %v1958 = vpack.c.bf16 %v1830, %v1830
      %v1959 = vpack.c.bf16 %v1831, %v1831
      %v1960 = vpack.c.bf16 %v1832, %v1832
      %v1961 = vpack.c.bf16 %v1833, %v1833
      %v1962 = vpack.c.bf16 %v1834, %v1834
      %v1963 = vpack.c.bf16 %v1835, %v1835
      %v1964 = vpack.c.bf16 %v1836, %v1836
      %v1965 = vpack.c.bf16 %v1837, %v1837
      %v1966 = vpack.c.bf16 %v1838, %v1838
      %v1967 = vpack.c.bf16 %v1839, %v1839
      %v1968 = vpack.c.bf16 %v1840, %v1840
      %v1969 = vpack.c.bf16 %v1841, %v1841
      %v1970 = vpack.c.bf16 %v1842, %v1842
      %v1971 = vpack.c.bf16 %v1843, %v1843
      %v1972 = vpack.c.bf16 %v1844, %v1844
      %v1973 = vpack.c.bf16 %v1845, %v1845
      %v1974 = vpack.c.bf16 %v1846, %v1846
      %v1975 = vpack.c.bf16 %v1847, %v1847
      %v1976 = vpack.c.bf16 %v1848, %v1848
      %v1977 = vpack.c.bf16 %v1849, %v1849
      %v1978 = vpack.c.bf16 %v1850, %v1850
      %v1979 = vpack.c.bf16 %v1851, %v1851
      %v1980 = vpack.c.bf16 %v1852, %v1852
      %v1981 = vpack.c.bf16 %v1853, %v1853
      %v1982 = vpack.c.bf16 %v1854, %v1854
      %v1983 = vpack.c.bf16 %v1855, %v1855
      %v1984 = vpack.c.bf16 %v1856, %v1856
      %v1985 = vpack.c.bf16 %v1857, %v1857
      %v1986 = vpack.c.bf16 %v1858, %v1858
      %v1987 = vpack.c.bf16 %v1859, %v1859
      %v1988 = vpack.c.bf16 %v1860, %v1860
      %v1989 = vpack.c.bf16 %v1861, %v1861
      %v1990 = vpack.c.bf16 %v1862, %v1862
      %v1991 = vpack.c.bf16 %v1863, %v1863
      %v1992 = vpack.c.bf16 %v1864, %v1864
      %v1993 = vpack.c.bf16 %v1865, %v1865
      %v1994 = vpack.c.bf16 %v1866, %v1866
      %v1995 = vpack.c.bf16 %v1867, %v1867
      %v1996 = vpack.c.bf16 %v1868, %v1868
      %v1997 = vpack.c.bf16 %v1869, %v1869
      %v1998 = vpack.c.bf16 %v1870, %v1870
      %v1999 = vpack.c.bf16 %v1871, %v1871
      %v2000 = vpack.c.bf16 %v1872, %v1872
      %v2001 = vpack.c.bf16 %v1873, %v1873
      %v2002 = vpack.c.bf16 %v1874, %v1874
      %v2003 = vpack.c.bf16 %v1875, %v1875
      %v2004 = vpack.c.bf16 %v1876, %v1876
      %v2005 = vpack.c.bf16 %v1877, %v1877
      %v2006 = vpack.c.bf16 %v1878, %v1878
      %v2007 = vpack.c.bf16 %v1879, %v1879
      %v2008 = vpack.c.bf16 %v1880, %v1880
      %vm2009 = vcmask 60416
      %2010 = vst.msk [vmem:[%s143] sm:$0xf] %vm2009, %v1881
      %2011 = vst.msk [vmem:[%s143 + $0x4] sm:$0xf] %vm2009, %v1882
      %2012 = vst.msk [vmem:[%s143 + $0x8] sm:$0xf] %vm2009, %v1883
      %2013 = vst.msk [vmem:[%s143 + $0xc] sm:$0xf] %vm2009, %v1884
      %2014 = vst.msk [vmem:[%s143 + $0x10] sm:$0xf] %vm2009, %v1885
      %2015 = vst.msk [vmem:[%s143 + $0x14] sm:$0xf] %vm2009, %v1886
      %2016 = vst.msk [vmem:[%s143 + $0x18] sm:$0xf] %vm2009, %v1887
      %2017 = vst.msk [vmem:[%s143 + $0x1c] sm:$0xf] %vm2009, %v1888
      %2018 = vst.msk [vmem:[%s143 + $0x20] sm:$0xf] %vm2009, %v1889
      %2019 = vst.msk [vmem:[%s143 + $0x24] sm:$0xf] %vm2009, %v1890
      %2020 = vst.msk [vmem:[%s143 + $0x28] sm:$0xf] %vm2009, %v1891
      %2021 = vst.msk [vmem:[%s143 + $0x2c] sm:$0xf] %vm2009, %v1892
      %2022 = vst.msk [vmem:[%s143 + $0x30] sm:$0xf] %vm2009, %v1893
      %2023 = vst.msk [vmem:[%s143 + $0x34] sm:$0xf] %vm2009, %v1894
      %2024 = vst.msk [vmem:[%s143 + $0x38] sm:$0xf] %vm2009, %v1895
      %2025 = vst.msk [vmem:[%s143 + $0x3c] sm:$0xf] %vm2009, %v1896
      %2026 = vst.msk [vmem:[%s143 + $0x40] sm:$0xf] %vm2009, %v1897
      %2027 = vst.msk [vmem:[%s143 + $0x44] sm:$0xf] %vm2009, %v1898
      %2028 = vst.msk [vmem:[%s143 + $0x48] sm:$0xf] %vm2009, %v1899
      %2029 = vst.msk [vmem:[%s143 + $0x4c] sm:$0xf] %vm2009, %v1900
      %2030 = vst.msk [vmem:[%s143 + $0x50] sm:$0xf] %vm2009, %v1901
      %2031 = vst.msk [vmem:[%s143 + $0x54] sm:$0xf] %vm2009, %v1902
      %2032 = vst.msk [vmem:[%s143 + $0x58] sm:$0xf] %vm2009, %v1903
      %2033 = vst.msk [vmem:[%s143 + $0x5c] sm:$0xf] %vm2009, %v1904
      %2034 = vst.msk [vmem:[%s143 + $0x60] sm:$0xf] %vm2009, %v1905
      %2035 = vst.msk [vmem:[%s143 + $0x64] sm:$0xf] %vm2009, %v1906
      %2036 = vst.msk [vmem:[%s143 + $0x68] sm:$0xf] %vm2009, %v1907
      %2037 = vst.msk [vmem:[%s143 + $0x6c] sm:$0xf] %vm2009, %v1908
      %2038 = vst.msk [vmem:[%s143 + $0x70] sm:$0xf] %vm2009, %v1909
      %2039 = vst.msk [vmem:[%s143 + $0x74] sm:$0xf] %vm2009, %v1910
      %2040 = vst.msk [vmem:[%s143 + $0x78] sm:$0xf] %vm2009, %v1911
      %2041 = vst.msk [vmem:[%s143 + $0x7c] sm:$0xf] %vm2009, %v1912
      %2042 = vst.msk [vmem:[%s143 + $0x80] sm:$0xf] %vm2009, %v1913
      %2043 = vst.msk [vmem:[%s143 + $0x84] sm:$0xf] %vm2009, %v1914
      %2044 = vst.msk [vmem:[%s143 + $0x88] sm:$0xf] %vm2009, %v1915
      %2045 = vst.msk [vmem:[%s143 + $0x8c] sm:$0xf] %vm2009, %v1916
      %2046 = vst.msk [vmem:[%s143 + $0x90] sm:$0xf] %vm2009, %v1917
      %2047 = vst.msk [vmem:[%s143 + $0x94] sm:$0xf] %vm2009, %v1918
      %2048 = vst.msk [vmem:[%s143 + $0x98] sm:$0xf] %vm2009, %v1919
      %2049 = vst.msk [vmem:[%s143 + $0x9c] sm:$0xf] %vm2009, %v1920
      %2050 = vst.msk [vmem:[%s143 + $0xa0] sm:$0xf] %vm2009, %v1921
      %2051 = vst.msk [vmem:[%s143 + $0xa4] sm:$0xf] %vm2009, %v1922
      %2052 = vst.msk [vmem:[%s143 + $0xa8] sm:$0xf] %vm2009, %v1923
      %2053 = vst.msk [vmem:[%s143 + $0xac] sm:$0xf] %vm2009, %v1924
      %2054 = vst.msk [vmem:[%s143 + $0xb0] sm:$0xf] %vm2009, %v1925
      %2055 = vst.msk [vmem:[%s143 + $0xb4] sm:$0xf] %vm2009, %v1926
      %2056 = vst.msk [vmem:[%s143 + $0xb8] sm:$0xf] %vm2009, %v1927
      %2057 = vst.msk [vmem:[%s143 + $0xbc] sm:$0xf] %vm2009, %v1928
      %2058 = vst.msk [vmem:[%s143 + $0xc0] sm:$0xf] %vm2009, %v1929
      %2059 = vst.msk [vmem:[%s143 + $0xc4] sm:$0xf] %vm2009, %v1930
      %2060 = vst.msk [vmem:[%s143 + $0xc8] sm:$0xf] %vm2009, %v1931
      %2061 = vst.msk [vmem:[%s143 + $0xcc] sm:$0xf] %vm2009, %v1932
      %2062 = vst.msk [vmem:[%s143 + $0xd0] sm:$0xf] %vm2009, %v1933
      %2063 = vst.msk [vmem:[%s143 + $0xd4] sm:$0xf] %vm2009, %v1934
      %2064 = vst.msk [vmem:[%s143 + $0xd8] sm:$0xf] %vm2009, %v1935
      %2065 = vst.msk [vmem:[%s143 + $0xdc] sm:$0xf] %vm2009, %v1936
      %2066 = vst.msk [vmem:[%s143 + $0xe0] sm:$0xf] %vm2009, %v1937
      %2067 = vst.msk [vmem:[%s143 + $0xe4] sm:$0xf] %vm2009, %v1938
      %2068 = vst.msk [vmem:[%s143 + $0xe8] sm:$0xf] %vm2009, %v1939
      %2069 = vst.msk [vmem:[%s143 + $0xec] sm:$0xf] %vm2009, %v1940
      %2070 = vst.msk [vmem:[%s143 + $0xf0] sm:$0xf] %vm2009, %v1941
      %2071 = vst.msk [vmem:[%s143 + $0xf4] sm:$0xf] %vm2009, %v1942
      %2072 = vst.msk [vmem:[%s143 + $0xf8] sm:$0xf] %vm2009, %v1943
      %2073 = vst.msk [vmem:[%s143 + $0xfc] sm:$0xf] %vm2009, %v1944
      %2074 = vst.msk [vmem:[%s143 + $0x100] sm:$0xf] %vm2009, %v1945
      %2075 = vst.msk [vmem:[%s143 + $0x104] sm:$0xf] %vm2009, %v1946
      %2076 = vst.msk [vmem:[%s143 + $0x108] sm:$0xf] %vm2009, %v1947
      %2077 = vst.msk [vmem:[%s143 + $0x10c] sm:$0xf] %vm2009, %v1948
      %2078 = vst.msk [vmem:[%s143 + $0x110] sm:$0xf] %vm2009, %v1949
      %2079 = vst.msk [vmem:[%s143 + $0x114] sm:$0xf] %vm2009, %v1950
      %2080 = vst.msk [vmem:[%s143 + $0x118] sm:$0xf] %vm2009, %v1951
      %2081 = vst.msk [vmem:[%s143 + $0x11c] sm:$0xf] %vm2009, %v1952
      %2082 = vst.msk [vmem:[%s143 + $0x120] sm:$0xf] %vm2009, %v1953
      %2083 = vst.msk [vmem:[%s143 + $0x124] sm:$0xf] %vm2009, %v1954
      %2084 = vst.msk [vmem:[%s143 + $0x128] sm:$0xf] %vm2009, %v1955
      %2085 = vst.msk [vmem:[%s143 + $0x12c] sm:$0xf] %vm2009, %v1956
      %2086 = vst.msk [vmem:[%s143 + $0x130] sm:$0xf] %vm2009, %v1957
      %2087 = vst.msk [vmem:[%s143 + $0x134] sm:$0xf] %vm2009, %v1958
      %2088 = vst.msk [vmem:[%s143 + $0x138] sm:$0xf] %vm2009, %v1959
      %2089 = vst.msk [vmem:[%s143 + $0x13c] sm:$0xf] %vm2009, %v1960
      %2090 = vst.msk [vmem:[%s143 + $0x140] sm:$0xf] %vm2009, %v1961
      %2091 = vst.msk [vmem:[%s143 + $0x144] sm:$0xf] %vm2009, %v1962
      %2092 = vst.msk [vmem:[%s143 + $0x148] sm:$0xf] %vm2009, %v1963
      %2093 = vst.msk [vmem:[%s143 + $0x14c] sm:$0xf] %vm2009, %v1964
      %2094 = vst.msk [vmem:[%s143 + $0x150] sm:$0xf] %vm2009, %v1965
      %2095 = vst.msk [vmem:[%s143 + $0x154] sm:$0xf] %vm2009, %v1966
      %2096 = vst.msk [vmem:[%s143 + $0x158] sm:$0xf] %vm2009, %v1967
      %2097 = vst.msk [vmem:[%s143 + $0x15c] sm:$0xf] %vm2009, %v1968
      %2098 = vst.msk [vmem:[%s143 + $0x160] sm:$0xf] %vm2009, %v1969
      %2099 = vst.msk [vmem:[%s143 + $0x164] sm:$0xf] %vm2009, %v1970
      %2100 = vst.msk [vmem:[%s143 + $0x168] sm:$0xf] %vm2009, %v1971
      %2101 = vst.msk [vmem:[%s143 + $0x16c] sm:$0xf] %vm2009, %v1972
      %2102 = vst.msk [vmem:[%s143 + $0x170] sm:$0xf] %vm2009, %v1973
      %2103 = vst.msk [vmem:[%s143 + $0x174] sm:$0xf] %vm2009, %v1974
      %2104 = vst.msk [vmem:[%s143 + $0x178] sm:$0xf] %vm2009, %v1975
      %2105 = vst.msk [vmem:[%s143 + $0x17c] sm:$0xf] %vm2009, %v1976
      %2106 = vst.msk [vmem:[%s143 + $0x180] sm:$0xf] %vm2009, %v1977
      %2107 = vst.msk [vmem:[%s143 + $0x184] sm:$0xf] %vm2009, %v1978
      %2108 = vst.msk [vmem:[%s143 + $0x188] sm:$0xf] %vm2009, %v1979
      %2109 = vst.msk [vmem:[%s143 + $0x18c] sm:$0xf] %vm2009, %v1980
      %2110 = vst.msk [vmem:[%s143 + $0x190] sm:$0xf] %vm2009, %v1981
      %2111 = vst.msk [vmem:[%s143 + $0x194] sm:$0xf] %vm2009, %v1982
      %2112 = vst.msk [vmem:[%s143 + $0x198] sm:$0xf] %vm2009, %v1983
      %2113 = vst.msk [vmem:[%s143 + $0x19c] sm:$0xf] %vm2009, %v1984
      %2114 = vst.msk [vmem:[%s143 + $0x1a0] sm:$0xf] %vm2009, %v1985
      %2115 = vst.msk [vmem:[%s143 + $0x1a4] sm:$0xf] %vm2009, %v1986
      %2116 = vst.msk [vmem:[%s143 + $0x1a8] sm:$0xf] %vm2009, %v1987
      %2117 = vst.msk [vmem:[%s143 + $0x1ac] sm:$0xf] %vm2009, %v1988
      %2118 = vst.msk [vmem:[%s143 + $0x1b0] sm:$0xf] %vm2009, %v1989
      %2119 = vst.msk [vmem:[%s143 + $0x1b4] sm:$0xf] %vm2009, %v1990
      %2120 = vst.msk [vmem:[%s143 + $0x1b8] sm:$0xf] %vm2009, %v1991
      %2121 = vst.msk [vmem:[%s143 + $0x1bc] sm:$0xf] %vm2009, %v1992
      %2122 = vst.msk [vmem:[%s143 + $0x1c0] sm:$0xf] %vm2009, %v1993
      %2123 = vst.msk [vmem:[%s143 + $0x1c4] sm:$0xf] %vm2009, %v1994
      %2124 = vst.msk [vmem:[%s143 + $0x1c8] sm:$0xf] %vm2009, %v1995
      %2125 = vst.msk [vmem:[%s143 + $0x1cc] sm:$0xf] %vm2009, %v1996
      %2126 = vst.msk [vmem:[%s143 + $0x1d0] sm:$0xf] %vm2009, %v1997
      %2127 = vst.msk [vmem:[%s143 + $0x1d4] sm:$0xf] %vm2009, %v1998
      %2128 = vst.msk [vmem:[%s143 + $0x1d8] sm:$0xf] %vm2009, %v1999
      %2129 = vst.msk [vmem:[%s143 + $0x1dc] sm:$0xf] %vm2009, %v2000
      %2130 = vst.msk [vmem:[%s143 + $0x1e0] sm:$0xf] %vm2009, %v2001
      %2131 = vst.msk [vmem:[%s143 + $0x1e4] sm:$0xf] %vm2009, %v2002
      %2132 = vst.msk [vmem:[%s143 + $0x1e8] sm:$0xf] %vm2009, %v2003
      %2133 = vst.msk [vmem:[%s143 + $0x1ec] sm:$0xf] %vm2009, %v2004
      %2134 = vst.msk [vmem:[%s143 + $0x1f0] sm:$0xf] %vm2009, %v2005
      %2135 = vst.msk [vmem:[%s143 + $0x1f4] sm:$0xf] %vm2009, %v2006
      %2136 = vst.msk [vmem:[%s143 + $0x1f8] sm:$0xf] %vm2009, %v2007
      %2137 = vst.msk [vmem:[%s143 + $0x1fc] sm:$0xf] %vm2009, %v2008
      %s2138 = smul.u32 128, %s13
      %p2139 = scmp.lt.s32.totalorder %s2138, 255
      %s2140 = scalar_select %p2139, %s2138, 255
      %s2141 = smul.addr %s2140, 4
      %s2142 = scalar_lea.vmem %s2, %s2141
      // Predicated region
      $region29: #{netD2_forward.5} parent=27 // pred_check
        %p2143 = pneg %p78
      $region30: #{netD2_forward.5} parent=27 // pred_check_branch
        %2145 = sbr.rel (%p2143) target = $region32
      $region31: #{netD2_forward.5} parent=27 // pred_region
        %s2146 = smul.u32 128, %s13
      $region32: #{netD2_forward.5} parent=27 // pred_fallthru
        _
    $region28: #{netD2_forward.5} parent=5 // pred_fallthru
      _
    %p2147 = scmp.le.s32.totalorder 2, %s8
    // Predicated region
    $region33: #{netD2_forward.5} parent=5 // pred_check
      %p2148 = pneg %p2147
    $region34: #{netD2_forward.5} parent=5 // pred_check_branch
      %2150 = sbr.rel (%p2148) target = $region36
    $region35: #{netD2_forward.5} parent=5 // pred_region
      %s2151 = ssub.s32 %s8, 2
      // Predicated region
      $region37: #{netD2_forward.5} parent=35 // pred_check
        %p2152 = pneg %p84
      $region38: #{netD2_forward.5} parent=35 // pred_check_branch
        %2154 = sbr.rel (%p2152) target = $region40
      $region39: #{netD2_forward.5} parent=35 // pred_region
        %s2155 = smul.u32 128, %s14
        %p2156 = scmp.lt.s32.totalorder %s2155, 255
        %s2157 = scalar_select %p2156, %s2155, 255
        %s2158 = smul.addr %s2157, 4
        %s2159 = scalar_lea.vmem %s2, %s2158
      $region40: #{netD2_forward.5} parent=35 // pred_fallthru
        _
    $region36: #{netD2_forward.5} parent=5 // pred_fallthru
      _
  $region6: #{netD2_forward.5} parent=0 // loop_footer
    %s12 = sadd.s32 1, %s8
  $region7: #{netD2_forward.5} parent=0 // loop_footer_branch
    %7 = sbr.rel target = $region3
  $region8: #{netD2_forward.5} parent=0 // loop_exit
    _

// kernel: netD2_forward.6
$region0: #{netD2_forward.6}
  #allocation0 [shape = 'u32[]', space=smem, size = 0x4, offset = 0x4, fixed_abs, tag = 'smem constant byte address 0x4 - core index']
  #allocation1 [shape = 'u32[72,128]{1,0:T(1,128)}', space=vmem, size = 0x9000, scoped, tag = 'internal scratch']
  %s0 = inlined_call_operand.vmem [shape: bf16[2,272,64], index: 0, kind: input, shape index: {}]
  %s1 = inlined_call_operand.vmem [shape: bf16[2,64,16], index: 1, kind: input, shape index: {}]
  %s2 = inlined_call_operand.vmem [shape: bf16[512,16], index: 2, kind: output, shape index: {0}]
  %s3 = inlined_call_operand.vmem [shape: f32[1,1,16], index: 3, kind: output, shape index: {1}]
  %s4 = inlined_call_operand.vmem [shape: f32[1,1,16], index: 4, kind: output, shape index: {2}]
  %5 = xla_tuple %s2, %s3, %s4
  %s6 = sld [smem:[#allocation0]]
  $region34: #{netD2_forward.6} parent=0
    _
  %s8 = ssub.s32 1, %s6
  %s9 = scalar_select 0, %s8, %s6
  // Predicated region
  $region2: #{netD2_forward.6} parent=0 // pred_check
    _
  $region3: #{netD2_forward.6} parent=0 // pred_check_branch
    %11 = sbr.rel (0) target = $region5
  $region4: #{netD2_forward.6} parent=0 // pred_region
    _
  $region5: #{netD2_forward.6} parent=0 // pred_fallthru
    _
  // Predicated region
  $region6: #{netD2_forward.6} parent=0 // pred_check
    _
  $region7: #{netD2_forward.6} parent=0 // pred_check_branch
    %13 = sbr.rel (0) target = $region9
  $region8: #{netD2_forward.6} parent=0 // pred_region
    _
  $region9: #{netD2_forward.6} parent=0 // pred_fallthru
    _
  %v15 = vld [vmem:[%s0] sm:$0xf]
  %v16 = vld [vmem:[%s0 + $0x4] sm:$0xf]
  %v17 = vld [vmem:[%s0 + $0x8] sm:$0xf]
  %v18 = vld [vmem:[%s0 + $0xc] sm:$0xf]
  %v19 = vld [vmem:[%s0 + $0x10] sm:$0xf]
  %v20 = vld [vmem:[%s0 + $0x14] sm:$0xf]
  %v21 = vld [vmem:[%s0 + $0x18] sm:$0xf]
  %v22 = vld [vmem:[%s0 + $0x1c] sm:$0xf]
  %v23 = vld [vmem:[%s0 + $0x20] sm:$0xf]
  %v24 = vld [vmem:[%s0 + $0x24] sm:$0xf]
  %v25 = vld [vmem:[%s0 + $0x28] sm:$0xf]
  %v26 = vld [vmem:[%s0 + $0x2c] sm:$0xf]
  %v27 = vld [vmem:[%s0 + $0x30] sm:$0xf]
  %v28 = vld [vmem:[%s0 + $0x34] sm:$0xf]
  %v29 = vld [vmem:[%s0 + $0x38] sm:$0xf]
  %v30 = vld [vmem:[%s0 + $0x3c] sm:$0xf]
  %v31 = vld [vmem:[%s0 + $0x40] sm:$0xf]
  %v32 = vld [vmem:[%s0 + $0x44] sm:$0xf]
  %v33 = vld [vmem:[%s0 + $0x48] sm:$0xf]
  %v34 = vld [vmem:[%s0 + $0x4c] sm:$0xf]
  %v35 = vld [vmem:[%s0 + $0x50] sm:$0xf]
  %v36 = vld [vmem:[%s0 + $0x54] sm:$0xf]
  %v37 = vld [vmem:[%s0 + $0x58] sm:$0xf]
  %v38 = vld [vmem:[%s0 + $0x5c] sm:$0xf]
  %v39 = vld [vmem:[%s0 + $0x60] sm:$0xf]
  %v40 = vld [vmem:[%s0 + $0x64] sm:$0xf]
  %v41 = vld [vmem:[%s0 + $0x68] sm:$0xf]
  %v42 = vld [vmem:[%s0 + $0x6c] sm:$0xf]
  %v43 = vld [vmem:[%s0 + $0x70] sm:$0xf]
  %v44 = vld [vmem:[%s0 + $0x74] sm:$0xf]
  %v45 = vld [vmem:[%s0 + $0x78] sm:$0xf]
  %v46 = vld [vmem:[%s0 + $0x7c] sm:$0xf]
  %v47 = vld [vmem:[%s0 + $0x88] sm:$0xf]
  %v48 = vld [vmem:[%s0 + $0x8c] sm:$0xf]
  %v49 = vld [vmem:[%s0 + $0x90] sm:$0xf]
  %v50 = vld [vmem:[%s0 + $0x94] sm:$0xf]
  %v51 = vld [vmem:[%s0 + $0x98] sm:$0xf]
  %v52 = vld [vmem:[%s0 + $0x9c] sm:$0xf]
  %v53 = vld [vmem:[%s0 + $0xa0] sm:$0xf]
  %v54 = vld [vmem:[%s0 + $0xa4] sm:$0xf]
  %v55 = vld [vmem:[%s0 + $0xa8] sm:$0xf]
  %v56 = vld [vmem:[%s0 + $0xac] sm:$0xf]
  %v57 = vld [vmem:[%s0 + $0xb0] sm:$0xf]
  %v58 = vld [vmem:[%s0 + $0xb4] sm:$0xf]
  %v59 = vld [vmem:[%s0 + $0xb8] sm:$0xf]
  %v60 = vld [vmem:[%s0 + $0xbc] sm:$0xf]
  %v61 = vld [vmem:[%s0 + $0xc0] sm:$0xf]
  %v62 = vld [vmem:[%s0 + $0xc4] sm:$0xf]
  %v63 = vld [vmem:[%s0 + $0xc8] sm:$0xf]
  %v64 = vld [vmem:[%s0 + $0xcc] sm:$0xf]
  %v65 = vld [vmem:[%s0 + $0xd0] sm:$0xf]
  %v66 = vld [vmem:[%s0 + $0xd4] sm:$0xf]
  %v67 = vld [vmem:[%s0 + $0xd8] sm:$0xf]
  %v68 = vld [vmem:[%s0 + $0xdc] sm:$0xf]
  %v69 = vld [vmem:[%s0 + $0xe0] sm:$0xf]
  %v70 = vld [vmem:[%s0 + $0xe4] sm:$0xf]
  %v71 = vld [vmem:[%s0 + $0xe8] sm:$0xf]
  %v72 = vld [vmem:[%s0 + $0xec] sm:$0xf]
  %v73 = vld [vmem:[%s0 + $0xf0] sm:$0xf]
  %v74 = vld [vmem:[%s0 + $0xf4] sm:$0xf]
  %v75 = vld [vmem:[%s0 + $0xf8] sm:$0xf]
  %v76 = vld [vmem:[%s0 + $0xfc] sm:$0xf]
  %v77 = vld [vmem:[%s0 + $0x100] sm:$0xf]
  %v78 = vld [vmem:[%s0 + $0x104] sm:$0xf]
  %v79 = vld [vmem:[%s0 + $0x80] sm:$0xf]
  %v80 = vld [vmem:[%s0 + $0x84] sm:$0xf]
  %v81 = vld [vmem:[%s0 + $0x108] sm:$0xf]
  %v82 = vld [vmem:[%s0 + $0x10c] sm:$0xf]
  %v83 = vld [vmem:[%s1] sm:$0xf]
  %v84 = vld [vmem:[%s1 + $0x4] sm:$0xf]
  %v85 = vld [vmem:[%s1 + $0x8] sm:$0xf]
  %v86 = vld [vmem:[%s1 + $0xc] sm:$0xf]
  %v87 = vld [vmem:[%s1 + $0x10] sm:$0xf]
  %v88 = vld [vmem:[%s1 + $0x14] sm:$0xf]
  %v89 = vld [vmem:[%s1 + $0x18] sm:$0xf]
  %v90 = vld [vmem:[%s1 + $0x1c] sm:$0xf]
  %s91 = scalar_lea.vmem %s1, 32
  %v92 = vld [vmem:[%s91] sm:$0xf]
  %v93 = vld [vmem:[%s91 + $0x4] sm:$0xf]
  %v94 = vld [vmem:[%s91 + $0x8] sm:$0xf]
  %v95 = vld [vmem:[%s91 + $0xc] sm:$0xf]
  %v96 = vld [vmem:[%s91 + $0x10] sm:$0xf]
  %v97 = vld [vmem:[%s91 + $0x14] sm:$0xf]
  %v98 = vld [vmem:[%s91 + $0x18] sm:$0xf]
  %v99 = vld [vmem:[%s91 + $0x1c] sm:$0xf]
  %v164 = vunpack.c.l.b16 %v17
  %v165 = vunpack.c.l.b16 %v18
  %v166 = vunpack.c.l.b16 %v19
  %v167 = vunpack.c.l.b16 %v20
  %v168 = vunpack.c.l.b16 %v21
  %v169 = vunpack.c.l.b16 %v22
  %v170 = vunpack.c.l.b16 %v23
  %v171 = vunpack.c.l.b16 %v24
  %v172 = vunpack.c.l.b16 %v25
  %v173 = vunpack.c.l.b16 %v26
  %v174 = vunpack.c.l.b16 %v27
  %v175 = vunpack.c.l.b16 %v28
  %v176 = vunpack.c.l.b16 %v29
  %v177 = vunpack.c.l.b16 %v30
  %v178 = vunpack.c.l.b16 %v31
  %v179 = vunpack.c.l.b16 %v32
  %v180 = vunpack.c.l.b16 %v33
  %v181 = vunpack.c.l.b16 %v34
  %v182 = vunpack.c.l.b16 %v35
  %v183 = vunpack.c.l.b16 %v36
  %v184 = vunpack.c.l.b16 %v37
  %v185 = vunpack.c.l.b16 %v38
  %v186 = vunpack.c.l.b16 %v39
  %v187 = vunpack.c.l.b16 %v40
  %v188 = vunpack.c.l.b16 %v41
  %v189 = vunpack.c.l.b16 %v42
  %v190 = vunpack.c.l.b16 %v43
  %v191 = vunpack.c.l.b16 %v44
  %v192 = vunpack.c.l.b16 %v45
  %v193 = vunpack.c.l.b16 %v46
  %v194 = vunpack.c.l.b16 %v79
  %v195 = vunpack.c.l.b16 %v80
  %v196 = vunpack.c.l.b16 %v49
  %v197 = vunpack.c.l.b16 %v50
  %v198 = vunpack.c.l.b16 %v51
  %v199 = vunpack.c.l.b16 %v52
  %v200 = vunpack.c.l.b16 %v53
  %v201 = vunpack.c.l.b16 %v54
  %v202 = vunpack.c.l.b16 %v55
  %v203 = vunpack.c.l.b16 %v56
  %v204 = vunpack.c.l.b16 %v57
  %v205 = vunpack.c.l.b16 %v58
  %v206 = vunpack.c.l.b16 %v59
  %v207 = vunpack.c.l.b16 %v60
  %v208 = vunpack.c.l.b16 %v61
  %v209 = vunpack.c.l.b16 %v62
  %v210 = vunpack.c.l.b16 %v63
  %v211 = vunpack.c.l.b16 %v64
  %v212 = vunpack.c.l.b16 %v65
  %v213 = vunpack.c.l.b16 %v66
  %v214 = vunpack.c.l.b16 %v67
  %v215 = vunpack.c.l.b16 %v68
  %v216 = vunpack.c.l.b16 %v69
  %v217 = vunpack.c.l.b16 %v70
  %v218 = vunpack.c.l.b16 %v71
  %v219 = vunpack.c.l.b16 %v72
  %v220 = vunpack.c.l.b16 %v73
  %v221 = vunpack.c.l.b16 %v74
  %v222 = vunpack.c.l.b16 %v75
  %v223 = vunpack.c.l.b16 %v76
  %v224 = vunpack.c.l.b16 %v77
  %v225 = vunpack.c.l.b16 %v78
  %v226 = vunpack.c.l.b16 %v81
  %v227 = vunpack.c.l.b16 %v82
  %v228 = vpack.c.b16 %v165, %v164
  %v229 = vpack.c.b16 %v167, %v166
  %v230 = vpack.c.b16 %v169, %v168
  %v231 = vpack.c.b16 %v171, %v170
  %v232 = vpack.c.b16 %v173, %v172
  %v233 = vpack.c.b16 %v175, %v174
  %v234 = vpack.c.b16 %v177, %v176
  %v235 = vpack.c.b16 %v179, %v178
  %v236 = vpack.c.b16 %v181, %v180
  %v237 = vpack.c.b16 %v183, %v182
  %v238 = vpack.c.b16 %v185, %v184
  %v239 = vpack.c.b16 %v187, %v186
  %v240 = vpack.c.b16 %v189, %v188
  %v241 = vpack.c.b16 %v191, %v190
  %v242 = vpack.c.b16 %v193, %v192
  %v243 = vpack.c.b16 %v195, %v194
  %v244 = vpack.c.b16 %v197, %v196
  %v245 = vpack.c.b16 %v199, %v198
  %v246 = vpack.c.b16 %v201, %v200
  %v247 = vpack.c.b16 %v203, %v202
  %v248 = vpack.c.b16 %v205, %v204
  %v249 = vpack.c.b16 %v207, %v206
  %v250 = vpack.c.b16 %v209, %v208
  %v251 = vpack.c.b16 %v211, %v210
  %v252 = vpack.c.b16 %v213, %v212
  %v253 = vpack.c.b16 %v215, %v214
  %v254 = vpack.c.b16 %v217, %v216
  %v255 = vpack.c.b16 %v219, %v218
  %v256 = vpack.c.b16 %v221, %v220
  %v257 = vpack.c.b16 %v223, %v222
  %v258 = vpack.c.b16 %v225, %v224
  %v259 = vpack.c.b16 %v227, %v226
  %v268 = vunpack.c.l.b16 %v92
  %v269 = vunpack.c.l.b16 %v93
  %v270 = vunpack.c.l.b16 %v94
  %v271 = vunpack.c.l.b16 %v95
  %v272 = vunpack.c.l.b16 %v96
  %v273 = vunpack.c.l.b16 %v97
  %v274 = vunpack.c.l.b16 %v98
  %v275 = vunpack.c.l.b16 %v99
  %v276 = vpack.c.b16 %v269, %v268
  %v277 = vpack.c.b16 %v271, %v270
  %v278 = vpack.c.b16 %v273, %v272
  %v279 = vpack.c.b16 %v275, %v274
  %vm284 = vcmask 523264
  %v286 = vsel %vm284, %v228, 0
  %v289 = vsel %vm284, %v229, 0
  %v292 = vsel %vm284, %v230, 0
  %v295 = vsel %vm284, %v231, 0
  %v298 = vsel %vm284, %v232, 0
  %v301 = vsel %vm284, %v233, 0
  %v304 = vsel %vm284, %v234, 0
  %v307 = vsel %vm284, %v235, 0
  %v310 = vsel %vm284, %v236, 0
  %v313 = vsel %vm284, %v237, 0
  %v316 = vsel %vm284, %v238, 0
  %v319 = vsel %vm284, %v239, 0
  %v322 = vsel %vm284, %v240, 0
  %v325 = vsel %vm284, %v241, 0
  %v328 = vsel %vm284, %v242, 0
  %v331 = vsel %vm284, %v243, 0
  %v334 = vsel %vm284, %v244, 0
  %v337 = vsel %vm284, %v245, 0
  %v340 = vsel %vm284, %v246, 0
  %v343 = vsel %vm284, %v247, 0
  %v346 = vsel %vm284, %v248, 0
  %v349 = vsel %vm284, %v249, 0
  %v352 = vsel %vm284, %v250, 0
  %v355 = vsel %vm284, %v251, 0
  %v358 = vsel %vm284, %v252, 0
  %v361 = vsel %vm284, %v253, 0
  %v364 = vsel %vm284, %v254, 0
  %v367 = vsel %vm284, %v255, 0
  %v370 = vsel %vm284, %v256, 0
  %v373 = vsel %vm284, %v257, 0
  %v376 = vsel %vm284, %v258, 0
  %v379 = vsel %vm284, %v259, 0
  %381 = vmatpush.bf16.msra.mxu0 0
  %382 = vmatpush.bf16.msra.mxu0 0
  %383 = vmatpush.bf16.msra.mxu0 0
  %384 = vmatpush.bf16.msra.mxu0 0
  %385 = vmatpush.bf16.msra.mxu0 %v279
  %386 = vmatpush.bf16.msra.mxu0 %v278
  %387 = vmatpush.bf16.msra.mxu0 %v277
  %388 = vmatpush.bf16.msra.mxu0 %v276
  %389 = vmatmul.bf16.gmra.mxu0 %v286
  %v390 = vpop.f32.mrf.mxu0
  %v391 = vadd.f32 0.0, %v390
  %v392 = vpop.f32.mrf.mxu0
  %v393 = vadd.f32 0.0, %v392
  %394 = vmatmul.bf16.gmra.mxu0 %v289
  %v395 = vpop.f32.mrf.mxu0
  %v396 = vadd.f32 0.0, %v395
  %v397 = vpop.f32.mrf.mxu0
  %v398 = vadd.f32 0.0, %v397
  %399 = vmatmul.bf16.gmra.mxu0 %v292
  %v400 = vpop.f32.mrf.mxu0
  %v401 = vadd.f32 0.0, %v400
  %v402 = vpop.f32.mrf.mxu0
  %v403 = vadd.f32 0.0, %v402
  %404 = vmatmul.bf16.gmra.mxu0 %v295
  %v405 = vpop.f32.mrf.mxu0
  %v406 = vadd.f32 0.0, %v405
  %v407 = vpop.f32.mrf.mxu0
  %v408 = vadd.f32 0.0, %v407
  %409 = vmatmul.bf16.gmra.mxu0 %v298
  %v410 = vpop.f32.mrf.mxu0
  %v411 = vadd.f32 0.0, %v410
  %v412 = vpop.f32.mrf.mxu0
  %v413 = vadd.f32 0.0, %v412
  %414 = vmatmul.bf16.gmra.mxu0 %v301
  %v415 = vpop.f32.mrf.mxu0
  %v416 = vadd.f32 0.0, %v415
  %v417 = vpop.f32.mrf.mxu0
  %v418 = vadd.f32 0.0, %v417
  %419 = vmatmul.bf16.gmra.mxu0 %v304
  %v420 = vpop.f32.mrf.mxu0
  %v421 = vadd.f32 0.0, %v420
  %v422 = vpop.f32.mrf.mxu0
  %v423 = vadd.f32 0.0, %v422
  %424 = vmatmul.bf16.gmra.mxu0 %v307
  %v425 = vpop.f32.mrf.mxu0
  %v426 = vadd.f32 0.0, %v425
  %v427 = vpop.f32.mrf.mxu0
  %v428 = vadd.f32 0.0, %v427
  %429 = vmatmul.bf16.gmra.mxu0 %v310
  %v430 = vpop.f32.mrf.mxu0
  %v431 = vadd.f32 0.0, %v430
  %v432 = vpop.f32.mrf.mxu0
  %v433 = vadd.f32 0.0, %v432
  %434 = vmatmul.bf16.gmra.mxu0 %v313
  %v435 = vpop.f32.mrf.mxu0
  %v436 = vadd.f32 0.0, %v435
  %v437 = vpop.f32.mrf.mxu0
  %v438 = vadd.f32 0.0, %v437
  %439 = vmatmul.bf16.gmra.mxu0 %v316
  %v440 = vpop.f32.mrf.mxu0
  %v441 = vadd.f32 0.0, %v440
  %v442 = vpop.f32.mrf.mxu0
  %v443 = vadd.f32 0.0, %v442
  %444 = vmatmul.bf16.gmra.mxu0 %v319
  %v445 = vpop.f32.mrf.mxu0
  %v446 = vadd.f32 0.0, %v445
  %v447 = vpop.f32.mrf.mxu0
  %v448 = vadd.f32 0.0, %v447
  %449 = vmatmul.bf16.gmra.mxu0 %v322
  %v450 = vpop.f32.mrf.mxu0
  %v451 = vadd.f32 0.0, %v450
  %v452 = vpop.f32.mrf.mxu0
  %v453 = vadd.f32 0.0, %v452
  %454 = vmatmul.bf16.gmra.mxu0 %v325
  %v455 = vpop.f32.mrf.mxu0
  %v456 = vadd.f32 0.0, %v455
  %v457 = vpop.f32.mrf.mxu0
  %v458 = vadd.f32 0.0, %v457
  %459 = vmatmul.bf16.gmra.mxu0 %v328
  %v460 = vpop.f32.mrf.mxu0
  %v461 = vadd.f32 0.0, %v460
  %v462 = vpop.f32.mrf.mxu0
  %v463 = vadd.f32 0.0, %v462
  %464 = vmatmul.bf16.gmra.mxu0 %v331
  %v465 = vpop.f32.mrf.mxu0
  %v466 = vadd.f32 0.0, %v465
  %v467 = vpop.f32.mrf.mxu0
  %v468 = vadd.f32 0.0, %v467
  %469 = vmatmul.bf16.gmra.mxu0 %v334
  %v470 = vpop.f32.mrf.mxu0
  %v471 = vadd.f32 0.0, %v470
  %v472 = vpop.f32.mrf.mxu0
  %v473 = vadd.f32 0.0, %v472
  %474 = vmatmul.bf16.gmra.mxu0 %v337
  %v475 = vpop.f32.mrf.mxu0
  %v476 = vadd.f32 0.0, %v475
  %v477 = vpop.f32.mrf.mxu0
  %v478 = vadd.f32 0.0, %v477
  %479 = vmatmul.bf16.gmra.mxu0 %v340
  %v480 = vpop.f32.mrf.mxu0
  %v481 = vadd.f32 0.0, %v480
  %v482 = vpop.f32.mrf.mxu0
  %v483 = vadd.f32 0.0, %v482
  %484 = vmatmul.bf16.gmra.mxu0 %v343
  %v485 = vpop.f32.mrf.mxu0
  %v486 = vadd.f32 0.0, %v485
  %v487 = vpop.f32.mrf.mxu0
  %v488 = vadd.f32 0.0, %v487
  %489 = vmatmul.bf16.gmra.mxu0 %v346
  %v490 = vpop.f32.mrf.mxu0
  %v491 = vadd.f32 0.0, %v490
  %v492 = vpop.f32.mrf.mxu0
  %v493 = vadd.f32 0.0, %v492
  %494 = vmatmul.bf16.gmra.mxu0 %v349
  %v495 = vpop.f32.mrf.mxu0
  %v496 = vadd.f32 0.0, %v495
  %v497 = vpop.f32.mrf.mxu0
  %v498 = vadd.f32 0.0, %v497
  %499 = vmatmul.bf16.gmra.mxu0 %v352
  %v500 = vpop.f32.mrf.mxu0
  %v501 = vadd.f32 0.0, %v500
  %v502 = vpop.f32.mrf.mxu0
  %v503 = vadd.f32 0.0, %v502
  %504 = vmatmul.bf16.gmra.mxu0 %v355
  %v505 = vpop.f32.mrf.mxu0
  %v506 = vadd.f32 0.0, %v505
  %v507 = vpop.f32.mrf.mxu0
  %v508 = vadd.f32 0.0, %v507
  %509 = vmatmul.bf16.gmra.mxu0 %v358
  %v510 = vpop.f32.mrf.mxu0
  %v511 = vadd.f32 0.0, %v510
  %v512 = vpop.f32.mrf.mxu0
  %v513 = vadd.f32 0.0, %v512
  %514 = vmatmul.bf16.gmra.mxu0 %v361
  %v515 = vpop.f32.mrf.mxu0
  %v516 = vadd.f32 0.0, %v515
  %v517 = vpop.f32.mrf.mxu0
  %v518 = vadd.f32 0.0, %v517
  %519 = vmatmul.bf16.gmra.mxu0 %v364
  %v520 = vpop.f32.mrf.mxu0
  %v521 = vadd.f32 0.0, %v520
  %v522 = vpop.f32.mrf.mxu0
  %v523 = vadd.f32 0.0, %v522
  %524 = vmatmul.bf16.gmra.mxu0 %v367
  %v525 = vpop.f32.mrf.mxu0
  %v526 = vadd.f32 0.0, %v525
  %v527 = vpop.f32.mrf.mxu0
  %v528 = vadd.f32 0.0, %v527
  %529 = vmatmul.bf16.gmra.mxu0 %v370
  %v530 = vpop.f32.mrf.mxu0
  %v531 = vadd.f32 0.0, %v530
  %v532 = vpop.f32.mrf.mxu0
  %v533 = vadd.f32 0.0, %v532
  %534 = vmatmul.bf16.gmra.mxu0 %v373
  %v535 = vpop.f32.mrf.mxu0
  %v536 = vadd.f32 0.0, %v535
  %v537 = vpop.f32.mrf.mxu0
  %v538 = vadd.f32 0.0, %v537
  %539 = vmatmul.bf16.gmra.mxu0 %v376
  %v540 = vpop.f32.mrf.mxu0
  %v541 = vadd.f32 0.0, %v540
  %v542 = vpop.f32.mrf.mxu0
  %v543 = vadd.f32 0.0, %v542
  %544 = vmatmul.bf16.gmra.mxu0 %v379
  %v545 = vpop.f32.mrf.mxu0
  %v546 = vadd.f32 0.0, %v545
  %v547 = vpop.f32.mrf.mxu0
  %v548 = vadd.f32 0.0, %v547
  %549 = vdwg.mxu0
  %v554 = vunpack.c.l.b16 %v15
  %v555 = vunpack.c.l.b16 %v16
  %v556 = vunpack.c.l.b16 %v47
  %v557 = vunpack.c.l.b16 %v48
  %v558 = vpack.c.b16 %v555, %v554
  %v559 = vpack.c.b16 %v557, %v556
  %v568 = vunpack.c.l.b16 %v83
  %v569 = vunpack.c.l.b16 %v84
  %v570 = vunpack.c.l.b16 %v85
  %v571 = vunpack.c.l.b16 %v86
  %v572 = vunpack.c.l.b16 %v87
  %v573 = vunpack.c.l.b16 %v88
  %v574 = vunpack.c.l.b16 %v89
  %v575 = vunpack.c.l.b16 %v90
  %v576 = vpack.c.b16 %v569, %v568
  %v577 = vpack.c.b16 %v571, %v570
  %v578 = vpack.c.b16 %v573, %v572
  %v579 = vpack.c.b16 %v575, %v574
  %v585 = vsel %vm284, %v558, 0
  %v588 = vsel %vm284, %v559, 0
  %590 = vmatpush.bf16.msra.mxu0 0
  %591 = vmatpush.bf16.msra.mxu0 0
  %592 = vmatpush.bf16.msra.mxu0 0
  %593 = vmatpush.bf16.msra.mxu0 0
  %594 = vmatpush.bf16.msra.mxu0 %v579
  %595 = vmatpush.bf16.msra.mxu0 %v578
  %596 = vmatpush.bf16.msra.mxu0 %v577
  %597 = vmatpush.bf16.msra.mxu0 %v576
  %598 = vmatmul.bf16.gmra.mxu0 %v585
  %v599 = vpop.f32.mrf.mxu0
  %v600 = vadd.f32 %v391, %v599
  %v601 = vpop.f32.mrf.mxu0
  %v602 = vadd.f32 %v393, %v601
  %603 = vmatmul.bf16.gmra.mxu0 %v286
  %v604 = vpop.f32.mrf.mxu0
  %v605 = vadd.f32 %v396, %v604
  %v606 = vpop.f32.mrf.mxu0
  %v607 = vadd.f32 %v398, %v606
  %608 = vmatmul.bf16.gmra.mxu0 %v289
  %v609 = vpop.f32.mrf.mxu0
  %v610 = vadd.f32 %v401, %v609
  %v611 = vpop.f32.mrf.mxu0
  %v612 = vadd.f32 %v403, %v611
  %613 = vmatmul.bf16.gmra.mxu0 %v292
  %v614 = vpop.f32.mrf.mxu0
  %v615 = vadd.f32 %v406, %v614
  %v616 = vpop.f32.mrf.mxu0
  %v617 = vadd.f32 %v408, %v616
  %618 = vmatmul.bf16.gmra.mxu0 %v295
  %v619 = vpop.f32.mrf.mxu0
  %v620 = vadd.f32 %v411, %v619
  %v621 = vpop.f32.mrf.mxu0
  %v622 = vadd.f32 %v413, %v621
  %623 = vmatmul.bf16.gmra.mxu0 %v298
  %v624 = vpop.f32.mrf.mxu0
  %v625 = vadd.f32 %v416, %v624
  %v626 = vpop.f32.mrf.mxu0
  %v627 = vadd.f32 %v418, %v626
  %628 = vmatmul.bf16.gmra.mxu0 %v301
  %v629 = vpop.f32.mrf.mxu0
  %v630 = vadd.f32 %v421, %v629
  %v631 = vpop.f32.mrf.mxu0
  %v632 = vadd.f32 %v423, %v631
  %633 = vmatmul.bf16.gmra.mxu0 %v304
  %v634 = vpop.f32.mrf.mxu0
  %v635 = vadd.f32 %v426, %v634
  %v636 = vpop.f32.mrf.mxu0
  %v637 = vadd.f32 %v428, %v636
  %638 = vmatmul.bf16.gmra.mxu0 %v307
  %v639 = vpop.f32.mrf.mxu0
  %v640 = vadd.f32 %v431, %v639
  %v641 = vpop.f32.mrf.mxu0
  %v642 = vadd.f32 %v433, %v641
  %643 = vmatmul.bf16.gmra.mxu0 %v310
  %v644 = vpop.f32.mrf.mxu0
  %v645 = vadd.f32 %v436, %v644
  %v646 = vpop.f32.mrf.mxu0
  %v647 = vadd.f32 %v438, %v646
  %648 = vmatmul.bf16.gmra.mxu0 %v313
  %v649 = vpop.f32.mrf.mxu0
  %v650 = vadd.f32 %v441, %v649
  %v651 = vpop.f32.mrf.mxu0
  %v652 = vadd.f32 %v443, %v651
  %653 = vmatmul.bf16.gmra.mxu0 %v316
  %v654 = vpop.f32.mrf.mxu0
  %v655 = vadd.f32 %v446, %v654
  %v656 = vpop.f32.mrf.mxu0
  %v657 = vadd.f32 %v448, %v656
  %658 = vmatmul.bf16.gmra.mxu0 %v319
  %v659 = vpop.f32.mrf.mxu0
  %v660 = vadd.f32 %v451, %v659
  %v661 = vpop.f32.mrf.mxu0
  %v662 = vadd.f32 %v453, %v661
  %663 = vmatmul.bf16.gmra.mxu0 %v322
  %v664 = vpop.f32.mrf.mxu0
  %v665 = vadd.f32 %v456, %v664
  %v666 = vpop.f32.mrf.mxu0
  %v667 = vadd.f32 %v458, %v666
  %668 = vmatmul.bf16.gmra.mxu0 %v325
  %v669 = vpop.f32.mrf.mxu0
  %v670 = vadd.f32 %v461, %v669
  %v671 = vpop.f32.mrf.mxu0
  %v672 = vadd.f32 %v463, %v671
  %673 = vmatmul.bf16.gmra.mxu0 %v328
  %v674 = vpop.f32.mrf.mxu0
  %v675 = vadd.f32 %v466, %v674
  %v676 = vpop.f32.mrf.mxu0
  %v677 = vadd.f32 %v468, %v676
  %678 = vmatmul.bf16.gmra.mxu0 %v588
  %v679 = vpop.f32.mrf.mxu0
  %v680 = vadd.f32 %v471, %v679
  %v681 = vpop.f32.mrf.mxu0
  %v682 = vadd.f32 %v473, %v681
  %683 = vmatmul.bf16.gmra.mxu0 %v334
  %v684 = vpop.f32.mrf.mxu0
  %v685 = vadd.f32 %v476, %v684
  %v686 = vpop.f32.mrf.mxu0
  %v687 = vadd.f32 %v478, %v686
  %688 = vmatmul.bf16.gmra.mxu0 %v337
  %v689 = vpop.f32.mrf.mxu0
  %v690 = vadd.f32 %v481, %v689
  %v691 = vpop.f32.mrf.mxu0
  %v692 = vadd.f32 %v483, %v691
  %693 = vmatmul.bf16.gmra.mxu0 %v340
  %v694 = vpop.f32.mrf.mxu0
  %v695 = vadd.f32 %v486, %v694
  %v696 = vpop.f32.mrf.mxu0
  %v697 = vadd.f32 %v488, %v696
  %698 = vmatmul.bf16.gmra.mxu0 %v343
  %v699 = vpop.f32.mrf.mxu0
  %v700 = vadd.f32 %v491, %v699
  %v701 = vpop.f32.mrf.mxu0
  %v702 = vadd.f32 %v493, %v701
  %703 = vmatmul.bf16.gmra.mxu0 %v346
  %v704 = vpop.f32.mrf.mxu0
  %v705 = vadd.f32 %v496, %v704
  %v706 = vpop.f32.mrf.mxu0
  %v707 = vadd.f32 %v498, %v706
  %708 = vmatmul.bf16.gmra.mxu0 %v349
  %v709 = vpop.f32.mrf.mxu0
  %v710 = vadd.f32 %v501, %v709
  %v711 = vpop.f32.mrf.mxu0
  %v712 = vadd.f32 %v503, %v711
  %713 = vmatmul.bf16.gmra.mxu0 %v352
  %v714 = vpop.f32.mrf.mxu0
  %v715 = vadd.f32 %v506, %v714
  %v716 = vpop.f32.mrf.mxu0
  %v717 = vadd.f32 %v508, %v716
  %718 = vmatmul.bf16.gmra.mxu0 %v355
  %v719 = vpop.f32.mrf.mxu0
  %v720 = vadd.f32 %v511, %v719
  %v721 = vpop.f32.mrf.mxu0
  %v722 = vadd.f32 %v513, %v721
  %723 = vmatmul.bf16.gmra.mxu0 %v358
  %v724 = vpop.f32.mrf.mxu0
  %v725 = vadd.f32 %v516, %v724
  %v726 = vpop.f32.mrf.mxu0
  %v727 = vadd.f32 %v518, %v726
  %728 = vmatmul.bf16.gmra.mxu0 %v361
  %v729 = vpop.f32.mrf.mxu0
  %v730 = vadd.f32 %v521, %v729
  %v731 = vpop.f32.mrf.mxu0
  %v732 = vadd.f32 %v523, %v731
  %733 = vmatmul.bf16.gmra.mxu0 %v364
  %v734 = vpop.f32.mrf.mxu0
  %v735 = vadd.f32 %v526, %v734
  %v736 = vpop.f32.mrf.mxu0
  %v737 = vadd.f32 %v528, %v736
  %738 = vmatmul.bf16.gmra.mxu0 %v367
  %v739 = vpop.f32.mrf.mxu0
  %v740 = vadd.f32 %v531, %v739
  %v741 = vpop.f32.mrf.mxu0
  %v742 = vadd.f32 %v533, %v741
  %743 = vmatmul.bf16.gmra.mxu0 %v370
  %v744 = vpop.f32.mrf.mxu0
  %v745 = vadd.f32 %v536, %v744
  %v746 = vpop.f32.mrf.mxu0
  %v747 = vadd.f32 %v538, %v746
  %748 = vmatmul.bf16.gmra.mxu0 %v373
  %v749 = vpop.f32.mrf.mxu0
  %v750 = vadd.f32 %v541, %v749
  %v751 = vpop.f32.mrf.mxu0
  %v752 = vadd.f32 %v543, %v751
  %753 = vmatmul.bf16.gmra.mxu0 %v376
  %v754 = vpop.f32.mrf.mxu0
  %v755 = vadd.f32 %v546, %v754
  %v756 = vpop.f32.mrf.mxu0
  %v757 = vadd.f32 %v548, %v756
  %758 = vdwg.mxu0
  %vm759 = vcmask 130048
  %v760 = vsel %vm759, %v600, 0.0
  %v761 = vsel %vm759, %v602, 0.0
  %v762 = vadd.f32 %v760, %v761
  %v763 = vsel %vm759, %v605, 0.0
  %v764 = vadd.f32 %v762, %v763
  %v765 = vsel %vm759, %v607, 0.0
  %v766 = vadd.f32 %v764, %v765
  %v767 = vsel %vm759, %v610, 0.0
  %v768 = vadd.f32 %v766, %v767
  %v769 = vsel %vm759, %v612, 0.0
  %v770 = vadd.f32 %v768, %v769
  %v771 = vsel %vm759, %v615, 0.0
  %v772 = vadd.f32 %v770, %v771
  %v773 = vsel %vm759, %v617, 0.0
  %v774 = vadd.f32 %v772, %v773
  %v775 = vsel %vm759, %v620, 0.0
  %v776 = vadd.f32 %v774, %v775
  %v777 = vsel %vm759, %v622, 0.0
  %v778 = vadd.f32 %v776, %v777
  %v779 = vsel %vm759, %v625, 0.0
  %v780 = vadd.f32 %v778, %v779
  %v781 = vsel %vm759, %v627, 0.0
  %v782 = vadd.f32 %v780, %v781
  %v783 = vsel %vm759, %v630, 0.0
  %v784 = vadd.f32 %v782, %v783
  %v785 = vsel %vm759, %v632, 0.0
  %v786 = vadd.f32 %v784, %v785
  %v787 = vsel %vm759, %v635, 0.0
  %v788 = vadd.f32 %v786, %v787
  %v789 = vsel %vm759, %v637, 0.0
  %v790 = vadd.f32 %v788, %v789
  %v791 = vsel %vm759, %v640, 0.0
  %v792 = vadd.f32 %v790, %v791
  %v793 = vsel %vm759, %v642, 0.0
  %v794 = vadd.f32 %v792, %v793
  %v795 = vsel %vm759, %v645, 0.0
  %v796 = vadd.f32 %v794, %v795
  %v797 = vsel %vm759, %v647, 0.0
  %v798 = vadd.f32 %v796, %v797
  %v799 = vsel %vm759, %v650, 0.0
  %v800 = vadd.f32 %v798, %v799
  %v801 = vsel %vm759, %v652, 0.0
  %v802 = vadd.f32 %v800, %v801
  %v803 = vsel %vm759, %v655, 0.0
  %v804 = vadd.f32 %v802, %v803
  %v805 = vsel %vm759, %v657, 0.0
  %v806 = vadd.f32 %v804, %v805
  %v807 = vsel %vm759, %v660, 0.0
  %v808 = vadd.f32 %v806, %v807
  %v809 = vsel %vm759, %v662, 0.0
  %v810 = vadd.f32 %v808, %v809
  %v811 = vsel %vm759, %v665, 0.0
  %v812 = vadd.f32 %v810, %v811
  %v813 = vsel %vm759, %v667, 0.0
  %v814 = vadd.f32 %v812, %v813
  %v815 = vsel %vm759, %v670, 0.0
  %v816 = vadd.f32 %v814, %v815
  %v817 = vsel %vm759, %v672, 0.0
  %v818 = vadd.f32 %v816, %v817
  %v819 = vsel %vm759, %v675, 0.0
  %v820 = vadd.f32 %v818, %v819
  %v821 = vsel %vm759, %v677, 0.0
  %v822 = vadd.f32 %v820, %v821
  %v823 = vsel %vm759, %v680, 0.0
  %v824 = vadd.f32 %v822, %v823
  %v825 = vsel %vm759, %v682, 0.0
  %v826 = vadd.f32 %v824, %v825
  %v827 = vsel %vm759, %v685, 0.0
  %v828 = vadd.f32 %v826, %v827
  %v829 = vsel %vm759, %v687, 0.0
  %v830 = vadd.f32 %v828, %v829
  %v831 = vsel %vm759, %v690, 0.0
  %v832 = vadd.f32 %v830, %v831
  %v833 = vsel %vm759, %v692, 0.0
  %v834 = vadd.f32 %v832, %v833
  %v835 = vsel %vm759, %v695, 0.0
  %v836 = vadd.f32 %v834, %v835
  %v837 = vsel %vm759, %v697, 0.0
  %v838 = vadd.f32 %v836, %v837
  %v839 = vsel %vm759, %v700, 0.0
  %v840 = vadd.f32 %v838, %v839
  %v841 = vsel %vm759, %v702, 0.0
  %v842 = vadd.f32 %v840, %v841
  %v843 = vsel %vm759, %v705, 0.0
  %v844 = vadd.f32 %v842, %v843
  %v845 = vsel %vm759, %v707, 0.0
  %v846 = vadd.f32 %v844, %v845
  %v847 = vsel %vm759, %v710, 0.0
  %v848 = vadd.f32 %v846, %v847
  %v849 = vsel %vm759, %v712, 0.0
  %v850 = vadd.f32 %v848, %v849
  %v851 = vsel %vm759, %v715, 0.0
  %v852 = vadd.f32 %v850, %v851
  %v853 = vsel %vm759, %v717, 0.0
  %v854 = vadd.f32 %v852, %v853
  %v855 = vsel %vm759, %v720, 0.0
  %v856 = vadd.f32 %v854, %v855
  %v857 = vsel %vm759, %v722, 0.0
  %v858 = vadd.f32 %v856, %v857
  %v859 = vsel %vm759, %v725, 0.0
  %v860 = vadd.f32 %v858, %v859
  %v861 = vsel %vm759, %v727, 0.0
  %v862 = vadd.f32 %v860, %v861
  %v863 = vsel %vm759, %v730, 0.0
  %v864 = vadd.f32 %v862, %v863
  %v865 = vsel %vm759, %v732, 0.0
  %v866 = vadd.f32 %v864, %v865
  %v867 = vsel %vm759, %v735, 0.0
  %v868 = vadd.f32 %v866, %v867
  %v869 = vsel %vm759, %v737, 0.0
  %v870 = vadd.f32 %v868, %v869
  %v871 = vsel %vm759, %v740, 0.0
  %v872 = vadd.f32 %v870, %v871
  %v873 = vsel %vm759, %v742, 0.0
  %v874 = vadd.f32 %v872, %v873
  %v875 = vsel %vm759, %v745, 0.0
  %v876 = vadd.f32 %v874, %v875
  %v877 = vsel %vm759, %v747, 0.0
  %v878 = vadd.f32 %v876, %v877
  %v879 = vsel %vm759, %v750, 0.0
  %v880 = vadd.f32 %v878, %v879
  %v881 = vsel %vm759, %v752, 0.0
  %v882 = vadd.f32 %v880, %v881
  %v883 = vsel %vm759, %v755, 0.0
  %v884 = vadd.f32 %v882, %v883
  %v885 = vsel %vm759, %v757, 0.0
  %v886 = vadd.f32 %v884, %v885
  %v887 = vrot.slane %v886, 4
  %v888 = vadd.f32 %v886, %v887
  %v889 = vrot.slane %v888, 2
  %v890 = vadd.f32 %v888, %v889
  %v891 = vrot.slane %v890, 1
  %v892 = vadd.f32 %v890, %v891
  %vm893 = vcmask 122880
  %894 = vst.msk [vmem:[%s3] sm:$0x1] %vm893, %v892
  %v895 = vmul.f32 %v600, %v600
  %v896 = vmul.f32 %v602, %v602
  %v897 = vmul.f32 %v605, %v605
  %v898 = vmul.f32 %v607, %v607
  %v899 = vmul.f32 %v610, %v610
  %v900 = vmul.f32 %v612, %v612
  %v901 = vmul.f32 %v615, %v615
  %v902 = vmul.f32 %v617, %v617
  %v903 = vmul.f32 %v620, %v620
  %v904 = vmul.f32 %v622, %v622
  %v905 = vmul.f32 %v625, %v625
  %v906 = vmul.f32 %v627, %v627
  %v907 = vmul.f32 %v630, %v630
  %v908 = vmul.f32 %v632, %v632
  %v909 = vmul.f32 %v635, %v635
  %v910 = vmul.f32 %v637, %v637
  %v911 = vmul.f32 %v640, %v640
  %v912 = vmul.f32 %v642, %v642
  %v913 = vmul.f32 %v645, %v645
  %v914 = vmul.f32 %v647, %v647
  %v915 = vmul.f32 %v650, %v650
  %v916 = vmul.f32 %v652, %v652
  %v917 = vmul.f32 %v655, %v655
  %v918 = vmul.f32 %v657, %v657
  %v919 = vmul.f32 %v660, %v660
  %v920 = vmul.f32 %v662, %v662
  %v921 = vmul.f32 %v665, %v665
  %v922 = vmul.f32 %v667, %v667
  %v923 = vmul.f32 %v670, %v670
  %v924 = vmul.f32 %v672, %v672
  %v925 = vmul.f32 %v675, %v675
  %v926 = vmul.f32 %v677, %v677
  %v927 = vmul.f32 %v680, %v680
  %v928 = vmul.f32 %v682, %v682
  %v929 = vmul.f32 %v685, %v685
  %v930 = vmul.f32 %v687, %v687
  %v931 = vmul.f32 %v690, %v690
  %v932 = vmul.f32 %v692, %v692
  %v933 = vmul.f32 %v695, %v695
  %v934 = vmul.f32 %v697, %v697
  %v935 = vmul.f32 %v700, %v700
  %v936 = vmul.f32 %v702, %v702
  %v937 = vmul.f32 %v705, %v705
  %v938 = vmul.f32 %v707, %v707
  %v939 = vmul.f32 %v710, %v710
  %v940 = vmul.f32 %v712, %v712
  %v941 = vmul.f32 %v715, %v715
  %v942 = vmul.f32 %v717, %v717
  %v943 = vmul.f32 %v720, %v720
  %v944 = vmul.f32 %v722, %v722
  %v945 = vmul.f32 %v725, %v725
  %v946 = vmul.f32 %v727, %v727
  %v947 = vmul.f32 %v730, %v730
  %v948 = vmul.f32 %v732, %v732
  %v949 = vmul.f32 %v735, %v735
  %v950 = vmul.f32 %v737, %v737
  %v951 = vmul.f32 %v740, %v740
  %v952 = vmul.f32 %v742, %v742
  %v953 = vmul.f32 %v745, %v745
  %v954 = vmul.f32 %v747, %v747
  %v955 = vmul.f32 %v750, %v750
  %v956 = vmul.f32 %v752, %v752
  %v957 = vmul.f32 %v755, %v755
  %v958 = vmul.f32 %v757, %v757
  %v959 = vsel %vm759, %v895, 0.0
  %v960 = vsel %vm759, %v896, 0.0
  %v961 = vadd.f32 %v959, %v960
  %v962 = vsel %vm759, %v897, 0.0
  %v963 = vadd.f32 %v961, %v962
  %v964 = vsel %vm759, %v898, 0.0
  %v965 = vadd.f32 %v963, %v964
  %v966 = vsel %vm759, %v899, 0.0
  %v967 = vadd.f32 %v965, %v966
  %v968 = vsel %vm759, %v900, 0.0
  %v969 = vadd.f32 %v967, %v968
  %v970 = vsel %vm759, %v901, 0.0
  %v971 = vadd.f32 %v969, %v970
  %v972 = vsel %vm759, %v902, 0.0
  %v973 = vadd.f32 %v971, %v972
  %v974 = vsel %vm759, %v903, 0.0
  %v975 = vadd.f32 %v973, %v974
  %v976 = vsel %vm759, %v904, 0.0
  %v977 = vadd.f32 %v975, %v976
  %v978 = vsel %vm759, %v905, 0.0
  %v979 = vadd.f32 %v977, %v978
  %v980 = vsel %vm759, %v906, 0.0
  %v981 = vadd.f32 %v979, %v980
  %v982 = vsel %vm759, %v907, 0.0
  %v983 = vadd.f32 %v981, %v982
  %v984 = vsel %vm759, %v908, 0.0
  %v985 = vadd.f32 %v983, %v984
  %v986 = vsel %vm759, %v909, 0.0
  %v987 = vadd.f32 %v985, %v986
  %v988 = vsel %vm759, %v910, 0.0
  %v989 = vadd.f32 %v987, %v988
  %v990 = vsel %vm759, %v911, 0.0
  %v991 = vadd.f32 %v989, %v990
  %v992 = vsel %vm759, %v912, 0.0
  %v993 = vadd.f32 %v991, %v992
  %v994 = vsel %vm759, %v913, 0.0
  %v995 = vadd.f32 %v993, %v994
  %v996 = vsel %vm759, %v914, 0.0
  %v997 = vadd.f32 %v995, %v996
  %v998 = vsel %vm759, %v915, 0.0
  %v999 = vadd.f32 %v997, %v998
  %v1000 = vsel %vm759, %v916, 0.0
  %v1001 = vadd.f32 %v999, %v1000
  %v1002 = vsel %vm759, %v917, 0.0
  %v1003 = vadd.f32 %v1001, %v1002
  %v1004 = vsel %vm759, %v918, 0.0
  %v1005 = vadd.f32 %v1003, %v1004
  %v1006 = vsel %vm759, %v919, 0.0
  %v1007 = vadd.f32 %v1005, %v1006
  %v1008 = vsel %vm759, %v920, 0.0
  %v1009 = vadd.f32 %v1007, %v1008
  %v1010 = vsel %vm759, %v921, 0.0
  %v1011 = vadd.f32 %v1009, %v1010
  %v1012 = vsel %vm759, %v922, 0.0
  %v1013 = vadd.f32 %v1011, %v1012
  %v1014 = vsel %vm759, %v923, 0.0
  %v1015 = vadd.f32 %v1013, %v1014
  %v1016 = vsel %vm759, %v924, 0.0
  %v1017 = vadd.f32 %v1015, %v1016
  %v1018 = vsel %vm759, %v925, 0.0
  %v1019 = vadd.f32 %v1017, %v1018
  %v1020 = vsel %vm759, %v926, 0.0
  %v1021 = vadd.f32 %v1019, %v1020
  %v1022 = vsel %vm759, %v927, 0.0
  %v1023 = vadd.f32 %v1021, %v1022
  %v1024 = vsel %vm759, %v928, 0.0
  %v1025 = vadd.f32 %v1023, %v1024
  %v1026 = vsel %vm759, %v929, 0.0
  %v1027 = vadd.f32 %v1025, %v1026
  %v1028 = vsel %vm759, %v930, 0.0
  %v1029 = vadd.f32 %v1027, %v1028
  %v1030 = vsel %vm759, %v931, 0.0
  %v1031 = vadd.f32 %v1029, %v1030
  %v1032 = vsel %vm759, %v932, 0.0
  %v1033 = vadd.f32 %v1031, %v1032
  %v1034 = vsel %vm759, %v933, 0.0
  %v1035 = vadd.f32 %v1033, %v1034
  %v1036 = vsel %vm759, %v934, 0.0
  %v1037 = vadd.f32 %v1035, %v1036
  %v1038 = vsel %vm759, %v935, 0.0
  %v1039 = vadd.f32 %v1037, %v1038
  %v1040 = vsel %vm759, %v936, 0.0
  %v1041 = vadd.f32 %v1039, %v1040
  %v1042 = vsel %vm759, %v937, 0.0
  %v1043 = vadd.f32 %v1041, %v1042
  %v1044 = vsel %vm759, %v938, 0.0
  %v1045 = vadd.f32 %v1043, %v1044
  %v1046 = vsel %vm759, %v939, 0.0
  %v1047 = vadd.f32 %v1045, %v1046
  %v1048 = vsel %vm759, %v940, 0.0
  %v1049 = vadd.f32 %v1047, %v1048
  %v1050 = vsel %vm759, %v941, 0.0
  %v1051 = vadd.f32 %v1049, %v1050
  %v1052 = vsel %vm759, %v942, 0.0
  %v1053 = vadd.f32 %v1051, %v1052
  %v1054 = vsel %vm759, %v943, 0.0
  %v1055 = vadd.f32 %v1053, %v1054
  %v1056 = vsel %vm759, %v944, 0.0
  %v1057 = vadd.f32 %v1055, %v1056
  %v1058 = vsel %vm759, %v945, 0.0
  %v1059 = vadd.f32 %v1057, %v1058
  %v1060 = vsel %vm759, %v946, 0.0
  %v1061 = vadd.f32 %v1059, %v1060
  %v1062 = vsel %vm759, %v947, 0.0
  %v1063 = vadd.f32 %v1061, %v1062
  %v1064 = vsel %vm759, %v948, 0.0
  %v1065 = vadd.f32 %v1063, %v1064
  %v1066 = vsel %vm759, %v949, 0.0
  %v1067 = vadd.f32 %v1065, %v1066
  %v1068 = vsel %vm759, %v950, 0.0
  %v1069 = vadd.f32 %v1067, %v1068
  %v1070 = vsel %vm759, %v951, 0.0
  %v1071 = vadd.f32 %v1069, %v1070
  %v1072 = vsel %vm759, %v952, 0.0
  %v1073 = vadd.f32 %v1071, %v1072
  %v1074 = vsel %vm759, %v953, 0.0
  %v1075 = vadd.f32 %v1073, %v1074
  %v1076 = vsel %vm759, %v954, 0.0
  %v1077 = vadd.f32 %v1075, %v1076
  %v1078 = vsel %vm759, %v955, 0.0
  %v1079 = vadd.f32 %v1077, %v1078
  %v1080 = vsel %vm759, %v956, 0.0
  %v1081 = vadd.f32 %v1079, %v1080
  %v1082 = vsel %vm759, %v957, 0.0
  %v1083 = vadd.f32 %v1081, %v1082
  %v1084 = vsel %vm759, %v958, 0.0
  %v1085 = vadd.f32 %v1083, %v1084
  %v1086 = vrot.slane %v1085, 4
  %v1087 = vadd.f32 %v1085, %v1086
  %v1088 = vrot.slane %v1087, 2
  %v1089 = vadd.f32 %v1087, %v1088
  %v1090 = vrot.slane %v1089, 1
  %v1091 = vadd.f32 %v1089, %v1090
  %1092 = vst.msk [vmem:[%s4] sm:$0x1] %vm893, %v1091
  %v1093 = vpack.c.bf16 %v600, %v600
  %v1094 = vpack.c.bf16 %v602, %v602
  %v1095 = vpack.c.bf16 %v605, %v605
  %v1096 = vpack.c.bf16 %v607, %v607
  %v1097 = vpack.c.bf16 %v610, %v610
  %v1098 = vpack.c.bf16 %v612, %v612
  %v1099 = vpack.c.bf16 %v615, %v615
  %v1100 = vpack.c.bf16 %v617, %v617
  %v1101 = vpack.c.bf16 %v620, %v620
  %v1102 = vpack.c.bf16 %v622, %v622
  %v1103 = vpack.c.bf16 %v625, %v625
  %v1104 = vpack.c.bf16 %v627, %v627
  %v1105 = vpack.c.bf16 %v630, %v630
  %v1106 = vpack.c.bf16 %v632, %v632
  %v1107 = vpack.c.bf16 %v635, %v635
  %v1108 = vpack.c.bf16 %v637, %v637
  %v1109 = vpack.c.bf16 %v640, %v640
  %v1110 = vpack.c.bf16 %v642, %v642
  %v1111 = vpack.c.bf16 %v645, %v645
  %v1112 = vpack.c.bf16 %v647, %v647
  %v1113 = vpack.c.bf16 %v650, %v650
  %v1114 = vpack.c.bf16 %v652, %v652
  %v1115 = vpack.c.bf16 %v655, %v655
  %v1116 = vpack.c.bf16 %v657, %v657
  %v1117 = vpack.c.bf16 %v660, %v660
  %v1118 = vpack.c.bf16 %v662, %v662
  %v1119 = vpack.c.bf16 %v665, %v665
  %v1120 = vpack.c.bf16 %v667, %v667
  %v1121 = vpack.c.bf16 %v670, %v670
  %v1122 = vpack.c.bf16 %v672, %v672
  %v1123 = vpack.c.bf16 %v675, %v675
  %v1124 = vpack.c.bf16 %v677, %v677
  %v1125 = vpack.c.bf16 %v680, %v680
  %v1126 = vpack.c.bf16 %v682, %v682
  %v1127 = vpack.c.bf16 %v685, %v685
  %v1128 = vpack.c.bf16 %v687, %v687
  %v1129 = vpack.c.bf16 %v690, %v690
  %v1130 = vpack.c.bf16 %v692, %v692
  %v1131 = vpack.c.bf16 %v695, %v695
  %v1132 = vpack.c.bf16 %v697, %v697
  %v1133 = vpack.c.bf16 %v700, %v700
  %v1134 = vpack.c.bf16 %v702, %v702
  %v1135 = vpack.c.bf16 %v705, %v705
  %v1136 = vpack.c.bf16 %v707, %v707
  %v1137 = vpack.c.bf16 %v710, %v710
  %v1138 = vpack.c.bf16 %v712, %v712
  %v1139 = vpack.c.bf16 %v715, %v715
  %v1140 = vpack.c.bf16 %v717, %v717
  %v1141 = vpack.c.bf16 %v720, %v720
  %v1142 = vpack.c.bf16 %v722, %v722
  %v1143 = vpack.c.bf16 %v725, %v725
  %v1144 = vpack.c.bf16 %v727, %v727
  %v1145 = vpack.c.bf16 %v730, %v730
  %v1146 = vpack.c.bf16 %v732, %v732
  %v1147 = vpack.c.bf16 %v735, %v735
  %v1148 = vpack.c.bf16 %v737, %v737
  %v1149 = vpack.c.bf16 %v740, %v740
  %v1150 = vpack.c.bf16 %v742, %v742
  %v1151 = vpack.c.bf16 %v745, %v745
  %v1152 = vpack.c.bf16 %v747, %v747
  %v1153 = vpack.c.bf16 %v750, %v750
  %v1154 = vpack.c.bf16 %v752, %v752
  %v1155 = vpack.c.bf16 %v755, %v755
  %v1156 = vpack.c.bf16 %v757, %v757
  %vm1157 = vcmask 125952
  %1158 = vst.msk [vmem:[%s2] sm:$0xf] %vm1157, %v1093
  %1159 = vst.msk [vmem:[%s2 + $0x4] sm:$0xf] %vm1157, %v1094
  %1160 = vst.msk [vmem:[%s2 + $0x8] sm:$0xf] %vm1157, %v1095
  %1161 = vst.msk [vmem:[%s2 + $0xc] sm:$0xf] %vm1157, %v1096
  %1162 = vst.msk [vmem:[%s2 + $0x10] sm:$0xf] %vm1157, %v1097
  %1163 = vst.msk [vmem:[%s2 + $0x14] sm:$0xf] %vm1157, %v1098
  %1164 = vst.msk [vmem:[%s2 + $0x18] sm:$0xf] %vm1157, %v1099
  %1165 = vst.msk [vmem:[%s2 + $0x1c] sm:$0xf] %vm1157, %v1100
  %1166 = vst.msk [vmem:[%s2 + $0x20] sm:$0xf] %vm1157, %v1101
  %1167 = vst.msk [vmem:[%s2 + $0x24] sm:$0xf] %vm1157, %v1102
  %1168 = vst.msk [vmem:[%s2 + $0x28] sm:$0xf] %vm1157, %v1103
  %1169 = vst.msk [vmem:[%s2 + $0x2c] sm:$0xf] %vm1157, %v1104
  %1170 = vst.msk [vmem:[%s2 + $0x30] sm:$0xf] %vm1157, %v1105
  %1171 = vst.msk [vmem:[%s2 + $0x34] sm:$0xf] %vm1157, %v1106
  %1172 = vst.msk [vmem:[%s2 + $0x38] sm:$0xf] %vm1157, %v1107
  %1173 = vst.msk [vmem:[%s2 + $0x3c] sm:$0xf] %vm1157, %v1108
  %1174 = vst.msk [vmem:[%s2 + $0x40] sm:$0xf] %vm1157, %v1109
  %1175 = vst.msk [vmem:[%s2 + $0x44] sm:$0xf] %vm1157, %v1110
  %1176 = vst.msk [vmem:[%s2 + $0x48] sm:$0xf] %vm1157, %v1111
  %1177 = vst.msk [vmem:[%s2 + $0x4c] sm:$0xf] %vm1157, %v1112
  %1178 = vst.msk [vmem:[%s2 + $0x50] sm:$0xf] %vm1157, %v1113
  %1179 = vst.msk [vmem:[%s2 + $0x54] sm:$0xf] %vm1157, %v1114
  %1180 = vst.msk [vmem:[%s2 + $0x58] sm:$0xf] %vm1157, %v1115
  %1181 = vst.msk [vmem:[%s2 + $0x5c] sm:$0xf] %vm1157, %v1116
  %1182 = vst.msk [vmem:[%s2 + $0x60] sm:$0xf] %vm1157, %v1117
  %1183 = vst.msk [vmem:[%s2 + $0x64] sm:$0xf] %vm1157, %v1118
  %1184 = vst.msk [vmem:[%s2 + $0x68] sm:$0xf] %vm1157, %v1119
  %1185 = vst.msk [vmem:[%s2 + $0x6c] sm:$0xf] %vm1157, %v1120
  %1186 = vst.msk [vmem:[%s2 + $0x70] sm:$0xf] %vm1157, %v1121
  %1187 = vst.msk [vmem:[%s2 + $0x74] sm:$0xf] %vm1157, %v1122
  %1188 = vst.msk [vmem:[%s2 + $0x78] sm:$0xf] %vm1157, %v1123
  %1189 = vst.msk [vmem:[%s2 + $0x7c] sm:$0xf] %vm1157, %v1124
  %1190 = vst.msk [vmem:[%s2 + $0x80] sm:$0xf] %vm1157, %v1125
  %1191 = vst.msk [vmem:[%s2 + $0x84] sm:$0xf] %vm1157, %v1126
  %1192 = vst.msk [vmem:[%s2 + $0x88] sm:$0xf] %vm1157, %v1127
  %1193 = vst.msk [vmem:[%s2 + $0x8c] sm:$0xf] %vm1157, %v1128
  %1194 = vst.msk [vmem:[%s2 + $0x90] sm:$0xf] %vm1157, %v1129
  %1195 = vst.msk [vmem:[%s2 + $0x94] sm:$0xf] %vm1157, %v1130
  %1196 = vst.msk [vmem:[%s2 + $0x98] sm:$0xf] %vm1157, %v1131
  %1197 = vst.msk [vmem:[%s2 + $0x9c] sm:$0xf] %vm1157, %v1132
  %1198 = vst.msk [vmem:[%s2 + $0xa0] sm:$0xf] %vm1157, %v1133
  %1199 = vst.msk [vmem:[%s2 + $0xa4] sm:$0xf] %vm1157, %v1134
  %1200 = vst.msk [vmem:[%s2 + $0xa8] sm:$0xf] %vm1157, %v1135
  %1201 = vst.msk [vmem:[%s2 + $0xac] sm:$0xf] %vm1157, %v1136
  %1202 = vst.msk [vmem:[%s2 + $0xb0] sm:$0xf] %vm1157, %v1137
  %1203 = vst.msk [vmem:[%s2 + $0xb4] sm:$0xf] %vm1157, %v1138
  %1204 = vst.msk [vmem:[%s2 + $0xb8] sm:$0xf] %vm1157, %v1139
  %1205 = vst.msk [vmem:[%s2 + $0xbc] sm:$0xf] %vm1157, %v1140
  %1206 = vst.msk [vmem:[%s2 + $0xc0] sm:$0xf] %vm1157, %v1141
  %1207 = vst.msk [vmem:[%s2 + $0xc4] sm:$0xf] %vm1157, %v1142
  %1208 = vst.msk [vmem:[%s2 + $0xc8] sm:$0xf] %vm1157, %v1143
  %1209 = vst.msk [vmem:[%s2 + $0xcc] sm:$0xf] %vm1157, %v1144
  %1210 = vst.msk [vmem:[%s2 + $0xd0] sm:$0xf] %vm1157, %v1145
  %1211 = vst.msk [vmem:[%s2 + $0xd4] sm:$0xf] %vm1157, %v1146
  %1212 = vst.msk [vmem:[%s2 + $0xd8] sm:$0xf] %vm1157, %v1147
  %1213 = vst.msk [vmem:[%s2 + $0xdc] sm:$0xf] %vm1157, %v1148
  %1214 = vst.msk [vmem:[%s2 + $0xe0] sm:$0xf] %vm1157, %v1149
  %1215 = vst.msk [vmem:[%s2 + $0xe4] sm:$0xf] %vm1157, %v1150
  %1216 = vst.msk [vmem:[%s2 + $0xe8] sm:$0xf] %vm1157, %v1151
  %1217 = vst.msk [vmem:[%s2 + $0xec] sm:$0xf] %vm1157, %v1152
  %1218 = vst.msk [vmem:[%s2 + $0xf0] sm:$0xf] %vm1157, %v1153
  %1219 = vst.msk [vmem:[%s2 + $0xf4] sm:$0xf] %vm1157, %v1154
  %1220 = vst.msk [vmem:[%s2 + $0xf8] sm:$0xf] %vm1157, %v1155
  %1221 = vst.msk [vmem:[%s2 + $0xfc] sm:$0xf] %vm1157, %v1156
  // Predicated region
  $region10: #{netD2_forward.6} parent=0 // pred_check
    _
  $region11: #{netD2_forward.6} parent=0 // pred_check_branch
    %1223 = sbr.rel (0) target = $region13
  $region12: #{netD2_forward.6} parent=0 // pred_region
    _
  $region13: #{netD2_forward.6} parent=0 // pred_fallthru
    _
  // Predicated region
  $region14: #{netD2_forward.6} parent=0 // pred_check
    _
  $region15: #{netD2_forward.6} parent=0 // pred_check_branch
    %1225 = sbr.rel (0) target = $region17
  $region16: #{netD2_forward.6} parent=0 // pred_region
    _
  $region17: #{netD2_forward.6} parent=0 // pred_fallthru
    _
  // Predicated region
  $region18: #{netD2_forward.6} parent=0 // pred_check
    _
  $region19: #{netD2_forward.6} parent=0 // pred_check_branch
    %1227 = sbr.rel (0) target = $region21
  $region20: #{netD2_forward.6} parent=0 // pred_region
    _
  $region21: #{netD2_forward.6} parent=0 // pred_fallthru
    _
  // Predicated region
  $region22: #{netD2_forward.6} parent=0 // pred_check
    _
  $region23: #{netD2_forward.6} parent=0 // pred_check_branch
    %1229 = sbr.rel (0) target = $region25
  $region24: #{netD2_forward.6} parent=0 // pred_region
    _
  $region25: #{netD2_forward.6} parent=0 // pred_fallthru
    _
  // Predicated region
  $region26: #{netD2_forward.6} parent=0 // pred_check
    _
  $region27: #{netD2_forward.6} parent=0 // pred_check_branch
    %1231 = sbr.rel (0) target = $region29
  $region28: #{netD2_forward.6} parent=0 // pred_region
    _
  $region29: #{netD2_forward.6} parent=0 // pred_fallthru
    _
  // Predicated region
  $region30: #{netD2_forward.6} parent=0 // pred_check
    _
  $region31: #{netD2_forward.6} parent=0 // pred_check_branch
    %1233 = sbr.rel (0) target = $region33
  $region32: #{netD2_forward.6} parent=0 // pred_region
    _
  $region33: #{netD2_forward.6} parent=0 // pred_fallthru
    _

// kernel: netD2_forward.7
$region0: #{netD2_forward.7}
  #allocation0 [shape = 'u32[]', space=smem, size = 0x4, offset = 0x4, fixed_abs, tag = 'smem constant byte address 0x4 - core index']
  #allocation1 [shape = 'u32[72,128]{1,0:T(1,128)}', space=vmem, size = 0x9000, scoped, tag = 'internal scratch']
  %s0 = inlined_call_operand.vmem [shape: bf16[2,72,128], index: 0, kind: input, shape index: {}]
  %s1 = inlined_call_operand.vmem [shape: bf16[2,128,32], index: 1, kind: input, shape index: {}]
  %s2 = inlined_call_operand.vmem [shape: bf16[128,32], index: 2, kind: output, shape index: {0}]
  %s3 = inlined_call_operand.vmem [shape: f32[1,1,32], index: 3, kind: output, shape index: {1}]
  %s4 = inlined_call_operand.vmem [shape: f32[1,1,32], index: 4, kind: output, shape index: {2}]
  %5 = xla_tuple %s2, %s3, %s4
  %s6 = sld [smem:[#allocation0]]
  $region34: #{netD2_forward.7} parent=0
    _
  %s8 = ssub.s32 1, %s6
  %s9 = scalar_select 0, %s8, %s6
  // Predicated region
  $region2: #{netD2_forward.7} parent=0 // pred_check
    _
  $region3: #{netD2_forward.7} parent=0 // pred_check_branch
    %11 = sbr.rel (0) target = $region5
  $region4: #{netD2_forward.7} parent=0 // pred_region
    _
  $region5: #{netD2_forward.7} parent=0 // pred_fallthru
    _
  // Predicated region
  $region6: #{netD2_forward.7} parent=0 // pred_check
    _
  $region7: #{netD2_forward.7} parent=0 // pred_check_branch
    %13 = sbr.rel (0) target = $region9
  $region8: #{netD2_forward.7} parent=0 // pred_region
    _
  $region9: #{netD2_forward.7} parent=0 // pred_fallthru
    _
  %v14 = vld [vmem:[%s0] sm:$0xf]
  %v15 = vld [vmem:[%s0 + $0x4] sm:$0xf]
  %v16 = vld [vmem:[%s0 + $0x8] sm:$0xf]
  %v17 = vld [vmem:[%s0 + $0xc] sm:$0xf]
  %v18 = vld [vmem:[%s0 + $0x10] sm:$0xf]
  %v19 = vld [vmem:[%s0 + $0x14] sm:$0xf]
  %v20 = vld [vmem:[%s0 + $0x18] sm:$0xf]
  %v21 = vld [vmem:[%s0 + $0x1c] sm:$0xf]
  %v22 = vld [vmem:[%s0 + $0x24] sm:$0xf]
  %v23 = vld [vmem:[%s0 + $0x28] sm:$0xf]
  %v24 = vld [vmem:[%s0 + $0x2c] sm:$0xf]
  %v25 = vld [vmem:[%s0 + $0x30] sm:$0xf]
  %v26 = vld [vmem:[%s0 + $0x34] sm:$0xf]
  %v27 = vld [vmem:[%s0 + $0x38] sm:$0xf]
  %v28 = vld [vmem:[%s0 + $0x3c] sm:$0xf]
  %v29 = vld [vmem:[%s0 + $0x40] sm:$0xf]
  %v30 = vld [vmem:[%s0 + $0x4] sm:$0xf]
  %v31 = vld [vmem:[%s0 + $0x8] sm:$0xf]
  %v32 = vld [vmem:[%s0 + $0xc] sm:$0xf]
  %v33 = vld [vmem:[%s0 + $0x10] sm:$0xf]
  %v34 = vld [vmem:[%s0 + $0x14] sm:$0xf]
  %v35 = vld [vmem:[%s0 + $0x18] sm:$0xf]
  %v36 = vld [vmem:[%s0 + $0x1c] sm:$0xf]
  %v37 = vld [vmem:[%s0 + $0x20] sm:$0xf]
  %v38 = vld [vmem:[%s0 + $0x28] sm:$0xf]
  %v39 = vld [vmem:[%s0 + $0x2c] sm:$0xf]
  %v40 = vld [vmem:[%s0 + $0x30] sm:$0xf]
  %v41 = vld [vmem:[%s0 + $0x34] sm:$0xf]
  %v42 = vld [vmem:[%s0 + $0x38] sm:$0xf]
  %v43 = vld [vmem:[%s0 + $0x3c] sm:$0xf]
  %v44 = vld [vmem:[%s0 + $0x40] sm:$0xf]
  %v45 = vld [vmem:[%s0 + $0x44] sm:$0xf]
  %v46 = vld [vmem:[%s1] sm:$0xf]
  %v47 = vld [vmem:[%s1 + $0x4] sm:$0xf]
  %v48 = vld [vmem:[%s1 + $0x8] sm:$0xf]
  %v49 = vld [vmem:[%s1 + $0xc] sm:$0xf]
  %v50 = vld [vmem:[%s1 + $0x10] sm:$0xf]
  %v51 = vld [vmem:[%s1 + $0x14] sm:$0xf]
  %v52 = vld [vmem:[%s1 + $0x18] sm:$0xf]
  %v53 = vld [vmem:[%s1 + $0x1c] sm:$0xf]
  %v54 = vld [vmem:[%s1 + $0x20] sm:$0xf]
  %v55 = vld [vmem:[%s1 + $0x24] sm:$0xf]
  %v56 = vld [vmem:[%s1 + $0x28] sm:$0xf]
  %v57 = vld [vmem:[%s1 + $0x2c] sm:$0xf]
  %v58 = vld [vmem:[%s1 + $0x30] sm:$0xf]
  %v59 = vld [vmem:[%s1 + $0x34] sm:$0xf]
  %v60 = vld [vmem:[%s1 + $0x38] sm:$0xf]
  %v61 = vld [vmem:[%s1 + $0x3c] sm:$0xf]
  %s62 = scalar_lea.vmem %s1, 64
  %v63 = vld [vmem:[%s62] sm:$0xf]
  %v64 = vld [vmem:[%s62 + $0x4] sm:$0xf]
  %v65 = vld [vmem:[%s62 + $0x8] sm:$0xf]
  %v66 = vld [vmem:[%s62 + $0xc] sm:$0xf]
  %v67 = vld [vmem:[%s62 + $0x10] sm:$0xf]
  %v68 = vld [vmem:[%s62 + $0x14] sm:$0xf]
  %v69 = vld [vmem:[%s62 + $0x18] sm:$0xf]
  %v70 = vld [vmem:[%s62 + $0x1c] sm:$0xf]
  %v71 = vld [vmem:[%s62 + $0x20] sm:$0xf]
  %v72 = vld [vmem:[%s62 + $0x24] sm:$0xf]
  %v73 = vld [vmem:[%s62 + $0x28] sm:$0xf]
  %v74 = vld [vmem:[%s62 + $0x2c] sm:$0xf]
  %v75 = vld [vmem:[%s62 + $0x30] sm:$0xf]
  %v76 = vld [vmem:[%s62 + $0x34] sm:$0xf]
  %v77 = vld [vmem:[%s62 + $0x38] sm:$0xf]
  %v78 = vld [vmem:[%s62 + $0x3c] sm:$0xf]
  %v95 = vunpack.c.l.b16 %v30
  %v96 = vunpack.c.l.b16 %v31
  %v97 = vunpack.c.l.b16 %v32
  %v98 = vunpack.c.l.b16 %v33
  %v99 = vunpack.c.l.b16 %v34
  %v100 = vunpack.c.l.b16 %v35
  %v101 = vunpack.c.l.b16 %v36
  %v102 = vunpack.c.l.b16 %v37
  %v103 = vunpack.c.l.b16 %v38
  %v104 = vunpack.c.l.b16 %v39
  %v105 = vunpack.c.l.b16 %v40
  %v106 = vunpack.c.l.b16 %v41
  %v107 = vunpack.c.l.b16 %v42
  %v108 = vunpack.c.l.b16 %v43
  %v109 = vunpack.c.l.b16 %v44
  %v110 = vunpack.c.l.b16 %v45
  %v111 = vpack.c.b16 %v96, %v95
  %v112 = vpack.c.b16 %v98, %v97
  %v113 = vpack.c.b16 %v100, %v99
  %v114 = vpack.c.b16 %v102, %v101
  %v115 = vpack.c.b16 %v104, %v103
  %v116 = vpack.c.b16 %v106, %v105
  %v117 = vpack.c.b16 %v108, %v107
  %v118 = vpack.c.b16 %v110, %v109
  %v143 = vunpack.c.l.b16 %v63
  %v144 = vunpack.c.l.b16 %v64
  %v145 = vunpack.c.l.b16 %v65
  %v146 = vunpack.c.l.b16 %v66
  %v147 = vunpack.c.l.b16 %v67
  %v148 = vunpack.c.l.b16 %v68
  %v149 = vunpack.c.l.b16 %v69
  %v150 = vunpack.c.l.b16 %v70
  %v151 = vunpack.c.l.b16 %v71
  %v152 = vunpack.c.l.b16 %v72
  %v153 = vunpack.c.l.b16 %v73
  %v154 = vunpack.c.l.b16 %v74
  %v155 = vunpack.c.l.b16 %v75
  %v156 = vunpack.c.l.b16 %v76
  %v157 = vunpack.c.l.b16 %v77
  %v158 = vunpack.c.l.b16 %v78
  %v159 = vpack.c.b16 %v144, %v143
  %v160 = vpack.c.b16 %v146, %v145
  %v161 = vpack.c.b16 %v148, %v147
  %v162 = vpack.c.b16 %v150, %v149
  %v163 = vpack.c.b16 %v152, %v151
  %v164 = vpack.c.b16 %v154, %v153
  %v165 = vpack.c.b16 %v156, %v155
  %v166 = vpack.c.b16 %v158, %v157
  %175 = vmatpush.bf16.msra.mxu0 %v166
  %176 = vmatpush.bf16.msra.mxu0 %v165
  %177 = vmatpush.bf16.msra.mxu0 %v164
  %178 = vmatpush.bf16.msra.mxu0 %v163
  %179 = vmatpush.bf16.msra.mxu0 %v162
  %180 = vmatpush.bf16.msra.mxu0 %v161
  %181 = vmatpush.bf16.msra.mxu0 %v160
  %182 = vmatpush.bf16.msra.mxu0 %v159
  %183 = vmatmul.bf16.gmra.mxu0 %v111
  %v184 = vpop.f32.mrf.mxu0
  %v185 = vadd.f32 0.0, %v184
  %v186 = vpop.f32.mrf.mxu0
  %v187 = vadd.f32 0.0, %v186
  %188 = vmatmul.bf16.gmra.mxu0 %v112
  %v189 = vpop.f32.mrf.mxu0
  %v190 = vadd.f32 0.0, %v189
  %v191 = vpop.f32.mrf.mxu0
  %v192 = vadd.f32 0.0, %v191
  %193 = vmatmul.bf16.gmra.mxu0 %v113
  %v194 = vpop.f32.mrf.mxu0
  %v195 = vadd.f32 0.0, %v194
  %v196 = vpop.f32.mrf.mxu0
  %v197 = vadd.f32 0.0, %v196
  %198 = vmatmul.bf16.gmra.mxu0 %v114
  %v199 = vpop.f32.mrf.mxu0
  %v200 = vadd.f32 0.0, %v199
  %v201 = vpop.f32.mrf.mxu0
  %v202 = vadd.f32 0.0, %v201
  %203 = vmatmul.bf16.gmra.mxu0 %v115
  %v204 = vpop.f32.mrf.mxu0
  %v205 = vadd.f32 0.0, %v204
  %v206 = vpop.f32.mrf.mxu0
  %v207 = vadd.f32 0.0, %v206
  %208 = vmatmul.bf16.gmra.mxu0 %v116
  %v209 = vpop.f32.mrf.mxu0
  %v210 = vadd.f32 0.0, %v209
  %v211 = vpop.f32.mrf.mxu0
  %v212 = vadd.f32 0.0, %v211
  %213 = vmatmul.bf16.gmra.mxu0 %v117
  %v214 = vpop.f32.mrf.mxu0
  %v215 = vadd.f32 0.0, %v214
  %v216 = vpop.f32.mrf.mxu0
  %v217 = vadd.f32 0.0, %v216
  %218 = vmatmul.bf16.gmra.mxu0 %v118
  %v219 = vpop.f32.mrf.mxu0
  %v220 = vadd.f32 0.0, %v219
  %v221 = vpop.f32.mrf.mxu0
  %v222 = vadd.f32 0.0, %v221
  %223 = vdwg.mxu0
  %v240 = vunpack.c.l.b16 %v14
  %v241 = vunpack.c.l.b16 %v15
  %v242 = vunpack.c.l.b16 %v16
  %v243 = vunpack.c.l.b16 %v17
  %v244 = vunpack.c.l.b16 %v18
  %v245 = vunpack.c.l.b16 %v19
  %v246 = vunpack.c.l.b16 %v20
  %v247 = vunpack.c.l.b16 %v21
  %v248 = vunpack.c.l.b16 %v22
  %v249 = vunpack.c.l.b16 %v23
  %v250 = vunpack.c.l.b16 %v24
  %v251 = vunpack.c.l.b16 %v25
  %v252 = vunpack.c.l.b16 %v26
  %v253 = vunpack.c.l.b16 %v27
  %v254 = vunpack.c.l.b16 %v28
  %v255 = vunpack.c.l.b16 %v29
  %v256 = vpack.c.b16 %v241, %v240
  %v257 = vpack.c.b16 %v243, %v242
  %v258 = vpack.c.b16 %v245, %v244
  %v259 = vpack.c.b16 %v247, %v246
  %v260 = vpack.c.b16 %v249, %v248
  %v261 = vpack.c.b16 %v251, %v250
  %v262 = vpack.c.b16 %v253, %v252
  %v263 = vpack.c.b16 %v255, %v254
  %v288 = vunpack.c.l.b16 %v46
  %v289 = vunpack.c.l.b16 %v47
  %v290 = vunpack.c.l.b16 %v48
  %v291 = vunpack.c.l.b16 %v49
  %v292 = vunpack.c.l.b16 %v50
  %v293 = vunpack.c.l.b16 %v51
  %v294 = vunpack.c.l.b16 %v52
  %v295 = vunpack.c.l.b16 %v53
  %v296 = vunpack.c.l.b16 %v54
  %v297 = vunpack.c.l.b16 %v55
  %v298 = vunpack.c.l.b16 %v56
  %v299 = vunpack.c.l.b16 %v57
  %v300 = vunpack.c.l.b16 %v58
  %v301 = vunpack.c.l.b16 %v59
  %v302 = vunpack.c.l.b16 %v60
  %v303 = vunpack.c.l.b16 %v61
  %v304 = vpack.c.b16 %v289, %v288
  %v305 = vpack.c.b16 %v291, %v290
  %v306 = vpack.c.b16 %v293, %v292
  %v307 = vpack.c.b16 %v295, %v294
  %v308 = vpack.c.b16 %v297, %v296
  %v309 = vpack.c.b16 %v299, %v298
  %v310 = vpack.c.b16 %v301, %v300
  %v311 = vpack.c.b16 %v303, %v302
  %320 = vmatpush.bf16.msra.mxu0 %v311
  %321 = vmatpush.bf16.msra.mxu0 %v310
  %322 = vmatpush.bf16.msra.mxu0 %v309
  %323 = vmatpush.bf16.msra.mxu0 %v308
  %324 = vmatpush.bf16.msra.mxu0 %v307
  %325 = vmatpush.bf16.msra.mxu0 %v306
  %326 = vmatpush.bf16.msra.mxu0 %v305
  %327 = vmatpush.bf16.msra.mxu0 %v304
  %328 = vmatmul.bf16.gmra.mxu0 %v256
  %v329 = vpop.f32.mrf.mxu0
  %v330 = vadd.f32 %v185, %v329
  %v331 = vpop.f32.mrf.mxu0
  %v332 = vadd.f32 %v187, %v331
  %333 = vmatmul.bf16.gmra.mxu0 %v257
  %v334 = vpop.f32.mrf.mxu0
  %v335 = vadd.f32 %v190, %v334
  %v336 = vpop.f32.mrf.mxu0
  %v337 = vadd.f32 %v192, %v336
  %338 = vmatmul.bf16.gmra.mxu0 %v258
  %v339 = vpop.f32.mrf.mxu0
  %v340 = vadd.f32 %v195, %v339
  %v341 = vpop.f32.mrf.mxu0
  %v342 = vadd.f32 %v197, %v341
  %343 = vmatmul.bf16.gmra.mxu0 %v259
  %v344 = vpop.f32.mrf.mxu0
  %v345 = vadd.f32 %v200, %v344
  %v346 = vpop.f32.mrf.mxu0
  %v347 = vadd.f32 %v202, %v346
  %348 = vmatmul.bf16.gmra.mxu0 %v260
  %v349 = vpop.f32.mrf.mxu0
  %v350 = vadd.f32 %v205, %v349
  %v351 = vpop.f32.mrf.mxu0
  %v352 = vadd.f32 %v207, %v351
  %353 = vmatmul.bf16.gmra.mxu0 %v261
  %v354 = vpop.f32.mrf.mxu0
  %v355 = vadd.f32 %v210, %v354
  %v356 = vpop.f32.mrf.mxu0
  %v357 = vadd.f32 %v212, %v356
  %358 = vmatmul.bf16.gmra.mxu0 %v262
  %v359 = vpop.f32.mrf.mxu0
  %v360 = vadd.f32 %v215, %v359
  %v361 = vpop.f32.mrf.mxu0
  %v362 = vadd.f32 %v217, %v361
  %363 = vmatmul.bf16.gmra.mxu0 %v263
  %v364 = vpop.f32.mrf.mxu0
  %v365 = vadd.f32 %v220, %v364
  %v366 = vpop.f32.mrf.mxu0
  %v367 = vadd.f32 %v222, %v366
  %368 = vdwg.mxu0
  %vm369 = vcmask 261120
  %v370 = vsel %vm369, %v330, 0.0
  %v371 = vsel %vm369, %v332, 0.0
  %v372 = vadd.f32 %v370, %v371
  %v373 = vsel %vm369, %v335, 0.0
  %v374 = vadd.f32 %v372, %v373
  %v375 = vsel %vm369, %v337, 0.0
  %v376 = vadd.f32 %v374, %v375
  %v377 = vsel %vm369, %v340, 0.0
  %v378 = vadd.f32 %v376, %v377
  %v379 = vsel %vm369, %v342, 0.0
  %v380 = vadd.f32 %v378, %v379
  %v381 = vsel %vm369, %v345, 0.0
  %v382 = vadd.f32 %v380, %v381
  %v383 = vsel %vm369, %v347, 0.0
  %v384 = vadd.f32 %v382, %v383
  %v385 = vsel %vm369, %v350, 0.0
  %v386 = vadd.f32 %v384, %v385
  %v387 = vsel %vm369, %v352, 0.0
  %v388 = vadd.f32 %v386, %v387
  %v389 = vsel %vm369, %v355, 0.0
  %v390 = vadd.f32 %v388, %v389
  %v391 = vsel %vm369, %v357, 0.0
  %v392 = vadd.f32 %v390, %v391
  %v393 = vsel %vm369, %v360, 0.0
  %v394 = vadd.f32 %v392, %v393
  %v395 = vsel %vm369, %v362, 0.0
  %v396 = vadd.f32 %v394, %v395
  %v397 = vsel %vm369, %v365, 0.0
  %v398 = vadd.f32 %v396, %v397
  %v399 = vsel %vm369, %v367, 0.0
  %v400 = vadd.f32 %v398, %v399
  %v401 = vrot.slane %v400, 4
  %v402 = vadd.f32 %v400, %v401
  %v403 = vrot.slane %v402, 2
  %v404 = vadd.f32 %v402, %v403
  %v405 = vrot.slane %v404, 1
  %v406 = vadd.f32 %v404, %v405
  %vm407 = vcmask 253952
  %408 = vst.msk [vmem:[%s3] sm:$0x1] %vm407, %v406
  %v409 = vmul.f32 %v330, %v330
  %v410 = vmul.f32 %v332, %v332
  %v411 = vmul.f32 %v335, %v335
  %v412 = vmul.f32 %v337, %v337
  %v413 = vmul.f32 %v340, %v340
  %v414 = vmul.f32 %v342, %v342
  %v415 = vmul.f32 %v345, %v345
  %v416 = vmul.f32 %v347, %v347
  %v417 = vmul.f32 %v350, %v350
  %v418 = vmul.f32 %v352, %v352
  %v419 = vmul.f32 %v355, %v355
  %v420 = vmul.f32 %v357, %v357
  %v421 = vmul.f32 %v360, %v360
  %v422 = vmul.f32 %v362, %v362
  %v423 = vmul.f32 %v365, %v365
  %v424 = vmul.f32 %v367, %v367
  %v425 = vsel %vm369, %v409, 0.0
  %v426 = vsel %vm369, %v410, 0.0
  %v427 = vadd.f32 %v425, %v426
  %v428 = vsel %vm369, %v411, 0.0
  %v429 = vadd.f32 %v427, %v428
  %v430 = vsel %vm369, %v412, 0.0
  %v431 = vadd.f32 %v429, %v430
  %v432 = vsel %vm369, %v413, 0.0
  %v433 = vadd.f32 %v431, %v432
  %v434 = vsel %vm369, %v414, 0.0
  %v435 = vadd.f32 %v433, %v434
  %v436 = vsel %vm369, %v415, 0.0
  %v437 = vadd.f32 %v435, %v436
  %v438 = vsel %vm369, %v416, 0.0
  %v439 = vadd.f32 %v437, %v438
  %v440 = vsel %vm369, %v417, 0.0
  %v441 = vadd.f32 %v439, %v440
  %v442 = vsel %vm369, %v418, 0.0
  %v443 = vadd.f32 %v441, %v442
  %v444 = vsel %vm369, %v419, 0.0
  %v445 = vadd.f32 %v443, %v444
  %v446 = vsel %vm369, %v420, 0.0
  %v447 = vadd.f32 %v445, %v446
  %v448 = vsel %vm369, %v421, 0.0
  %v449 = vadd.f32 %v447, %v448
  %v450 = vsel %vm369, %v422, 0.0
  %v451 = vadd.f32 %v449, %v450
  %v452 = vsel %vm369, %v423, 0.0
  %v453 = vadd.f32 %v451, %v452
  %v454 = vsel %vm369, %v424, 0.0
  %v455 = vadd.f32 %v453, %v454
  %v456 = vrot.slane %v455, 4
  %v457 = vadd.f32 %v455, %v456
  %v458 = vrot.slane %v457, 2
  %v459 = vadd.f32 %v457, %v458
  %v460 = vrot.slane %v459, 1
  %v461 = vadd.f32 %v459, %v460
  %462 = vst.msk [vmem:[%s4] sm:$0x1] %vm407, %v461
  %v463 = vpack.c.bf16 %v330, %v330
  %v464 = vpack.c.bf16 %v332, %v332
  %v465 = vpack.c.bf16 %v335, %v335
  %v466 = vpack.c.bf16 %v337, %v337
  %v467 = vpack.c.bf16 %v340, %v340
  %v468 = vpack.c.bf16 %v342, %v342
  %v469 = vpack.c.bf16 %v345, %v345
  %v470 = vpack.c.bf16 %v347, %v347
  %v471 = vpack.c.bf16 %v350, %v350
  %v472 = vpack.c.bf16 %v352, %v352
  %v473 = vpack.c.bf16 %v355, %v355
  %v474 = vpack.c.bf16 %v357, %v357
  %v475 = vpack.c.bf16 %v360, %v360
  %v476 = vpack.c.bf16 %v362, %v362
  %v477 = vpack.c.bf16 %v365, %v365
  %v478 = vpack.c.bf16 %v367, %v367
  %vm479 = vcmask 257024
  %480 = vst.msk [vmem:[%s2] sm:$0xf] %vm479, %v463
  %481 = vst.msk [vmem:[%s2 + $0x4] sm:$0xf] %vm479, %v464
  %482 = vst.msk [vmem:[%s2 + $0x8] sm:$0xf] %vm479, %v465
  %483 = vst.msk [vmem:[%s2 + $0xc] sm:$0xf] %vm479, %v466
  %484 = vst.msk [vmem:[%s2 + $0x10] sm:$0xf] %vm479, %v467
  %485 = vst.msk [vmem:[%s2 + $0x14] sm:$0xf] %vm479, %v468
  %486 = vst.msk [vmem:[%s2 + $0x18] sm:$0xf] %vm479, %v469
  %487 = vst.msk [vmem:[%s2 + $0x1c] sm:$0xf] %vm479, %v470
  %488 = vst.msk [vmem:[%s2 + $0x20] sm:$0xf] %vm479, %v471
  %489 = vst.msk [vmem:[%s2 + $0x24] sm:$0xf] %vm479, %v472
  %490 = vst.msk [vmem:[%s2 + $0x28] sm:$0xf] %vm479, %v473
  %491 = vst.msk [vmem:[%s2 + $0x2c] sm:$0xf] %vm479, %v474
  %492 = vst.msk [vmem:[%s2 + $0x30] sm:$0xf] %vm479, %v475
  %493 = vst.msk [vmem:[%s2 + $0x34] sm:$0xf] %vm479, %v476
  %494 = vst.msk [vmem:[%s2 + $0x38] sm:$0xf] %vm479, %v477
  %495 = vst.msk [vmem:[%s2 + $0x3c] sm:$0xf] %vm479, %v478
  // Predicated region
  $region10: #{netD2_forward.7} parent=0 // pred_check
    _
  $region11: #{netD2_forward.7} parent=0 // pred_check_branch
    %497 = sbr.rel (0) target = $region13
  $region12: #{netD2_forward.7} parent=0 // pred_region
    _
  $region13: #{netD2_forward.7} parent=0 // pred_fallthru
    _
  // Predicated region
  $region14: #{netD2_forward.7} parent=0 // pred_check
    _
  $region15: #{netD2_forward.7} parent=0 // pred_check_branch
    %499 = sbr.rel (0) target = $region17
  $region16: #{netD2_forward.7} parent=0 // pred_region
    _
  $region17: #{netD2_forward.7} parent=0 // pred_fallthru
    _
  // Predicated region
  $region18: #{netD2_forward.7} parent=0 // pred_check
    _
  $region19: #{netD2_forward.7} parent=0 // pred_check_branch
    %501 = sbr.rel (0) target = $region21
  $region20: #{netD2_forward.7} parent=0 // pred_region
    _
  $region21: #{netD2_forward.7} parent=0 // pred_fallthru
    _
  // Predicated region
  $region22: #{netD2_forward.7} parent=0 // pred_check
    _
  $region23: #{netD2_forward.7} parent=0 // pred_check_branch
    %503 = sbr.rel (0) target = $region25
  $region24: #{netD2_forward.7} parent=0 // pred_region
    _
  $region25: #{netD2_forward.7} parent=0 // pred_fallthru
    _
  // Predicated region
  $region26: #{netD2_forward.7} parent=0 // pred_check
    _
  $region27: #{netD2_forward.7} parent=0 // pred_check_branch
    %505 = sbr.rel (0) target = $region29
  $region28: #{netD2_forward.7} parent=0 // pred_region
    _
  $region29: #{netD2_forward.7} parent=0 // pred_fallthru
    _
  // Predicated region
  $region30: #{netD2_forward.7} parent=0 // pred_check
    _
  $region31: #{netD2_forward.7} parent=0 // pred_check_branch
    %507 = sbr.rel (0) target = $region33
  $region32: #{netD2_forward.7} parent=0 // pred_region
    _
  $region33: #{netD2_forward.7} parent=0 // pred_fallthru
    _

// kernel: netD2_forward.8
$region0: #{netD2_forward.8}
  #allocation0 [shape = 'u32[]', space=smem, size = 0x4, offset = 0x4, fixed_abs, tag = 'smem constant byte address 0x4 - core index']
  #allocation1 [shape = 'u32[72,128]{1,0:T(1,128)}', space=vmem, size = 0x9000, scoped, tag = 'internal scratch']
  %s0 = inlined_call_operand.vmem [shape: bf16[2,20,256], index: 0, kind: input, shape index: {}]
  %s1 = inlined_call_operand.vmem [shape: bf16[2,256,64], index: 1, kind: input, shape index: {}]
  %s2 = inlined_call_operand.vmem [shape: bf16[32,64], index: 2, kind: output, shape index: {0}]
  %s3 = inlined_call_operand.vmem [shape: f32[1,1,64], index: 3, kind: output, shape index: {1}]
  %s4 = inlined_call_operand.vmem [shape: f32[1,1,64], index: 4, kind: output, shape index: {2}]
  %5 = xla_tuple %s2, %s3, %s4
  %s6 = sld [smem:[#allocation0]]
  $region34: #{netD2_forward.8} parent=0
    _
  %s8 = ssub.s32 1, %s6
  %s9 = scalar_select 0, %s8, %s6
  // Predicated region
  $region2: #{netD2_forward.8} parent=0 // pred_check
    _
  $region3: #{netD2_forward.8} parent=0 // pred_check_branch
    %11 = sbr.rel (0) target = $region5
  $region4: #{netD2_forward.8} parent=0 // pred_region
    _
  $region5: #{netD2_forward.8} parent=0 // pred_fallthru
    _
  // Predicated region
  $region6: #{netD2_forward.8} parent=0 // pred_check
    _
  $region7: #{netD2_forward.8} parent=0 // pred_check_branch
    %13 = sbr.rel (0) target = $region9
  $region8: #{netD2_forward.8} parent=0 // pred_region
    _
  $region9: #{netD2_forward.8} parent=0 // pred_fallthru
    _
  %v14 = vld [vmem:[%s0] sm:$0xff]
  %v15 = vld [vmem:[%s0 + $0x8] sm:$0xff]
  %v16 = vld [vmem:[%s0 + $0x18] sm:$0xff]
  %v17 = vld [vmem:[%s0 + $0x20] sm:$0xff]
  %v18 = vld [vmem:[%s0] sm:$0xcc]
  %v19 = vld [vmem:[%s0 + $0x10] sm:$0x33]
  %v20 = vld [vmem:[%s0 + $0x18] sm:$0xcc]
  %v21 = vld [vmem:[%s0 + $0x28] sm:$0x33]
  %vm28 = vcmask 1041408
  %vm29 = vcmask 1045508
  %vm30 = vmor %vm28, %vm29
  %v31 = vrot.slane %v18, 6
  %v32 = vrot.slane %v31, 4
  %v33 = vrot.slane %v15, 6
  %v34 = vsel %vm30, %v32, %v33
  %v35 = vrot.slane %v33, 4
  %v36 = vrot.slane %v19, 6
  %v37 = vsel %vm30, %v35, %v36
  %v38 = vrot.slane %v20, 6
  %v39 = vrot.slane %v38, 4
  %v40 = vrot.slane %v17, 6
  %v41 = vsel %vm30, %v39, %v40
  %v42 = vrot.slane %v40, 4
  %v43 = vrot.slane %v21, 6
  %v44 = vsel %vm30, %v42, %v43
  %v45 = vld [vmem:[%s1] sm:$0xf]
  %v46 = vld [vmem:[%s1 + $0x4] sm:$0xf]
  %v47 = vld [vmem:[%s1 + $0x8] sm:$0xf]
  %v48 = vld [vmem:[%s1 + $0xc] sm:$0xf]
  %v49 = vld [vmem:[%s1 + $0x10] sm:$0xf]
  %v50 = vld [vmem:[%s1 + $0x14] sm:$0xf]
  %v51 = vld [vmem:[%s1 + $0x18] sm:$0xf]
  %v52 = vld [vmem:[%s1 + $0x1c] sm:$0xf]
  %v53 = vld [vmem:[%s1 + $0x20] sm:$0xf]
  %v54 = vld [vmem:[%s1 + $0x24] sm:$0xf]
  %v55 = vld [vmem:[%s1 + $0x28] sm:$0xf]
  %v56 = vld [vmem:[%s1 + $0x2c] sm:$0xf]
  %v57 = vld [vmem:[%s1 + $0x30] sm:$0xf]
  %v58 = vld [vmem:[%s1 + $0x34] sm:$0xf]
  %v59 = vld [vmem:[%s1 + $0x38] sm:$0xf]
  %v60 = vld [vmem:[%s1 + $0x3c] sm:$0xf]
  %v61 = vld [vmem:[%s1 + $0x40] sm:$0xf]
  %v62 = vld [vmem:[%s1 + $0x44] sm:$0xf]
  %v63 = vld [vmem:[%s1 + $0x48] sm:$0xf]
  %v64 = vld [vmem:[%s1 + $0x4c] sm:$0xf]
  %v65 = vld [vmem:[%s1 + $0x50] sm:$0xf]
  %v66 = vld [vmem:[%s1 + $0x54] sm:$0xf]
  %v67 = vld [vmem:[%s1 + $0x58] sm:$0xf]
  %v68 = vld [vmem:[%s1 + $0x5c] sm:$0xf]
  %v69 = vld [vmem:[%s1 + $0x60] sm:$0xf]
  %v70 = vld [vmem:[%s1 + $0x64] sm:$0xf]
  %v71 = vld [vmem:[%s1 + $0x68] sm:$0xf]
  %v72 = vld [vmem:[%s1 + $0x6c] sm:$0xf]
  %v73 = vld [vmem:[%s1 + $0x70] sm:$0xf]
  %v74 = vld [vmem:[%s1 + $0x74] sm:$0xf]
  %v75 = vld [vmem:[%s1 + $0x78] sm:$0xf]
  %v76 = vld [vmem:[%s1 + $0x7c] sm:$0xf]
  %s77 = scalar_lea.vmem %s1, 128
  %v78 = vld [vmem:[%s77] sm:$0xf]
  %v79 = vld [vmem:[%s77 + $0x4] sm:$0xf]
  %v80 = vld [vmem:[%s77 + $0x8] sm:$0xf]
  %v81 = vld [vmem:[%s77 + $0xc] sm:$0xf]
  %v82 = vld [vmem:[%s77 + $0x10] sm:$0xf]
  %v83 = vld [vmem:[%s77 + $0x14] sm:$0xf]
  %v84 = vld [vmem:[%s77 + $0x18] sm:$0xf]
  %v85 = vld [vmem:[%s77 + $0x1c] sm:$0xf]
  %v86 = vld [vmem:[%s77 + $0x20] sm:$0xf]
  %v87 = vld [vmem:[%s77 + $0x24] sm:$0xf]
  %v88 = vld [vmem:[%s77 + $0x28] sm:$0xf]
  %v89 = vld [vmem:[%s77 + $0x2c] sm:$0xf]
  %v90 = vld [vmem:[%s77 + $0x30] sm:$0xf]
  %v91 = vld [vmem:[%s77 + $0x34] sm:$0xf]
  %v92 = vld [vmem:[%s77 + $0x38] sm:$0xf]
  %v93 = vld [vmem:[%s77 + $0x3c] sm:$0xf]
  %v94 = vld [vmem:[%s77 + $0x40] sm:$0xf]
  %v95 = vld [vmem:[%s77 + $0x44] sm:$0xf]
  %v96 = vld [vmem:[%s77 + $0x48] sm:$0xf]
  %v97 = vld [vmem:[%s77 + $0x4c] sm:$0xf]
  %v98 = vld [vmem:[%s77 + $0x50] sm:$0xf]
  %v99 = vld [vmem:[%s77 + $0x54] sm:$0xf]
  %v100 = vld [vmem:[%s77 + $0x58] sm:$0xf]
  %v101 = vld [vmem:[%s77 + $0x5c] sm:$0xf]
  %v102 = vld [vmem:[%s77 + $0x60] sm:$0xf]
  %v103 = vld [vmem:[%s77 + $0x64] sm:$0xf]
  %v104 = vld [vmem:[%s77 + $0x68] sm:$0xf]
  %v105 = vld [vmem:[%s77 + $0x6c] sm:$0xf]
  %v106 = vld [vmem:[%s77 + $0x70] sm:$0xf]
  %v107 = vld [vmem:[%s77 + $0x74] sm:$0xf]
  %v108 = vld [vmem:[%s77 + $0x78] sm:$0xf]
  %v109 = vld [vmem:[%s77 + $0x7c] sm:$0xf]
  %v110 = vunpack.c.l.b16 %v34
  %v111 = vunpack.c.h.b16 %v34
  %v112 = vunpack.c.l.b16 %v37
  %v113 = vunpack.c.h.b16 %v37
  %v114 = vunpack.c.l.b16 %v41
  %v115 = vunpack.c.h.b16 %v41
  %v116 = vunpack.c.l.b16 %v44
  %v117 = vunpack.c.h.b16 %v44
  %v118 = vpack.c.b16 %v112, %v110
  %v119 = vpack.c.b16 %v113, %v111
  %v120 = vpack.c.b16 %v116, %v114
  %v121 = vpack.c.b16 %v117, %v115
  %v158 = vunpack.c.l.b16 %v78
  %v159 = vunpack.c.l.b16 %v79
  %v160 = vunpack.c.l.b16 %v80
  %v161 = vunpack.c.l.b16 %v81
  %v162 = vunpack.c.l.b16 %v82
  %v163 = vunpack.c.l.b16 %v83
  %v164 = vunpack.c.l.b16 %v84
  %v165 = vunpack.c.l.b16 %v85
  %v166 = vunpack.c.l.b16 %v86
  %v167 = vunpack.c.l.b16 %v87
  %v168 = vunpack.c.l.b16 %v88
  %v169 = vunpack.c.l.b16 %v89
  %v170 = vunpack.c.l.b16 %v90
  %v171 = vunpack.c.l.b16 %v91
  %v172 = vunpack.c.l.b16 %v92
  %v173 = vunpack.c.l.b16 %v93
  %v174 = vunpack.c.l.b16 %v94
  %v175 = vunpack.c.l.b16 %v95
  %v176 = vunpack.c.l.b16 %v96
  %v177 = vunpack.c.l.b16 %v97
  %v178 = vunpack.c.l.b16 %v98
  %v179 = vunpack.c.l.b16 %v99
  %v180 = vunpack.c.l.b16 %v100
  %v181 = vunpack.c.l.b16 %v101
  %v182 = vunpack.c.l.b16 %v102
  %v183 = vunpack.c.l.b16 %v103
  %v184 = vunpack.c.l.b16 %v104
  %v185 = vunpack.c.l.b16 %v105
  %v186 = vunpack.c.l.b16 %v106
  %v187 = vunpack.c.l.b16 %v107
  %v188 = vunpack.c.l.b16 %v108
  %v189 = vunpack.c.l.b16 %v109
  %v190 = vpack.c.b16 %v159, %v158
  %v191 = vpack.c.b16 %v161, %v160
  %v192 = vpack.c.b16 %v163, %v162
  %v193 = vpack.c.b16 %v165, %v164
  %v194 = vpack.c.b16 %v167, %v166
  %v195 = vpack.c.b16 %v169, %v168
  %v196 = vpack.c.b16 %v171, %v170
  %v197 = vpack.c.b16 %v173, %v172
  %v198 = vpack.c.b16 %v175, %v174
  %v199 = vpack.c.b16 %v177, %v176
  %v200 = vpack.c.b16 %v179, %v178
  %v201 = vpack.c.b16 %v181, %v180
  %v202 = vpack.c.b16 %v183, %v182
  %v203 = vpack.c.b16 %v185, %v184
  %v204 = vpack.c.b16 %v187, %v186
  %v205 = vpack.c.b16 %v189, %v188
  %222 = vmatpush.bf16.msra.mxu0 %v197
  %223 = vmatpush.bf16.msra.mxu0 %v196
  %224 = vmatpush.bf16.msra.mxu0 %v195
  %225 = vmatpush.bf16.msra.mxu0 %v194
  %226 = vmatpush.bf16.msra.mxu0 %v193
  %227 = vmatpush.bf16.msra.mxu0 %v192
  %228 = vmatpush.bf16.msra.mxu0 %v191
  %229 = vmatpush.bf16.msra.mxu0 %v190
  %230 = vmatmul.bf16.gmra.mxu0 %v118
  %v231 = vpop.f32.mrf.mxu0
  %v232 = vadd.f32 0.0, %v231
  %v233 = vpop.f32.mrf.mxu0
  %v234 = vadd.f32 0.0, %v233
  %235 = vmatmul.bf16.gmra.mxu0 %v120
  %v236 = vpop.f32.mrf.mxu0
  %v237 = vadd.f32 0.0, %v236
  %v238 = vpop.f32.mrf.mxu0
  %v239 = vadd.f32 0.0, %v238
  %240 = vdwg.mxu0
  %241 = vmatpush.bf16.msra.mxu0 %v205
  %242 = vmatpush.bf16.msra.mxu0 %v204
  %243 = vmatpush.bf16.msra.mxu0 %v203
  %244 = vmatpush.bf16.msra.mxu0 %v202
  %245 = vmatpush.bf16.msra.mxu0 %v201
  %246 = vmatpush.bf16.msra.mxu0 %v200
  %247 = vmatpush.bf16.msra.mxu0 %v199
  %248 = vmatpush.bf16.msra.mxu0 %v198
  %249 = vmatmul.bf16.gmra.mxu0 %v119
  %v250 = vpop.f32.mrf.mxu0
  %v251 = vadd.f32 %v232, %v250
  %v252 = vpop.f32.mrf.mxu0
  %v253 = vadd.f32 %v234, %v252
  %254 = vmatmul.bf16.gmra.mxu0 %v121
  %v255 = vpop.f32.mrf.mxu0
  %v256 = vadd.f32 %v237, %v255
  %v257 = vpop.f32.mrf.mxu0
  %v258 = vadd.f32 %v239, %v257
  %259 = vdwg.mxu0
  %v262 = vunpack.c.l.b16 %v14
  %v263 = vunpack.c.h.b16 %v14
  %v264 = vunpack.c.l.b16 %v15
  %v265 = vunpack.c.h.b16 %v15
  %v266 = vunpack.c.l.b16 %v16
  %v267 = vunpack.c.h.b16 %v16
  %v268 = vunpack.c.l.b16 %v17
  %v269 = vunpack.c.h.b16 %v17
  %v270 = vpack.c.b16 %v264, %v262
  %v271 = vpack.c.b16 %v265, %v263
  %v272 = vpack.c.b16 %v268, %v266
  %v273 = vpack.c.b16 %v269, %v267
  %v310 = vunpack.c.l.b16 %v45
  %v311 = vunpack.c.l.b16 %v46
  %v312 = vunpack.c.l.b16 %v47
  %v313 = vunpack.c.l.b16 %v48
  %v314 = vunpack.c.l.b16 %v49
  %v315 = vunpack.c.l.b16 %v50
  %v316 = vunpack.c.l.b16 %v51
  %v317 = vunpack.c.l.b16 %v52
  %v318 = vunpack.c.l.b16 %v53
  %v319 = vunpack.c.l.b16 %v54
  %v320 = vunpack.c.l.b16 %v55
  %v321 = vunpack.c.l.b16 %v56
  %v322 = vunpack.c.l.b16 %v57
  %v323 = vunpack.c.l.b16 %v58
  %v324 = vunpack.c.l.b16 %v59
  %v325 = vunpack.c.l.b16 %v60
  %v326 = vunpack.c.l.b16 %v61
  %v327 = vunpack.c.l.b16 %v62
  %v328 = vunpack.c.l.b16 %v63
  %v329 = vunpack.c.l.b16 %v64
  %v330 = vunpack.c.l.b16 %v65
  %v331 = vunpack.c.l.b16 %v66
  %v332 = vunpack.c.l.b16 %v67
  %v333 = vunpack.c.l.b16 %v68
  %v334 = vunpack.c.l.b16 %v69
  %v335 = vunpack.c.l.b16 %v70
  %v336 = vunpack.c.l.b16 %v71
  %v337 = vunpack.c.l.b16 %v72
  %v338 = vunpack.c.l.b16 %v73
  %v339 = vunpack.c.l.b16 %v74
  %v340 = vunpack.c.l.b16 %v75
  %v341 = vunpack.c.l.b16 %v76
  %v342 = vpack.c.b16 %v311, %v310
  %v343 = vpack.c.b16 %v313, %v312
  %v344 = vpack.c.b16 %v315, %v314
  %v345 = vpack.c.b16 %v317, %v316
  %v346 = vpack.c.b16 %v319, %v318
  %v347 = vpack.c.b16 %v321, %v320
  %v348 = vpack.c.b16 %v323, %v322
  %v349 = vpack.c.b16 %v325, %v324
  %v350 = vpack.c.b16 %v327, %v326
  %v351 = vpack.c.b16 %v329, %v328
  %v352 = vpack.c.b16 %v331, %v330
  %v353 = vpack.c.b16 %v333, %v332
  %v354 = vpack.c.b16 %v335, %v334
  %v355 = vpack.c.b16 %v337, %v336
  %v356 = vpack.c.b16 %v339, %v338
  %v357 = vpack.c.b16 %v341, %v340
  %374 = vmatpush.bf16.msra.mxu0 %v349
  %375 = vmatpush.bf16.msra.mxu0 %v348
  %376 = vmatpush.bf16.msra.mxu0 %v347
  %377 = vmatpush.bf16.msra.mxu0 %v346
  %378 = vmatpush.bf16.msra.mxu0 %v345
  %379 = vmatpush.bf16.msra.mxu0 %v344
  %380 = vmatpush.bf16.msra.mxu0 %v343
  %381 = vmatpush.bf16.msra.mxu0 %v342
  %382 = vmatmul.bf16.gmra.mxu0 %v270
  %v383 = vpop.f32.mrf.mxu0
  %v384 = vadd.f32 %v251, %v383
  %v385 = vpop.f32.mrf.mxu0
  %v386 = vadd.f32 %v253, %v385
  %387 = vmatmul.bf16.gmra.mxu0 %v272
  %v388 = vpop.f32.mrf.mxu0
  %v389 = vadd.f32 %v256, %v388
  %v390 = vpop.f32.mrf.mxu0
  %v391 = vadd.f32 %v258, %v390
  %392 = vdwg.mxu0
  %393 = vmatpush.bf16.msra.mxu0 %v357
  %394 = vmatpush.bf16.msra.mxu0 %v356
  %395 = vmatpush.bf16.msra.mxu0 %v355
  %396 = vmatpush.bf16.msra.mxu0 %v354
  %397 = vmatpush.bf16.msra.mxu0 %v353
  %398 = vmatpush.bf16.msra.mxu0 %v352
  %399 = vmatpush.bf16.msra.mxu0 %v351
  %400 = vmatpush.bf16.msra.mxu0 %v350
  %401 = vmatmul.bf16.gmra.mxu0 %v271
  %v402 = vpop.f32.mrf.mxu0
  %v403 = vadd.f32 %v384, %v402
  %v404 = vpop.f32.mrf.mxu0
  %v405 = vadd.f32 %v386, %v404
  %406 = vmatmul.bf16.gmra.mxu0 %v273
  %v407 = vpop.f32.mrf.mxu0
  %v408 = vadd.f32 %v389, %v407
  %v409 = vpop.f32.mrf.mxu0
  %v410 = vadd.f32 %v391, %v409
  %411 = vdwg.mxu0
  %vm412 = vcmask 523264
  %v413 = vsel %vm412, %v403, 0.0
  %v414 = vsel %vm412, %v405, 0.0
  %v415 = vadd.f32 %v413, %v414
  %v416 = vsel %vm412, %v408, 0.0
  %v417 = vadd.f32 %v415, %v416
  %v418 = vsel %vm412, %v410, 0.0
  %v419 = vadd.f32 %v417, %v418
  %v420 = vrot.slane %v419, 4
  %v421 = vadd.f32 %v419, %v420
  %v422 = vrot.slane %v421, 2
  %v423 = vadd.f32 %v421, %v422
  %v424 = vrot.slane %v423, 1
  %v425 = vadd.f32 %v423, %v424
  %vm426 = vcmask 516096
  %427 = vst.msk [vmem:[%s3] sm:$0x1] %vm426, %v425
  %v428 = vmul.f32 %v403, %v403
  %v429 = vmul.f32 %v405, %v405
  %v430 = vmul.f32 %v408, %v408
  %v431 = vmul.f32 %v410, %v410
  %v432 = vsel %vm412, %v428, 0.0
  %v433 = vsel %vm412, %v429, 0.0
  %v434 = vadd.f32 %v432, %v433
  %v435 = vsel %vm412, %v430, 0.0
  %v436 = vadd.f32 %v434, %v435
  %v437 = vsel %vm412, %v431, 0.0
  %v438 = vadd.f32 %v436, %v437
  %v439 = vrot.slane %v438, 4
  %v440 = vadd.f32 %v438, %v439
  %v441 = vrot.slane %v440, 2
  %v442 = vadd.f32 %v440, %v441
  %v443 = vrot.slane %v442, 1
  %v444 = vadd.f32 %v442, %v443
  %445 = vst.msk [vmem:[%s4] sm:$0x1] %vm426, %v444
  %v446 = vpack.c.bf16 %v403, %v403
  %v447 = vpack.c.bf16 %v405, %v405
  %v448 = vpack.c.bf16 %v408, %v408
  %v449 = vpack.c.bf16 %v410, %v410
  %vm450 = vcmask 519168
  %451 = vst.msk [vmem:[%s2] sm:$0xf] %vm450, %v446
  %452 = vst.msk [vmem:[%s2 + $0x4] sm:$0xf] %vm450, %v447
  %453 = vst.msk [vmem:[%s2 + $0x8] sm:$0xf] %vm450, %v448
  %454 = vst.msk [vmem:[%s2 + $0xc] sm:$0xf] %vm450, %v449
  // Predicated region
  $region10: #{netD2_forward.8} parent=0 // pred_check
    _
  $region11: #{netD2_forward.8} parent=0 // pred_check_branch
    %456 = sbr.rel (0) target = $region13
  $region12: #{netD2_forward.8} parent=0 // pred_region
    _
  $region13: #{netD2_forward.8} parent=0 // pred_fallthru
    _
  // Predicated region
  $region14: #{netD2_forward.8} parent=0 // pred_check
    _
  $region15: #{netD2_forward.8} parent=0 // pred_check_branch
    %458 = sbr.rel (0) target = $region17
  $region16: #{netD2_forward.8} parent=0 // pred_region
    _
  $region17: #{netD2_forward.8} parent=0 // pred_fallthru
    _
  // Predicated region
  $region18: #{netD2_forward.8} parent=0 // pred_check
    _
  $region19: #{netD2_forward.8} parent=0 // pred_check_branch
    %460 = sbr.rel (0) target = $region21
  $region20: #{netD2_forward.8} parent=0 // pred_region
    _
  $region21: #{netD2_forward.8} parent=0 // pred_fallthru
    _
  // Predicated region
  $region22: #{netD2_forward.8} parent=0 // pred_check
    _
  $region23: #{netD2_forward.8} parent=0 // pred_check_branch
    %462 = sbr.rel (0) target = $region25
  $region24: #{netD2_forward.8} parent=0 // pred_region
    _
  $region25: #{netD2_forward.8} parent=0 // pred_fallthru
    _
  // Predicated region
  $region26: #{netD2_forward.8} parent=0 // pred_check
    _
  $region27: #{netD2_forward.8} parent=0 // pred_check_branch
    %464 = sbr.rel (0) target = $region29
  $region28: #{netD2_forward.8} parent=0 // pred_region
    _
  $region29: #{netD2_forward.8} parent=0 // pred_fallthru
    _
  // Predicated region
  $region30: #{netD2_forward.8} parent=0 // pred_check
    _
  $region31: #{netD2_forward.8} parent=0 // pred_check_branch
    %466 = sbr.rel (0) target = $region33
  $region32: #{netD2_forward.8} parent=0 // pred_region
    _
  $region33: #{netD2_forward.8} parent=0 // pred_fallthru
    _

// kernel: netD2_forward.9
$region0: #{netD2_forward.9}
  #allocation0 [shape = 'u32[]', space=smem, size = 0x4, offset = 0x4, fixed_abs, tag = 'smem constant byte address 0x4 - core index']
  #allocation1 [shape = 'u32[72,128]{1,0:T(1,128)}', space=vmem, size = 0x9000, scoped, tag = 'internal scratch']
  #allocation2 [shape = 'f32[1,1]{1,0:T(1,128)S(1)}', space=vmem, size = 0x200, scoped, tag = 'scoped memory for netD2_forward.9']
  %s0 = inlined_call_operand.vmem [shape: bf16[2,1024], index: 0, kind: input, shape index: {}]
  %s1 = inlined_call_operand.vmem [shape: bf16[1024,1024], index: 1, kind: input, shape index: {}]
  %s2 = inlined_call_operand.vmem [shape: bf16[1024,1024], index: 2, kind: input, shape index: {}]
  %s3 = inlined_call_operand.vmem [shape: f32[1,1024], index: 3, kind: input, shape index: {}]
  %s4 = inlined_call_operand.vmem [shape: bf16[1024,1], index: 4, kind: input, shape index: {}]
  %s5 = inlined_call_operand.<no memory space> [shape: f32[1,1], index: 5, kind: input, shape index: {}]
  %s6 = inlined_call_operand.vmem [shape: f32[2,1], index: 6, kind: output, shape index: {}]
  %s7 = sld [smem:[#allocation0]]
  $region34: #{netD2_forward.9} parent=0
    _
  %s9 = ssub.s32 1, %s7
  %s10 = scalar_select 0, %s9, %s7
  %v11 = vstv %s5
  %12 = vst [vmem:[#allocation2] sm:$0x1] %v11
  // Predicated region
  $region2: #{netD2_forward.9} parent=0 // pred_check
    _
  $region3: #{netD2_forward.9} parent=0 // pred_check_branch
    %14 = sbr.rel (0) target = $region5
  $region4: #{netD2_forward.9} parent=0 // pred_region
    _
  $region5: #{netD2_forward.9} parent=0 // pred_fallthru
    _
  // Predicated region
  $region6: #{netD2_forward.9} parent=0 // pred_check
    _
  $region7: #{netD2_forward.9} parent=0 // pred_check_branch
    %16 = sbr.rel (0) target = $region9
  $region8: #{netD2_forward.9} parent=0 // pred_region
    _
  $region9: #{netD2_forward.9} parent=0 // pred_fallthru
    _
  // Predicated region
  $region10: #{netD2_forward.9} parent=0 // pred_check
    _
  $region11: #{netD2_forward.9} parent=0 // pred_check_branch
    %18 = sbr.rel (0) target = $region13
  $region12: #{netD2_forward.9} parent=0 // pred_region
    _
  $region13: #{netD2_forward.9} parent=0 // pred_fallthru
    _
  // Predicated region
  $region14: #{netD2_forward.9} parent=0 // pred_check
    _
  $region15: #{netD2_forward.9} parent=0 // pred_check_branch
    %20 = sbr.rel (0) target = $region17
  $region16: #{netD2_forward.9} parent=0 // pred_region
    _
  $region17: #{netD2_forward.9} parent=0 // pred_fallthru
    _
  // Predicated region
  $region18: #{netD2_forward.9} parent=0 // pred_check
    _
  $region19: #{netD2_forward.9} parent=0 // pred_check_branch
    %22 = sbr.rel (0) target = $region21
  $region20: #{netD2_forward.9} parent=0 // pred_region
    _
  $region21: #{netD2_forward.9} parent=0 // pred_fallthru
    _
  // Predicated region
  $region22: #{netD2_forward.9} parent=0 // pred_check
    _
  $region23: #{netD2_forward.9} parent=0 // pred_check_branch
    %24 = sbr.rel (0) target = $region25
  $region24: #{netD2_forward.9} parent=0 // pred_region
    _
  $region25: #{netD2_forward.9} parent=0 // pred_fallthru
    _
  %v25 = vld [vmem:[%s0] sm:$0xff]
  %v26 = vld [vmem:[%s1] sm:$0xff]
  %v27 = vld [vmem:[%s1 + $0x8] sm:$0xff]
  %v28 = vld [vmem:[%s1 + $0x10] sm:$0xff]
  %v29 = vld [vmem:[%s1 + $0x18] sm:$0xff]
  %v30 = vld [vmem:[%s1 + $0x20] sm:$0xff]
  %v31 = vld [vmem:[%s1 + $0x28] sm:$0xff]
  %v32 = vld [vmem:[%s1 + $0x30] sm:$0xff]
  %v33 = vld [vmem:[%s1 + $0x38] sm:$0xff]
  %v34 = vld [vmem:[%s1 + $0x40] sm:$0xff]
  %v35 = vld [vmem:[%s1 + $0x48] sm:$0xff]
  %v36 = vld [vmem:[%s1 + $0x50] sm:$0xff]
  %v37 = vld [vmem:[%s1 + $0x58] sm:$0xff]
  %v38 = vld [vmem:[%s1 + $0x60] sm:$0xff]
  %v39 = vld [vmem:[%s1 + $0x68] sm:$0xff]
  %v40 = vld [vmem:[%s1 + $0x70] sm:$0xff]
  %v41 = vld [vmem:[%s1 + $0x78] sm:$0xff]
  %v42 = vld [vmem:[%s1 + $0x80] sm:$0xff]
  %v43 = vld [vmem:[%s1 + $0x88] sm:$0xff]
  %v44 = vld [vmem:[%s1 + $0x90] sm:$0xff]
  %v45 = vld [vmem:[%s1 + $0x98] sm:$0xff]
  %v46 = vld [vmem:[%s1 + $0xa0] sm:$0xff]
  %v47 = vld [vmem:[%s1 + $0xa8] sm:$0xff]
  %v48 = vld [vmem:[%s1 + $0xb0] sm:$0xff]
  %v49 = vld [vmem:[%s1 + $0xb8] sm:$0xff]
  %v50 = vld [vmem:[%s1 + $0xc0] sm:$0xff]
  %v51 = vld [vmem:[%s1 + $0xc8] sm:$0xff]
  %v52 = vld [vmem:[%s1 + $0xd0] sm:$0xff]
  %v53 = vld [vmem:[%s1 + $0xd8] sm:$0xff]
  %v54 = vld [vmem:[%s1 + $0xe0] sm:$0xff]
  %v55 = vld [vmem:[%s1 + $0xe8] sm:$0xff]
  %v56 = vld [vmem:[%s1 + $0xf0] sm:$0xff]
  %v57 = vld [vmem:[%s1 + $0xf8] sm:$0xff]
  %v58 = vld [vmem:[%s1 + $0x100] sm:$0xff]
  %v59 = vld [vmem:[%s1 + $0x108] sm:$0xff]
  %v60 = vld [vmem:[%s1 + $0x110] sm:$0xff]
  %v61 = vld [vmem:[%s1 + $0x118] sm:$0xff]
  %v62 = vld [vmem:[%s1 + $0x120] sm:$0xff]
  %v63 = vld [vmem:[%s1 + $0x128] sm:$0xff]
  %v64 = vld [vmem:[%s1 + $0x130] sm:$0xff]
  %v65 = vld [vmem:[%s1 + $0x138] sm:$0xff]
  %v66 = vld [vmem:[%s1 + $0x140] sm:$0xff]
  %v67 = vld [vmem:[%s1 + $0x148] sm:$0xff]
  %v68 = vld [vmem:[%s1 + $0x150] sm:$0xff]
  %v69 = vld [vmem:[%s1 + $0x158] sm:$0xff]
  %v70 = vld [vmem:[%s1 + $0x160] sm:$0xff]
  %v71 = vld [vmem:[%s1 + $0x168] sm:$0xff]
  %v72 = vld [vmem:[%s1 + $0x170] sm:$0xff]
  %v73 = vld [vmem:[%s1 + $0x178] sm:$0xff]
  %v74 = vld [vmem:[%s1 + $0x180] sm:$0xff]
  %v75 = vld [vmem:[%s1 + $0x188] sm:$0xff]
  %v76 = vld [vmem:[%s1 + $0x190] sm:$0xff]
  %v77 = vld [vmem:[%s1 + $0x198] sm:$0xff]
  %v78 = vld [vmem:[%s1 + $0x1a0] sm:$0xff]
  %v79 = vld [vmem:[%s1 + $0x1a8] sm:$0xff]
  %v80 = vld [vmem:[%s1 + $0x1b0] sm:$0xff]
  %v81 = vld [vmem:[%s1 + $0x1b8] sm:$0xff]
  %v82 = vld [vmem:[%s1 + $0x1c0] sm:$0xff]
  %v83 = vld [vmem:[%s1 + $0x1c8] sm:$0xff]
  %v84 = vld [vmem:[%s1 + $0x1d0] sm:$0xff]
  %v85 = vld [vmem:[%s1 + $0x1d8] sm:$0xff]
  %v86 = vld [vmem:[%s1 + $0x1e0] sm:$0xff]
  %v87 = vld [vmem:[%s1 + $0x1e8] sm:$0xff]
  %v88 = vld [vmem:[%s1 + $0x1f0] sm:$0xff]
  %v89 = vld [vmem:[%s1 + $0x1f8] sm:$0xff]
  %v90 = vld [vmem:[%s1 + $0x200] sm:$0xff]
  %v91 = vld [vmem:[%s1 + $0x208] sm:$0xff]
  %v92 = vld [vmem:[%s1 + $0x210] sm:$0xff]
  %v93 = vld [vmem:[%s1 + $0x218] sm:$0xff]
  %v94 = vld [vmem:[%s1 + $0x220] sm:$0xff]
  %v95 = vld [vmem:[%s1 + $0x228] sm:$0xff]
  %v96 = vld [vmem:[%s1 + $0x230] sm:$0xff]
  %v97 = vld [vmem:[%s1 + $0x238] sm:$0xff]
  %v98 = vld [vmem:[%s1 + $0x240] sm:$0xff]
  %v99 = vld [vmem:[%s1 + $0x248] sm:$0xff]
  %v100 = vld [vmem:[%s1 + $0x250] sm:$0xff]
  %v101 = vld [vmem:[%s1 + $0x258] sm:$0xff]
  %v102 = vld [vmem:[%s1 + $0x260] sm:$0xff]
  %v103 = vld [vmem:[%s1 + $0x268] sm:$0xff]
  %v104 = vld [vmem:[%s1 + $0x270] sm:$0xff]
  %v105 = vld [vmem:[%s1 + $0x278] sm:$0xff]
  %v106 = vld [vmem:[%s1 + $0x280] sm:$0xff]
  %v107 = vld [vmem:[%s1 + $0x288] sm:$0xff]
  %v108 = vld [vmem:[%s1 + $0x290] sm:$0xff]
  %v109 = vld [vmem:[%s1 + $0x298] sm:$0xff]
  %v110 = vld [vmem:[%s1 + $0x2a0] sm:$0xff]
  %v111 = vld [vmem:[%s1 + $0x2a8] sm:$0xff]
  %v112 = vld [vmem:[%s1 + $0x2b0] sm:$0xff]
  %v113 = vld [vmem:[%s1 + $0x2b8] sm:$0xff]
  %v114 = vld [vmem:[%s1 + $0x2c0] sm:$0xff]
  %v115 = vld [vmem:[%s1 + $0x2c8] sm:$0xff]
  %v116 = vld [vmem:[%s1 + $0x2d0] sm:$0xff]
  %v117 = vld [vmem:[%s1 + $0x2d8] sm:$0xff]
  %v118 = vld [vmem:[%s1 + $0x2e0] sm:$0xff]
  %v119 = vld [vmem:[%s1 + $0x2e8] sm:$0xff]
  %v120 = vld [vmem:[%s1 + $0x2f0] sm:$0xff]
  %v121 = vld [vmem:[%s1 + $0x2f8] sm:$0xff]
  %v122 = vld [vmem:[%s1 + $0x300] sm:$0xff]
  %v123 = vld [vmem:[%s1 + $0x308] sm:$0xff]
  %v124 = vld [vmem:[%s1 + $0x310] sm:$0xff]
  %v125 = vld [vmem:[%s1 + $0x318] sm:$0xff]
  %v126 = vld [vmem:[%s1 + $0x320] sm:$0xff]
  %v127 = vld [vmem:[%s1 + $0x328] sm:$0xff]
  %v128 = vld [vmem:[%s1 + $0x330] sm:$0xff]
  %v129 = vld [vmem:[%s1 + $0x338] sm:$0xff]
  %v130 = vld [vmem:[%s1 + $0x340] sm:$0xff]
  %v131 = vld [vmem:[%s1 + $0x348] sm:$0xff]
  %v132 = vld [vmem:[%s1 + $0x350] sm:$0xff]
  %v133 = vld [vmem:[%s1 + $0x358] sm:$0xff]
  %v134 = vld [vmem:[%s1 + $0x360] sm:$0xff]
  %v135 = vld [vmem:[%s1 + $0x368] sm:$0xff]
  %v136 = vld [vmem:[%s1 + $0x370] sm:$0xff]
  %v137 = vld [vmem:[%s1 + $0x378] sm:$0xff]
  %v138 = vld [vmem:[%s1 + $0x380] sm:$0xff]
  %v139 = vld [vmem:[%s1 + $0x388] sm:$0xff]
  %v140 = vld [vmem:[%s1 + $0x390] sm:$0xff]
  %v141 = vld [vmem:[%s1 + $0x398] sm:$0xff]
  %v142 = vld [vmem:[%s1 + $0x3a0] sm:$0xff]
  %v143 = vld [vmem:[%s1 + $0x3a8] sm:$0xff]
  %v144 = vld [vmem:[%s1 + $0x3b0] sm:$0xff]
  %v145 = vld [vmem:[%s1 + $0x3b8] sm:$0xff]
  %v146 = vld [vmem:[%s1 + $0x3c0] sm:$0xff]
  %v147 = vld [vmem:[%s1 + $0x3c8] sm:$0xff]
  %v148 = vld [vmem:[%s1 + $0x3d0] sm:$0xff]
  %v149 = vld [vmem:[%s1 + $0x3d8] sm:$0xff]
  %v150 = vld [vmem:[%s1 + $0x3e0] sm:$0xff]
  %v151 = vld [vmem:[%s1 + $0x3e8] sm:$0xff]
  %v152 = vld [vmem:[%s1 + $0x3f0] sm:$0xff]
  %v153 = vld [vmem:[%s1 + $0x3f8] sm:$0xff]
  %v154 = vld [vmem:[%s1 + $0x400] sm:$0xff]
  %v155 = vld [vmem:[%s1 + $0x408] sm:$0xff]
  %v156 = vld [vmem:[%s1 + $0x410] sm:$0xff]
  %v157 = vld [vmem:[%s1 + $0x418] sm:$0xff]
  %v158 = vld [vmem:[%s1 + $0x420] sm:$0xff]
  %v159 = vld [vmem:[%s1 + $0x428] sm:$0xff]
  %v160 = vld [vmem:[%s1 + $0x430] sm:$0xff]
  %v161 = vld [vmem:[%s1 + $0x438] sm:$0xff]
  %v162 = vld [vmem:[%s1 + $0x440] sm:$0xff]
  %v163 = vld [vmem:[%s1 + $0x448] sm:$0xff]
  %v164 = vld [vmem:[%s1 + $0x450] sm:$0xff]
  %v165 = vld [vmem:[%s1 + $0x458] sm:$0xff]
  %v166 = vld [vmem:[%s1 + $0x460] sm:$0xff]
  %v167 = vld [vmem:[%s1 + $0x468] sm:$0xff]
  %v168 = vld [vmem:[%s1 + $0x470] sm:$0xff]
  %v169 = vld [vmem:[%s1 + $0x478] sm:$0xff]
  %v170 = vld [vmem:[%s1 + $0x480] sm:$0xff]
  %v171 = vld [vmem:[%s1 + $0x488] sm:$0xff]
  %v172 = vld [vmem:[%s1 + $0x490] sm:$0xff]
  %v173 = vld [vmem:[%s1 + $0x498] sm:$0xff]
  %v174 = vld [vmem:[%s1 + $0x4a0] sm:$0xff]
  %v175 = vld [vmem:[%s1 + $0x4a8] sm:$0xff]
  %v176 = vld [vmem:[%s1 + $0x4b0] sm:$0xff]
  %v177 = vld [vmem:[%s1 + $0x4b8] sm:$0xff]
  %v178 = vld [vmem:[%s1 + $0x4c0] sm:$0xff]
  %v179 = vld [vmem:[%s1 + $0x4c8] sm:$0xff]
  %v180 = vld [vmem:[%s1 + $0x4d0] sm:$0xff]
  %v181 = vld [vmem:[%s1 + $0x4d8] sm:$0xff]
  %v182 = vld [vmem:[%s1 + $0x4e0] sm:$0xff]
  %v183 = vld [vmem:[%s1 + $0x4e8] sm:$0xff]
  %v184 = vld [vmem:[%s1 + $0x4f0] sm:$0xff]
  %v185 = vld [vmem:[%s1 + $0x4f8] sm:$0xff]
  %v186 = vld [vmem:[%s1 + $0x500] sm:$0xff]
  %v187 = vld [vmem:[%s1 + $0x508] sm:$0xff]
  %v188 = vld [vmem:[%s1 + $0x510] sm:$0xff]
  %v189 = vld [vmem:[%s1 + $0x518] sm:$0xff]
  %v190 = vld [vmem:[%s1 + $0x520] sm:$0xff]
  %v191 = vld [vmem:[%s1 + $0x528] sm:$0xff]
  %v192 = vld [vmem:[%s1 + $0x530] sm:$0xff]
  %v193 = vld [vmem:[%s1 + $0x538] sm:$0xff]
  %v194 = vld [vmem:[%s1 + $0x540] sm:$0xff]
  %v195 = vld [vmem:[%s1 + $0x548] sm:$0xff]
  %v196 = vld [vmem:[%s1 + $0x550] sm:$0xff]
  %v197 = vld [vmem:[%s1 + $0x558] sm:$0xff]
  %v198 = vld [vmem:[%s1 + $0x560] sm:$0xff]
  %v199 = vld [vmem:[%s1 + $0x568] sm:$0xff]
  %v200 = vld [vmem:[%s1 + $0x570] sm:$0xff]
  %v201 = vld [vmem:[%s1 + $0x578] sm:$0xff]
  %v202 = vld [vmem:[%s1 + $0x580] sm:$0xff]
  %v203 = vld [vmem:[%s1 + $0x588] sm:$0xff]
  %v204 = vld [vmem:[%s1 + $0x590] sm:$0xff]
  %v205 = vld [vmem:[%s1 + $0x598] sm:$0xff]
  %v206 = vld [vmem:[%s1 + $0x5a0] sm:$0xff]
  %v207 = vld [vmem:[%s1 + $0x5a8] sm:$0xff]
  %v208 = vld [vmem:[%s1 + $0x5b0] sm:$0xff]
  %v209 = vld [vmem:[%s1 + $0x5b8] sm:$0xff]
  %v210 = vld [vmem:[%s1 + $0x5c0] sm:$0xff]
  %v211 = vld [vmem:[%s1 + $0x5c8] sm:$0xff]
  %v212 = vld [vmem:[%s1 + $0x5d0] sm:$0xff]
  %v213 = vld [vmem:[%s1 + $0x5d8] sm:$0xff]
  %v214 = vld [vmem:[%s1 + $0x5e0] sm:$0xff]
  %v215 = vld [vmem:[%s1 + $0x5e8] sm:$0xff]
  %v216 = vld [vmem:[%s1 + $0x5f0] sm:$0xff]
  %v217 = vld [vmem:[%s1 + $0x5f8] sm:$0xff]
  %v218 = vld [vmem:[%s1 + $0x600] sm:$0xff]
  %v219 = vld [vmem:[%s1 + $0x608] sm:$0xff]
  %v220 = vld [vmem:[%s1 + $0x610] sm:$0xff]
  %v221 = vld [vmem:[%s1 + $0x618] sm:$0xff]
  %v222 = vld [vmem:[%s1 + $0x620] sm:$0xff]
  %v223 = vld [vmem:[%s1 + $0x628] sm:$0xff]
  %v224 = vld [vmem:[%s1 + $0x630] sm:$0xff]
  %v225 = vld [vmem:[%s1 + $0x638] sm:$0xff]
  %v226 = vld [vmem:[%s1 + $0x640] sm:$0xff]
  %v227 = vld [vmem:[%s1 + $0x648] sm:$0xff]
  %v228 = vld [vmem:[%s1 + $0x650] sm:$0xff]
  %v229 = vld [vmem:[%s1 + $0x658] sm:$0xff]
  %v230 = vld [vmem:[%s1 + $0x660] sm:$0xff]
  %v231 = vld [vmem:[%s1 + $0x668] sm:$0xff]
  %v232 = vld [vmem:[%s1 + $0x670] sm:$0xff]
  %v233 = vld [vmem:[%s1 + $0x678] sm:$0xff]
  %v234 = vld [vmem:[%s1 + $0x680] sm:$0xff]
  %v235 = vld [vmem:[%s1 + $0x688] sm:$0xff]
  %v236 = vld [vmem:[%s1 + $0x690] sm:$0xff]
  %v237 = vld [vmem:[%s1 + $0x698] sm:$0xff]
  %v238 = vld [vmem:[%s1 + $0x6a0] sm:$0xff]
  %v239 = vld [vmem:[%s1 + $0x6a8] sm:$0xff]
  %v240 = vld [vmem:[%s1 + $0x6b0] sm:$0xff]
  %v241 = vld [vmem:[%s1 + $0x6b8] sm:$0xff]
  %v242 = vld [vmem:[%s1 + $0x6c0] sm:$0xff]
  %v243 = vld [vmem:[%s1 + $0x6c8] sm:$0xff]
  %v244 = vld [vmem:[%s1 + $0x6d0] sm:$0xff]
  %v245 = vld [vmem:[%s1 + $0x6d8] sm:$0xff]
  %v246 = vld [vmem:[%s1 + $0x6e0] sm:$0xff]
  %v247 = vld [vmem:[%s1 + $0x6e8] sm:$0xff]
  %v248 = vld [vmem:[%s1 + $0x6f0] sm:$0xff]
  %v249 = vld [vmem:[%s1 + $0x6f8] sm:$0xff]
  %v250 = vld [vmem:[%s1 + $0x700] sm:$0xff]
  %v251 = vld [vmem:[%s1 + $0x708] sm:$0xff]
  %v252 = vld [vmem:[%s1 + $0x710] sm:$0xff]
  %v253 = vld [vmem:[%s1 + $0x718] sm:$0xff]
  %v254 = vld [vmem:[%s1 + $0x720] sm:$0xff]
  %v255 = vld [vmem:[%s1 + $0x728] sm:$0xff]
  %v256 = vld [vmem:[%s1 + $0x730] sm:$0xff]
  %v257 = vld [vmem:[%s1 + $0x738] sm:$0xff]
  %v258 = vld [vmem:[%s1 + $0x740] sm:$0xff]
  %v259 = vld [vmem:[%s1 + $0x748] sm:$0xff]
  %v260 = vld [vmem:[%s1 + $0x750] sm:$0xff]
  %v261 = vld [vmem:[%s1 + $0x758] sm:$0xff]
  %v262 = vld [vmem:[%s1 + $0x760] sm:$0xff]
  %v263 = vld [vmem:[%s1 + $0x768] sm:$0xff]
  %v264 = vld [vmem:[%s1 + $0x770] sm:$0xff]
  %v265 = vld [vmem:[%s1 + $0x778] sm:$0xff]
  %v266 = vld [vmem:[%s1 + $0x780] sm:$0xff]
  %v267 = vld [vmem:[%s1 + $0x788] sm:$0xff]
  %v268 = vld [vmem:[%s1 + $0x790] sm:$0xff]
  %v269 = vld [vmem:[%s1 + $0x798] sm:$0xff]
  %v270 = vld [vmem:[%s1 + $0x7a0] sm:$0xff]
  %v271 = vld [vmem:[%s1 + $0x7a8] sm:$0xff]
  %v272 = vld [vmem:[%s1 + $0x7b0] sm:$0xff]
  %v273 = vld [vmem:[%s1 + $0x7b8] sm:$0xff]
  %v274 = vld [vmem:[%s1 + $0x7c0] sm:$0xff]
  %v275 = vld [vmem:[%s1 + $0x7c8] sm:$0xff]
  %v276 = vld [vmem:[%s1 + $0x7d0] sm:$0xff]
  %v277 = vld [vmem:[%s1 + $0x7d8] sm:$0xff]
  %v278 = vld [vmem:[%s1 + $0x7e0] sm:$0xff]
  %v279 = vld [vmem:[%s1 + $0x7e8] sm:$0xff]
  %v280 = vld [vmem:[%s1 + $0x7f0] sm:$0xff]
  %v281 = vld [vmem:[%s1 + $0x7f8] sm:$0xff]
  %v282 = vld [vmem:[%s1 + $0x800] sm:$0xff]
  %v283 = vld [vmem:[%s1 + $0x808] sm:$0xff]
  %v284 = vld [vmem:[%s1 + $0x810] sm:$0xff]
  %v285 = vld [vmem:[%s1 + $0x818] sm:$0xff]
  %v286 = vld [vmem:[%s1 + $0x820] sm:$0xff]
  %v287 = vld [vmem:[%s1 + $0x828] sm:$0xff]
  %v288 = vld [vmem:[%s1 + $0x830] sm:$0xff]
  %v289 = vld [vmem:[%s1 + $0x838] sm:$0xff]
  %v290 = vld [vmem:[%s1 + $0x840] sm:$0xff]
  %v291 = vld [vmem:[%s1 + $0x848] sm:$0xff]
  %v292 = vld [vmem:[%s1 + $0x850] sm:$0xff]
  %v293 = vld [vmem:[%s1 + $0x858] sm:$0xff]
  %v294 = vld [vmem:[%s1 + $0x860] sm:$0xff]
  %v295 = vld [vmem:[%s1 + $0x868] sm:$0xff]
  %v296 = vld [vmem:[%s1 + $0x870] sm:$0xff]
  %v297 = vld [vmem:[%s1 + $0x878] sm:$0xff]
  %v298 = vld [vmem:[%s1 + $0x880] sm:$0xff]
  %v299 = vld [vmem:[%s1 + $0x888] sm:$0xff]
  %v300 = vld [vmem:[%s1 + $0x890] sm:$0xff]
  %v301 = vld [vmem:[%s1 + $0x898] sm:$0xff]
  %v302 = vld [vmem:[%s1 + $0x8a0] sm:$0xff]
  %v303 = vld [vmem:[%s1 + $0x8a8] sm:$0xff]
  %v304 = vld [vmem:[%s1 + $0x8b0] sm:$0xff]
  %v305 = vld [vmem:[%s1 + $0x8b8] sm:$0xff]
  %v306 = vld [vmem:[%s1 + $0x8c0] sm:$0xff]
  %v307 = vld [vmem:[%s1 + $0x8c8] sm:$0xff]
  %v308 = vld [vmem:[%s1 + $0x8d0] sm:$0xff]
  %v309 = vld [vmem:[%s1 + $0x8d8] sm:$0xff]
  %v310 = vld [vmem:[%s1 + $0x8e0] sm:$0xff]
  %v311 = vld [vmem:[%s1 + $0x8e8] sm:$0xff]
  %v312 = vld [vmem:[%s1 + $0x8f0] sm:$0xff]
  %v313 = vld [vmem:[%s1 + $0x8f8] sm:$0xff]
  %v314 = vld [vmem:[%s1 + $0x900] sm:$0xff]
  %v315 = vld [vmem:[%s1 + $0x908] sm:$0xff]
  %v316 = vld [vmem:[%s1 + $0x910] sm:$0xff]
  %v317 = vld [vmem:[%s1 + $0x918] sm:$0xff]
  %v318 = vld [vmem:[%s1 + $0x920] sm:$0xff]
  %v319 = vld [vmem:[%s1 + $0x928] sm:$0xff]
  %v320 = vld [vmem:[%s1 + $0x930] sm:$0xff]
  %v321 = vld [vmem:[%s1 + $0x938] sm:$0xff]
  %v322 = vld [vmem:[%s1 + $0x940] sm:$0xff]
  %v323 = vld [vmem:[%s1 + $0x948] sm:$0xff]
  %v324 = vld [vmem:[%s1 + $0x950] sm:$0xff]
  %v325 = vld [vmem:[%s1 + $0x958] sm:$0xff]
  %v326 = vld [vmem:[%s1 + $0x960] sm:$0xff]
  %v327 = vld [vmem:[%s1 + $0x968] sm:$0xff]
  %v328 = vld [vmem:[%s1 + $0x970] sm:$0xff]
  %v329 = vld [vmem:[%s1 + $0x978] sm:$0xff]
  %v330 = vld [vmem:[%s1 + $0x980] sm:$0xff]
  %v331 = vld [vmem:[%s1 + $0x988] sm:$0xff]
  %v332 = vld [vmem:[%s1 + $0x990] sm:$0xff]
  %v333 = vld [vmem:[%s1 + $0x998] sm:$0xff]
  %v334 = vld [vmem:[%s1 + $0x9a0] sm:$0xff]
  %v335 = vld [vmem:[%s1 + $0x9a8] sm:$0xff]
  %v336 = vld [vmem:[%s1 + $0x9b0] sm:$0xff]
  %v337 = vld [vmem:[%s1 + $0x9b8] sm:$0xff]
  %v338 = vld [vmem:[%s1 + $0x9c0] sm:$0xff]
  %v339 = vld [vmem:[%s1 + $0x9c8] sm:$0xff]
  %v340 = vld [vmem:[%s1 + $0x9d0] sm:$0xff]
  %v341 = vld [vmem:[%s1 + $0x9d8] sm:$0xff]
  %v342 = vld [vmem:[%s1 + $0x9e0] sm:$0xff]
  %v343 = vld [vmem:[%s1 + $0x9e8] sm:$0xff]
  %v344 = vld [vmem:[%s1 + $0x9f0] sm:$0xff]
  %v345 = vld [vmem:[%s1 + $0x9f8] sm:$0xff]
  %v346 = vld [vmem:[%s1 + $0xa00] sm:$0xff]
  %v347 = vld [vmem:[%s1 + $0xa08] sm:$0xff]
  %v348 = vld [vmem:[%s1 + $0xa10] sm:$0xff]
  %v349 = vld [vmem:[%s1 + $0xa18] sm:$0xff]
  %v350 = vld [vmem:[%s1 + $0xa20] sm:$0xff]
  %v351 = vld [vmem:[%s1 + $0xa28] sm:$0xff]
  %v352 = vld [vmem:[%s1 + $0xa30] sm:$0xff]
  %v353 = vld [vmem:[%s1 + $0xa38] sm:$0xff]
  %v354 = vld [vmem:[%s1 + $0xa40] sm:$0xff]
  %v355 = vld [vmem:[%s1 + $0xa48] sm:$0xff]
  %v356 = vld [vmem:[%s1 + $0xa50] sm:$0xff]
  %v357 = vld [vmem:[%s1 + $0xa58] sm:$0xff]
  %v358 = vld [vmem:[%s1 + $0xa60] sm:$0xff]
  %v359 = vld [vmem:[%s1 + $0xa68] sm:$0xff]
  %v360 = vld [vmem:[%s1 + $0xa70] sm:$0xff]
  %v361 = vld [vmem:[%s1 + $0xa78] sm:$0xff]
  %v362 = vld [vmem:[%s1 + $0xa80] sm:$0xff]
  %v363 = vld [vmem:[%s1 + $0xa88] sm:$0xff]
  %v364 = vld [vmem:[%s1 + $0xa90] sm:$0xff]
  %v365 = vld [vmem:[%s1 + $0xa98] sm:$0xff]
  %v366 = vld [vmem:[%s1 + $0xaa0] sm:$0xff]
  %v367 = vld [vmem:[%s1 + $0xaa8] sm:$0xff]
  %v368 = vld [vmem:[%s1 + $0xab0] sm:$0xff]
  %v369 = vld [vmem:[%s1 + $0xab8] sm:$0xff]
  %v370 = vld [vmem:[%s1 + $0xac0] sm:$0xff]
  %v371 = vld [vmem:[%s1 + $0xac8] sm:$0xff]
  %v372 = vld [vmem:[%s1 + $0xad0] sm:$0xff]
  %v373 = vld [vmem:[%s1 + $0xad8] sm:$0xff]
  %v374 = vld [vmem:[%s1 + $0xae0] sm:$0xff]
  %v375 = vld [vmem:[%s1 + $0xae8] sm:$0xff]
  %v376 = vld [vmem:[%s1 + $0xaf0] sm:$0xff]
  %v377 = vld [vmem:[%s1 + $0xaf8] sm:$0xff]
  %v378 = vld [vmem:[%s1 + $0xb00] sm:$0xff]
  %v379 = vld [vmem:[%s1 + $0xb08] sm:$0xff]
  %v380 = vld [vmem:[%s1 + $0xb10] sm:$0xff]
  %v381 = vld [vmem:[%s1 + $0xb18] sm:$0xff]
  %v382 = vld [vmem:[%s1 + $0xb20] sm:$0xff]
  %v383 = vld [vmem:[%s1 + $0xb28] sm:$0xff]
  %v384 = vld [vmem:[%s1 + $0xb30] sm:$0xff]
  %v385 = vld [vmem:[%s1 + $0xb38] sm:$0xff]
  %v386 = vld [vmem:[%s1 + $0xb40] sm:$0xff]
  %v387 = vld [vmem:[%s1 + $0xb48] sm:$0xff]
  %v388 = vld [vmem:[%s1 + $0xb50] sm:$0xff]
  %v389 = vld [vmem:[%s1 + $0xb58] sm:$0xff]
  %v390 = vld [vmem:[%s1 + $0xb60] sm:$0xff]
  %v391 = vld [vmem:[%s1 + $0xb68] sm:$0xff]
  %v392 = vld [vmem:[%s1 + $0xb70] sm:$0xff]
  %v393 = vld [vmem:[%s1 + $0xb78] sm:$0xff]
  %v394 = vld [vmem:[%s1 + $0xb80] sm:$0xff]
  %v395 = vld [vmem:[%s1 + $0xb88] sm:$0xff]
  %v396 = vld [vmem:[%s1 + $0xb90] sm:$0xff]
  %v397 = vld [vmem:[%s1 + $0xb98] sm:$0xff]
  %v398 = vld [vmem:[%s1 + $0xba0] sm:$0xff]
  %v399 = vld [vmem:[%s1 + $0xba8] sm:$0xff]
  %v400 = vld [vmem:[%s1 + $0xbb0] sm:$0xff]
  %v401 = vld [vmem:[%s1 + $0xbb8] sm:$0xff]
  %v402 = vld [vmem:[%s1 + $0xbc0] sm:$0xff]
  %v403 = vld [vmem:[%s1 + $0xbc8] sm:$0xff]
  %v404 = vld [vmem:[%s1 + $0xbd0] sm:$0xff]
  %v405 = vld [vmem:[%s1 + $0xbd8] sm:$0xff]
  %v406 = vld [vmem:[%s1 + $0xbe0] sm:$0xff]
  %v407 = vld [vmem:[%s1 + $0xbe8] sm:$0xff]
  %v408 = vld [vmem:[%s1 + $0xbf0] sm:$0xff]
  %v409 = vld [vmem:[%s1 + $0xbf8] sm:$0xff]
  %v410 = vld [vmem:[%s1 + $0xc00] sm:$0xff]
  %v411 = vld [vmem:[%s1 + $0xc08] sm:$0xff]
  %v412 = vld [vmem:[%s1 + $0xc10] sm:$0xff]
  %v413 = vld [vmem:[%s1 + $0xc18] sm:$0xff]
  %v414 = vld [vmem:[%s1 + $0xc20] sm:$0xff]
  %v415 = vld [vmem:[%s1 + $0xc28] sm:$0xff]
  %v416 = vld [vmem:[%s1 + $0xc30] sm:$0xff]
  %v417 = vld [vmem:[%s1 + $0xc38] sm:$0xff]
  %v418 = vld [vmem:[%s1 + $0xc40] sm:$0xff]
  %v419 = vld [vmem:[%s1 + $0xc48] sm:$0xff]
  %v420 = vld [vmem:[%s1 + $0xc50] sm:$0xff]
  %v421 = vld [vmem:[%s1 + $0xc58] sm:$0xff]
  %v422 = vld [vmem:[%s1 + $0xc60] sm:$0xff]
  %v423 = vld [vmem:[%s1 + $0xc68] sm:$0xff]
  %v424 = vld [vmem:[%s1 + $0xc70] sm:$0xff]
  %v425 = vld [vmem:[%s1 + $0xc78] sm:$0xff]
  %v426 = vld [vmem:[%s1 + $0xc80] sm:$0xff]
  %v427 = vld [vmem:[%s1 + $0xc88] sm:$0xff]
  %v428 = vld [vmem:[%s1 + $0xc90] sm:$0xff]
  %v429 = vld [vmem:[%s1 + $0xc98] sm:$0xff]
  %v430 = vld [vmem:[%s1 + $0xca0] sm:$0xff]
  %v431 = vld [vmem:[%s1 + $0xca8] sm:$0xff]
  %v432 = vld [vmem:[%s1 + $0xcb0] sm:$0xff]
  %v433 = vld [vmem:[%s1 + $0xcb8] sm:$0xff]
  %v434 = vld [vmem:[%s1 + $0xcc0] sm:$0xff]
  %v435 = vld [vmem:[%s1 + $0xcc8] sm:$0xff]
  %v436 = vld [vmem:[%s1 + $0xcd0] sm:$0xff]
  %v437 = vld [vmem:[%s1 + $0xcd8] sm:$0xff]
  %v438 = vld [vmem:[%s1 + $0xce0] sm:$0xff]
  %v439 = vld [vmem:[%s1 + $0xce8] sm:$0xff]
  %v440 = vld [vmem:[%s1 + $0xcf0] sm:$0xff]
  %v441 = vld [vmem:[%s1 + $0xcf8] sm:$0xff]
  %v442 = vld [vmem:[%s1 + $0xd00] sm:$0xff]
  %v443 = vld [vmem:[%s1 + $0xd08] sm:$0xff]
  %v444 = vld [vmem:[%s1 + $0xd10] sm:$0xff]
  %v445 = vld [vmem:[%s1 + $0xd18] sm:$0xff]
  %v446 = vld [vmem:[%s1 + $0xd20] sm:$0xff]
  %v447 = vld [vmem:[%s1 + $0xd28] sm:$0xff]
  %v448 = vld [vmem:[%s1 + $0xd30] sm:$0xff]
  %v449 = vld [vmem:[%s1 + $0xd38] sm:$0xff]
  %v450 = vld [vmem:[%s1 + $0xd40] sm:$0xff]
  %v451 = vld [vmem:[%s1 + $0xd48] sm:$0xff]
  %v452 = vld [vmem:[%s1 + $0xd50] sm:$0xff]
  %v453 = vld [vmem:[%s1 + $0xd58] sm:$0xff]
  %v454 = vld [vmem:[%s1 + $0xd60] sm:$0xff]
  %v455 = vld [vmem:[%s1 + $0xd68] sm:$0xff]
  %v456 = vld [vmem:[%s1 + $0xd70] sm:$0xff]
  %v457 = vld [vmem:[%s1 + $0xd78] sm:$0xff]
  %v458 = vld [vmem:[%s1 + $0xd80] sm:$0xff]
  %v459 = vld [vmem:[%s1 + $0xd88] sm:$0xff]
  %v460 = vld [vmem:[%s1 + $0xd90] sm:$0xff]
  %v461 = vld [vmem:[%s1 + $0xd98] sm:$0xff]
  %v462 = vld [vmem:[%s1 + $0xda0] sm:$0xff]
  %v463 = vld [vmem:[%s1 + $0xda8] sm:$0xff]
  %v464 = vld [vmem:[%s1 + $0xdb0] sm:$0xff]
  %v465 = vld [vmem:[%s1 + $0xdb8] sm:$0xff]
  %v466 = vld [vmem:[%s1 + $0xdc0] sm:$0xff]
  %v467 = vld [vmem:[%s1 + $0xdc8] sm:$0xff]
  %v468 = vld [vmem:[%s1 + $0xdd0] sm:$0xff]
  %v469 = vld [vmem:[%s1 + $0xdd8] sm:$0xff]
  %v470 = vld [vmem:[%s1 + $0xde0] sm:$0xff]
  %v471 = vld [vmem:[%s1 + $0xde8] sm:$0xff]
  %v472 = vld [vmem:[%s1 + $0xdf0] sm:$0xff]
  %v473 = vld [vmem:[%s1 + $0xdf8] sm:$0xff]
  %v474 = vld [vmem:[%s1 + $0xe00] sm:$0xff]
  %v475 = vld [vmem:[%s1 + $0xe08] sm:$0xff]
  %v476 = vld [vmem:[%s1 + $0xe10] sm:$0xff]
  %v477 = vld [vmem:[%s1 + $0xe18] sm:$0xff]
  %v478 = vld [vmem:[%s1 + $0xe20] sm:$0xff]
  %v479 = vld [vmem:[%s1 + $0xe28] sm:$0xff]
  %v480 = vld [vmem:[%s1 + $0xe30] sm:$0xff]
  %v481 = vld [vmem:[%s1 + $0xe38] sm:$0xff]
  %v482 = vld [vmem:[%s1 + $0xe40] sm:$0xff]
  %v483 = vld [vmem:[%s1 + $0xe48] sm:$0xff]
  %v484 = vld [vmem:[%s1 + $0xe50] sm:$0xff]
  %v485 = vld [vmem:[%s1 + $0xe58] sm:$0xff]
  %v486 = vld [vmem:[%s1 + $0xe60] sm:$0xff]
  %v487 = vld [vmem:[%s1 + $0xe68] sm:$0xff]
  %v488 = vld [vmem:[%s1 + $0xe70] sm:$0xff]
  %v489 = vld [vmem:[%s1 + $0xe78] sm:$0xff]
  %v490 = vld [vmem:[%s1 + $0xe80] sm:$0xff]
  %v491 = vld [vmem:[%s1 + $0xe88] sm:$0xff]
  %v492 = vld [vmem:[%s1 + $0xe90] sm:$0xff]
  %v493 = vld [vmem:[%s1 + $0xe98] sm:$0xff]
  %v494 = vld [vmem:[%s1 + $0xea0] sm:$0xff]
  %v495 = vld [vmem:[%s1 + $0xea8] sm:$0xff]
  %v496 = vld [vmem:[%s1 + $0xeb0] sm:$0xff]
  %v497 = vld [vmem:[%s1 + $0xeb8] sm:$0xff]
  %v498 = vld [vmem:[%s1 + $0xec0] sm:$0xff]
  %v499 = vld [vmem:[%s1 + $0xec8] sm:$0xff]
  %v500 = vld [vmem:[%s1 + $0xed0] sm:$0xff]
  %v501 = vld [vmem:[%s1 + $0xed8] sm:$0xff]
  %v502 = vld [vmem:[%s1 + $0xee0] sm:$0xff]
  %v503 = vld [vmem:[%s1 + $0xee8] sm:$0xff]
  %v504 = vld [vmem:[%s1 + $0xef0] sm:$0xff]
  %v505 = vld [vmem:[%s1 + $0xef8] sm:$0xff]
  %v506 = vld [vmem:[%s1 + $0xf00] sm:$0xff]
  %v507 = vld [vmem:[%s1 + $0xf08] sm:$0xff]
  %v508 = vld [vmem:[%s1 + $0xf10] sm:$0xff]
  %v509 = vld [vmem:[%s1 + $0xf18] sm:$0xff]
  %v510 = vld [vmem:[%s1 + $0xf20] sm:$0xff]
  %v511 = vld [vmem:[%s1 + $0xf28] sm:$0xff]
  %v512 = vld [vmem:[%s1 + $0xf30] sm:$0xff]
  %v513 = vld [vmem:[%s1 + $0xf38] sm:$0xff]
  %v514 = vld [vmem:[%s1 + $0xf40] sm:$0xff]
  %v515 = vld [vmem:[%s1 + $0xf48] sm:$0xff]
  %v516 = vld [vmem:[%s1 + $0xf50] sm:$0xff]
  %v517 = vld [vmem:[%s1 + $0xf58] sm:$0xff]
  %v518 = vld [vmem:[%s1 + $0xf60] sm:$0xff]
  %v519 = vld [vmem:[%s1 + $0xf68] sm:$0xff]
  %v520 = vld [vmem:[%s1 + $0xf70] sm:$0xff]
  %v521 = vld [vmem:[%s1 + $0xf78] sm:$0xff]
  %v522 = vld [vmem:[%s1 + $0xf80] sm:$0xff]
  %v523 = vld [vmem:[%s1 + $0xf88] sm:$0xff]
  %v524 = vld [vmem:[%s1 + $0xf90] sm:$0xff]
  %v525 = vld [vmem:[%s1 + $0xf98] sm:$0xff]
  %v526 = vld [vmem:[%s1 + $0xfa0] sm:$0xff]
  %v527 = vld [vmem:[%s1 + $0xfa8] sm:$0xff]
  %v528 = vld [vmem:[%s1 + $0xfb0] sm:$0xff]
  %v529 = vld [vmem:[%s1 + $0xfb8] sm:$0xff]
  %v530 = vld [vmem:[%s1 + $0xfc0] sm:$0xff]
  %v531 = vld [vmem:[%s1 + $0xfc8] sm:$0xff]
  %v532 = vld [vmem:[%s1 + $0xfd0] sm:$0xff]
  %v533 = vld [vmem:[%s1 + $0xfd8] sm:$0xff]
  %v534 = vld [vmem:[%s1 + $0xfe0] sm:$0xff]
  %v535 = vld [vmem:[%s1 + $0xfe8] sm:$0xff]
  %v536 = vld [vmem:[%s1 + $0xff0] sm:$0xff]
  %v537 = vld [vmem:[%s1 + $0xff8] sm:$0xff]
  %539 = vst [vmem:[#allocation1] ss:$9 sm:$0xff] %v25
  %v540 = vld [vmem:[#allocation1] sm:$0xff]
  %v541 = vld [vmem:[#allocation1 + $0x9] sm:$0xff]
  %v542 = vld [vmem:[#allocation1 + $0x12] sm:$0xff]
  %v543 = vld [vmem:[#allocation1 + $0x1b] sm:$0xff]
  %v544 = vld [vmem:[#allocation1 + $0x24] sm:$0xff]
  %v545 = vld [vmem:[#allocation1 + $0x2d] sm:$0xff]
  %v546 = vld [vmem:[#allocation1 + $0x36] sm:$0xff]
  %v547 = vld [vmem:[#allocation1 + $0x3f] sm:$0xff]
  %v1068 = vunpack.c.l.b16 %v26
  %v1069 = vunpack.c.h.b16 %v26
  %v1070 = vunpack.c.l.b16 %v27
  %v1071 = vunpack.c.h.b16 %v27
  %v1072 = vunpack.c.l.b16 %v28
  %v1073 = vunpack.c.h.b16 %v28
  %v1074 = vunpack.c.l.b16 %v29
  %v1075 = vunpack.c.h.b16 %v29
  %v1076 = vunpack.c.l.b16 %v30
  %v1077 = vunpack.c.h.b16 %v30
  %v1078 = vunpack.c.l.b16 %v31
  %v1079 = vunpack.c.h.b16 %v31
  %v1080 = vunpack.c.l.b16 %v32
  %v1081 = vunpack.c.h.b16 %v32
  %v1082 = vunpack.c.l.b16 %v33
  %v1083 = vunpack.c.h.b16 %v33
  %v1084 = vunpack.c.l.b16 %v34
  %v1085 = vunpack.c.h.b16 %v34
  %v1086 = vunpack.c.l.b16 %v35
  %v1087 = vunpack.c.h.b16 %v35
  %v1088 = vunpack.c.l.b16 %v36
  %v1089 = vunpack.c.h.b16 %v36
  %v1090 = vunpack.c.l.b16 %v37
  %v1091 = vunpack.c.h.b16 %v37
  %v1092 = vunpack.c.l.b16 %v38
  %v1093 = vunpack.c.h.b16 %v38
  %v1094 = vunpack.c.l.b16 %v39
  %v1095 = vunpack.c.h.b16 %v39
  %v1096 = vunpack.c.l.b16 %v40
  %v1097 = vunpack.c.h.b16 %v40
  %v1098 = vunpack.c.l.b16 %v41
  %v1099 = vunpack.c.h.b16 %v41
  %v1100 = vunpack.c.l.b16 %v42
  %v1101 = vunpack.c.h.b16 %v42
  %v1102 = vunpack.c.l.b16 %v43
  %v1103 = vunpack.c.h.b16 %v43
  %v1104 = vunpack.c.l.b16 %v44
  %v1105 = vunpack.c.h.b16 %v44
  %v1106 = vunpack.c.l.b16 %v45
  %v1107 = vunpack.c.h.b16 %v45
  %v1108 = vunpack.c.l.b16 %v46
  %v1109 = vunpack.c.h.b16 %v46
  %v1110 = vunpack.c.l.b16 %v47
  %v1111 = vunpack.c.h.b16 %v47
  %v1112 = vunpack.c.l.b16 %v48
  %v1113 = vunpack.c.h.b16 %v48
  %v1114 = vunpack.c.l.b16 %v49
  %v1115 = vunpack.c.h.b16 %v49
  %v1116 = vunpack.c.l.b16 %v50
  %v1117 = vunpack.c.h.b16 %v50
  %v1118 = vunpack.c.l.b16 %v51
  %v1119 = vunpack.c.h.b16 %v51
  %v1120 = vunpack.c.l.b16 %v52
  %v1121 = vunpack.c.h.b16 %v52
  %v1122 = vunpack.c.l.b16 %v53
  %v1123 = vunpack.c.h.b16 %v53
  %v1124 = vunpack.c.l.b16 %v54
  %v1125 = vunpack.c.h.b16 %v54
  %v1126 = vunpack.c.l.b16 %v55
  %v1127 = vunpack.c.h.b16 %v55
  %v1128 = vunpack.c.l.b16 %v56
  %v1129 = vunpack.c.h.b16 %v56
  %v1130 = vunpack.c.l.b16 %v57
  %v1131 = vunpack.c.h.b16 %v57
  %v1132 = vunpack.c.l.b16 %v58
  %v1133 = vunpack.c.h.b16 %v58
  %v1134 = vunpack.c.l.b16 %v59
  %v1135 = vunpack.c.h.b16 %v59
  %v1136 = vunpack.c.l.b16 %v60
  %v1137 = vunpack.c.h.b16 %v60
  %v1138 = vunpack.c.l.b16 %v61
  %v1139 = vunpack.c.h.b16 %v61
  %v1140 = vunpack.c.l.b16 %v62
  %v1141 = vunpack.c.h.b16 %v62
  %v1142 = vunpack.c.l.b16 %v63
  %v1143 = vunpack.c.h.b16 %v63
  %v1144 = vunpack.c.l.b16 %v64
  %v1145 = vunpack.c.h.b16 %v64
  %v1146 = vunpack.c.l.b16 %v65
  %v1147 = vunpack.c.h.b16 %v65
  %v1148 = vunpack.c.l.b16 %v66
  %v1149 = vunpack.c.h.b16 %v66
  %v1150 = vunpack.c.l.b16 %v67
  %v1151 = vunpack.c.h.b16 %v67
  %v1152 = vunpack.c.l.b16 %v68
  %v1153 = vunpack.c.h.b16 %v68
  %v1154 = vunpack.c.l.b16 %v69
  %v1155 = vunpack.c.h.b16 %v69
  %v1156 = vunpack.c.l.b16 %v70
  %v1157 = vunpack.c.h.b16 %v70
  %v1158 = vunpack.c.l.b16 %v71
  %v1159 = vunpack.c.h.b16 %v71
  %v1160 = vunpack.c.l.b16 %v72
  %v1161 = vunpack.c.h.b16 %v72
  %v1162 = vunpack.c.l.b16 %v73
  %v1163 = vunpack.c.h.b16 %v73
  %v1164 = vunpack.c.l.b16 %v74
  %v1165 = vunpack.c.h.b16 %v74
  %v1166 = vunpack.c.l.b16 %v75
  %v1167 = vunpack.c.h.b16 %v75
  %v1168 = vunpack.c.l.b16 %v76
  %v1169 = vunpack.c.h.b16 %v76
  %v1170 = vunpack.c.l.b16 %v77
  %v1171 = vunpack.c.h.b16 %v77
  %v1172 = vunpack.c.l.b16 %v78
  %v1173 = vunpack.c.h.b16 %v78
  %v1174 = vunpack.c.l.b16 %v79
  %v1175 = vunpack.c.h.b16 %v79
  %v1176 = vunpack.c.l.b16 %v80
  %v1177 = vunpack.c.h.b16 %v80
  %v1178 = vunpack.c.l.b16 %v81
  %v1179 = vunpack.c.h.b16 %v81
  %v1180 = vunpack.c.l.b16 %v82
  %v1181 = vunpack.c.h.b16 %v82
  %v1182 = vunpack.c.l.b16 %v83
  %v1183 = vunpack.c.h.b16 %v83
  %v1184 = vunpack.c.l.b16 %v84
  %v1185 = vunpack.c.h.b16 %v84
  %v1186 = vunpack.c.l.b16 %v85
  %v1187 = vunpack.c.h.b16 %v85
  %v1188 = vunpack.c.l.b16 %v86
  %v1189 = vunpack.c.h.b16 %v86
  %v1190 = vunpack.c.l.b16 %v87
  %v1191 = vunpack.c.h.b16 %v87
  %v1192 = vunpack.c.l.b16 %v88
  %v1193 = vunpack.c.h.b16 %v88
  %v1194 = vunpack.c.l.b16 %v89
  %v1195 = vunpack.c.h.b16 %v89
  %v1196 = vunpack.c.l.b16 %v90
  %v1197 = vunpack.c.h.b16 %v90
  %v1198 = vunpack.c.l.b16 %v91
  %v1199 = vunpack.c.h.b16 %v91
  %v1200 = vunpack.c.l.b16 %v92
  %v1201 = vunpack.c.h.b16 %v92
  %v1202 = vunpack.c.l.b16 %v93
  %v1203 = vunpack.c.h.b16 %v93
  %v1204 = vunpack.c.l.b16 %v94
  %v1205 = vunpack.c.h.b16 %v94
  %v1206 = vunpack.c.l.b16 %v95
  %v1207 = vunpack.c.h.b16 %v95
  %v1208 = vunpack.c.l.b16 %v96
  %v1209 = vunpack.c.h.b16 %v96
  %v1210 = vunpack.c.l.b16 %v97
  %v1211 = vunpack.c.h.b16 %v97
  %v1212 = vunpack.c.l.b16 %v98
  %v1213 = vunpack.c.h.b16 %v98
  %v1214 = vunpack.c.l.b16 %v99
  %v1215 = vunpack.c.h.b16 %v99
  %v1216 = vunpack.c.l.b16 %v100
  %v1217 = vunpack.c.h.b16 %v100
  %v1218 = vunpack.c.l.b16 %v101
  %v1219 = vunpack.c.h.b16 %v101
  %v1220 = vunpack.c.l.b16 %v102
  %v1221 = vunpack.c.h.b16 %v102
  %v1222 = vunpack.c.l.b16 %v103
  %v1223 = vunpack.c.h.b16 %v103
  %v1224 = vunpack.c.l.b16 %v104
  %v1225 = vunpack.c.h.b16 %v104
  %v1226 = vunpack.c.l.b16 %v105
  %v1227 = vunpack.c.h.b16 %v105
  %v1228 = vunpack.c.l.b16 %v106
  %v1229 = vunpack.c.h.b16 %v106
  %v1230 = vunpack.c.l.b16 %v107
  %v1231 = vunpack.c.h.b16 %v107
  %v1232 = vunpack.c.l.b16 %v108
  %v1233 = vunpack.c.h.b16 %v108
  %v1234 = vunpack.c.l.b16 %v109
  %v1235 = vunpack.c.h.b16 %v109
  %v1236 = vunpack.c.l.b16 %v110
  %v1237 = vunpack.c.h.b16 %v110
  %v1238 = vunpack.c.l.b16 %v111
  %v1239 = vunpack.c.h.b16 %v111
  %v1240 = vunpack.c.l.b16 %v112
  %v1241 = vunpack.c.h.b16 %v112
  %v1242 = vunpack.c.l.b16 %v113
  %v1243 = vunpack.c.h.b16 %v113
  %v1244 = vunpack.c.l.b16 %v114
  %v1245 = vunpack.c.h.b16 %v114
  %v1246 = vunpack.c.l.b16 %v115
  %v1247 = vunpack.c.h.b16 %v115
  %v1248 = vunpack.c.l.b16 %v116
  %v1249 = vunpack.c.h.b16 %v116
  %v1250 = vunpack.c.l.b16 %v117
  %v1251 = vunpack.c.h.b16 %v117
  %v1252 = vunpack.c.l.b16 %v118
  %v1253 = vunpack.c.h.b16 %v118
  %v1254 = vunpack.c.l.b16 %v119
  %v1255 = vunpack.c.h.b16 %v119
  %v1256 = vunpack.c.l.b16 %v120
  %v1257 = vunpack.c.h.b16 %v120
  %v1258 = vunpack.c.l.b16 %v121
  %v1259 = vunpack.c.h.b16 %v121
  %v1260 = vunpack.c.l.b16 %v122
  %v1261 = vunpack.c.h.b16 %v122
  %v1262 = vunpack.c.l.b16 %v123
  %v1263 = vunpack.c.h.b16 %v123
  %v1264 = vunpack.c.l.b16 %v124
  %v1265 = vunpack.c.h.b16 %v124
  %v1266 = vunpack.c.l.b16 %v125
  %v1267 = vunpack.c.h.b16 %v125
  %v1268 = vunpack.c.l.b16 %v126
  %v1269 = vunpack.c.h.b16 %v126
  %v1270 = vunpack.c.l.b16 %v127
  %v1271 = vunpack.c.h.b16 %v127
  %v1272 = vunpack.c.l.b16 %v128
  %v1273 = vunpack.c.h.b16 %v128
  %v1274 = vunpack.c.l.b16 %v129
  %v1275 = vunpack.c.h.b16 %v129
  %v1276 = vunpack.c.l.b16 %v130
  %v1277 = vunpack.c.h.b16 %v130
  %v1278 = vunpack.c.l.b16 %v131
  %v1279 = vunpack.c.h.b16 %v131
  %v1280 = vunpack.c.l.b16 %v132
  %v1281 = vunpack.c.h.b16 %v132
  %v1282 = vunpack.c.l.b16 %v133
  %v1283 = vunpack.c.h.b16 %v133
  %v1284 = vunpack.c.l.b16 %v134
  %v1285 = vunpack.c.h.b16 %v134
  %v1286 = vunpack.c.l.b16 %v135
  %v1287 = vunpack.c.h.b16 %v135
  %v1288 = vunpack.c.l.b16 %v136
  %v1289 = vunpack.c.h.b16 %v136
  %v1290 = vunpack.c.l.b16 %v137
  %v1291 = vunpack.c.h.b16 %v137
  %v1292 = vunpack.c.l.b16 %v138
  %v1293 = vunpack.c.h.b16 %v138
  %v1294 = vunpack.c.l.b16 %v139
  %v1295 = vunpack.c.h.b16 %v139
  %v1296 = vunpack.c.l.b16 %v140
  %v1297 = vunpack.c.h.b16 %v140
  %v1298 = vunpack.c.l.b16 %v141
  %v1299 = vunpack.c.h.b16 %v141
  %v1300 = vunpack.c.l.b16 %v142
  %v1301 = vunpack.c.h.b16 %v142
  %v1302 = vunpack.c.l.b16 %v143
  %v1303 = vunpack.c.h.b16 %v143
  %v1304 = vunpack.c.l.b16 %v144
  %v1305 = vunpack.c.h.b16 %v144
  %v1306 = vunpack.c.l.b16 %v145
  %v1307 = vunpack.c.h.b16 %v145
  %v1308 = vunpack.c.l.b16 %v146
  %v1309 = vunpack.c.h.b16 %v146
  %v1310 = vunpack.c.l.b16 %v147
  %v1311 = vunpack.c.h.b16 %v147
  %v1312 = vunpack.c.l.b16 %v148
  %v1313 = vunpack.c.h.b16 %v148
  %v1314 = vunpack.c.l.b16 %v149
  %v1315 = vunpack.c.h.b16 %v149
  %v1316 = vunpack.c.l.b16 %v150
  %v1317 = vunpack.c.h.b16 %v150
  %v1318 = vunpack.c.l.b16 %v151
  %v1319 = vunpack.c.h.b16 %v151
  %v1320 = vunpack.c.l.b16 %v152
  %v1321 = vunpack.c.h.b16 %v152
  %v1322 = vunpack.c.l.b16 %v153
  %v1323 = vunpack.c.h.b16 %v153
  %v1324 = vunpack.c.l.b16 %v154
  %v1325 = vunpack.c.h.b16 %v154
  %v1326 = vunpack.c.l.b16 %v155
  %v1327 = vunpack.c.h.b16 %v155
  %v1328 = vunpack.c.l.b16 %v156
  %v1329 = vunpack.c.h.b16 %v156
  %v1330 = vunpack.c.l.b16 %v157
  %v1331 = vunpack.c.h.b16 %v157
  %v1332 = vunpack.c.l.b16 %v158
  %v1333 = vunpack.c.h.b16 %v158
  %v1334 = vunpack.c.l.b16 %v159
  %v1335 = vunpack.c.h.b16 %v159
  %v1336 = vunpack.c.l.b16 %v160
  %v1337 = vunpack.c.h.b16 %v160
  %v1338 = vunpack.c.l.b16 %v161
  %v1339 = vunpack.c.h.b16 %v161
  %v1340 = vunpack.c.l.b16 %v162
  %v1341 = vunpack.c.h.b16 %v162
  %v1342 = vunpack.c.l.b16 %v163
  %v1343 = vunpack.c.h.b16 %v163
  %v1344 = vunpack.c.l.b16 %v164
  %v1345 = vunpack.c.h.b16 %v164
  %v1346 = vunpack.c.l.b16 %v165
  %v1347 = vunpack.c.h.b16 %v165
  %v1348 = vunpack.c.l.b16 %v166
  %v1349 = vunpack.c.h.b16 %v166
  %v1350 = vunpack.c.l.b16 %v167
  %v1351 = vunpack.c.h.b16 %v167
  %v1352 = vunpack.c.l.b16 %v168
  %v1353 = vunpack.c.h.b16 %v168
  %v1354 = vunpack.c.l.b16 %v169
  %v1355 = vunpack.c.h.b16 %v169
  %v1356 = vunpack.c.l.b16 %v170
  %v1357 = vunpack.c.h.b16 %v170
  %v1358 = vunpack.c.l.b16 %v171
  %v1359 = vunpack.c.h.b16 %v171
  %v1360 = vunpack.c.l.b16 %v172
  %v1361 = vunpack.c.h.b16 %v172
  %v1362 = vunpack.c.l.b16 %v173
  %v1363 = vunpack.c.h.b16 %v173
  %v1364 = vunpack.c.l.b16 %v174
  %v1365 = vunpack.c.h.b16 %v174
  %v1366 = vunpack.c.l.b16 %v175
  %v1367 = vunpack.c.h.b16 %v175
  %v1368 = vunpack.c.l.b16 %v176
  %v1369 = vunpack.c.h.b16 %v176
  %v1370 = vunpack.c.l.b16 %v177
  %v1371 = vunpack.c.h.b16 %v177
  %v1372 = vunpack.c.l.b16 %v178
  %v1373 = vunpack.c.h.b16 %v178
  %v1374 = vunpack.c.l.b16 %v179
  %v1375 = vunpack.c.h.b16 %v179
  %v1376 = vunpack.c.l.b16 %v180
  %v1377 = vunpack.c.h.b16 %v180
  %v1378 = vunpack.c.l.b16 %v181
  %v1379 = vunpack.c.h.b16 %v181
  %v1380 = vunpack.c.l.b16 %v182
  %v1381 = vunpack.c.h.b16 %v182
  %v1382 = vunpack.c.l.b16 %v183
  %v1383 = vunpack.c.h.b16 %v183
  %v1384 = vunpack.c.l.b16 %v184
  %v1385 = vunpack.c.h.b16 %v184
  %v1386 = vunpack.c.l.b16 %v185
  %v1387 = vunpack.c.h.b16 %v185
  %v1388 = vunpack.c.l.b16 %v186
  %v1389 = vunpack.c.h.b16 %v186
  %v1390 = vunpack.c.l.b16 %v187
  %v1391 = vunpack.c.h.b16 %v187
  %v1392 = vunpack.c.l.b16 %v188
  %v1393 = vunpack.c.h.b16 %v188
  %v1394 = vunpack.c.l.b16 %v189
  %v1395 = vunpack.c.h.b16 %v189
  %v1396 = vunpack.c.l.b16 %v190
  %v1397 = vunpack.c.h.b16 %v190
  %v1398 = vunpack.c.l.b16 %v191
  %v1399 = vunpack.c.h.b16 %v191
  %v1400 = vunpack.c.l.b16 %v192
  %v1401 = vunpack.c.h.b16 %v192
  %v1402 = vunpack.c.l.b16 %v193
  %v1403 = vunpack.c.h.b16 %v193
  %v1404 = vunpack.c.l.b16 %v194
  %v1405 = vunpack.c.h.b16 %v194
  %v1406 = vunpack.c.l.b16 %v195
  %v1407 = vunpack.c.h.b16 %v195
  %v1408 = vunpack.c.l.b16 %v196
  %v1409 = vunpack.c.h.b16 %v196
  %v1410 = vunpack.c.l.b16 %v197
  %v1411 = vunpack.c.h.b16 %v197
  %v1412 = vunpack.c.l.b16 %v198
  %v1413 = vunpack.c.h.b16 %v198
  %v1414 = vunpack.c.l.b16 %v199
  %v1415 = vunpack.c.h.b16 %v199
  %v1416 = vunpack.c.l.b16 %v200
  %v1417 = vunpack.c.h.b16 %v200
  %v1418 = vunpack.c.l.b16 %v201
  %v1419 = vunpack.c.h.b16 %v201
  %v1420 = vunpack.c.l.b16 %v202
  %v1421 = vunpack.c.h.b16 %v202
  %v1422 = vunpack.c.l.b16 %v203
  %v1423 = vunpack.c.h.b16 %v203
  %v1424 = vunpack.c.l.b16 %v204
  %v1425 = vunpack.c.h.b16 %v204
  %v1426 = vunpack.c.l.b16 %v205
  %v1427 = vunpack.c.h.b16 %v205
  %v1428 = vunpack.c.l.b16 %v206
  %v1429 = vunpack.c.h.b16 %v206
  %v1430 = vunpack.c.l.b16 %v207
  %v1431 = vunpack.c.h.b16 %v207
  %v1432 = vunpack.c.l.b16 %v208
  %v1433 = vunpack.c.h.b16 %v208
  %v1434 = vunpack.c.l.b16 %v209
  %v1435 = vunpack.c.h.b16 %v209
  %v1436 = vunpack.c.l.b16 %v210
  %v1437 = vunpack.c.h.b16 %v210
  %v1438 = vunpack.c.l.b16 %v211
  %v1439 = vunpack.c.h.b16 %v211
  %v1440 = vunpack.c.l.b16 %v212
  %v1441 = vunpack.c.h.b16 %v212
  %v1442 = vunpack.c.l.b16 %v213
  %v1443 = vunpack.c.h.b16 %v213
  %v1444 = vunpack.c.l.b16 %v214
  %v1445 = vunpack.c.h.b16 %v214
  %v1446 = vunpack.c.l.b16 %v215
  %v1447 = vunpack.c.h.b16 %v215
  %v1448 = vunpack.c.l.b16 %v216
  %v1449 = vunpack.c.h.b16 %v216
  %v1450 = vunpack.c.l.b16 %v217
  %v1451 = vunpack.c.h.b16 %v217
  %v1452 = vunpack.c.l.b16 %v218
  %v1453 = vunpack.c.h.b16 %v218
  %v1454 = vunpack.c.l.b16 %v219
  %v1455 = vunpack.c.h.b16 %v219
  %v1456 = vunpack.c.l.b16 %v220
  %v1457 = vunpack.c.h.b16 %v220
  %v1458 = vunpack.c.l.b16 %v221
  %v1459 = vunpack.c.h.b16 %v221
  %v1460 = vunpack.c.l.b16 %v222
  %v1461 = vunpack.c.h.b16 %v222
  %v1462 = vunpack.c.l.b16 %v223
  %v1463 = vunpack.c.h.b16 %v223
  %v1464 = vunpack.c.l.b16 %v224
  %v1465 = vunpack.c.h.b16 %v224
  %v1466 = vunpack.c.l.b16 %v225
  %v1467 = vunpack.c.h.b16 %v225
  %v1468 = vunpack.c.l.b16 %v226
  %v1469 = vunpack.c.h.b16 %v226
  %v1470 = vunpack.c.l.b16 %v227
  %v1471 = vunpack.c.h.b16 %v227
  %v1472 = vunpack.c.l.b16 %v228
  %v1473 = vunpack.c.h.b16 %v228
  %v1474 = vunpack.c.l.b16 %v229
  %v1475 = vunpack.c.h.b16 %v229
  %v1476 = vunpack.c.l.b16 %v230
  %v1477 = vunpack.c.h.b16 %v230
  %v1478 = vunpack.c.l.b16 %v231
  %v1479 = vunpack.c.h.b16 %v231
  %v1480 = vunpack.c.l.b16 %v232
  %v1481 = vunpack.c.h.b16 %v232
  %v1482 = vunpack.c.l.b16 %v233
  %v1483 = vunpack.c.h.b16 %v233
  %v1484 = vunpack.c.l.b16 %v234
  %v1485 = vunpack.c.h.b16 %v234
  %v1486 = vunpack.c.l.b16 %v235
  %v1487 = vunpack.c.h.b16 %v235
  %v1488 = vunpack.c.l.b16 %v236
  %v1489 = vunpack.c.h.b16 %v236
  %v1490 = vunpack.c.l.b16 %v237
  %v1491 = vunpack.c.h.b16 %v237
  %v1492 = vunpack.c.l.b16 %v238
  %v1493 = vunpack.c.h.b16 %v238
  %v1494 = vunpack.c.l.b16 %v239
  %v1495 = vunpack.c.h.b16 %v239
  %v1496 = vunpack.c.l.b16 %v240
  %v1497 = vunpack.c.h.b16 %v240
  %v1498 = vunpack.c.l.b16 %v241
  %v1499 = vunpack.c.h.b16 %v241
  %v1500 = vunpack.c.l.b16 %v242
  %v1501 = vunpack.c.h.b16 %v242
  %v1502 = vunpack.c.l.b16 %v243
  %v1503 = vunpack.c.h.b16 %v243
  %v1504 = vunpack.c.l.b16 %v244
  %v1505 = vunpack.c.h.b16 %v244
  %v1506 = vunpack.c.l.b16 %v245
  %v1507 = vunpack.c.h.b16 %v245
  %v1508 = vunpack.c.l.b16 %v246
  %v1509 = vunpack.c.h.b16 %v246
  %v1510 = vunpack.c.l.b16 %v247
  %v1511 = vunpack.c.h.b16 %v247
  %v1512 = vunpack.c.l.b16 %v248
  %v1513 = vunpack.c.h.b16 %v248
  %v1514 = vunpack.c.l.b16 %v249
  %v1515 = vunpack.c.h.b16 %v249
  %v1516 = vunpack.c.l.b16 %v250
  %v1517 = vunpack.c.h.b16 %v250
  %v1518 = vunpack.c.l.b16 %v251
  %v1519 = vunpack.c.h.b16 %v251
  %v1520 = vunpack.c.l.b16 %v252
  %v1521 = vunpack.c.h.b16 %v252
  %v1522 = vunpack.c.l.b16 %v253
  %v1523 = vunpack.c.h.b16 %v253
  %v1524 = vunpack.c.l.b16 %v254
  %v1525 = vunpack.c.h.b16 %v254
  %v1526 = vunpack.c.l.b16 %v255
  %v1527 = vunpack.c.h.b16 %v255
  %v1528 = vunpack.c.l.b16 %v256
  %v1529 = vunpack.c.h.b16 %v256
  %v1530 = vunpack.c.l.b16 %v257
  %v1531 = vunpack.c.h.b16 %v257
  %v1532 = vunpack.c.l.b16 %v258
  %v1533 = vunpack.c.h.b16 %v258
  %v1534 = vunpack.c.l.b16 %v259
  %v1535 = vunpack.c.h.b16 %v259
  %v1536 = vunpack.c.l.b16 %v260
  %v1537 = vunpack.c.h.b16 %v260
  %v1538 = vunpack.c.l.b16 %v261
  %v1539 = vunpack.c.h.b16 %v261
  %v1540 = vunpack.c.l.b16 %v262
  %v1541 = vunpack.c.h.b16 %v262
  %v1542 = vunpack.c.l.b16 %v263
  %v1543 = vunpack.c.h.b16 %v263
  %v1544 = vunpack.c.l.b16 %v264
  %v1545 = vunpack.c.h.b16 %v264
  %v1546 = vunpack.c.l.b16 %v265
  %v1547 = vunpack.c.h.b16 %v265
  %v1548 = vunpack.c.l.b16 %v266
  %v1549 = vunpack.c.h.b16 %v266
  %v1550 = vunpack.c.l.b16 %v267
  %v1551 = vunpack.c.h.b16 %v267
  %v1552 = vunpack.c.l.b16 %v268
  %v1553 = vunpack.c.h.b16 %v268
  %v1554 = vunpack.c.l.b16 %v269
  %v1555 = vunpack.c.h.b16 %v269
  %v1556 = vunpack.c.l.b16 %v270
  %v1557 = vunpack.c.h.b16 %v270
  %v1558 = vunpack.c.l.b16 %v271
  %v1559 = vunpack.c.h.b16 %v271
  %v1560 = vunpack.c.l.b16 %v272
  %v1561 = vunpack.c.h.b16 %v272
  %v1562 = vunpack.c.l.b16 %v273
  %v1563 = vunpack.c.h.b16 %v273
  %v1564 = vunpack.c.l.b16 %v274
  %v1565 = vunpack.c.h.b16 %v274
  %v1566 = vunpack.c.l.b16 %v275
  %v1567 = vunpack.c.h.b16 %v275
  %v1568 = vunpack.c.l.b16 %v276
  %v1569 = vunpack.c.h.b16 %v276
  %v1570 = vunpack.c.l.b16 %v277
  %v1571 = vunpack.c.h.b16 %v277
  %v1572 = vunpack.c.l.b16 %v278
  %v1573 = vunpack.c.h.b16 %v278
  %v1574 = vunpack.c.l.b16 %v279
  %v1575 = vunpack.c.h.b16 %v279
  %v1576 = vunpack.c.l.b16 %v280
  %v1577 = vunpack.c.h.b16 %v280
  %v1578 = vunpack.c.l.b16 %v281
  %v1579 = vunpack.c.h.b16 %v281
  %v1580 = vunpack.c.l.b16 %v282
  %v1581 = vunpack.c.h.b16 %v282
  %v1582 = vunpack.c.l.b16 %v283
  %v1583 = vunpack.c.h.b16 %v283
  %v1584 = vunpack.c.l.b16 %v284
  %v1585 = vunpack.c.h.b16 %v284
  %v1586 = vunpack.c.l.b16 %v285
  %v1587 = vunpack.c.h.b16 %v285
  %v1588 = vunpack.c.l.b16 %v286
  %v1589 = vunpack.c.h.b16 %v286
  %v1590 = vunpack.c.l.b16 %v287
  %v1591 = vunpack.c.h.b16 %v287
  %v1592 = vunpack.c.l.b16 %v288
  %v1593 = vunpack.c.h.b16 %v288
  %v1594 = vunpack.c.l.b16 %v289
  %v1595 = vunpack.c.h.b16 %v289
  %v1596 = vunpack.c.l.b16 %v290
  %v1597 = vunpack.c.h.b16 %v290
  %v1598 = vunpack.c.l.b16 %v291
  %v1599 = vunpack.c.h.b16 %v291
  %v1600 = vunpack.c.l.b16 %v292
  %v1601 = vunpack.c.h.b16 %v292
  %v1602 = vunpack.c.l.b16 %v293
  %v1603 = vunpack.c.h.b16 %v293
  %v1604 = vunpack.c.l.b16 %v294
  %v1605 = vunpack.c.h.b16 %v294
  %v1606 = vunpack.c.l.b16 %v295
  %v1607 = vunpack.c.h.b16 %v295
  %v1608 = vunpack.c.l.b16 %v296
  %v1609 = vunpack.c.h.b16 %v296
  %v1610 = vunpack.c.l.b16 %v297
  %v1611 = vunpack.c.h.b16 %v297
  %v1612 = vunpack.c.l.b16 %v298
  %v1613 = vunpack.c.h.b16 %v298
  %v1614 = vunpack.c.l.b16 %v299
  %v1615 = vunpack.c.h.b16 %v299
  %v1616 = vunpack.c.l.b16 %v300
  %v1617 = vunpack.c.h.b16 %v300
  %v1618 = vunpack.c.l.b16 %v301
  %v1619 = vunpack.c.h.b16 %v301
  %v1620 = vunpack.c.l.b16 %v302
  %v1621 = vunpack.c.h.b16 %v302
  %v1622 = vunpack.c.l.b16 %v303
  %v1623 = vunpack.c.h.b16 %v303
  %v1624 = vunpack.c.l.b16 %v304
  %v1625 = vunpack.c.h.b16 %v304
  %v1626 = vunpack.c.l.b16 %v305
  %v1627 = vunpack.c.h.b16 %v305
  %v1628 = vunpack.c.l.b16 %v306
  %v1629 = vunpack.c.h.b16 %v306
  %v1630 = vunpack.c.l.b16 %v307
  %v1631 = vunpack.c.h.b16 %v307
  %v1632 = vunpack.c.l.b16 %v308
  %v1633 = vunpack.c.h.b16 %v308
  %v1634 = vunpack.c.l.b16 %v309
  %v1635 = vunpack.c.h.b16 %v309
  %v1636 = vunpack.c.l.b16 %v310
  %v1637 = vunpack.c.h.b16 %v310
  %v1638 = vunpack.c.l.b16 %v311
  %v1639 = vunpack.c.h.b16 %v311
  %v1640 = vunpack.c.l.b16 %v312
  %v1641 = vunpack.c.h.b16 %v312
  %v1642 = vunpack.c.l.b16 %v313
  %v1643 = vunpack.c.h.b16 %v313
  %v1644 = vunpack.c.l.b16 %v314
  %v1645 = vunpack.c.h.b16 %v314
  %v1646 = vunpack.c.l.b16 %v315
  %v1647 = vunpack.c.h.b16 %v315
  %v1648 = vunpack.c.l.b16 %v316
  %v1649 = vunpack.c.h.b16 %v316
  %v1650 = vunpack.c.l.b16 %v317
  %v1651 = vunpack.c.h.b16 %v317
  %v1652 = vunpack.c.l.b16 %v318
  %v1653 = vunpack.c.h.b16 %v318
  %v1654 = vunpack.c.l.b16 %v319
  %v1655 = vunpack.c.h.b16 %v319
  %v1656 = vunpack.c.l.b16 %v320
  %v1657 = vunpack.c.h.b16 %v320
  %v1658 = vunpack.c.l.b16 %v321
  %v1659 = vunpack.c.h.b16 %v321
  %v1660 = vunpack.c.l.b16 %v322
  %v1661 = vunpack.c.h.b16 %v322
  %v1662 = vunpack.c.l.b16 %v323
  %v1663 = vunpack.c.h.b16 %v323
  %v1664 = vunpack.c.l.b16 %v324
  %v1665 = vunpack.c.h.b16 %v324
  %v1666 = vunpack.c.l.b16 %v325
  %v1667 = vunpack.c.h.b16 %v325
  %v1668 = vunpack.c.l.b16 %v326
  %v1669 = vunpack.c.h.b16 %v326
  %v1670 = vunpack.c.l.b16 %v327
  %v1671 = vunpack.c.h.b16 %v327
  %v1672 = vunpack.c.l.b16 %v328
  %v1673 = vunpack.c.h.b16 %v328
  %v1674 = vunpack.c.l.b16 %v329
  %v1675 = vunpack.c.h.b16 %v329
  %v1676 = vunpack.c.l.b16 %v330
  %v1677 = vunpack.c.h.b16 %v330
  %v1678 = vunpack.c.l.b16 %v331
  %v1679 = vunpack.c.h.b16 %v331
  %v1680 = vunpack.c.l.b16 %v332
  %v1681 = vunpack.c.h.b16 %v332
  %v1682 = vunpack.c.l.b16 %v333
  %v1683 = vunpack.c.h.b16 %v333
  %v1684 = vunpack.c.l.b16 %v334
  %v1685 = vunpack.c.h.b16 %v334
  %v1686 = vunpack.c.l.b16 %v335
  %v1687 = vunpack.c.h.b16 %v335
  %v1688 = vunpack.c.l.b16 %v336
  %v1689 = vunpack.c.h.b16 %v336
  %v1690 = vunpack.c.l.b16 %v337
  %v1691 = vunpack.c.h.b16 %v337
  %v1692 = vunpack.c.l.b16 %v338
  %v1693 = vunpack.c.h.b16 %v338
  %v1694 = vunpack.c.l.b16 %v339
  %v1695 = vunpack.c.h.b16 %v339
  %v1696 = vunpack.c.l.b16 %v340
  %v1697 = vunpack.c.h.b16 %v340
  %v1698 = vunpack.c.l.b16 %v341
  %v1699 = vunpack.c.h.b16 %v341
  %v1700 = vunpack.c.l.b16 %v342
  %v1701 = vunpack.c.h.b16 %v342
  %v1702 = vunpack.c.l.b16 %v343
  %v1703 = vunpack.c.h.b16 %v343
  %v1704 = vunpack.c.l.b16 %v344
  %v1705 = vunpack.c.h.b16 %v344
  %v1706 = vunpack.c.l.b16 %v345
  %v1707 = vunpack.c.h.b16 %v345
  %v1708 = vunpack.c.l.b16 %v346
  %v1709 = vunpack.c.h.b16 %v346
  %v1710 = vunpack.c.l.b16 %v347
  %v1711 = vunpack.c.h.b16 %v347
  %v1712 = vunpack.c.l.b16 %v348
  %v1713 = vunpack.c.h.b16 %v348
  %v1714 = vunpack.c.l.b16 %v349
  %v1715 = vunpack.c.h.b16 %v349
  %v1716 = vunpack.c.l.b16 %v350
  %v1717 = vunpack.c.h.b16 %v350
  %v1718 = vunpack.c.l.b16 %v351
  %v1719 = vunpack.c.h.b16 %v351
  %v1720 = vunpack.c.l.b16 %v352
  %v1721 = vunpack.c.h.b16 %v352
  %v1722 = vunpack.c.l.b16 %v353
  %v1723 = vunpack.c.h.b16 %v353
  %v1724 = vunpack.c.l.b16 %v354
  %v1725 = vunpack.c.h.b16 %v354
  %v1726 = vunpack.c.l.b16 %v355
  %v1727 = vunpack.c.h.b16 %v355
  %v1728 = vunpack.c.l.b16 %v356
  %v1729 = vunpack.c.h.b16 %v356
  %v1730 = vunpack.c.l.b16 %v357
  %v1731 = vunpack.c.h.b16 %v357
  %v1732 = vunpack.c.l.b16 %v358
  %v1733 = vunpack.c.h.b16 %v358
  %v1734 = vunpack.c.l.b16 %v359
  %v1735 = vunpack.c.h.b16 %v359
  %v1736 = vunpack.c.l.b16 %v360
  %v1737 = vunpack.c.h.b16 %v360
  %v1738 = vunpack.c.l.b16 %v361
  %v1739 = vunpack.c.h.b16 %v361
  %v1740 = vunpack.c.l.b16 %v362
  %v1741 = vunpack.c.h.b16 %v362
  %v1742 = vunpack.c.l.b16 %v363
  %v1743 = vunpack.c.h.b16 %v363
  %v1744 = vunpack.c.l.b16 %v364
  %v1745 = vunpack.c.h.b16 %v364
  %v1746 = vunpack.c.l.b16 %v365
  %v1747 = vunpack.c.h.b16 %v365
  %v1748 = vunpack.c.l.b16 %v366
  %v1749 = vunpack.c.h.b16 %v366
  %v1750 = vunpack.c.l.b16 %v367
  %v1751 = vunpack.c.h.b16 %v367
  %v1752 = vunpack.c.l.b16 %v368
  %v1753 = vunpack.c.h.b16 %v368
  %v1754 = vunpack.c.l.b16 %v369
  %v1755 = vunpack.c.h.b16 %v369
  %v1756 = vunpack.c.l.b16 %v370
  %v1757 = vunpack.c.h.b16 %v370
  %v1758 = vunpack.c.l.b16 %v371
  %v1759 = vunpack.c.h.b16 %v371
  %v1760 = vunpack.c.l.b16 %v372
  %v1761 = vunpack.c.h.b16 %v372
  %v1762 = vunpack.c.l.b16 %v373
  %v1763 = vunpack.c.h.b16 %v373
  %v1764 = vunpack.c.l.b16 %v374
  %v1765 = vunpack.c.h.b16 %v374
  %v1766 = vunpack.c.l.b16 %v375
  %v1767 = vunpack.c.h.b16 %v375
  %v1768 = vunpack.c.l.b16 %v376
  %v1769 = vunpack.c.h.b16 %v376
  %v1770 = vunpack.c.l.b16 %v377
  %v1771 = vunpack.c.h.b16 %v377
  %v1772 = vunpack.c.l.b16 %v378
  %v1773 = vunpack.c.h.b16 %v378
  %v1774 = vunpack.c.l.b16 %v379
  %v1775 = vunpack.c.h.b16 %v379
  %v1776 = vunpack.c.l.b16 %v380
  %v1777 = vunpack.c.h.b16 %v380
  %v1778 = vunpack.c.l.b16 %v381
  %v1779 = vunpack.c.h.b16 %v381
  %v1780 = vunpack.c.l.b16 %v382
  %v1781 = vunpack.c.h.b16 %v382
  %v1782 = vunpack.c.l.b16 %v383
  %v1783 = vunpack.c.h.b16 %v383
  %v1784 = vunpack.c.l.b16 %v384
  %v1785 = vunpack.c.h.b16 %v384
  %v1786 = vunpack.c.l.b16 %v385
  %v1787 = vunpack.c.h.b16 %v385
  %v1788 = vunpack.c.l.b16 %v386
  %v1789 = vunpack.c.h.b16 %v386
  %v1790 = vunpack.c.l.b16 %v387
  %v1791 = vunpack.c.h.b16 %v387
  %v1792 = vunpack.c.l.b16 %v388
  %v1793 = vunpack.c.h.b16 %v388
  %v1794 = vunpack.c.l.b16 %v389
  %v1795 = vunpack.c.h.b16 %v389
  %v1796 = vunpack.c.l.b16 %v390
  %v1797 = vunpack.c.h.b16 %v390
  %v1798 = vunpack.c.l.b16 %v391
  %v1799 = vunpack.c.h.b16 %v391
  %v1800 = vunpack.c.l.b16 %v392
  %v1801 = vunpack.c.h.b16 %v392
  %v1802 = vunpack.c.l.b16 %v393
  %v1803 = vunpack.c.h.b16 %v393
  %v1804 = vunpack.c.l.b16 %v394
  %v1805 = vunpack.c.h.b16 %v394
  %v1806 = vunpack.c.l.b16 %v395
  %v1807 = vunpack.c.h.b16 %v395
  %v1808 = vunpack.c.l.b16 %v396
  %v1809 = vunpack.c.h.b16 %v396
  %v1810 = vunpack.c.l.b16 %v397
  %v1811 = vunpack.c.h.b16 %v397
  %v1812 = vunpack.c.l.b16 %v398
  %v1813 = vunpack.c.h.b16 %v398
  %v1814 = vunpack.c.l.b16 %v399
  %v1815 = vunpack.c.h.b16 %v399
  %v1816 = vunpack.c.l.b16 %v400
  %v1817 = vunpack.c.h.b16 %v400
  %v1818 = vunpack.c.l.b16 %v401
  %v1819 = vunpack.c.h.b16 %v401
  %v1820 = vunpack.c.l.b16 %v402
  %v1821 = vunpack.c.h.b16 %v402
  %v1822 = vunpack.c.l.b16 %v403
  %v1823 = vunpack.c.h.b16 %v403
  %v1824 = vunpack.c.l.b16 %v404
  %v1825 = vunpack.c.h.b16 %v404
  %v1826 = vunpack.c.l.b16 %v405
  %v1827 = vunpack.c.h.b16 %v405
  %v1828 = vunpack.c.l.b16 %v406
  %v1829 = vunpack.c.h.b16 %v406
  %v1830 = vunpack.c.l.b16 %v407
  %v1831 = vunpack.c.h.b16 %v407
  %v1832 = vunpack.c.l.b16 %v408
  %v1833 = vunpack.c.h.b16 %v408
  %v1834 = vunpack.c.l.b16 %v409
  %v1835 = vunpack.c.h.b16 %v409
  %v1836 = vunpack.c.l.b16 %v410
  %v1837 = vunpack.c.h.b16 %v410
  %v1838 = vunpack.c.l.b16 %v411
  %v1839 = vunpack.c.h.b16 %v411
  %v1840 = vunpack.c.l.b16 %v412
  %v1841 = vunpack.c.h.b16 %v412
  %v1842 = vunpack.c.l.b16 %v413
  %v1843 = vunpack.c.h.b16 %v413
  %v1844 = vunpack.c.l.b16 %v414
  %v1845 = vunpack.c.h.b16 %v414
  %v1846 = vunpack.c.l.b16 %v415
  %v1847 = vunpack.c.h.b16 %v415
  %v1848 = vunpack.c.l.b16 %v416
  %v1849 = vunpack.c.h.b16 %v416
  %v1850 = vunpack.c.l.b16 %v417
  %v1851 = vunpack.c.h.b16 %v417
  %v1852 = vunpack.c.l.b16 %v418
  %v1853 = vunpack.c.h.b16 %v418
  %v1854 = vunpack.c.l.b16 %v419
  %v1855 = vunpack.c.h.b16 %v419
  %v1856 = vunpack.c.l.b16 %v420
  %v1857 = vunpack.c.h.b16 %v420
  %v1858 = vunpack.c.l.b16 %v421
  %v1859 = vunpack.c.h.b16 %v421
  %v1860 = vunpack.c.l.b16 %v422
  %v1861 = vunpack.c.h.b16 %v422
  %v1862 = vunpack.c.l.b16 %v423
  %v1863 = vunpack.c.h.b16 %v423
  %v1864 = vunpack.c.l.b16 %v424
  %v1865 = vunpack.c.h.b16 %v424
  %v1866 = vunpack.c.l.b16 %v425
  %v1867 = vunpack.c.h.b16 %v425
  %v1868 = vunpack.c.l.b16 %v426
  %v1869 = vunpack.c.h.b16 %v426
  %v1870 = vunpack.c.l.b16 %v427
  %v1871 = vunpack.c.h.b16 %v427
  %v1872 = vunpack.c.l.b16 %v428
  %v1873 = vunpack.c.h.b16 %v428
  %v1874 = vunpack.c.l.b16 %v429
  %v1875 = vunpack.c.h.b16 %v429
  %v1876 = vunpack.c.l.b16 %v430
  %v1877 = vunpack.c.h.b16 %v430
  %v1878 = vunpack.c.l.b16 %v431
  %v1879 = vunpack.c.h.b16 %v431
  %v1880 = vunpack.c.l.b16 %v432
  %v1881 = vunpack.c.h.b16 %v432
  %v1882 = vunpack.c.l.b16 %v433
  %v1883 = vunpack.c.h.b16 %v433
  %v1884 = vunpack.c.l.b16 %v434
  %v1885 = vunpack.c.h.b16 %v434
  %v1886 = vunpack.c.l.b16 %v435
  %v1887 = vunpack.c.h.b16 %v435
  %v1888 = vunpack.c.l.b16 %v436
  %v1889 = vunpack.c.h.b16 %v436
  %v1890 = vunpack.c.l.b16 %v437
  %v1891 = vunpack.c.h.b16 %v437
  %v1892 = vunpack.c.l.b16 %v438
  %v1893 = vunpack.c.h.b16 %v438
  %v1894 = vunpack.c.l.b16 %v439
  %v1895 = vunpack.c.h.b16 %v439
  %v1896 = vunpack.c.l.b16 %v440
  %v1897 = vunpack.c.h.b16 %v440
  %v1898 = vunpack.c.l.b16 %v441
  %v1899 = vunpack.c.h.b16 %v441
  %v1900 = vunpack.c.l.b16 %v442
  %v1901 = vunpack.c.h.b16 %v442
  %v1902 = vunpack.c.l.b16 %v443
  %v1903 = vunpack.c.h.b16 %v443
  %v1904 = vunpack.c.l.b16 %v444
  %v1905 = vunpack.c.h.b16 %v444
  %v1906 = vunpack.c.l.b16 %v445
  %v1907 = vunpack.c.h.b16 %v445
  %v1908 = vunpack.c.l.b16 %v446
  %v1909 = vunpack.c.h.b16 %v446
  %v1910 = vunpack.c.l.b16 %v447
  %v1911 = vunpack.c.h.b16 %v447
  %v1912 = vunpack.c.l.b16 %v448
  %v1913 = vunpack.c.h.b16 %v448
  %v1914 = vunpack.c.l.b16 %v449
  %v1915 = vunpack.c.h.b16 %v449
  %v1916 = vunpack.c.l.b16 %v450
  %v1917 = vunpack.c.h.b16 %v450
  %v1918 = vunpack.c.l.b16 %v451
  %v1919 = vunpack.c.h.b16 %v451
  %v1920 = vunpack.c.l.b16 %v452
  %v1921 = vunpack.c.h.b16 %v452
  %v1922 = vunpack.c.l.b16 %v453
  %v1923 = vunpack.c.h.b16 %v453
  %v1924 = vunpack.c.l.b16 %v454
  %v1925 = vunpack.c.h.b16 %v454
  %v1926 = vunpack.c.l.b16 %v455
  %v1927 = vunpack.c.h.b16 %v455
  %v1928 = vunpack.c.l.b16 %v456
  %v1929 = vunpack.c.h.b16 %v456
  %v1930 = vunpack.c.l.b16 %v457
  %v1931 = vunpack.c.h.b16 %v457
  %v1932 = vunpack.c.l.b16 %v458
  %v1933 = vunpack.c.h.b16 %v458
  %v1934 = vunpack.c.l.b16 %v459
  %v1935 = vunpack.c.h.b16 %v459
  %v1936 = vunpack.c.l.b16 %v460
  %v1937 = vunpack.c.h.b16 %v460
  %v1938 = vunpack.c.l.b16 %v461
  %v1939 = vunpack.c.h.b16 %v461
  %v1940 = vunpack.c.l.b16 %v462
  %v1941 = vunpack.c.h.b16 %v462
  %v1942 = vunpack.c.l.b16 %v463
  %v1943 = vunpack.c.h.b16 %v463
  %v1944 = vunpack.c.l.b16 %v464
  %v1945 = vunpack.c.h.b16 %v464
  %v1946 = vunpack.c.l.b16 %v465
  %v1947 = vunpack.c.h.b16 %v465
  %v1948 = vunpack.c.l.b16 %v466
  %v1949 = vunpack.c.h.b16 %v466
  %v1950 = vunpack.c.l.b16 %v467
  %v1951 = vunpack.c.h.b16 %v467
  %v1952 = vunpack.c.l.b16 %v468
  %v1953 = vunpack.c.h.b16 %v468
  %v1954 = vunpack.c.l.b16 %v469
  %v1955 = vunpack.c.h.b16 %v469
  %v1956 = vunpack.c.l.b16 %v470
  %v1957 = vunpack.c.h.b16 %v470
  %v1958 = vunpack.c.l.b16 %v471
  %v1959 = vunpack.c.h.b16 %v471
  %v1960 = vunpack.c.l.b16 %v472
  %v1961 = vunpack.c.h.b16 %v472
  %v1962 = vunpack.c.l.b16 %v473
  %v1963 = vunpack.c.h.b16 %v473
  %v1964 = vunpack.c.l.b16 %v474
  %v1965 = vunpack.c.h.b16 %v474
  %v1966 = vunpack.c.l.b16 %v475
  %v1967 = vunpack.c.h.b16 %v475
  %v1968 = vunpack.c.l.b16 %v476
  %v1969 = vunpack.c.h.b16 %v476
  %v1970 = vunpack.c.l.b16 %v477
  %v1971 = vunpack.c.h.b16 %v477
  %v1972 = vunpack.c.l.b16 %v478
  %v1973 = vunpack.c.h.b16 %v478
  %v1974 = vunpack.c.l.b16 %v479
  %v1975 = vunpack.c.h.b16 %v479
  %v1976 = vunpack.c.l.b16 %v480
  %v1977 = vunpack.c.h.b16 %v480
  %v1978 = vunpack.c.l.b16 %v481
  %v1979 = vunpack.c.h.b16 %v481
  %v1980 = vunpack.c.l.b16 %v482
  %v1981 = vunpack.c.h.b16 %v482
  %v1982 = vunpack.c.l.b16 %v483
  %v1983 = vunpack.c.h.b16 %v483
  %v1984 = vunpack.c.l.b16 %v484
  %v1985 = vunpack.c.h.b16 %v484
  %v1986 = vunpack.c.l.b16 %v485
  %v1987 = vunpack.c.h.b16 %v485
  %v1988 = vunpack.c.l.b16 %v486
  %v1989 = vunpack.c.h.b16 %v486
  %v1990 = vunpack.c.l.b16 %v487
  %v1991 = vunpack.c.h.b16 %v487
  %v1992 = vunpack.c.l.b16 %v488
  %v1993 = vunpack.c.h.b16 %v488
  %v1994 = vunpack.c.l.b16 %v489
  %v1995 = vunpack.c.h.b16 %v489
  %v1996 = vunpack.c.l.b16 %v490
  %v1997 = vunpack.c.h.b16 %v490
  %v1998 = vunpack.c.l.b16 %v491
  %v1999 = vunpack.c.h.b16 %v491
  %v2000 = vunpack.c.l.b16 %v492
  %v2001 = vunpack.c.h.b16 %v492
  %v2002 = vunpack.c.l.b16 %v493
  %v2003 = vunpack.c.h.b16 %v493
  %v2004 = vunpack.c.l.b16 %v494
  %v2005 = vunpack.c.h.b16 %v494
  %v2006 = vunpack.c.l.b16 %v495
  %v2007 = vunpack.c.h.b16 %v495
  %v2008 = vunpack.c.l.b16 %v496
  %v2009 = vunpack.c.h.b16 %v496
  %v2010 = vunpack.c.l.b16 %v497
  %v2011 = vunpack.c.h.b16 %v497
  %v2012 = vunpack.c.l.b16 %v498
  %v2013 = vunpack.c.h.b16 %v498
  %v2014 = vunpack.c.l.b16 %v499
  %v2015 = vunpack.c.h.b16 %v499
  %v2016 = vunpack.c.l.b16 %v500
  %v2017 = vunpack.c.h.b16 %v500
  %v2018 = vunpack.c.l.b16 %v501
  %v2019 = vunpack.c.h.b16 %v501
  %v2020 = vunpack.c.l.b16 %v502
  %v2021 = vunpack.c.h.b16 %v502
  %v2022 = vunpack.c.l.b16 %v503
  %v2023 = vunpack.c.h.b16 %v503
  %v2024 = vunpack.c.l.b16 %v504
  %v2025 = vunpack.c.h.b16 %v504
  %v2026 = vunpack.c.l.b16 %v505
  %v2027 = vunpack.c.h.b16 %v505
  %v2028 = vunpack.c.l.b16 %v506
  %v2029 = vunpack.c.h.b16 %v506
  %v2030 = vunpack.c.l.b16 %v507
  %v2031 = vunpack.c.h.b16 %v507
  %v2032 = vunpack.c.l.b16 %v508
  %v2033 = vunpack.c.h.b16 %v508
  %v2034 = vunpack.c.l.b16 %v509
  %v2035 = vunpack.c.h.b16 %v509
  %v2036 = vunpack.c.l.b16 %v510
  %v2037 = vunpack.c.h.b16 %v510
  %v2038 = vunpack.c.l.b16 %v511
  %v2039 = vunpack.c.h.b16 %v511
  %v2040 = vunpack.c.l.b16 %v512
  %v2041 = vunpack.c.h.b16 %v512
  %v2042 = vunpack.c.l.b16 %v513
  %v2043 = vunpack.c.h.b16 %v513
  %v2044 = vunpack.c.l.b16 %v514
  %v2045 = vunpack.c.h.b16 %v514
  %v2046 = vunpack.c.l.b16 %v515
  %v2047 = vunpack.c.h.b16 %v515
  %v2048 = vunpack.c.l.b16 %v516
  %v2049 = vunpack.c.h.b16 %v516
  %v2050 = vunpack.c.l.b16 %v517
  %v2051 = vunpack.c.h.b16 %v517
  %v2052 = vunpack.c.l.b16 %v518
  %v2053 = vunpack.c.h.b16 %v518
  %v2054 = vunpack.c.l.b16 %v519
  %v2055 = vunpack.c.h.b16 %v519
  %v2056 = vunpack.c.l.b16 %v520
  %v2057 = vunpack.c.h.b16 %v520
  %v2058 = vunpack.c.l.b16 %v521
  %v2059 = vunpack.c.h.b16 %v521
  %v2060 = vunpack.c.l.b16 %v522
  %v2061 = vunpack.c.h.b16 %v522
  %v2062 = vunpack.c.l.b16 %v523
  %v2063 = vunpack.c.h.b16 %v523
  %v2064 = vunpack.c.l.b16 %v524
  %v2065 = vunpack.c.h.b16 %v524
  %v2066 = vunpack.c.l.b16 %v525
  %v2067 = vunpack.c.h.b16 %v525
  %v2068 = vunpack.c.l.b16 %v526
  %v2069 = vunpack.c.h.b16 %v526
  %v2070 = vunpack.c.l.b16 %v527
  %v2071 = vunpack.c.h.b16 %v527
  %v2072 = vunpack.c.l.b16 %v528
  %v2073 = vunpack.c.h.b16 %v528
  %v2074 = vunpack.c.l.b16 %v529
  %v2075 = vunpack.c.h.b16 %v529
  %v2076 = vunpack.c.l.b16 %v530
  %v2077 = vunpack.c.h.b16 %v530
  %v2078 = vunpack.c.l.b16 %v531
  %v2079 = vunpack.c.h.b16 %v531
  %v2080 = vunpack.c.l.b16 %v532
  %v2081 = vunpack.c.h.b16 %v532
  %v2082 = vunpack.c.l.b16 %v533
  %v2083 = vunpack.c.h.b16 %v533
  %v2084 = vunpack.c.l.b16 %v534
  %v2085 = vunpack.c.h.b16 %v534
  %v2086 = vunpack.c.l.b16 %v535
  %v2087 = vunpack.c.h.b16 %v535
  %v2088 = vunpack.c.l.b16 %v536
  %v2089 = vunpack.c.h.b16 %v536
  %v2090 = vunpack.c.l.b16 %v537
  %v2091 = vunpack.c.h.b16 %v537
  %v2092 = vpack.c.b16 %v1076, %v1068
  %v2093 = vpack.c.b16 %v1077, %v1069
  %v2094 = vpack.c.b16 %v1078, %v1070
  %v2095 = vpack.c.b16 %v1079, %v1071
  %v2096 = vpack.c.b16 %v1080, %v1072
  %v2097 = vpack.c.b16 %v1081, %v1073
  %v2098 = vpack.c.b16 %v1082, %v1074
  %v2099 = vpack.c.b16 %v1083, %v1075
  %v2100 = vpack.c.b16 %v1092, %v1084
  %v2101 = vpack.c.b16 %v1093, %v1085
  %v2102 = vpack.c.b16 %v1094, %v1086
  %v2103 = vpack.c.b16 %v1095, %v1087
  %v2104 = vpack.c.b16 %v1096, %v1088
  %v2105 = vpack.c.b16 %v1097, %v1089
  %v2106 = vpack.c.b16 %v1098, %v1090
  %v2107 = vpack.c.b16 %v1099, %v1091
  %v2108 = vpack.c.b16 %v1108, %v1100
  %v2109 = vpack.c.b16 %v1109, %v1101
  %v2110 = vpack.c.b16 %v1110, %v1102
  %v2111 = vpack.c.b16 %v1111, %v1103
  %v2112 = vpack.c.b16 %v1112, %v1104
  %v2113 = vpack.c.b16 %v1113, %v1105
  %v2114 = vpack.c.b16 %v1114, %v1106
  %v2115 = vpack.c.b16 %v1115, %v1107
  %v2116 = vpack.c.b16 %v1124, %v1116
  %v2117 = vpack.c.b16 %v1125, %v1117
  %v2118 = vpack.c.b16 %v1126, %v1118
  %v2119 = vpack.c.b16 %v1127, %v1119
  %v2120 = vpack.c.b16 %v1128, %v1120
  %v2121 = vpack.c.b16 %v1129, %v1121
  %v2122 = vpack.c.b16 %v1130, %v1122
  %v2123 = vpack.c.b16 %v1131, %v1123
  %v2124 = vpack.c.b16 %v1140, %v1132
  %v2125 = vpack.c.b16 %v1141, %v1133
  %v2126 = vpack.c.b16 %v1142, %v1134
  %v2127 = vpack.c.b16 %v1143, %v1135
  %v2128 = vpack.c.b16 %v1144, %v1136
  %v2129 = vpack.c.b16 %v1145, %v1137
  %v2130 = vpack.c.b16 %v1146, %v1138
  %v2131 = vpack.c.b16 %v1147, %v1139
  %v2132 = vpack.c.b16 %v1156, %v1148
  %v2133 = vpack.c.b16 %v1157, %v1149
  %v2134 = vpack.c.b16 %v1158, %v1150
  %v2135 = vpack.c.b16 %v1159, %v1151
  %v2136 = vpack.c.b16 %v1160, %v1152
  %v2137 = vpack.c.b16 %v1161, %v1153
  %v2138 = vpack.c.b16 %v1162, %v1154
  %v2139 = vpack.c.b16 %v1163, %v1155
  %v2140 = vpack.c.b16 %v1172, %v1164
  %v2141 = vpack.c.b16 %v1173, %v1165
  %v2142 = vpack.c.b16 %v1174, %v1166
  %v2143 = vpack.c.b16 %v1175, %v1167
  %v2144 = vpack.c.b16 %v1176, %v1168
  %v2145 = vpack.c.b16 %v1177, %v1169
  %v2146 = vpack.c.b16 %v1178, %v1170
  %v2147 = vpack.c.b16 %v1179, %v1171
  %v2148 = vpack.c.b16 %v1188, %v1180
  %v2149 = vpack.c.b16 %v1189, %v1181
  %v2150 = vpack.c.b16 %v1190, %v1182
  %v2151 = vpack.c.b16 %v1191, %v1183
  %v2152 = vpack.c.b16 %v1192, %v1184
  %v2153 = vpack.c.b16 %v1193, %v1185
  %v2154 = vpack.c.b16 %v1194, %v1186
  %v2155 = vpack.c.b16 %v1195, %v1187
  %v2156 = vpack.c.b16 %v1204, %v1196
  %v2157 = vpack.c.b16 %v1205, %v1197
  %v2158 = vpack.c.b16 %v1206, %v1198
  %v2159 = vpack.c.b16 %v1207, %v1199
  %v2160 = vpack.c.b16 %v1208, %v1200
  %v2161 = vpack.c.b16 %v1209, %v1201
  %v2162 = vpack.c.b16 %v1210, %v1202
  %v2163 = vpack.c.b16 %v1211, %v1203
  %v2164 = vpack.c.b16 %v1220, %v1212
  %v2165 = vpack.c.b16 %v1221, %v1213
  %v2166 = vpack.c.b16 %v1222, %v1214
  %v2167 = vpack.c.b16 %v1223, %v1215
  %v2168 = vpack.c.b16 %v1224, %v1216
  %v2169 = vpack.c.b16 %v1225, %v1217
  %v2170 = vpack.c.b16 %v1226, %v1218
  %v2171 = vpack.c.b16 %v1227, %v1219
  %v2172 = vpack.c.b16 %v1236, %v1228
  %v2173 = vpack.c.b16 %v1237, %v1229
  %v2174 = vpack.c.b16 %v1238, %v1230
  %v2175 = vpack.c.b16 %v1239, %v1231
  %v2176 = vpack.c.b16 %v1240, %v1232
  %v2177 = vpack.c.b16 %v1241, %v1233
  %v2178 = vpack.c.b16 %v1242, %v1234
  %v2179 = vpack.c.b16 %v1243, %v1235
  %v2180 = vpack.c.b16 %v1252, %v1244
  %v2181 = vpack.c.b16 %v1253, %v1245
  %v2182 = vpack.c.b16 %v1254, %v1246
  %v2183 = vpack.c.b16 %v1255, %v1247
  %v2184 = vpack.c.b16 %v1256, %v1248
  %v2185 = vpack.c.b16 %v1257, %v1249
  %v2186 = vpack.c.b16 %v1258, %v1250
  %v2187 = vpack.c.b16 %v1259, %v1251
  %v2188 = vpack.c.b16 %v1268, %v1260
  %v2189 = vpack.c.b16 %v1269, %v1261
  %v2190 = vpack.c.b16 %v1270, %v1262
  %v2191 = vpack.c.b16 %v1271, %v1263
  %v2192 = vpack.c.b16 %v1272, %v1264
  %v2193 = vpack.c.b16 %v1273, %v1265
  %v2194 = vpack.c.b16 %v1274, %v1266
  %v2195 = vpack.c.b16 %v1275, %v1267
  %v2196 = vpack.c.b16 %v1284, %v1276
  %v2197 = vpack.c.b16 %v1285, %v1277
  %v2198 = vpack.c.b16 %v1286, %v1278
  %v2199 = vpack.c.b16 %v1287, %v1279
  %v2200 = vpack.c.b16 %v1288, %v1280
  %v2201 = vpack.c.b16 %v1289, %v1281
  %v2202 = vpack.c.b16 %v1290, %v1282
  %v2203 = vpack.c.b16 %v1291, %v1283
  %v2204 = vpack.c.b16 %v1300, %v1292
  %v2205 = vpack.c.b16 %v1301, %v1293
  %v2206 = vpack.c.b16 %v1302, %v1294
  %v2207 = vpack.c.b16 %v1303, %v1295
  %v2208 = vpack.c.b16 %v1304, %v1296
  %v2209 = vpack.c.b16 %v1305, %v1297
  %v2210 = vpack.c.b16 %v1306, %v1298
  %v2211 = vpack.c.b16 %v1307, %v1299
  %v2212 = vpack.c.b16 %v1316, %v1308
  %v2213 = vpack.c.b16 %v1317, %v1309
  %v2214 = vpack.c.b16 %v1318, %v1310
  %v2215 = vpack.c.b16 %v1319, %v1311
  %v2216 = vpack.c.b16 %v1320, %v1312
  %v2217 = vpack.c.b16 %v1321, %v1313
  %v2218 = vpack.c.b16 %v1322, %v1314
  %v2219 = vpack.c.b16 %v1323, %v1315
  %v2220 = vpack.c.b16 %v1332, %v1324
  %v2221 = vpack.c.b16 %v1333, %v1325
  %v2222 = vpack.c.b16 %v1334, %v1326
  %v2223 = vpack.c.b16 %v1335, %v1327
  %v2224 = vpack.c.b16 %v1336, %v1328
  %v2225 = vpack.c.b16 %v1337, %v1329
  %v2226 = vpack.c.b16 %v1338, %v1330
  %v2227 = vpack.c.b16 %v1339, %v1331
  %v2228 = vpack.c.b16 %v1348, %v1340
  %v2229 = vpack.c.b16 %v1349, %v1341
  %v2230 = vpack.c.b16 %v1350, %v1342
  %v2231 = vpack.c.b16 %v1351, %v1343
  %v2232 = vpack.c.b16 %v1352, %v1344
  %v2233 = vpack.c.b16 %v1353, %v1345
  %v2234 = vpack.c.b16 %v1354, %v1346
  %v2235 = vpack.c.b16 %v1355, %v1347
  %v2236 = vpack.c.b16 %v1364, %v1356
  %v2237 = vpack.c.b16 %v1365, %v1357
  %v2238 = vpack.c.b16 %v1366, %v1358
  %v2239 = vpack.c.b16 %v1367, %v1359
  %v2240 = vpack.c.b16 %v1368, %v1360
  %v2241 = vpack.c.b16 %v1369, %v1361
  %v2242 = vpack.c.b16 %v1370, %v1362
  %v2243 = vpack.c.b16 %v1371, %v1363
  %v2244 = vpack.c.b16 %v1380, %v1372
  %v2245 = vpack.c.b16 %v1381, %v1373
  %v2246 = vpack.c.b16 %v1382, %v1374
  %v2247 = vpack.c.b16 %v1383, %v1375
  %v2248 = vpack.c.b16 %v1384, %v1376
  %v2249 = vpack.c.b16 %v1385, %v1377
  %v2250 = vpack.c.b16 %v1386, %v1378
  %v2251 = vpack.c.b16 %v1387, %v1379
  %v2252 = vpack.c.b16 %v1396, %v1388
  %v2253 = vpack.c.b16 %v1397, %v1389
  %v2254 = vpack.c.b16 %v1398, %v1390
  %v2255 = vpack.c.b16 %v1399, %v1391
  %v2256 = vpack.c.b16 %v1400, %v1392
  %v2257 = vpack.c.b16 %v1401, %v1393
  %v2258 = vpack.c.b16 %v1402, %v1394
  %v2259 = vpack.c.b16 %v1403, %v1395
  %v2260 = vpack.c.b16 %v1412, %v1404
  %v2261 = vpack.c.b16 %v1413, %v1405
  %v2262 = vpack.c.b16 %v1414, %v1406
  %v2263 = vpack.c.b16 %v1415, %v1407
  %v2264 = vpack.c.b16 %v1416, %v1408
  %v2265 = vpack.c.b16 %v1417, %v1409
  %v2266 = vpack.c.b16 %v1418, %v1410
  %v2267 = vpack.c.b16 %v1419, %v1411
  %v2268 = vpack.c.b16 %v1428, %v1420
  %v2269 = vpack.c.b16 %v1429, %v1421
  %v2270 = vpack.c.b16 %v1430, %v1422
  %v2271 = vpack.c.b16 %v1431, %v1423
  %v2272 = vpack.c.b16 %v1432, %v1424
  %v2273 = vpack.c.b16 %v1433, %v1425
  %v2274 = vpack.c.b16 %v1434, %v1426
  %v2275 = vpack.c.b16 %v1435, %v1427
  %v2276 = vpack.c.b16 %v1444, %v1436
  %v2277 = vpack.c.b16 %v1445, %v1437
  %v2278 = vpack.c.b16 %v1446, %v1438
  %v2279 = vpack.c.b16 %v1447, %v1439
  %v2280 = vpack.c.b16 %v1448, %v1440
  %v2281 = vpack.c.b16 %v1449, %v1441
  %v2282 = vpack.c.b16 %v1450, %v1442
  %v2283 = vpack.c.b16 %v1451, %v1443
  %v2284 = vpack.c.b16 %v1460, %v1452
  %v2285 = vpack.c.b16 %v1461, %v1453
  %v2286 = vpack.c.b16 %v1462, %v1454
  %v2287 = vpack.c.b16 %v1463, %v1455
  %v2288 = vpack.c.b16 %v1464, %v1456
  %v2289 = vpack.c.b16 %v1465, %v1457
  %v2290 = vpack.c.b16 %v1466, %v1458
  %v2291 = vpack.c.b16 %v1467, %v1459
  %v2292 = vpack.c.b16 %v1476, %v1468
  %v2293 = vpack.c.b16 %v1477, %v1469
  %v2294 = vpack.c.b16 %v1478, %v1470
  %v2295 = vpack.c.b16 %v1479, %v1471
  %v2296 = vpack.c.b16 %v1480, %v1472
  %v2297 = vpack.c.b16 %v1481, %v1473
  %v2298 = vpack.c.b16 %v1482, %v1474
  %v2299 = vpack.c.b16 %v1483, %v1475
  %v2300 = vpack.c.b16 %v1492, %v1484
  %v2301 = vpack.c.b16 %v1493, %v1485
  %v2302 = vpack.c.b16 %v1494, %v1486
  %v2303 = vpack.c.b16 %v1495, %v1487
  %v2304 = vpack.c.b16 %v1496, %v1488
  %v2305 = vpack.c.b16 %v1497, %v1489
  %v2306 = vpack.c.b16 %v1498, %v1490
  %v2307 = vpack.c.b16 %v1499, %v1491
  %v2308 = vpack.c.b16 %v1508, %v1500
  %v2309 = vpack.c.b16 %v1509, %v1501
  %v2310 = vpack.c.b16 %v1510, %v1502
  %v2311 = vpack.c.b16 %v1511, %v1503
  %v2312 = vpack.c.b16 %v1512, %v1504
  %v2313 = vpack.c.b16 %v1513, %v1505
  %v2314 = vpack.c.b16 %v1514, %v1506
  %v2315 = vpack.c.b16 %v1515, %v1507
  %v2316 = vpack.c.b16 %v1524, %v1516
  %v2317 = vpack.c.b16 %v1525, %v1517
  %v2318 = vpack.c.b16 %v1526, %v1518
  %v2319 = vpack.c.b16 %v1527, %v1519
  %v2320 = vpack.c.b16 %v1528, %v1520
  %v2321 = vpack.c.b16 %v1529, %v1521
  %v2322 = vpack.c.b16 %v1530, %v1522
  %v2323 = vpack.c.b16 %v1531, %v1523
  %v2324 = vpack.c.b16 %v1540, %v1532
  %v2325 = vpack.c.b16 %v1541, %v1533
  %v2326 = vpack.c.b16 %v1542, %v1534
  %v2327 = vpack.c.b16 %v1543, %v1535
  %v2328 = vpack.c.b16 %v1544, %v1536
  %v2329 = vpack.c.b16 %v1545, %v1537
  %v2330 = vpack.c.b16 %v1546, %v1538
  %v2331 = vpack.c.b16 %v1547, %v1539
  %v2332 = vpack.c.b16 %v1556, %v1548
  %v2333 = vpack.c.b16 %v1557, %v1549
  %v2334 = vpack.c.b16 %v1558, %v1550
  %v2335 = vpack.c.b16 %v1559, %v1551
  %v2336 = vpack.c.b16 %v1560, %v1552
  %v2337 = vpack.c.b16 %v1561, %v1553
  %v2338 = vpack.c.b16 %v1562, %v1554
  %v2339 = vpack.c.b16 %v1563, %v1555
  %v2340 = vpack.c.b16 %v1572, %v1564
  %v2341 = vpack.c.b16 %v1573, %v1565
  %v2342 = vpack.c.b16 %v1574, %v1566
  %v2343 = vpack.c.b16 %v1575, %v1567
  %v2344 = vpack.c.b16 %v1576, %v1568
  %v2345 = vpack.c.b16 %v1577, %v1569
  %v2346 = vpack.c.b16 %v1578, %v1570
  %v2347 = vpack.c.b16 %v1579, %v1571
  %v2348 = vpack.c.b16 %v1588, %v1580
  %v2349 = vpack.c.b16 %v1589, %v1581
  %v2350 = vpack.c.b16 %v1590, %v1582
  %v2351 = vpack.c.b16 %v1591, %v1583
  %v2352 = vpack.c.b16 %v1592, %v1584
  %v2353 = vpack.c.b16 %v1593, %v1585
  %v2354 = vpack.c.b16 %v1594, %v1586
  %v2355 = vpack.c.b16 %v1595, %v1587
  %v2356 = vpack.c.b16 %v1604, %v1596
  %v2357 = vpack.c.b16 %v1605, %v1597
  %v2358 = vpack.c.b16 %v1606, %v1598
  %v2359 = vpack.c.b16 %v1607, %v1599
  %v2360 = vpack.c.b16 %v1608, %v1600
  %v2361 = vpack.c.b16 %v1609, %v1601
  %v2362 = vpack.c.b16 %v1610, %v1602
  %v2363 = vpack.c.b16 %v1611, %v1603
  %v2364 = vpack.c.b16 %v1620, %v1612
  %v2365 = vpack.c.b16 %v1621, %v1613
  %v2366 = vpack.c.b16 %v1622, %v1614
  %v2367 = vpack.c.b16 %v1623, %v1615
  %v2368 = vpack.c.b16 %v1624, %v1616
  %v2369 = vpack.c.b16 %v1625, %v1617
  %v2370 = vpack.c.b16 %v1626, %v1618
  %v2371 = vpack.c.b16 %v1627, %v1619
  %v2372 = vpack.c.b16 %v1636, %v1628
  %v2373 = vpack.c.b16 %v1637, %v1629
  %v2374 = vpack.c.b16 %v1638, %v1630
  %v2375 = vpack.c.b16 %v1639, %v1631
  %v2376 = vpack.c.b16 %v1640, %v1632
  %v2377 = vpack.c.b16 %v1641, %v1633
  %v2378 = vpack.c.b16 %v1642, %v1634
  %v2379 = vpack.c.b16 %v1643, %v1635
  %v2380 = vpack.c.b16 %v1652, %v1644
  %v2381 = vpack.c.b16 %v1653, %v1645
  %v2382 = vpack.c.b16 %v1654, %v1646
  %v2383 = vpack.c.b16 %v1655, %v1647
  %v2384 = vpack.c.b16 %v1656, %v1648
  %v2385 = vpack.c.b16 %v1657, %v1649
  %v2386 = vpack.c.b16 %v1658, %v1650
  %v2387 = vpack.c.b16 %v1659, %v1651
  %v2388 = vpack.c.b16 %v1668, %v1660
  %v2389 = vpack.c.b16 %v1669, %v1661
  %v2390 = vpack.c.b16 %v1670, %v1662
  %v2391 = vpack.c.b16 %v1671, %v1663
  %v2392 = vpack.c.b16 %v1672, %v1664
  %v2393 = vpack.c.b16 %v1673, %v1665
  %v2394 = vpack.c.b16 %v1674, %v1666
  %v2395 = vpack.c.b16 %v1675, %v1667
  %v2396 = vpack.c.b16 %v1684, %v1676
  %v2397 = vpack.c.b16 %v1685, %v1677
  %v2398 = vpack.c.b16 %v1686, %v1678
  %v2399 = vpack.c.b16 %v1687, %v1679
  %v2400 = vpack.c.b16 %v1688, %v1680
  %v2401 = vpack.c.b16 %v1689, %v1681
  %v2402 = vpack.c.b16 %v1690, %v1682
  %v2403 = vpack.c.b16 %v1691, %v1683
  %v2404 = vpack.c.b16 %v1700, %v1692
  %v2405 = vpack.c.b16 %v1701, %v1693
  %v2406 = vpack.c.b16 %v1702, %v1694
  %v2407 = vpack.c.b16 %v1703, %v1695
  %v2408 = vpack.c.b16 %v1704, %v1696
  %v2409 = vpack.c.b16 %v1705, %v1697
  %v2410 = vpack.c.b16 %v1706, %v1698
  %v2411 = vpack.c.b16 %v1707, %v1699
  %v2412 = vpack.c.b16 %v1716, %v1708
  %v2413 = vpack.c.b16 %v1717, %v1709
  %v2414 = vpack.c.b16 %v1718, %v1710
  %v2415 = vpack.c.b16 %v1719, %v1711
  %v2416 = vpack.c.b16 %v1720, %v1712
  %v2417 = vpack.c.b16 %v1721, %v1713
  %v2418 = vpack.c.b16 %v1722, %v1714
  %v2419 = vpack.c.b16 %v1723, %v1715
  %v2420 = vpack.c.b16 %v1732, %v1724
  %v2421 = vpack.c.b16 %v1733, %v1725
  %v2422 = vpack.c.b16 %v1734, %v1726
  %v2423 = vpack.c.b16 %v1735, %v1727
  %v2424 = vpack.c.b16 %v1736, %v1728
  %v2425 = vpack.c.b16 %v1737, %v1729
  %v2426 = vpack.c.b16 %v1738, %v1730
  %v2427 = vpack.c.b16 %v1739, %v1731
  %v2428 = vpack.c.b16 %v1748, %v1740
  %v2429 = vpack.c.b16 %v1749, %v1741
  %v2430 = vpack.c.b16 %v1750, %v1742
  %v2431 = vpack.c.b16 %v1751, %v1743
  %v2432 = vpack.c.b16 %v1752, %v1744
  %v2433 = vpack.c.b16 %v1753, %v1745
  %v2434 = vpack.c.b16 %v1754, %v1746
  %v2435 = vpack.c.b16 %v1755, %v1747
  %v2436 = vpack.c.b16 %v1764, %v1756
  %v2437 = vpack.c.b16 %v1765, %v1757
  %v2438 = vpack.c.b16 %v1766, %v1758
  %v2439 = vpack.c.b16 %v1767, %v1759
  %v2440 = vpack.c.b16 %v1768, %v1760
  %v2441 = vpack.c.b16 %v1769, %v1761
  %v2442 = vpack.c.b16 %v1770, %v1762
  %v2443 = vpack.c.b16 %v1771, %v1763
  %v2444 = vpack.c.b16 %v1780, %v1772
  %v2445 = vpack.c.b16 %v1781, %v1773
  %v2446 = vpack.c.b16 %v1782, %v1774
  %v2447 = vpack.c.b16 %v1783, %v1775
  %v2448 = vpack.c.b16 %v1784, %v1776
  %v2449 = vpack.c.b16 %v1785, %v1777
  %v2450 = vpack.c.b16 %v1786, %v1778
  %v2451 = vpack.c.b16 %v1787, %v1779
  %v2452 = vpack.c.b16 %v1796, %v1788
  %v2453 = vpack.c.b16 %v1797, %v1789
  %v2454 = vpack.c.b16 %v1798, %v1790
  %v2455 = vpack.c.b16 %v1799, %v1791
  %v2456 = vpack.c.b16 %v1800, %v1792
  %v2457 = vpack.c.b16 %v1801, %v1793
  %v2458 = vpack.c.b16 %v1802, %v1794
  %v2459 = vpack.c.b16 %v1803, %v1795
  %v2460 = vpack.c.b16 %v1812, %v1804
  %v2461 = vpack.c.b16 %v1813, %v1805
  %v2462 = vpack.c.b16 %v1814, %v1806
  %v2463 = vpack.c.b16 %v1815, %v1807
  %v2464 = vpack.c.b16 %v1816, %v1808
  %v2465 = vpack.c.b16 %v1817, %v1809
  %v2466 = vpack.c.b16 %v1818, %v1810
  %v2467 = vpack.c.b16 %v1819, %v1811
  %v2468 = vpack.c.b16 %v1828, %v1820
  %v2469 = vpack.c.b16 %v1829, %v1821
  %v2470 = vpack.c.b16 %v1830, %v1822
  %v2471 = vpack.c.b16 %v1831, %v1823
  %v2472 = vpack.c.b16 %v1832, %v1824
  %v2473 = vpack.c.b16 %v1833, %v1825
  %v2474 = vpack.c.b16 %v1834, %v1826
  %v2475 = vpack.c.b16 %v1835, %v1827
  %v2476 = vpack.c.b16 %v1844, %v1836
  %v2477 = vpack.c.b16 %v1845, %v1837
  %v2478 = vpack.c.b16 %v1846, %v1838
  %v2479 = vpack.c.b16 %v1847, %v1839
  %v2480 = vpack.c.b16 %v1848, %v1840
  %v2481 = vpack.c.b16 %v1849, %v1841
  %v2482 = vpack.c.b16 %v1850, %v1842
  %v2483 = vpack.c.b16 %v1851, %v1843
  %v2484 = vpack.c.b16 %v1860, %v1852
  %v2485 = vpack.c.b16 %v1861, %v1853
  %v2486 = vpack.c.b16 %v1862, %v1854
  %v2487 = vpack.c.b16 %v1863, %v1855
  %v2488 = vpack.c.b16 %v1864, %v1856
  %v2489 = vpack.c.b16 %v1865, %v1857
  %v2490 = vpack.c.b16 %v1866, %v1858
  %v2491 = vpack.c.b16 %v1867, %v1859
  %v2492 = vpack.c.b16 %v1876, %v1868
  %v2493 = vpack.c.b16 %v1877, %v1869
  %v2494 = vpack.c.b16 %v1878, %v1870
  %v2495 = vpack.c.b16 %v1879, %v1871
  %v2496 = vpack.c.b16 %v1880, %v1872
  %v2497 = vpack.c.b16 %v1881, %v1873
  %v2498 = vpack.c.b16 %v1882, %v1874
  %v2499 = vpack.c.b16 %v1883, %v1875
  %v2500 = vpack.c.b16 %v1892, %v1884
  %v2501 = vpack.c.b16 %v1893, %v1885
  %v2502 = vpack.c.b16 %v1894, %v1886
  %v2503 = vpack.c.b16 %v1895, %v1887
  %v2504 = vpack.c.b16 %v1896, %v1888
  %v2505 = vpack.c.b16 %v1897, %v1889
  %v2506 = vpack.c.b16 %v1898, %v1890
  %v2507 = vpack.c.b16 %v1899, %v1891
  %v2508 = vpack.c.b16 %v1908, %v1900
  %v2509 = vpack.c.b16 %v1909, %v1901
  %v2510 = vpack.c.b16 %v1910, %v1902
  %v2511 = vpack.c.b16 %v1911, %v1903
  %v2512 = vpack.c.b16 %v1912, %v1904
  %v2513 = vpack.c.b16 %v1913, %v1905
  %v2514 = vpack.c.b16 %v1914, %v1906
  %v2515 = vpack.c.b16 %v1915, %v1907
  %v2516 = vpack.c.b16 %v1924, %v1916
  %v2517 = vpack.c.b16 %v1925, %v1917
  %v2518 = vpack.c.b16 %v1926, %v1918
  %v2519 = vpack.c.b16 %v1927, %v1919
  %v2520 = vpack.c.b16 %v1928, %v1920
  %v2521 = vpack.c.b16 %v1929, %v1921
  %v2522 = vpack.c.b16 %v1930, %v1922
  %v2523 = vpack.c.b16 %v1931, %v1923
  %v2524 = vpack.c.b16 %v1940, %v1932
  %v2525 = vpack.c.b16 %v1941, %v1933
  %v2526 = vpack.c.b16 %v1942, %v1934
  %v2527 = vpack.c.b16 %v1943, %v1935
  %v2528 = vpack.c.b16 %v1944, %v1936
  %v2529 = vpack.c.b16 %v1945, %v1937
  %v2530 = vpack.c.b16 %v1946, %v1938
  %v2531 = vpack.c.b16 %v1947, %v1939
  %v2532 = vpack.c.b16 %v1956, %v1948
  %v2533 = vpack.c.b16 %v1957, %v1949
  %v2534 = vpack.c.b16 %v1958, %v1950
  %v2535 = vpack.c.b16 %v1959, %v1951
  %v2536 = vpack.c.b16 %v1960, %v1952
  %v2537 = vpack.c.b16 %v1961, %v1953
  %v2538 = vpack.c.b16 %v1962, %v1954
  %v2539 = vpack.c.b16 %v1963, %v1955
  %v2540 = vpack.c.b16 %v1972, %v1964
  %v2541 = vpack.c.b16 %v1973, %v1965
  %v2542 = vpack.c.b16 %v1974, %v1966
  %v2543 = vpack.c.b16 %v1975, %v1967
  %v2544 = vpack.c.b16 %v1976, %v1968
  %v2545 = vpack.c.b16 %v1977, %v1969
  %v2546 = vpack.c.b16 %v1978, %v1970
  %v2547 = vpack.c.b16 %v1979, %v1971
  %v2548 = vpack.c.b16 %v1988, %v1980
  %v2549 = vpack.c.b16 %v1989, %v1981
  %v2550 = vpack.c.b16 %v1990, %v1982
  %v2551 = vpack.c.b16 %v1991, %v1983
  %v2552 = vpack.c.b16 %v1992, %v1984
  %v2553 = vpack.c.b16 %v1993, %v1985
  %v2554 = vpack.c.b16 %v1994, %v1986
  %v2555 = vpack.c.b16 %v1995, %v1987
  %v2556 = vpack.c.b16 %v2004, %v1996
  %v2557 = vpack.c.b16 %v2005, %v1997
  %v2558 = vpack.c.b16 %v2006, %v1998
  %v2559 = vpack.c.b16 %v2007, %v1999
  %v2560 = vpack.c.b16 %v2008, %v2000
  %v2561 = vpack.c.b16 %v2009, %v2001
  %v2562 = vpack.c.b16 %v2010, %v2002
  %v2563 = vpack.c.b16 %v2011, %v2003
  %v2564 = vpack.c.b16 %v2020, %v2012
  %v2565 = vpack.c.b16 %v2021, %v2013
  %v2566 = vpack.c.b16 %v2022, %v2014
  %v2567 = vpack.c.b16 %v2023, %v2015
  %v2568 = vpack.c.b16 %v2024, %v2016
  %v2569 = vpack.c.b16 %v2025, %v2017
  %v2570 = vpack.c.b16 %v2026, %v2018
  %v2571 = vpack.c.b16 %v2027, %v2019
  %v2572 = vpack.c.b16 %v2036, %v2028
  %v2573 = vpack.c.b16 %v2037, %v2029
  %v2574 = vpack.c.b16 %v2038, %v2030
  %v2575 = vpack.c.b16 %v2039, %v2031
  %v2576 = vpack.c.b16 %v2040, %v2032
  %v2577 = vpack.c.b16 %v2041, %v2033
  %v2578 = vpack.c.b16 %v2042, %v2034
  %v2579 = vpack.c.b16 %v2043, %v2035
  %v2580 = vpack.c.b16 %v2052, %v2044
  %v2581 = vpack.c.b16 %v2053, %v2045
  %v2582 = vpack.c.b16 %v2054, %v2046
  %v2583 = vpack.c.b16 %v2055, %v2047
  %v2584 = vpack.c.b16 %v2056, %v2048
  %v2585 = vpack.c.b16 %v2057, %v2049
  %v2586 = vpack.c.b16 %v2058, %v2050
  %v2587 = vpack.c.b16 %v2059, %v2051
  %v2588 = vpack.c.b16 %v2068, %v2060
  %v2589 = vpack.c.b16 %v2069, %v2061
  %v2590 = vpack.c.b16 %v2070, %v2062
  %v2591 = vpack.c.b16 %v2071, %v2063
  %v2592 = vpack.c.b16 %v2072, %v2064
  %v2593 = vpack.c.b16 %v2073, %v2065
  %v2594 = vpack.c.b16 %v2074, %v2066
  %v2595 = vpack.c.b16 %v2075, %v2067
  %v2596 = vpack.c.b16 %v2084, %v2076
  %v2597 = vpack.c.b16 %v2085, %v2077
  %v2598 = vpack.c.b16 %v2086, %v2078
  %v2599 = vpack.c.b16 %v2087, %v2079
  %v2600 = vpack.c.b16 %v2088, %v2080
  %v2601 = vpack.c.b16 %v2089, %v2081
  %v2602 = vpack.c.b16 %v2090, %v2082
  %v2603 = vpack.c.b16 %v2091, %v2083
  %3116 = vmatpush.bf16.msra.mxu0 %v2148
  %3117 = vmatpush.bf16.msra.mxu0 %v2140
  %3118 = vmatpush.bf16.msra.mxu0 %v2132
  %3119 = vmatpush.bf16.msra.mxu0 %v2124
  %3120 = vmatpush.bf16.msra.mxu0 %v2116
  %3121 = vmatpush.bf16.msra.mxu0 %v2108
  %3122 = vmatpush.bf16.msra.mxu0 %v2100
  %3123 = vmatpush.bf16.msra.mxu0 %v2092
  %3124 = vmatmul.bf16.gmra.mxu0 %v540
  %v3125 = vpop.f32.mrf.mxu0
  %v3126 = vadd.f32 0.0, %v3125
  %v3127 = vpop.f32.mrf.mxu0
  %3128 = vdwg.mxu0
  %3129 = vmatpush.bf16.msra.mxu0 %v2212
  %3130 = vmatpush.bf16.msra.mxu0 %v2204
  %3131 = vmatpush.bf16.msra.mxu0 %v2196
  %3132 = vmatpush.bf16.msra.mxu0 %v2188
  %3133 = vmatpush.bf16.msra.mxu0 %v2180
  %3134 = vmatpush.bf16.msra.mxu0 %v2172
  %3135 = vmatpush.bf16.msra.mxu0 %v2164
  %3136 = vmatpush.bf16.msra.mxu0 %v2156
  %3137 = vmatmul.bf16.gmra.mxu0 %v541
  %v3138 = vpop.f32.mrf.mxu0
  %v3139 = vadd.f32 %v3126, %v3138
  %v3140 = vpop.f32.mrf.mxu0
  %3141 = vdwg.mxu0
  %3142 = vmatpush.bf16.msra.mxu0 %v2276
  %3143 = vmatpush.bf16.msra.mxu0 %v2268
  %3144 = vmatpush.bf16.msra.mxu0 %v2260
  %3145 = vmatpush.bf16.msra.mxu0 %v2252
  %3146 = vmatpush.bf16.msra.mxu0 %v2244
  %3147 = vmatpush.bf16.msra.mxu0 %v2236
  %3148 = vmatpush.bf16.msra.mxu0 %v2228
  %3149 = vmatpush.bf16.msra.mxu0 %v2220
  %3150 = vmatmul.bf16.gmra.mxu0 %v542
  %v3151 = vpop.f32.mrf.mxu0
  %v3152 = vadd.f32 %v3139, %v3151
  %v3153 = vpop.f32.mrf.mxu0
  %3154 = vdwg.mxu0
  %3155 = vmatpush.bf16.msra.mxu0 %v2340
  %3156 = vmatpush.bf16.msra.mxu0 %v2332
  %3157 = vmatpush.bf16.msra.mxu0 %v2324
  %3158 = vmatpush.bf16.msra.mxu0 %v2316
  %3159 = vmatpush.bf16.msra.mxu0 %v2308
  %3160 = vmatpush.bf16.msra.mxu0 %v2300
  %3161 = vmatpush.bf16.msra.mxu0 %v2292
  %3162 = vmatpush.bf16.msra.mxu0 %v2284
  %3163 = vmatmul.bf16.gmra.mxu0 %v543
  %v3164 = vpop.f32.mrf.mxu0
  %v3165 = vadd.f32 %v3152, %v3164
  %v3166 = vpop.f32.mrf.mxu0
  %3167 = vdwg.mxu0
  %3168 = vmatpush.bf16.msra.mxu0 %v2404
  %3169 = vmatpush.bf16.msra.mxu0 %v2396
  %3170 = vmatpush.bf16.msra.mxu0 %v2388
  %3171 = vmatpush.bf16.msra.mxu0 %v2380
  %3172 = vmatpush.bf16.msra.mxu0 %v2372
  %3173 = vmatpush.bf16.msra.mxu0 %v2364
  %3174 = vmatpush.bf16.msra.mxu0 %v2356
  %3175 = vmatpush.bf16.msra.mxu0 %v2348
  %3176 = vmatmul.bf16.gmra.mxu0 %v544
  %v3177 = vpop.f32.mrf.mxu0
  %v3178 = vadd.f32 %v3165, %v3177
  %v3179 = vpop.f32.mrf.mxu0
  %3180 = vdwg.mxu0
  %3181 = vmatpush.bf16.msra.mxu0 %v2468
  %3182 = vmatpush.bf16.msra.mxu0 %v2460
  %3183 = vmatpush.bf16.msra.mxu0 %v2452
  %3184 = vmatpush.bf16.msra.mxu0 %v2444
  %3185 = vmatpush.bf16.msra.mxu0 %v2436
  %3186 = vmatpush.bf16.msra.mxu0 %v2428
  %3187 = vmatpush.bf16.msra.mxu0 %v2420
  %3188 = vmatpush.bf16.msra.mxu0 %v2412
  %3189 = vmatmul.bf16.gmra.mxu0 %v545
  %v3190 = vpop.f32.mrf.mxu0
  %v3191 = vadd.f32 %v3178, %v3190
  %v3192 = vpop.f32.mrf.mxu0
  %3193 = vdwg.mxu0
  %3194 = vmatpush.bf16.msra.mxu0 %v2532
  %3195 = vmatpush.bf16.msra.mxu0 %v2524
  %3196 = vmatpush.bf16.msra.mxu0 %v2516
  %3197 = vmatpush.bf16.msra.mxu0 %v2508
  %3198 = vmatpush.bf16.msra.mxu0 %v2500
  %3199 = vmatpush.bf16.msra.mxu0 %v2492
  %3200 = vmatpush.bf16.msra.mxu0 %v2484
  %3201 = vmatpush.bf16.msra.mxu0 %v2476
  %3202 = vmatmul.bf16.gmra.mxu0 %v546
  %v3203 = vpop.f32.mrf.mxu0
  %v3204 = vadd.f32 %v3191, %v3203
  %v3205 = vpop.f32.mrf.mxu0
  %3206 = vdwg.mxu0
  %3207 = vmatpush.bf16.msra.mxu0 %v2596
  %3208 = vmatpush.bf16.msra.mxu0 %v2588
  %3209 = vmatpush.bf16.msra.mxu0 %v2580
  %3210 = vmatpush.bf16.msra.mxu0 %v2572
  %3211 = vmatpush.bf16.msra.mxu0 %v2564
  %3212 = vmatpush.bf16.msra.mxu0 %v2556
  %3213 = vmatpush.bf16.msra.mxu0 %v2548
  %3214 = vmatpush.bf16.msra.mxu0 %v2540
  %3215 = vmatmul.bf16.gmra.mxu0 %v547
  %v3216 = vpop.f32.mrf.mxu0
  %v3217 = vadd.f32 %v3204, %v3216
  %v3218 = vpop.f32.mrf.mxu0
  %3219 = vdwg.mxu0
  %3220 = vmatpush.bf16.msra.mxu0 %v2149
  %3221 = vmatpush.bf16.msra.mxu0 %v2141
  %3222 = vmatpush.bf16.msra.mxu0 %v2133
  %3223 = vmatpush.bf16.msra.mxu0 %v2125
  %3224 = vmatpush.bf16.msra.mxu0 %v2117
  %3225 = vmatpush.bf16.msra.mxu0 %v2109
  %3226 = vmatpush.bf16.msra.mxu0 %v2101
  %3227 = vmatpush.bf16.msra.mxu0 %v2093
  %3228 = vmatmul.bf16.gmra.mxu0 %v540
  %v3229 = vpop.f32.mrf.mxu0
  %v3230 = vadd.f32 0.0, %v3229
  %v3231 = vpop.f32.mrf.mxu0
  %3232 = vdwg.mxu0
  %3233 = vmatpush.bf16.msra.mxu0 %v2213
  %3234 = vmatpush.bf16.msra.mxu0 %v2205
  %3235 = vmatpush.bf16.msra.mxu0 %v2197
  %3236 = vmatpush.bf16.msra.mxu0 %v2189
  %3237 = vmatpush.bf16.msra.mxu0 %v2181
  %3238 = vmatpush.bf16.msra.mxu0 %v2173
  %3239 = vmatpush.bf16.msra.mxu0 %v2165
  %3240 = vmatpush.bf16.msra.mxu0 %v2157
  %3241 = vmatmul.bf16.gmra.mxu0 %v541
  %v3242 = vpop.f32.mrf.mxu0
  %v3243 = vadd.f32 %v3230, %v3242
  %v3244 = vpop.f32.mrf.mxu0
  %3245 = vdwg.mxu0
  %3246 = vmatpush.bf16.msra.mxu0 %v2277
  %3247 = vmatpush.bf16.msra.mxu0 %v2269
  %3248 = vmatpush.bf16.msra.mxu0 %v2261
  %3249 = vmatpush.bf16.msra.mxu0 %v2253
  %3250 = vmatpush.bf16.msra.mxu0 %v2245
  %3251 = vmatpush.bf16.msra.mxu0 %v2237
  %3252 = vmatpush.bf16.msra.mxu0 %v2229
  %3253 = vmatpush.bf16.msra.mxu0 %v2221
  %3254 = vmatmul.bf16.gmra.mxu0 %v542
  %v3255 = vpop.f32.mrf.mxu0
  %v3256 = vadd.f32 %v3243, %v3255
  %v3257 = vpop.f32.mrf.mxu0
  %3258 = vdwg.mxu0
  %3259 = vmatpush.bf16.msra.mxu0 %v2341
  %3260 = vmatpush.bf16.msra.mxu0 %v2333
  %3261 = vmatpush.bf16.msra.mxu0 %v2325
  %3262 = vmatpush.bf16.msra.mxu0 %v2317
  %3263 = vmatpush.bf16.msra.mxu0 %v2309
  %3264 = vmatpush.bf16.msra.mxu0 %v2301
  %3265 = vmatpush.bf16.msra.mxu0 %v2293
  %3266 = vmatpush.bf16.msra.mxu0 %v2285
  %3267 = vmatmul.bf16.gmra.mxu0 %v543
  %v3268 = vpop.f32.mrf.mxu0
  %v3269 = vadd.f32 %v3256, %v3268
  %v3270 = vpop.f32.mrf.mxu0
  %3271 = vdwg.mxu0
  %3272 = vmatpush.bf16.msra.mxu0 %v2405
  %3273 = vmatpush.bf16.msra.mxu0 %v2397
  %3274 = vmatpush.bf16.msra.mxu0 %v2389
  %3275 = vmatpush.bf16.msra.mxu0 %v2381
  %3276 = vmatpush.bf16.msra.mxu0 %v2373
  %3277 = vmatpush.bf16.msra.mxu0 %v2365
  %3278 = vmatpush.bf16.msra.mxu0 %v2357
  %3279 = vmatpush.bf16.msra.mxu0 %v2349
  %3280 = vmatmul.bf16.gmra.mxu0 %v544
  %v3281 = vpop.f32.mrf.mxu0
  %v3282 = vadd.f32 %v3269, %v3281
  %v3283 = vpop.f32.mrf.mxu0
  %3284 = vdwg.mxu0
  %3285 = vmatpush.bf16.msra.mxu0 %v2469
  %3286 = vmatpush.bf16.msra.mxu0 %v2461
  %3287 = vmatpush.bf16.msra.mxu0 %v2453
  %3288 = vmatpush.bf16.msra.mxu0 %v2445
  %3289 = vmatpush.bf16.msra.mxu0 %v2437
  %3290 = vmatpush.bf16.msra.mxu0 %v2429
  %3291 = vmatpush.bf16.msra.mxu0 %v2421
  %3292 = vmatpush.bf16.msra.mxu0 %v2413
  %3293 = vmatmul.bf16.gmra.mxu0 %v545
  %v3294 = vpop.f32.mrf.mxu0
  %v3295 = vadd.f32 %v3282, %v3294
  %v3296 = vpop.f32.mrf.mxu0
  %3297 = vdwg.mxu0
  %3298 = vmatpush.bf16.msra.mxu0 %v2533
  %3299 = vmatpush.bf16.msra.mxu0 %v2525
  %3300 = vmatpush.bf16.msra.mxu0 %v2517
  %3301 = vmatpush.bf16.msra.mxu0 %v2509
  %3302 = vmatpush.bf16.msra.mxu0 %v2501
  %3303 = vmatpush.bf16.msra.mxu0 %v2493
  %3304 = vmatpush.bf16.msra.mxu0 %v2485
  %3305 = vmatpush.bf16.msra.mxu0 %v2477
  %3306 = vmatmul.bf16.gmra.mxu0 %v546
  %v3307 = vpop.f32.mrf.mxu0
  %v3308 = vadd.f32 %v3295, %v3307
  %v3309 = vpop.f32.mrf.mxu0
  %3310 = vdwg.mxu0
  %3311 = vmatpush.bf16.msra.mxu0 %v2597
  %3312 = vmatpush.bf16.msra.mxu0 %v2589
  %3313 = vmatpush.bf16.msra.mxu0 %v2581
  %3314 = vmatpush.bf16.msra.mxu0 %v2573
  %3315 = vmatpush.bf16.msra.mxu0 %v2565
  %3316 = vmatpush.bf16.msra.mxu0 %v2557
  %3317 = vmatpush.bf16.msra.mxu0 %v2549
  %3318 = vmatpush.bf16.msra.mxu0 %v2541
  %3319 = vmatmul.bf16.gmra.mxu0 %v547
  %v3320 = vpop.f32.mrf.mxu0
  %v3321 = vadd.f32 %v3308, %v3320
  %v3322 = vpop.f32.mrf.mxu0
  %3323 = vdwg.mxu0
  %3324 = vmatpush.bf16.msra.mxu0 %v2150
  %3325 = vmatpush.bf16.msra.mxu0 %v2142
  %3326 = vmatpush.bf16.msra.mxu0 %v2134
  %3327 = vmatpush.bf16.msra.mxu0 %v2126
  %3328 = vmatpush.bf16.msra.mxu0 %v2118
  %3329 = vmatpush.bf16.msra.mxu0 %v2110
  %3330 = vmatpush.bf16.msra.mxu0 %v2102
  %3331 = vmatpush.bf16.msra.mxu0 %v2094
  %3332 = vmatmul.bf16.gmra.mxu0 %v540
  %v3333 = vpop.f32.mrf.mxu0
  %v3334 = vadd.f32 0.0, %v3333
  %v3335 = vpop.f32.mrf.mxu0
  %3336 = vdwg.mxu0
  %3337 = vmatpush.bf16.msra.mxu0 %v2214
  %3338 = vmatpush.bf16.msra.mxu0 %v2206
  %3339 = vmatpush.bf16.msra.mxu0 %v2198
  %3340 = vmatpush.bf16.msra.mxu0 %v2190
  %3341 = vmatpush.bf16.msra.mxu0 %v2182
  %3342 = vmatpush.bf16.msra.mxu0 %v2174
  %3343 = vmatpush.bf16.msra.mxu0 %v2166
  %3344 = vmatpush.bf16.msra.mxu0 %v2158
  %3345 = vmatmul.bf16.gmra.mxu0 %v541
  %v3346 = vpop.f32.mrf.mxu0
  %v3347 = vadd.f32 %v3334, %v3346
  %v3348 = vpop.f32.mrf.mxu0
  %3349 = vdwg.mxu0
  %3350 = vmatpush.bf16.msra.mxu0 %v2278
  %3351 = vmatpush.bf16.msra.mxu0 %v2270
  %3352 = vmatpush.bf16.msra.mxu0 %v2262
  %3353 = vmatpush.bf16.msra.mxu0 %v2254
  %3354 = vmatpush.bf16.msra.mxu0 %v2246
  %3355 = vmatpush.bf16.msra.mxu0 %v2238
  %3356 = vmatpush.bf16.msra.mxu0 %v2230
  %3357 = vmatpush.bf16.msra.mxu0 %v2222
  %3358 = vmatmul.bf16.gmra.mxu0 %v542
  %v3359 = vpop.f32.mrf.mxu0
  %v3360 = vadd.f32 %v3347, %v3359
  %v3361 = vpop.f32.mrf.mxu0
  %3362 = vdwg.mxu0
  %3363 = vmatpush.bf16.msra.mxu0 %v2342
  %3364 = vmatpush.bf16.msra.mxu0 %v2334
  %3365 = vmatpush.bf16.msra.mxu0 %v2326
  %3366 = vmatpush.bf16.msra.mxu0 %v2318
  %3367 = vmatpush.bf16.msra.mxu0 %v2310
  %3368 = vmatpush.bf16.msra.mxu0 %v2302
  %3369 = vmatpush.bf16.msra.mxu0 %v2294
  %3370 = vmatpush.bf16.msra.mxu0 %v2286
  %3371 = vmatmul.bf16.gmra.mxu0 %v543
  %v3372 = vpop.f32.mrf.mxu0
  %v3373 = vadd.f32 %v3360, %v3372
  %v3374 = vpop.f32.mrf.mxu0
  %3375 = vdwg.mxu0
  %3376 = vmatpush.bf16.msra.mxu0 %v2406
  %3377 = vmatpush.bf16.msra.mxu0 %v2398
  %3378 = vmatpush.bf16.msra.mxu0 %v2390
  %3379 = vmatpush.bf16.msra.mxu0 %v2382
  %3380 = vmatpush.bf16.msra.mxu0 %v2374
  %3381 = vmatpush.bf16.msra.mxu0 %v2366
  %3382 = vmatpush.bf16.msra.mxu0 %v2358
  %3383 = vmatpush.bf16.msra.mxu0 %v2350
  %3384 = vmatmul.bf16.gmra.mxu0 %v544
  %v3385 = vpop.f32.mrf.mxu0
  %v3386 = vadd.f32 %v3373, %v3385
  %v3387 = vpop.f32.mrf.mxu0
  %3388 = vdwg.mxu0
  %3389 = vmatpush.bf16.msra.mxu0 %v2470
  %3390 = vmatpush.bf16.msra.mxu0 %v2462
  %3391 = vmatpush.bf16.msra.mxu0 %v2454
  %3392 = vmatpush.bf16.msra.mxu0 %v2446
  %3393 = vmatpush.bf16.msra.mxu0 %v2438
  %3394 = vmatpush.bf16.msra.mxu0 %v2430
  %3395 = vmatpush.bf16.msra.mxu0 %v2422
  %3396 = vmatpush.bf16.msra.mxu0 %v2414
  %3397 = vmatmul.bf16.gmra.mxu0 %v545
  %v3398 = vpop.f32.mrf.mxu0
  %v3399 = vadd.f32 %v3386, %v3398
  %v3400 = vpop.f32.mrf.mxu0
  %3401 = vdwg.mxu0
  %3402 = vmatpush.bf16.msra.mxu0 %v2534
  %3403 = vmatpush.bf16.msra.mxu0 %v2526
  %3404 = vmatpush.bf16.msra.mxu0 %v2518
  %3405 = vmatpush.bf16.msra.mxu0 %v2510
  %3406 = vmatpush.bf16.msra.mxu0 %v2502
  %3407 = vmatpush.bf16.msra.mxu0 %v2494
  %3408 = vmatpush.bf16.msra.mxu0 %v2486
  %3409 = vmatpush.bf16.msra.mxu0 %v2478
  %3410 = vmatmul.bf16.gmra.mxu0 %v546
  %v3411 = vpop.f32.mrf.mxu0
  %v3412 = vadd.f32 %v3399, %v3411
  %v3413 = vpop.f32.mrf.mxu0
  %3414 = vdwg.mxu0
  %3415 = vmatpush.bf16.msra.mxu0 %v2598
  %3416 = vmatpush.bf16.msra.mxu0 %v2590
  %3417 = vmatpush.bf16.msra.mxu0 %v2582
  %3418 = vmatpush.bf16.msra.mxu0 %v2574
  %3419 = vmatpush.bf16.msra.mxu0 %v2566
  %3420 = vmatpush.bf16.msra.mxu0 %v2558
  %3421 = vmatpush.bf16.msra.mxu0 %v2550
  %3422 = vmatpush.bf16.msra.mxu0 %v2542
  %3423 = vmatmul.bf16.gmra.mxu0 %v547
  %v3424 = vpop.f32.mrf.mxu0
  %v3425 = vadd.f32 %v3412, %v3424
  %v3426 = vpop.f32.mrf.mxu0
  %3427 = vdwg.mxu0
  %3428 = vmatpush.bf16.msra.mxu0 %v2151
  %3429 = vmatpush.bf16.msra.mxu0 %v2143
  %3430 = vmatpush.bf16.msra.mxu0 %v2135
  %3431 = vmatpush.bf16.msra.mxu0 %v2127
  %3432 = vmatpush.bf16.msra.mxu0 %v2119
  %3433 = vmatpush.bf16.msra.mxu0 %v2111
  %3434 = vmatpush.bf16.msra.mxu0 %v2103
  %3435 = vmatpush.bf16.msra.mxu0 %v2095
  %3436 = vmatmul.bf16.gmra.mxu0 %v540
  %v3437 = vpop.f32.mrf.mxu0
  %v3438 = vadd.f32 0.0, %v3437
  %v3439 = vpop.f32.mrf.mxu0
  %3440 = vdwg.mxu0
  %3441 = vmatpush.bf16.msra.mxu0 %v2215
  %3442 = vmatpush.bf16.msra.mxu0 %v2207
  %3443 = vmatpush.bf16.msra.mxu0 %v2199
  %3444 = vmatpush.bf16.msra.mxu0 %v2191
  %3445 = vmatpush.bf16.msra.mxu0 %v2183
  %3446 = vmatpush.bf16.msra.mxu0 %v2175
  %3447 = vmatpush.bf16.msra.mxu0 %v2167
  %3448 = vmatpush.bf16.msra.mxu0 %v2159
  %3449 = vmatmul.bf16.gmra.mxu0 %v541
  %v3450 = vpop.f32.mrf.mxu0
  %v3451 = vadd.f32 %v3438, %v3450
  %v3452 = vpop.f32.mrf.mxu0
  %3453 = vdwg.mxu0
  %3454 = vmatpush.bf16.msra.mxu0 %v2279
  %3455 = vmatpush.bf16.msra.mxu0 %v2271
  %3456 = vmatpush.bf16.msra.mxu0 %v2263
  %3457 = vmatpush.bf16.msra.mxu0 %v2255
  %3458 = vmatpush.bf16.msra.mxu0 %v2247
  %3459 = vmatpush.bf16.msra.mxu0 %v2239
  %3460 = vmatpush.bf16.msra.mxu0 %v2231
  %3461 = vmatpush.bf16.msra.mxu0 %v2223
  %3462 = vmatmul.bf16.gmra.mxu0 %v542
  %v3463 = vpop.f32.mrf.mxu0
  %v3464 = vadd.f32 %v3451, %v3463
  %v3465 = vpop.f32.mrf.mxu0
  %3466 = vdwg.mxu0
  %3467 = vmatpush.bf16.msra.mxu0 %v2343
  %3468 = vmatpush.bf16.msra.mxu0 %v2335
  %3469 = vmatpush.bf16.msra.mxu0 %v2327
  %3470 = vmatpush.bf16.msra.mxu0 %v2319
  %3471 = vmatpush.bf16.msra.mxu0 %v2311
  %3472 = vmatpush.bf16.msra.mxu0 %v2303
  %3473 = vmatpush.bf16.msra.mxu0 %v2295
  %3474 = vmatpush.bf16.msra.mxu0 %v2287
  %3475 = vmatmul.bf16.gmra.mxu0 %v543
  %v3476 = vpop.f32.mrf.mxu0
  %v3477 = vadd.f32 %v3464, %v3476
  %v3478 = vpop.f32.mrf.mxu0
  %3479 = vdwg.mxu0
  %3480 = vmatpush.bf16.msra.mxu0 %v2407
  %3481 = vmatpush.bf16.msra.mxu0 %v2399
  %3482 = vmatpush.bf16.msra.mxu0 %v2391
  %3483 = vmatpush.bf16.msra.mxu0 %v2383
  %3484 = vmatpush.bf16.msra.mxu0 %v2375
  %3485 = vmatpush.bf16.msra.mxu0 %v2367
  %3486 = vmatpush.bf16.msra.mxu0 %v2359
  %3487 = vmatpush.bf16.msra.mxu0 %v2351
  %3488 = vmatmul.bf16.gmra.mxu0 %v544
  %v3489 = vpop.f32.mrf.mxu0
  %v3490 = vadd.f32 %v3477, %v3489
  %v3491 = vpop.f32.mrf.mxu0
  %3492 = vdwg.mxu0
  %3493 = vmatpush.bf16.msra.mxu0 %v2471
  %3494 = vmatpush.bf16.msra.mxu0 %v2463
  %3495 = vmatpush.bf16.msra.mxu0 %v2455
  %3496 = vmatpush.bf16.msra.mxu0 %v2447
  %3497 = vmatpush.bf16.msra.mxu0 %v2439
  %3498 = vmatpush.bf16.msra.mxu0 %v2431
  %3499 = vmatpush.bf16.msra.mxu0 %v2423
  %3500 = vmatpush.bf16.msra.mxu0 %v2415
  %3501 = vmatmul.bf16.gmra.mxu0 %v545
  %v3502 = vpop.f32.mrf.mxu0
  %v3503 = vadd.f32 %v3490, %v3502
  %v3504 = vpop.f32.mrf.mxu0
  %3505 = vdwg.mxu0
  %3506 = vmatpush.bf16.msra.mxu0 %v2535
  %3507 = vmatpush.bf16.msra.mxu0 %v2527
  %3508 = vmatpush.bf16.msra.mxu0 %v2519
  %3509 = vmatpush.bf16.msra.mxu0 %v2511
  %3510 = vmatpush.bf16.msra.mxu0 %v2503
  %3511 = vmatpush.bf16.msra.mxu0 %v2495
  %3512 = vmatpush.bf16.msra.mxu0 %v2487
  %3513 = vmatpush.bf16.msra.mxu0 %v2479
  %3514 = vmatmul.bf16.gmra.mxu0 %v546
  %v3515 = vpop.f32.mrf.mxu0
  %v3516 = vadd.f32 %v3503, %v3515
  %v3517 = vpop.f32.mrf.mxu0
  %3518 = vdwg.mxu0
  %3519 = vmatpush.bf16.msra.mxu0 %v2599
  %3520 = vmatpush.bf16.msra.mxu0 %v2591
  %3521 = vmatpush.bf16.msra.mxu0 %v2583
  %3522 = vmatpush.bf16.msra.mxu0 %v2575
  %3523 = vmatpush.bf16.msra.mxu0 %v2567
  %3524 = vmatpush.bf16.msra.mxu0 %v2559
  %3525 = vmatpush.bf16.msra.mxu0 %v2551
  %3526 = vmatpush.bf16.msra.mxu0 %v2543
  %3527 = vmatmul.bf16.gmra.mxu0 %v547
  %v3528 = vpop.f32.mrf.mxu0
  %v3529 = vadd.f32 %v3516, %v3528
  %v3530 = vpop.f32.mrf.mxu0
  %3531 = vdwg.mxu0
  %3532 = vmatpush.bf16.msra.mxu0 %v2152
  %3533 = vmatpush.bf16.msra.mxu0 %v2144
  %3534 = vmatpush.bf16.msra.mxu0 %v2136
  %3535 = vmatpush.bf16.msra.mxu0 %v2128
  %3536 = vmatpush.bf16.msra.mxu0 %v2120
  %3537 = vmatpush.bf16.msra.mxu0 %v2112
  %3538 = vmatpush.bf16.msra.mxu0 %v2104
  %3539 = vmatpush.bf16.msra.mxu0 %v2096
  %3540 = vmatmul.bf16.gmra.mxu0 %v540
  %v3541 = vpop.f32.mrf.mxu0
  %v3542 = vadd.f32 0.0, %v3541
  %v3543 = vpop.f32.mrf.mxu0
  %3544 = vdwg.mxu0
  %3545 = vmatpush.bf16.msra.mxu0 %v2216
  %3546 = vmatpush.bf16.msra.mxu0 %v2208
  %3547 = vmatpush.bf16.msra.mxu0 %v2200
  %3548 = vmatpush.bf16.msra.mxu0 %v2192
  %3549 = vmatpush.bf16.msra.mxu0 %v2184
  %3550 = vmatpush.bf16.msra.mxu0 %v2176
  %3551 = vmatpush.bf16.msra.mxu0 %v2168
  %3552 = vmatpush.bf16.msra.mxu0 %v2160
  %3553 = vmatmul.bf16.gmra.mxu0 %v541
  %v3554 = vpop.f32.mrf.mxu0
  %v3555 = vadd.f32 %v3542, %v3554
  %v3556 = vpop.f32.mrf.mxu0
  %3557 = vdwg.mxu0
  %3558 = vmatpush.bf16.msra.mxu0 %v2280
  %3559 = vmatpush.bf16.msra.mxu0 %v2272
  %3560 = vmatpush.bf16.msra.mxu0 %v2264
  %3561 = vmatpush.bf16.msra.mxu0 %v2256
  %3562 = vmatpush.bf16.msra.mxu0 %v2248
  %3563 = vmatpush.bf16.msra.mxu0 %v2240
  %3564 = vmatpush.bf16.msra.mxu0 %v2232
  %3565 = vmatpush.bf16.msra.mxu0 %v2224
  %3566 = vmatmul.bf16.gmra.mxu0 %v542
  %v3567 = vpop.f32.mrf.mxu0
  %v3568 = vadd.f32 %v3555, %v3567
  %v3569 = vpop.f32.mrf.mxu0
  %3570 = vdwg.mxu0
  %3571 = vmatpush.bf16.msra.mxu0 %v2344
  %3572 = vmatpush.bf16.msra.mxu0 %v2336
  %3573 = vmatpush.bf16.msra.mxu0 %v2328
  %3574 = vmatpush.bf16.msra.mxu0 %v2320
  %3575 = vmatpush.bf16.msra.mxu0 %v2312
  %3576 = vmatpush.bf16.msra.mxu0 %v2304
  %3577 = vmatpush.bf16.msra.mxu0 %v2296
  %3578 = vmatpush.bf16.msra.mxu0 %v2288
  %3579 = vmatmul.bf16.gmra.mxu0 %v543
  %v3580 = vpop.f32.mrf.mxu0
  %v3581 = vadd.f32 %v3568, %v3580
  %v3582 = vpop.f32.mrf.mxu0
  %3583 = vdwg.mxu0
  %3584 = vmatpush.bf16.msra.mxu0 %v2408
  %3585 = vmatpush.bf16.msra.mxu0 %v2400
  %3586 = vmatpush.bf16.msra.mxu0 %v2392
  %3587 = vmatpush.bf16.msra.mxu0 %v2384
  %3588 = vmatpush.bf16.msra.mxu0 %v2376
  %3589 = vmatpush.bf16.msra.mxu0 %v2368
  %3590 = vmatpush.bf16.msra.mxu0 %v2360
  %3591 = vmatpush.bf16.msra.mxu0 %v2352
  %3592 = vmatmul.bf16.gmra.mxu0 %v544
  %v3593 = vpop.f32.mrf.mxu0
  %v3594 = vadd.f32 %v3581, %v3593
  %v3595 = vpop.f32.mrf.mxu0
  %3596 = vdwg.mxu0
  %3597 = vmatpush.bf16.msra.mxu0 %v2472
  %3598 = vmatpush.bf16.msra.mxu0 %v2464
  %3599 = vmatpush.bf16.msra.mxu0 %v2456
  %3600 = vmatpush.bf16.msra.mxu0 %v2448
  %3601 = vmatpush.bf16.msra.mxu0 %v2440
  %3602 = vmatpush.bf16.msra.mxu0 %v2432
  %3603 = vmatpush.bf16.msra.mxu0 %v2424
  %3604 = vmatpush.bf16.msra.mxu0 %v2416
  %3605 = vmatmul.bf16.gmra.mxu0 %v545
  %v3606 = vpop.f32.mrf.mxu0
  %v3607 = vadd.f32 %v3594, %v3606
  %v3608 = vpop.f32.mrf.mxu0
  %3609 = vdwg.mxu0
  %3610 = vmatpush.bf16.msra.mxu0 %v2536
  %3611 = vmatpush.bf16.msra.mxu0 %v2528
  %3612 = vmatpush.bf16.msra.mxu0 %v2520
  %3613 = vmatpush.bf16.msra.mxu0 %v2512
  %3614 = vmatpush.bf16.msra.mxu0 %v2504
  %3615 = vmatpush.bf16.msra.mxu0 %v2496
  %3616 = vmatpush.bf16.msra.mxu0 %v2488
  %3617 = vmatpush.bf16.msra.mxu0 %v2480
  %3618 = vmatmul.bf16.gmra.mxu0 %v546
  %v3619 = vpop.f32.mrf.mxu0
  %v3620 = vadd.f32 %v3607, %v3619
  %v3621 = vpop.f32.mrf.mxu0
  %3622 = vdwg.mxu0
  %3623 = vmatpush.bf16.msra.mxu0 %v2600
  %3624 = vmatpush.bf16.msra.mxu0 %v2592
  %3625 = vmatpush.bf16.msra.mxu0 %v2584
  %3626 = vmatpush.bf16.msra.mxu0 %v2576
  %3627 = vmatpush.bf16.msra.mxu0 %v2568
  %3628 = vmatpush.bf16.msra.mxu0 %v2560
  %3629 = vmatpush.bf16.msra.mxu0 %v2552
  %3630 = vmatpush.bf16.msra.mxu0 %v2544
  %3631 = vmatmul.bf16.gmra.mxu0 %v547
  %v3632 = vpop.f32.mrf.mxu0
  %v3633 = vadd.f32 %v3620, %v3632
  %v3634 = vpop.f32.mrf.mxu0
  %3635 = vdwg.mxu0
  %3636 = vmatpush.bf16.msra.mxu0 %v2153
  %3637 = vmatpush.bf16.msra.mxu0 %v2145
  %3638 = vmatpush.bf16.msra.mxu0 %v2137
  %3639 = vmatpush.bf16.msra.mxu0 %v2129
  %3640 = vmatpush.bf16.msra.mxu0 %v2121
  %3641 = vmatpush.bf16.msra.mxu0 %v2113
  %3642 = vmatpush.bf16.msra.mxu0 %v2105
  %3643 = vmatpush.bf16.msra.mxu0 %v2097
  %3644 = vmatmul.bf16.gmra.mxu0 %v540
  %v3645 = vpop.f32.mrf.mxu0
  %v3646 = vadd.f32 0.0, %v3645
  %v3647 = vpop.f32.mrf.mxu0
  %3648 = vdwg.mxu0
  %3649 = vmatpush.bf16.msra.mxu0 %v2217
  %3650 = vmatpush.bf16.msra.mxu0 %v2209
  %3651 = vmatpush.bf16.msra.mxu0 %v2201
  %3652 = vmatpush.bf16.msra.mxu0 %v2193
  %3653 = vmatpush.bf16.msra.mxu0 %v2185
  %3654 = vmatpush.bf16.msra.mxu0 %v2177
  %3655 = vmatpush.bf16.msra.mxu0 %v2169
  %3656 = vmatpush.bf16.msra.mxu0 %v2161
  %3657 = vmatmul.bf16.gmra.mxu0 %v541
  %v3658 = vpop.f32.mrf.mxu0
  %v3659 = vadd.f32 %v3646, %v3658
  %v3660 = vpop.f32.mrf.mxu0
  %3661 = vdwg.mxu0
  %3662 = vmatpush.bf16.msra.mxu0 %v2281
  %3663 = vmatpush.bf16.msra.mxu0 %v2273
  %3664 = vmatpush.bf16.msra.mxu0 %v2265
  %3665 = vmatpush.bf16.msra.mxu0 %v2257
  %3666 = vmatpush.bf16.msra.mxu0 %v2249
  %3667 = vmatpush.bf16.msra.mxu0 %v2241
  %3668 = vmatpush.bf16.msra.mxu0 %v2233
  %3669 = vmatpush.bf16.msra.mxu0 %v2225
  %3670 = vmatmul.bf16.gmra.mxu0 %v542
  %v3671 = vpop.f32.mrf.mxu0
  %v3672 = vadd.f32 %v3659, %v3671
  %v3673 = vpop.f32.mrf.mxu0
  %3674 = vdwg.mxu0
  %3675 = vmatpush.bf16.msra.mxu0 %v2345
  %3676 = vmatpush.bf16.msra.mxu0 %v2337
  %3677 = vmatpush.bf16.msra.mxu0 %v2329
  %3678 = vmatpush.bf16.msra.mxu0 %v2321
  %3679 = vmatpush.bf16.msra.mxu0 %v2313
  %3680 = vmatpush.bf16.msra.mxu0 %v2305
  %3681 = vmatpush.bf16.msra.mxu0 %v2297
  %3682 = vmatpush.bf16.msra.mxu0 %v2289
  %3683 = vmatmul.bf16.gmra.mxu0 %v543
  %v3684 = vpop.f32.mrf.mxu0
  %v3685 = vadd.f32 %v3672, %v3684
  %v3686 = vpop.f32.mrf.mxu0
  %3687 = vdwg.mxu0
  %3688 = vmatpush.bf16.msra.mxu0 %v2409
  %3689 = vmatpush.bf16.msra.mxu0 %v2401
  %3690 = vmatpush.bf16.msra.mxu0 %v2393
  %3691 = vmatpush.bf16.msra.mxu0 %v2385
  %3692 = vmatpush.bf16.msra.mxu0 %v2377
  %3693 = vmatpush.bf16.msra.mxu0 %v2369
  %3694 = vmatpush.bf16.msra.mxu0 %v2361
  %3695 = vmatpush.bf16.msra.mxu0 %v2353
  %3696 = vmatmul.bf16.gmra.mxu0 %v544
  %v3697 = vpop.f32.mrf.mxu0
  %v3698 = vadd.f32 %v3685, %v3697
  %v3699 = vpop.f32.mrf.mxu0
  %3700 = vdwg.mxu0
  %3701 = vmatpush.bf16.msra.mxu0 %v2473
  %3702 = vmatpush.bf16.msra.mxu0 %v2465
  %3703 = vmatpush.bf16.msra.mxu0 %v2457
  %3704 = vmatpush.bf16.msra.mxu0 %v2449
  %3705 = vmatpush.bf16.msra.mxu0 %v2441
  %3706 = vmatpush.bf16.msra.mxu0 %v2433
  %3707 = vmatpush.bf16.msra.mxu0 %v2425
  %3708 = vmatpush.bf16.msra.mxu0 %v2417
  %3709 = vmatmul.bf16.gmra.mxu0 %v545
  %v3710 = vpop.f32.mrf.mxu0
  %v3711 = vadd.f32 %v3698, %v3710
  %v3712 = vpop.f32.mrf.mxu0
  %3713 = vdwg.mxu0
  %3714 = vmatpush.bf16.msra.mxu0 %v2537
  %3715 = vmatpush.bf16.msra.mxu0 %v2529
  %3716 = vmatpush.bf16.msra.mxu0 %v2521
  %3717 = vmatpush.bf16.msra.mxu0 %v2513
  %3718 = vmatpush.bf16.msra.mxu0 %v2505
  %3719 = vmatpush.bf16.msra.mxu0 %v2497
  %3720 = vmatpush.bf16.msra.mxu0 %v2489
  %3721 = vmatpush.bf16.msra.mxu0 %v2481
  %3722 = vmatmul.bf16.gmra.mxu0 %v546
  %v3723 = vpop.f32.mrf.mxu0
  %v3724 = vadd.f32 %v3711, %v3723
  %v3725 = vpop.f32.mrf.mxu0
  %3726 = vdwg.mxu0
  %3727 = vmatpush.bf16.msra.mxu0 %v2601
  %3728 = vmatpush.bf16.msra.mxu0 %v2593
  %3729 = vmatpush.bf16.msra.mxu0 %v2585
  %3730 = vmatpush.bf16.msra.mxu0 %v2577
  %3731 = vmatpush.bf16.msra.mxu0 %v2569
  %3732 = vmatpush.bf16.msra.mxu0 %v2561
  %3733 = vmatpush.bf16.msra.mxu0 %v2553
  %3734 = vmatpush.bf16.msra.mxu0 %v2545
  %3735 = vmatmul.bf16.gmra.mxu0 %v547
  %v3736 = vpop.f32.mrf.mxu0
  %v3737 = vadd.f32 %v3724, %v3736
  %v3738 = vpop.f32.mrf.mxu0
  %3739 = vdwg.mxu0
  %3740 = vmatpush.bf16.msra.mxu0 %v2154
  %3741 = vmatpush.bf16.msra.mxu0 %v2146
  %3742 = vmatpush.bf16.msra.mxu0 %v2138
  %3743 = vmatpush.bf16.msra.mxu0 %v2130
  %3744 = vmatpush.bf16.msra.mxu0 %v2122
  %3745 = vmatpush.bf16.msra.mxu0 %v2114
  %3746 = vmatpush.bf16.msra.mxu0 %v2106
  %3747 = vmatpush.bf16.msra.mxu0 %v2098
  %3748 = vmatmul.bf16.gmra.mxu0 %v540
  %v3749 = vpop.f32.mrf.mxu0
  %v3750 = vadd.f32 0.0, %v3749
  %v3751 = vpop.f32.mrf.mxu0
  %3752 = vdwg.mxu0
  %3753 = vmatpush.bf16.msra.mxu0 %v2218
  %3754 = vmatpush.bf16.msra.mxu0 %v2210
  %3755 = vmatpush.bf16.msra.mxu0 %v2202
  %3756 = vmatpush.bf16.msra.mxu0 %v2194
  %3757 = vmatpush.bf16.msra.mxu0 %v2186
  %3758 = vmatpush.bf16.msra.mxu0 %v2178
  %3759 = vmatpush.bf16.msra.mxu0 %v2170
  %3760 = vmatpush.bf16.msra.mxu0 %v2162
  %3761 = vmatmul.bf16.gmra.mxu0 %v541
  %v3762 = vpop.f32.mrf.mxu0
  %v3763 = vadd.f32 %v3750, %v3762
  %v3764 = vpop.f32.mrf.mxu0
  %3765 = vdwg.mxu0
  %3766 = vmatpush.bf16.msra.mxu0 %v2282
  %3767 = vmatpush.bf16.msra.mxu0 %v2274
  %3768 = vmatpush.bf16.msra.mxu0 %v2266
  %3769 = vmatpush.bf16.msra.mxu0 %v2258
  %3770 = vmatpush.bf16.msra.mxu0 %v2250
  %3771 = vmatpush.bf16.msra.mxu0 %v2242
  %3772 = vmatpush.bf16.msra.mxu0 %v2234
  %3773 = vmatpush.bf16.msra.mxu0 %v2226
  %3774 = vmatmul.bf16.gmra.mxu0 %v542
  %v3775 = vpop.f32.mrf.mxu0
  %v3776 = vadd.f32 %v3763, %v3775
  %v3777 = vpop.f32.mrf.mxu0
  %3778 = vdwg.mxu0
  %3779 = vmatpush.bf16.msra.mxu0 %v2346
  %3780 = vmatpush.bf16.msra.mxu0 %v2338
  %3781 = vmatpush.bf16.msra.mxu0 %v2330
  %3782 = vmatpush.bf16.msra.mxu0 %v2322
  %3783 = vmatpush.bf16.msra.mxu0 %v2314
  %3784 = vmatpush.bf16.msra.mxu0 %v2306
  %3785 = vmatpush.bf16.msra.mxu0 %v2298
  %3786 = vmatpush.bf16.msra.mxu0 %v2290
  %3787 = vmatmul.bf16.gmra.mxu0 %v543
  %v3788 = vpop.f32.mrf.mxu0
  %v3789 = vadd.f32 %v3776, %v3788
  %v3790 = vpop.f32.mrf.mxu0
  %3791 = vdwg.mxu0
  %3792 = vmatpush.bf16.msra.mxu0 %v2410
  %3793 = vmatpush.bf16.msra.mxu0 %v2402
  %3794 = vmatpush.bf16.msra.mxu0 %v2394
  %3795 = vmatpush.bf16.msra.mxu0 %v2386
  %3796 = vmatpush.bf16.msra.mxu0 %v2378
  %3797 = vmatpush.bf16.msra.mxu0 %v2370
  %3798 = vmatpush.bf16.msra.mxu0 %v2362
  %3799 = vmatpush.bf16.msra.mxu0 %v2354
  %3800 = vmatmul.bf16.gmra.mxu0 %v544
  %v3801 = vpop.f32.mrf.mxu0
  %v3802 = vadd.f32 %v3789, %v3801
  %v3803 = vpop.f32.mrf.mxu0
  %3804 = vdwg.mxu0
  %3805 = vmatpush.bf16.msra.mxu0 %v2474
  %3806 = vmatpush.bf16.msra.mxu0 %v2466
  %3807 = vmatpush.bf16.msra.mxu0 %v2458
  %3808 = vmatpush.bf16.msra.mxu0 %v2450
  %3809 = vmatpush.bf16.msra.mxu0 %v2442
  %3810 = vmatpush.bf16.msra.mxu0 %v2434
  %3811 = vmatpush.bf16.msra.mxu0 %v2426
  %3812 = vmatpush.bf16.msra.mxu0 %v2418
  %3813 = vmatmul.bf16.gmra.mxu0 %v545
  %v3814 = vpop.f32.mrf.mxu0
  %v3815 = vadd.f32 %v3802, %v3814
  %v3816 = vpop.f32.mrf.mxu0
  %3817 = vdwg.mxu0
  %3818 = vmatpush.bf16.msra.mxu0 %v2538
  %3819 = vmatpush.bf16.msra.mxu0 %v2530
  %3820 = vmatpush.bf16.msra.mxu0 %v2522
  %3821 = vmatpush.bf16.msra.mxu0 %v2514
  %3822 = vmatpush.bf16.msra.mxu0 %v2506
  %3823 = vmatpush.bf16.msra.mxu0 %v2498
  %3824 = vmatpush.bf16.msra.mxu0 %v2490
  %3825 = vmatpush.bf16.msra.mxu0 %v2482
  %3826 = vmatmul.bf16.gmra.mxu0 %v546
  %v3827 = vpop.f32.mrf.mxu0
  %v3828 = vadd.f32 %v3815, %v3827
  %v3829 = vpop.f32.mrf.mxu0
  %3830 = vdwg.mxu0
  %3831 = vmatpush.bf16.msra.mxu0 %v2602
  %3832 = vmatpush.bf16.msra.mxu0 %v2594
  %3833 = vmatpush.bf16.msra.mxu0 %v2586
  %3834 = vmatpush.bf16.msra.mxu0 %v2578
  %3835 = vmatpush.bf16.msra.mxu0 %v2570
  %3836 = vmatpush.bf16.msra.mxu0 %v2562
  %3837 = vmatpush.bf16.msra.mxu0 %v2554
  %3838 = vmatpush.bf16.msra.mxu0 %v2546
  %3839 = vmatmul.bf16.gmra.mxu0 %v547
  %v3840 = vpop.f32.mrf.mxu0
  %v3841 = vadd.f32 %v3828, %v3840
  %v3842 = vpop.f32.mrf.mxu0
  %3843 = vdwg.mxu0
  %3844 = vmatpush.bf16.msra.mxu0 %v2155
  %3845 = vmatpush.bf16.msra.mxu0 %v2147
  %3846 = vmatpush.bf16.msra.mxu0 %v2139
  %3847 = vmatpush.bf16.msra.mxu0 %v2131
  %3848 = vmatpush.bf16.msra.mxu0 %v2123
  %3849 = vmatpush.bf16.msra.mxu0 %v2115
  %3850 = vmatpush.bf16.msra.mxu0 %v2107
  %3851 = vmatpush.bf16.msra.mxu0 %v2099
  %3852 = vmatmul.bf16.gmra.mxu0 %v540
  %v3853 = vpop.f32.mrf.mxu0
  %v3854 = vadd.f32 0.0, %v3853
  %v3855 = vpop.f32.mrf.mxu0
  %3856 = vdwg.mxu0
  %3857 = vmatpush.bf16.msra.mxu0 %v2219
  %3858 = vmatpush.bf16.msra.mxu0 %v2211
  %3859 = vmatpush.bf16.msra.mxu0 %v2203
  %3860 = vmatpush.bf16.msra.mxu0 %v2195
  %3861 = vmatpush.bf16.msra.mxu0 %v2187
  %3862 = vmatpush.bf16.msra.mxu0 %v2179
  %3863 = vmatpush.bf16.msra.mxu0 %v2171
  %3864 = vmatpush.bf16.msra.mxu0 %v2163
  %3865 = vmatmul.bf16.gmra.mxu0 %v541
  %v3866 = vpop.f32.mrf.mxu0
  %v3867 = vadd.f32 %v3854, %v3866
  %v3868 = vpop.f32.mrf.mxu0
  %3869 = vdwg.mxu0
  %3870 = vmatpush.bf16.msra.mxu0 %v2283
  %3871 = vmatpush.bf16.msra.mxu0 %v2275
  %3872 = vmatpush.bf16.msra.mxu0 %v2267
  %3873 = vmatpush.bf16.msra.mxu0 %v2259
  %3874 = vmatpush.bf16.msra.mxu0 %v2251
  %3875 = vmatpush.bf16.msra.mxu0 %v2243
  %3876 = vmatpush.bf16.msra.mxu0 %v2235
  %3877 = vmatpush.bf16.msra.mxu0 %v2227
  %3878 = vmatmul.bf16.gmra.mxu0 %v542
  %v3879 = vpop.f32.mrf.mxu0
  %v3880 = vadd.f32 %v3867, %v3879
  %v3881 = vpop.f32.mrf.mxu0
  %3882 = vdwg.mxu0
  %3883 = vmatpush.bf16.msra.mxu0 %v2347
  %3884 = vmatpush.bf16.msra.mxu0 %v2339
  %3885 = vmatpush.bf16.msra.mxu0 %v2331
  %3886 = vmatpush.bf16.msra.mxu0 %v2323
  %3887 = vmatpush.bf16.msra.mxu0 %v2315
  %3888 = vmatpush.bf16.msra.mxu0 %v2307
  %3889 = vmatpush.bf16.msra.mxu0 %v2299
  %3890 = vmatpush.bf16.msra.mxu0 %v2291
  %3891 = vmatmul.bf16.gmra.mxu0 %v543
  %v3892 = vpop.f32.mrf.mxu0
  %v3893 = vadd.f32 %v3880, %v3892
  %v3894 = vpop.f32.mrf.mxu0
  %3895 = vdwg.mxu0
  %3896 = vmatpush.bf16.msra.mxu0 %v2411
  %3897 = vmatpush.bf16.msra.mxu0 %v2403
  %3898 = vmatpush.bf16.msra.mxu0 %v2395
  %3899 = vmatpush.bf16.msra.mxu0 %v2387
  %3900 = vmatpush.bf16.msra.mxu0 %v2379
  %3901 = vmatpush.bf16.msra.mxu0 %v2371
  %3902 = vmatpush.bf16.msra.mxu0 %v2363
  %3903 = vmatpush.bf16.msra.mxu0 %v2355
  %3904 = vmatmul.bf16.gmra.mxu0 %v544
  %v3905 = vpop.f32.mrf.mxu0
  %v3906 = vadd.f32 %v3893, %v3905
  %v3907 = vpop.f32.mrf.mxu0
  %3908 = vdwg.mxu0
  %3909 = vmatpush.bf16.msra.mxu0 %v2475
  %3910 = vmatpush.bf16.msra.mxu0 %v2467
  %3911 = vmatpush.bf16.msra.mxu0 %v2459
  %3912 = vmatpush.bf16.msra.mxu0 %v2451
  %3913 = vmatpush.bf16.msra.mxu0 %v2443
  %3914 = vmatpush.bf16.msra.mxu0 %v2435
  %3915 = vmatpush.bf16.msra.mxu0 %v2427
  %3916 = vmatpush.bf16.msra.mxu0 %v2419
  %3917 = vmatmul.bf16.gmra.mxu0 %v545
  %v3918 = vpop.f32.mrf.mxu0
  %v3919 = vadd.f32 %v3906, %v3918
  %v3920 = vpop.f32.mrf.mxu0
  %3921 = vdwg.mxu0
  %3922 = vmatpush.bf16.msra.mxu0 %v2539
  %3923 = vmatpush.bf16.msra.mxu0 %v2531
  %3924 = vmatpush.bf16.msra.mxu0 %v2523
  %3925 = vmatpush.bf16.msra.mxu0 %v2515
  %3926 = vmatpush.bf16.msra.mxu0 %v2507
  %3927 = vmatpush.bf16.msra.mxu0 %v2499
  %3928 = vmatpush.bf16.msra.mxu0 %v2491
  %3929 = vmatpush.bf16.msra.mxu0 %v2483
  %3930 = vmatmul.bf16.gmra.mxu0 %v546
  %v3931 = vpop.f32.mrf.mxu0
  %v3932 = vadd.f32 %v3919, %v3931
  %v3933 = vpop.f32.mrf.mxu0
  %3934 = vdwg.mxu0
  %3935 = vmatpush.bf16.msra.mxu0 %v2603
  %3936 = vmatpush.bf16.msra.mxu0 %v2595
  %3937 = vmatpush.bf16.msra.mxu0 %v2587
  %3938 = vmatpush.bf16.msra.mxu0 %v2579
  %3939 = vmatpush.bf16.msra.mxu0 %v2571
  %3940 = vmatpush.bf16.msra.mxu0 %v2563
  %3941 = vmatpush.bf16.msra.mxu0 %v2555
  %3942 = vmatpush.bf16.msra.mxu0 %v2547
  %3943 = vmatmul.bf16.gmra.mxu0 %v547
  %v3944 = vpop.f32.mrf.mxu0
  %v3945 = vadd.f32 %v3932, %v3944
  %v3946 = vpop.f32.mrf.mxu0
  %3947 = vdwg.mxu0
  %vm3948 = vcmp.ge.f32.partialorder %v3217, 0.0
  %vm3949 = vcmp.ge.f32.partialorder %v3321, 0.0
  %vm3950 = vcmp.ge.f32.partialorder %v3425, 0.0
  %vm3951 = vcmp.ge.f32.partialorder %v3529, 0.0
  %vm3952 = vcmp.ge.f32.partialorder %v3633, 0.0
  %vm3953 = vcmp.ge.f32.partialorder %v3737, 0.0
  %vm3954 = vcmp.ge.f32.partialorder %v3841, 0.0
  %vm3955 = vcmp.ge.f32.partialorder %v3945, 0.0
  %v3956 = vmul.f32 %v3217, 0.01
  %v3957 = vmul.f32 %v3321, 0.01
  %v3958 = vmul.f32 %v3425, 0.01
  %v3959 = vmul.f32 %v3529, 0.01
  %v3960 = vmul.f32 %v3633, 0.01
  %v3961 = vmul.f32 %v3737, 0.01
  %v3962 = vmul.f32 %v3841, 0.01
  %v3963 = vmul.f32 %v3945, 0.01
  %v3964 = vsel %vm3948, %v3217, %v3956
  %v3965 = vsel %vm3949, %v3321, %v3957
  %v3966 = vsel %vm3950, %v3425, %v3958
  %v3967 = vsel %vm3951, %v3529, %v3959
  %v3968 = vsel %vm3952, %v3633, %v3960
  %v3969 = vsel %vm3953, %v3737, %v3961
  %v3970 = vsel %vm3954, %v3841, %v3962
  %v3971 = vsel %vm3955, %v3945, %v3963
  %v3972 = vpack.c.bf16 %v3964, %v3964
  %v3973 = vpack.c.bf16 %v3965, %v3965
  %v3974 = vpack.c.bf16 %v3966, %v3966
  %v3975 = vpack.c.bf16 %v3967, %v3967
  %v3976 = vpack.c.bf16 %v3968, %v3968
  %v3977 = vpack.c.bf16 %v3969, %v3969
  %v3978 = vpack.c.bf16 %v3970, %v3970
  %v3979 = vpack.c.bf16 %v3971, %v3971
  %v3980 = vld [vmem:[%s2] sm:$0xff]
  %v3981 = vld [vmem:[%s2 + $0x8] sm:$0xff]
  %v3982 = vld [vmem:[%s2 + $0x10] sm:$0xff]
  %v3983 = vld [vmem:[%s2 + $0x18] sm:$0xff]
  %v3984 = vld [vmem:[%s2 + $0x20] sm:$0xff]
  %v3985 = vld [vmem:[%s2 + $0x28] sm:$0xff]
  %v3986 = vld [vmem:[%s2 + $0x30] sm:$0xff]
  %v3987 = vld [vmem:[%s2 + $0x38] sm:$0xff]
  %v3988 = vld [vmem:[%s2 + $0x40] sm:$0xff]
  %v3989 = vld [vmem:[%s2 + $0x48] sm:$0xff]
  %v3990 = vld [vmem:[%s2 + $0x50] sm:$0xff]
  %v3991 = vld [vmem:[%s2 + $0x58] sm:$0xff]
  %v3992 = vld [vmem:[%s2 + $0x60] sm:$0xff]
  %v3993 = vld [vmem:[%s2 + $0x68] sm:$0xff]
  %v3994 = vld [vmem:[%s2 + $0x70] sm:$0xff]
  %v3995 = vld [vmem:[%s2 + $0x78] sm:$0xff]
  %v3996 = vld [vmem:[%s2 + $0x80] sm:$0xff]
  %v3997 = vld [vmem:[%s2 + $0x88] sm:$0xff]
  %v3998 = vld [vmem:[%s2 + $0x90] sm:$0xff]
  %v3999 = vld [vmem:[%s2 + $0x98] sm:$0xff]
  %v4000 = vld [vmem:[%s2 + $0xa0] sm:$0xff]
  %v4001 = vld [vmem:[%s2 + $0xa8] sm:$0xff]
  %v4002 = vld [vmem:[%s2 + $0xb0] sm:$0xff]
  %v4003 = vld [vmem:[%s2 + $0xb8] sm:$0xff]
  %v4004 = vld [vmem:[%s2 + $0xc0] sm:$0xff]
  %v4005 = vld [vmem:[%s2 + $0xc8] sm:$0xff]
  %v4006 = vld [vmem:[%s2 + $0xd0] sm:$0xff]
  %v4007 = vld [vmem:[%s2 + $0xd8] sm:$0xff]
  %v4008 = vld [vmem:[%s2 + $0xe0] sm:$0xff]
  %v4009 = vld [vmem:[%s2 + $0xe8] sm:$0xff]
  %v4010 = vld [vmem:[%s2 + $0xf0] sm:$0xff]
  %v4011 = vld [vmem:[%s2 + $0xf8] sm:$0xff]
  %v4012 = vld [vmem:[%s2 + $0x100] sm:$0xff]
  %v4013 = vld [vmem:[%s2 + $0x108] sm:$0xff]
  %v4014 = vld [vmem:[%s2 + $0x110] sm:$0xff]
  %v4015 = vld [vmem:[%s2 + $0x118] sm:$0xff]
  %v4016 = vld [vmem:[%s2 + $0x120] sm:$0xff]
  %v4017 = vld [vmem:[%s2 + $0x128] sm:$0xff]
  %v4018 = vld [vmem:[%s2 + $0x130] sm:$0xff]
  %v4019 = vld [vmem:[%s2 + $0x138] sm:$0xff]
  %v4020 = vld [vmem:[%s2 + $0x140] sm:$0xff]
  %v4021 = vld [vmem:[%s2 + $0x148] sm:$0xff]
  %v4022 = vld [vmem:[%s2 + $0x150] sm:$0xff]
  %v4023 = vld [vmem:[%s2 + $0x158] sm:$0xff]
  %v4024 = vld [vmem:[%s2 + $0x160] sm:$0xff]
  %v4025 = vld [vmem:[%s2 + $0x168] sm:$0xff]
  %v4026 = vld [vmem:[%s2 + $0x170] sm:$0xff]
  %v4027 = vld [vmem:[%s2 + $0x178] sm:$0xff]
  %v4028 = vld [vmem:[%s2 + $0x180] sm:$0xff]
  %v4029 = vld [vmem:[%s2 + $0x188] sm:$0xff]
  %v4030 = vld [vmem:[%s2 + $0x190] sm:$0xff]
  %v4031 = vld [vmem:[%s2 + $0x198] sm:$0xff]
  %v4032 = vld [vmem:[%s2 + $0x1a0] sm:$0xff]
  %v4033 = vld [vmem:[%s2 + $0x1a8] sm:$0xff]
  %v4034 = vld [vmem:[%s2 + $0x1b0] sm:$0xff]
  %v4035 = vld [vmem:[%s2 + $0x1b8] sm:$0xff]
  %v4036 = vld [vmem:[%s2 + $0x1c0] sm:$0xff]
  %v4037 = vld [vmem:[%s2 + $0x1c8] sm:$0xff]
  %v4038 = vld [vmem:[%s2 + $0x1d0] sm:$0xff]
  %v4039 = vld [vmem:[%s2 + $0x1d8] sm:$0xff]
  %v4040 = vld [vmem:[%s2 + $0x1e0] sm:$0xff]
  %v4041 = vld [vmem:[%s2 + $0x1e8] sm:$0xff]
  %v4042 = vld [vmem:[%s2 + $0x1f0] sm:$0xff]
  %v4043 = vld [vmem:[%s2 + $0x1f8] sm:$0xff]
  %v4044 = vld [vmem:[%s2 + $0x200] sm:$0xff]
  %v4045 = vld [vmem:[%s2 + $0x208] sm:$0xff]
  %v4046 = vld [vmem:[%s2 + $0x210] sm:$0xff]
  %v4047 = vld [vmem:[%s2 + $0x218] sm:$0xff]
  %v4048 = vld [vmem:[%s2 + $0x220] sm:$0xff]
  %v4049 = vld [vmem:[%s2 + $0x228] sm:$0xff]
  %v4050 = vld [vmem:[%s2 + $0x230] sm:$0xff]
  %v4051 = vld [vmem:[%s2 + $0x238] sm:$0xff]
  %v4052 = vld [vmem:[%s2 + $0x240] sm:$0xff]
  %v4053 = vld [vmem:[%s2 + $0x248] sm:$0xff]
  %v4054 = vld [vmem:[%s2 + $0x250] sm:$0xff]
  %v4055 = vld [vmem:[%s2 + $0x258] sm:$0xff]
  %v4056 = vld [vmem:[%s2 + $0x260] sm:$0xff]
  %v4057 = vld [vmem:[%s2 + $0x268] sm:$0xff]
  %v4058 = vld [vmem:[%s2 + $0x270] sm:$0xff]
  %v4059 = vld [vmem:[%s2 + $0x278] sm:$0xff]
  %v4060 = vld [vmem:[%s2 + $0x280] sm:$0xff]
  %v4061 = vld [vmem:[%s2 + $0x288] sm:$0xff]
  %v4062 = vld [vmem:[%s2 + $0x290] sm:$0xff]
  %v4063 = vld [vmem:[%s2 + $0x298] sm:$0xff]
  %v4064 = vld [vmem:[%s2 + $0x2a0] sm:$0xff]
  %v4065 = vld [vmem:[%s2 + $0x2a8] sm:$0xff]
  %v4066 = vld [vmem:[%s2 + $0x2b0] sm:$0xff]
  %v4067 = vld [vmem:[%s2 + $0x2b8] sm:$0xff]
  %v4068 = vld [vmem:[%s2 + $0x2c0] sm:$0xff]
  %v4069 = vld [vmem:[%s2 + $0x2c8] sm:$0xff]
  %v4070 = vld [vmem:[%s2 + $0x2d0] sm:$0xff]
  %v4071 = vld [vmem:[%s2 + $0x2d8] sm:$0xff]
  %v4072 = vld [vmem:[%s2 + $0x2e0] sm:$0xff]
  %v4073 = vld [vmem:[%s2 + $0x2e8] sm:$0xff]
  %v4074 = vld [vmem:[%s2 + $0x2f0] sm:$0xff]
  %v4075 = vld [vmem:[%s2 + $0x2f8] sm:$0xff]
  %v4076 = vld [vmem:[%s2 + $0x300] sm:$0xff]
  %v4077 = vld [vmem:[%s2 + $0x308] sm:$0xff]
  %v4078 = vld [vmem:[%s2 + $0x310] sm:$0xff]
  %v4079 = vld [vmem:[%s2 + $0x318] sm:$0xff]
  %v4080 = vld [vmem:[%s2 + $0x320] sm:$0xff]
  %v4081 = vld [vmem:[%s2 + $0x328] sm:$0xff]
  %v4082 = vld [vmem:[%s2 + $0x330] sm:$0xff]
  %v4083 = vld [vmem:[%s2 + $0x338] sm:$0xff]
  %v4084 = vld [vmem:[%s2 + $0x340] sm:$0xff]
  %v4085 = vld [vmem:[%s2 + $0x348] sm:$0xff]
  %v4086 = vld [vmem:[%s2 + $0x350] sm:$0xff]
  %v4087 = vld [vmem:[%s2 + $0x358] sm:$0xff]
  %v4088 = vld [vmem:[%s2 + $0x360] sm:$0xff]
  %v4089 = vld [vmem:[%s2 + $0x368] sm:$0xff]
  %v4090 = vld [vmem:[%s2 + $0x370] sm:$0xff]
  %v4091 = vld [vmem:[%s2 + $0x378] sm:$0xff]
  %v4092 = vld [vmem:[%s2 + $0x380] sm:$0xff]
  %v4093 = vld [vmem:[%s2 + $0x388] sm:$0xff]
  %v4094 = vld [vmem:[%s2 + $0x390] sm:$0xff]
  %v4095 = vld [vmem:[%s2 + $0x398] sm:$0xff]
  %v4096 = vld [vmem:[%s2 + $0x3a0] sm:$0xff]
  %v4097 = vld [vmem:[%s2 + $0x3a8] sm:$0xff]
  %v4098 = vld [vmem:[%s2 + $0x3b0] sm:$0xff]
  %v4099 = vld [vmem:[%s2 + $0x3b8] sm:$0xff]
  %v4100 = vld [vmem:[%s2 + $0x3c0] sm:$0xff]
  %v4101 = vld [vmem:[%s2 + $0x3c8] sm:$0xff]
  %v4102 = vld [vmem:[%s2 + $0x3d0] sm:$0xff]
  %v4103 = vld [vmem:[%s2 + $0x3d8] sm:$0xff]
  %v4104 = vld [vmem:[%s2 + $0x3e0] sm:$0xff]
  %v4105 = vld [vmem:[%s2 + $0x3e8] sm:$0xff]
  %v4106 = vld [vmem:[%s2 + $0x3f0] sm:$0xff]
  %v4107 = vld [vmem:[%s2 + $0x3f8] sm:$0xff]
  %v4108 = vld [vmem:[%s2 + $0x400] sm:$0xff]
  %v4109 = vld [vmem:[%s2 + $0x408] sm:$0xff]
  %v4110 = vld [vmem:[%s2 + $0x410] sm:$0xff]
  %v4111 = vld [vmem:[%s2 + $0x418] sm:$0xff]
  %v4112 = vld [vmem:[%s2 + $0x420] sm:$0xff]
  %v4113 = vld [vmem:[%s2 + $0x428] sm:$0xff]
  %v4114 = vld [vmem:[%s2 + $0x430] sm:$0xff]
  %v4115 = vld [vmem:[%s2 + $0x438] sm:$0xff]
  %v4116 = vld [vmem:[%s2 + $0x440] sm:$0xff]
  %v4117 = vld [vmem:[%s2 + $0x448] sm:$0xff]
  %v4118 = vld [vmem:[%s2 + $0x450] sm:$0xff]
  %v4119 = vld [vmem:[%s2 + $0x458] sm:$0xff]
  %v4120 = vld [vmem:[%s2 + $0x460] sm:$0xff]
  %v4121 = vld [vmem:[%s2 + $0x468] sm:$0xff]
  %v4122 = vld [vmem:[%s2 + $0x470] sm:$0xff]
  %v4123 = vld [vmem:[%s2 + $0x478] sm:$0xff]
  %v4124 = vld [vmem:[%s2 + $0x480] sm:$0xff]
  %v4125 = vld [vmem:[%s2 + $0x488] sm:$0xff]
  %v4126 = vld [vmem:[%s2 + $0x490] sm:$0xff]
  %v4127 = vld [vmem:[%s2 + $0x498] sm:$0xff]
  %v4128 = vld [vmem:[%s2 + $0x4a0] sm:$0xff]
  %v4129 = vld [vmem:[%s2 + $0x4a8] sm:$0xff]
  %v4130 = vld [vmem:[%s2 + $0x4b0] sm:$0xff]
  %v4131 = vld [vmem:[%s2 + $0x4b8] sm:$0xff]
  %v4132 = vld [vmem:[%s2 + $0x4c0] sm:$0xff]
  %v4133 = vld [vmem:[%s2 + $0x4c8] sm:$0xff]
  %v4134 = vld [vmem:[%s2 + $0x4d0] sm:$0xff]
  %v4135 = vld [vmem:[%s2 + $0x4d8] sm:$0xff]
  %v4136 = vld [vmem:[%s2 + $0x4e0] sm:$0xff]
  %v4137 = vld [vmem:[%s2 + $0x4e8] sm:$0xff]
  %v4138 = vld [vmem:[%s2 + $0x4f0] sm:$0xff]
  %v4139 = vld [vmem:[%s2 + $0x4f8] sm:$0xff]
  %v4140 = vld [vmem:[%s2 + $0x500] sm:$0xff]
  %v4141 = vld [vmem:[%s2 + $0x508] sm:$0xff]
  %v4142 = vld [vmem:[%s2 + $0x510] sm:$0xff]
  %v4143 = vld [vmem:[%s2 + $0x518] sm:$0xff]
  %v4144 = vld [vmem:[%s2 + $0x520] sm:$0xff]
  %v4145 = vld [vmem:[%s2 + $0x528] sm:$0xff]
  %v4146 = vld [vmem:[%s2 + $0x530] sm:$0xff]
  %v4147 = vld [vmem:[%s2 + $0x538] sm:$0xff]
  %v4148 = vld [vmem:[%s2 + $0x540] sm:$0xff]
  %v4149 = vld [vmem:[%s2 + $0x548] sm:$0xff]
  %v4150 = vld [vmem:[%s2 + $0x550] sm:$0xff]
  %v4151 = vld [vmem:[%s2 + $0x558] sm:$0xff]
  %v4152 = vld [vmem:[%s2 + $0x560] sm:$0xff]
  %v4153 = vld [vmem:[%s2 + $0x568] sm:$0xff]
  %v4154 = vld [vmem:[%s2 + $0x570] sm:$0xff]
  %v4155 = vld [vmem:[%s2 + $0x578] sm:$0xff]
  %v4156 = vld [vmem:[%s2 + $0x580] sm:$0xff]
  %v4157 = vld [vmem:[%s2 + $0x588] sm:$0xff]
  %v4158 = vld [vmem:[%s2 + $0x590] sm:$0xff]
  %v4159 = vld [vmem:[%s2 + $0x598] sm:$0xff]
  %v4160 = vld [vmem:[%s2 + $0x5a0] sm:$0xff]
  %v4161 = vld [vmem:[%s2 + $0x5a8] sm:$0xff]
  %v4162 = vld [vmem:[%s2 + $0x5b0] sm:$0xff]
  %v4163 = vld [vmem:[%s2 + $0x5b8] sm:$0xff]
  %v4164 = vld [vmem:[%s2 + $0x5c0] sm:$0xff]
  %v4165 = vld [vmem:[%s2 + $0x5c8] sm:$0xff]
  %v4166 = vld [vmem:[%s2 + $0x5d0] sm:$0xff]
  %v4167 = vld [vmem:[%s2 + $0x5d8] sm:$0xff]
  %v4168 = vld [vmem:[%s2 + $0x5e0] sm:$0xff]
  %v4169 = vld [vmem:[%s2 + $0x5e8] sm:$0xff]
  %v4170 = vld [vmem:[%s2 + $0x5f0] sm:$0xff]
  %v4171 = vld [vmem:[%s2 + $0x5f8] sm:$0xff]
  %v4172 = vld [vmem:[%s2 + $0x600] sm:$0xff]
  %v4173 = vld [vmem:[%s2 + $0x608] sm:$0xff]
  %v4174 = vld [vmem:[%s2 + $0x610] sm:$0xff]
  %v4175 = vld [vmem:[%s2 + $0x618] sm:$0xff]
  %v4176 = vld [vmem:[%s2 + $0x620] sm:$0xff]
  %v4177 = vld [vmem:[%s2 + $0x628] sm:$0xff]
  %v4178 = vld [vmem:[%s2 + $0x630] sm:$0xff]
  %v4179 = vld [vmem:[%s2 + $0x638] sm:$0xff]
  %v4180 = vld [vmem:[%s2 + $0x640] sm:$0xff]
  %v4181 = vld [vmem:[%s2 + $0x648] sm:$0xff]
  %v4182 = vld [vmem:[%s2 + $0x650] sm:$0xff]
  %v4183 = vld [vmem:[%s2 + $0x658] sm:$0xff]
  %v4184 = vld [vmem:[%s2 + $0x660] sm:$0xff]
  %v4185 = vld [vmem:[%s2 + $0x668] sm:$0xff]
  %v4186 = vld [vmem:[%s2 + $0x670] sm:$0xff]
  %v4187 = vld [vmem:[%s2 + $0x678] sm:$0xff]
  %v4188 = vld [vmem:[%s2 + $0x680] sm:$0xff]
  %v4189 = vld [vmem:[%s2 + $0x688] sm:$0xff]
  %v4190 = vld [vmem:[%s2 + $0x690] sm:$0xff]
  %v4191 = vld [vmem:[%s2 + $0x698] sm:$0xff]
  %v4192 = vld [vmem:[%s2 + $0x6a0] sm:$0xff]
  %v4193 = vld [vmem:[%s2 + $0x6a8] sm:$0xff]
  %v4194 = vld [vmem:[%s2 + $0x6b0] sm:$0xff]
  %v4195 = vld [vmem:[%s2 + $0x6b8] sm:$0xff]
  %v4196 = vld [vmem:[%s2 + $0x6c0] sm:$0xff]
  %v4197 = vld [vmem:[%s2 + $0x6c8] sm:$0xff]
  %v4198 = vld [vmem:[%s2 + $0x6d0] sm:$0xff]
  %v4199 = vld [vmem:[%s2 + $0x6d8] sm:$0xff]
  %v4200 = vld [vmem:[%s2 + $0x6e0] sm:$0xff]
  %v4201 = vld [vmem:[%s2 + $0x6e8] sm:$0xff]
  %v4202 = vld [vmem:[%s2 + $0x6f0] sm:$0xff]
  %v4203 = vld [vmem:[%s2 + $0x6f8] sm:$0xff]
  %v4204 = vld [vmem:[%s2 + $0x700] sm:$0xff]
  %v4205 = vld [vmem:[%s2 + $0x708] sm:$0xff]
  %v4206 = vld [vmem:[%s2 + $0x710] sm:$0xff]
  %v4207 = vld [vmem:[%s2 + $0x718] sm:$0xff]
  %v4208 = vld [vmem:[%s2 + $0x720] sm:$0xff]
  %v4209 = vld [vmem:[%s2 + $0x728] sm:$0xff]
  %v4210 = vld [vmem:[%s2 + $0x730] sm:$0xff]
  %v4211 = vld [vmem:[%s2 + $0x738] sm:$0xff]
  %v4212 = vld [vmem:[%s2 + $0x740] sm:$0xff]
  %v4213 = vld [vmem:[%s2 + $0x748] sm:$0xff]
  %v4214 = vld [vmem:[%s2 + $0x750] sm:$0xff]
  %v4215 = vld [vmem:[%s2 + $0x758] sm:$0xff]
  %v4216 = vld [vmem:[%s2 + $0x760] sm:$0xff]
  %v4217 = vld [vmem:[%s2 + $0x768] sm:$0xff]
  %v4218 = vld [vmem:[%s2 + $0x770] sm:$0xff]
  %v4219 = vld [vmem:[%s2 + $0x778] sm:$0xff]
  %v4220 = vld [vmem:[%s2 + $0x780] sm:$0xff]
  %v4221 = vld [vmem:[%s2 + $0x788] sm:$0xff]
  %v4222 = vld [vmem:[%s2 + $0x790] sm:$0xff]
  %v4223 = vld [vmem:[%s2 + $0x798] sm:$0xff]
  %v4224 = vld [vmem:[%s2 + $0x7a0] sm:$0xff]
  %v4225 = vld [vmem:[%s2 + $0x7a8] sm:$0xff]
  %v4226 = vld [vmem:[%s2 + $0x7b0] sm:$0xff]
  %v4227 = vld [vmem:[%s2 + $0x7b8] sm:$0xff]
  %v4228 = vld [vmem:[%s2 + $0x7c0] sm:$0xff]
  %v4229 = vld [vmem:[%s2 + $0x7c8] sm:$0xff]
  %v4230 = vld [vmem:[%s2 + $0x7d0] sm:$0xff]
  %v4231 = vld [vmem:[%s2 + $0x7d8] sm:$0xff]
  %v4232 = vld [vmem:[%s2 + $0x7e0] sm:$0xff]
  %v4233 = vld [vmem:[%s2 + $0x7e8] sm:$0xff]
  %v4234 = vld [vmem:[%s2 + $0x7f0] sm:$0xff]
  %v4235 = vld [vmem:[%s2 + $0x7f8] sm:$0xff]
  %v4236 = vld [vmem:[%s2 + $0x800] sm:$0xff]
  %v4237 = vld [vmem:[%s2 + $0x808] sm:$0xff]
  %v4238 = vld [vmem:[%s2 + $0x810] sm:$0xff]
  %v4239 = vld [vmem:[%s2 + $0x818] sm:$0xff]
  %v4240 = vld [vmem:[%s2 + $0x820] sm:$0xff]
  %v4241 = vld [vmem:[%s2 + $0x828] sm:$0xff]
  %v4242 = vld [vmem:[%s2 + $0x830] sm:$0xff]
  %v4243 = vld [vmem:[%s2 + $0x838] sm:$0xff]
  %v4244 = vld [vmem:[%s2 + $0x840] sm:$0xff]
  %v4245 = vld [vmem:[%s2 + $0x848] sm:$0xff]
  %v4246 = vld [vmem:[%s2 + $0x850] sm:$0xff]
  %v4247 = vld [vmem:[%s2 + $0x858] sm:$0xff]
  %v4248 = vld [vmem:[%s2 + $0x860] sm:$0xff]
  %v4249 = vld [vmem:[%s2 + $0x868] sm:$0xff]
  %v4250 = vld [vmem:[%s2 + $0x870] sm:$0xff]
  %v4251 = vld [vmem:[%s2 + $0x878] sm:$0xff]
  %v4252 = vld [vmem:[%s2 + $0x880] sm:$0xff]
  %v4253 = vld [vmem:[%s2 + $0x888] sm:$0xff]
  %v4254 = vld [vmem:[%s2 + $0x890] sm:$0xff]
  %v4255 = vld [vmem:[%s2 + $0x898] sm:$0xff]
  %v4256 = vld [vmem:[%s2 + $0x8a0] sm:$0xff]
  %v4257 = vld [vmem:[%s2 + $0x8a8] sm:$0xff]
  %v4258 = vld [vmem:[%s2 + $0x8b0] sm:$0xff]
  %v4259 = vld [vmem:[%s2 + $0x8b8] sm:$0xff]
  %v4260 = vld [vmem:[%s2 + $0x8c0] sm:$0xff]
  %v4261 = vld [vmem:[%s2 + $0x8c8] sm:$0xff]
  %v4262 = vld [vmem:[%s2 + $0x8d0] sm:$0xff]
  %v4263 = vld [vmem:[%s2 + $0x8d8] sm:$0xff]
  %v4264 = vld [vmem:[%s2 + $0x8e0] sm:$0xff]
  %v4265 = vld [vmem:[%s2 + $0x8e8] sm:$0xff]
  %v4266 = vld [vmem:[%s2 + $0x8f0] sm:$0xff]
  %v4267 = vld [vmem:[%s2 + $0x8f8] sm:$0xff]
  %v4268 = vld [vmem:[%s2 + $0x900] sm:$0xff]
  %v4269 = vld [vmem:[%s2 + $0x908] sm:$0xff]
  %v4270 = vld [vmem:[%s2 + $0x910] sm:$0xff]
  %v4271 = vld [vmem:[%s2 + $0x918] sm:$0xff]
  %v4272 = vld [vmem:[%s2 + $0x920] sm:$0xff]
  %v4273 = vld [vmem:[%s2 + $0x928] sm:$0xff]
  %v4274 = vld [vmem:[%s2 + $0x930] sm:$0xff]
  %v4275 = vld [vmem:[%s2 + $0x938] sm:$0xff]
  %v4276 = vld [vmem:[%s2 + $0x940] sm:$0xff]
  %v4277 = vld [vmem:[%s2 + $0x948] sm:$0xff]
  %v4278 = vld [vmem:[%s2 + $0x950] sm:$0xff]
  %v4279 = vld [vmem:[%s2 + $0x958] sm:$0xff]
  %v4280 = vld [vmem:[%s2 + $0x960] sm:$0xff]
  %v4281 = vld [vmem:[%s2 + $0x968] sm:$0xff]
  %v4282 = vld [vmem:[%s2 + $0x970] sm:$0xff]
  %v4283 = vld [vmem:[%s2 + $0x978] sm:$0xff]
  %v4284 = vld [vmem:[%s2 + $0x980] sm:$0xff]
  %v4285 = vld [vmem:[%s2 + $0x988] sm:$0xff]
  %v4286 = vld [vmem:[%s2 + $0x990] sm:$0xff]
  %v4287 = vld [vmem:[%s2 + $0x998] sm:$0xff]
  %v4288 = vld [vmem:[%s2 + $0x9a0] sm:$0xff]
  %v4289 = vld [vmem:[%s2 + $0x9a8] sm:$0xff]
  %v4290 = vld [vmem:[%s2 + $0x9b0] sm:$0xff]
  %v4291 = vld [vmem:[%s2 + $0x9b8] sm:$0xff]
  %v4292 = vld [vmem:[%s2 + $0x9c0] sm:$0xff]
  %v4293 = vld [vmem:[%s2 + $0x9c8] sm:$0xff]
  %v4294 = vld [vmem:[%s2 + $0x9d0] sm:$0xff]
  %v4295 = vld [vmem:[%s2 + $0x9d8] sm:$0xff]
  %v4296 = vld [vmem:[%s2 + $0x9e0] sm:$0xff]
  %v4297 = vld [vmem:[%s2 + $0x9e8] sm:$0xff]
  %v4298 = vld [vmem:[%s2 + $0x9f0] sm:$0xff]
  %v4299 = vld [vmem:[%s2 + $0x9f8] sm:$0xff]
  %v4300 = vld [vmem:[%s2 + $0xa00] sm:$0xff]
  %v4301 = vld [vmem:[%s2 + $0xa08] sm:$0xff]
  %v4302 = vld [vmem:[%s2 + $0xa10] sm:$0xff]
  %v4303 = vld [vmem:[%s2 + $0xa18] sm:$0xff]
  %v4304 = vld [vmem:[%s2 + $0xa20] sm:$0xff]
  %v4305 = vld [vmem:[%s2 + $0xa28] sm:$0xff]
  %v4306 = vld [vmem:[%s2 + $0xa30] sm:$0xff]
  %v4307 = vld [vmem:[%s2 + $0xa38] sm:$0xff]
  %v4308 = vld [vmem:[%s2 + $0xa40] sm:$0xff]
  %v4309 = vld [vmem:[%s2 + $0xa48] sm:$0xff]
  %v4310 = vld [vmem:[%s2 + $0xa50] sm:$0xff]
  %v4311 = vld [vmem:[%s2 + $0xa58] sm:$0xff]
  %v4312 = vld [vmem:[%s2 + $0xa60] sm:$0xff]
  %v4313 = vld [vmem:[%s2 + $0xa68] sm:$0xff]
  %v4314 = vld [vmem:[%s2 + $0xa70] sm:$0xff]
  %v4315 = vld [vmem:[%s2 + $0xa78] sm:$0xff]
  %v4316 = vld [vmem:[%s2 + $0xa80] sm:$0xff]
  %v4317 = vld [vmem:[%s2 + $0xa88] sm:$0xff]
  %v4318 = vld [vmem:[%s2 + $0xa90] sm:$0xff]
  %v4319 = vld [vmem:[%s2 + $0xa98] sm:$0xff]
  %v4320 = vld [vmem:[%s2 + $0xaa0] sm:$0xff]
  %v4321 = vld [vmem:[%s2 + $0xaa8] sm:$0xff]
  %v4322 = vld [vmem:[%s2 + $0xab0] sm:$0xff]
  %v4323 = vld [vmem:[%s2 + $0xab8] sm:$0xff]
  %v4324 = vld [vmem:[%s2 + $0xac0] sm:$0xff]
  %v4325 = vld [vmem:[%s2 + $0xac8] sm:$0xff]
  %v4326 = vld [vmem:[%s2 + $0xad0] sm:$0xff]
  %v4327 = vld [vmem:[%s2 + $0xad8] sm:$0xff]
  %v4328 = vld [vmem:[%s2 + $0xae0] sm:$0xff]
  %v4329 = vld [vmem:[%s2 + $0xae8] sm:$0xff]
  %v4330 = vld [vmem:[%s2 + $0xaf0] sm:$0xff]
  %v4331 = vld [vmem:[%s2 + $0xaf8] sm:$0xff]
  %v4332 = vld [vmem:[%s2 + $0xb00] sm:$0xff]
  %v4333 = vld [vmem:[%s2 + $0xb08] sm:$0xff]
  %v4334 = vld [vmem:[%s2 + $0xb10] sm:$0xff]
  %v4335 = vld [vmem:[%s2 + $0xb18] sm:$0xff]
  %v4336 = vld [vmem:[%s2 + $0xb20] sm:$0xff]
  %v4337 = vld [vmem:[%s2 + $0xb28] sm:$0xff]
  %v4338 = vld [vmem:[%s2 + $0xb30] sm:$0xff]
  %v4339 = vld [vmem:[%s2 + $0xb38] sm:$0xff]
  %v4340 = vld [vmem:[%s2 + $0xb40] sm:$0xff]
  %v4341 = vld [vmem:[%s2 + $0xb48] sm:$0xff]
  %v4342 = vld [vmem:[%s2 + $0xb50] sm:$0xff]
  %v4343 = vld [vmem:[%s2 + $0xb58] sm:$0xff]
  %v4344 = vld [vmem:[%s2 + $0xb60] sm:$0xff]
  %v4345 = vld [vmem:[%s2 + $0xb68] sm:$0xff]
  %v4346 = vld [vmem:[%s2 + $0xb70] sm:$0xff]
  %v4347 = vld [vmem:[%s2 + $0xb78] sm:$0xff]
  %v4348 = vld [vmem:[%s2 + $0xb80] sm:$0xff]
  %v4349 = vld [vmem:[%s2 + $0xb88] sm:$0xff]
  %v4350 = vld [vmem:[%s2 + $0xb90] sm:$0xff]
  %v4351 = vld [vmem:[%s2 + $0xb98] sm:$0xff]
  %v4352 = vld [vmem:[%s2 + $0xba0] sm:$0xff]
  %v4353 = vld [vmem:[%s2 + $0xba8] sm:$0xff]
  %v4354 = vld [vmem:[%s2 + $0xbb0] sm:$0xff]
  %v4355 = vld [vmem:[%s2 + $0xbb8] sm:$0xff]
  %v4356 = vld [vmem:[%s2 + $0xbc0] sm:$0xff]
  %v4357 = vld [vmem:[%s2 + $0xbc8] sm:$0xff]
  %v4358 = vld [vmem:[%s2 + $0xbd0] sm:$0xff]
  %v4359 = vld [vmem:[%s2 + $0xbd8] sm:$0xff]
  %v4360 = vld [vmem:[%s2 + $0xbe0] sm:$0xff]
  %v4361 = vld [vmem:[%s2 + $0xbe8] sm:$0xff]
  %v4362 = vld [vmem:[%s2 + $0xbf0] sm:$0xff]
  %v4363 = vld [vmem:[%s2 + $0xbf8] sm:$0xff]
  %v4364 = vld [vmem:[%s2 + $0xc00] sm:$0xff]
  %v4365 = vld [vmem:[%s2 + $0xc08] sm:$0xff]
  %v4366 = vld [vmem:[%s2 + $0xc10] sm:$0xff]
  %v4367 = vld [vmem:[%s2 + $0xc18] sm:$0xff]
  %v4368 = vld [vmem:[%s2 + $0xc20] sm:$0xff]
  %v4369 = vld [vmem:[%s2 + $0xc28] sm:$0xff]
  %v4370 = vld [vmem:[%s2 + $0xc30] sm:$0xff]
  %v4371 = vld [vmem:[%s2 + $0xc38] sm:$0xff]
  %v4372 = vld [vmem:[%s2 + $0xc40] sm:$0xff]
  %v4373 = vld [vmem:[%s2 + $0xc48] sm:$0xff]
  %v4374 = vld [vmem:[%s2 + $0xc50] sm:$0xff]
  %v4375 = vld [vmem:[%s2 + $0xc58] sm:$0xff]
  %v4376 = vld [vmem:[%s2 + $0xc60] sm:$0xff]
  %v4377 = vld [vmem:[%s2 + $0xc68] sm:$0xff]
  %v4378 = vld [vmem:[%s2 + $0xc70] sm:$0xff]
  %v4379 = vld [vmem:[%s2 + $0xc78] sm:$0xff]
  %v4380 = vld [vmem:[%s2 + $0xc80] sm:$0xff]
  %v4381 = vld [vmem:[%s2 + $0xc88] sm:$0xff]
  %v4382 = vld [vmem:[%s2 + $0xc90] sm:$0xff]
  %v4383 = vld [vmem:[%s2 + $0xc98] sm:$0xff]
  %v4384 = vld [vmem:[%s2 + $0xca0] sm:$0xff]
  %v4385 = vld [vmem:[%s2 + $0xca8] sm:$0xff]
  %v4386 = vld [vmem:[%s2 + $0xcb0] sm:$0xff]
  %v4387 = vld [vmem:[%s2 + $0xcb8] sm:$0xff]
  %v4388 = vld [vmem:[%s2 + $0xcc0] sm:$0xff]
  %v4389 = vld [vmem:[%s2 + $0xcc8] sm:$0xff]
  %v4390 = vld [vmem:[%s2 + $0xcd0] sm:$0xff]
  %v4391 = vld [vmem:[%s2 + $0xcd8] sm:$0xff]
  %v4392 = vld [vmem:[%s2 + $0xce0] sm:$0xff]
  %v4393 = vld [vmem:[%s2 + $0xce8] sm:$0xff]
  %v4394 = vld [vmem:[%s2 + $0xcf0] sm:$0xff]
  %v4395 = vld [vmem:[%s2 + $0xcf8] sm:$0xff]
  %v4396 = vld [vmem:[%s2 + $0xd00] sm:$0xff]
  %v4397 = vld [vmem:[%s2 + $0xd08] sm:$0xff]
  %v4398 = vld [vmem:[%s2 + $0xd10] sm:$0xff]
  %v4399 = vld [vmem:[%s2 + $0xd18] sm:$0xff]
  %v4400 = vld [vmem:[%s2 + $0xd20] sm:$0xff]
  %v4401 = vld [vmem:[%s2 + $0xd28] sm:$0xff]
  %v4402 = vld [vmem:[%s2 + $0xd30] sm:$0xff]
  %v4403 = vld [vmem:[%s2 + $0xd38] sm:$0xff]
  %v4404 = vld [vmem:[%s2 + $0xd40] sm:$0xff]
  %v4405 = vld [vmem:[%s2 + $0xd48] sm:$0xff]
  %v4406 = vld [vmem:[%s2 + $0xd50] sm:$0xff]
  %v4407 = vld [vmem:[%s2 + $0xd58] sm:$0xff]
  %v4408 = vld [vmem:[%s2 + $0xd60] sm:$0xff]
  %v4409 = vld [vmem:[%s2 + $0xd68] sm:$0xff]
  %v4410 = vld [vmem:[%s2 + $0xd70] sm:$0xff]
  %v4411 = vld [vmem:[%s2 + $0xd78] sm:$0xff]
  %v4412 = vld [vmem:[%s2 + $0xd80] sm:$0xff]
  %v4413 = vld [vmem:[%s2 + $0xd88] sm:$0xff]
  %v4414 = vld [vmem:[%s2 + $0xd90] sm:$0xff]
  %v4415 = vld [vmem:[%s2 + $0xd98] sm:$0xff]
  %v4416 = vld [vmem:[%s2 + $0xda0] sm:$0xff]
  %v4417 = vld [vmem:[%s2 + $0xda8] sm:$0xff]
  %v4418 = vld [vmem:[%s2 + $0xdb0] sm:$0xff]
  %v4419 = vld [vmem:[%s2 + $0xdb8] sm:$0xff]
  %v4420 = vld [vmem:[%s2 + $0xdc0] sm:$0xff]
  %v4421 = vld [vmem:[%s2 + $0xdc8] sm:$0xff]
  %v4422 = vld [vmem:[%s2 + $0xdd0] sm:$0xff]
  %v4423 = vld [vmem:[%s2 + $0xdd8] sm:$0xff]
  %v4424 = vld [vmem:[%s2 + $0xde0] sm:$0xff]
  %v4425 = vld [vmem:[%s2 + $0xde8] sm:$0xff]
  %v4426 = vld [vmem:[%s2 + $0xdf0] sm:$0xff]
  %v4427 = vld [vmem:[%s2 + $0xdf8] sm:$0xff]
  %v4428 = vld [vmem:[%s2 + $0xe00] sm:$0xff]
  %v4429 = vld [vmem:[%s2 + $0xe08] sm:$0xff]
  %v4430 = vld [vmem:[%s2 + $0xe10] sm:$0xff]
  %v4431 = vld [vmem:[%s2 + $0xe18] sm:$0xff]
  %v4432 = vld [vmem:[%s2 + $0xe20] sm:$0xff]
  %v4433 = vld [vmem:[%s2 + $0xe28] sm:$0xff]
  %v4434 = vld [vmem:[%s2 + $0xe30] sm:$0xff]
  %v4435 = vld [vmem:[%s2 + $0xe38] sm:$0xff]
  %v4436 = vld [vmem:[%s2 + $0xe40] sm:$0xff]
  %v4437 = vld [vmem:[%s2 + $0xe48] sm:$0xff]
  %v4438 = vld [vmem:[%s2 + $0xe50] sm:$0xff]
  %v4439 = vld [vmem:[%s2 + $0xe58] sm:$0xff]
  %v4440 = vld [vmem:[%s2 + $0xe60] sm:$0xff]
  %v4441 = vld [vmem:[%s2 + $0xe68] sm:$0xff]
  %v4442 = vld [vmem:[%s2 + $0xe70] sm:$0xff]
  %v4443 = vld [vmem:[%s2 + $0xe78] sm:$0xff]
  %v4444 = vld [vmem:[%s2 + $0xe80] sm:$0xff]
  %v4445 = vld [vmem:[%s2 + $0xe88] sm:$0xff]
  %v4446 = vld [vmem:[%s2 + $0xe90] sm:$0xff]
  %v4447 = vld [vmem:[%s2 + $0xe98] sm:$0xff]
  %v4448 = vld [vmem:[%s2 + $0xea0] sm:$0xff]
  %v4449 = vld [vmem:[%s2 + $0xea8] sm:$0xff]
  %v4450 = vld [vmem:[%s2 + $0xeb0] sm:$0xff]
  %v4451 = vld [vmem:[%s2 + $0xeb8] sm:$0xff]
  %v4452 = vld [vmem:[%s2 + $0xec0] sm:$0xff]
  %v4453 = vld [vmem:[%s2 + $0xec8] sm:$0xff]
  %v4454 = vld [vmem:[%s2 + $0xed0] sm:$0xff]
  %v4455 = vld [vmem:[%s2 + $0xed8] sm:$0xff]
  %v4456 = vld [vmem:[%s2 + $0xee0] sm:$0xff]
  %v4457 = vld [vmem:[%s2 + $0xee8] sm:$0xff]
  %v4458 = vld [vmem:[%s2 + $0xef0] sm:$0xff]
  %v4459 = vld [vmem:[%s2 + $0xef8] sm:$0xff]
  %v4460 = vld [vmem:[%s2 + $0xf00] sm:$0xff]
  %v4461 = vld [vmem:[%s2 + $0xf08] sm:$0xff]
  %v4462 = vld [vmem:[%s2 + $0xf10] sm:$0xff]
  %v4463 = vld [vmem:[%s2 + $0xf18] sm:$0xff]
  %v4464 = vld [vmem:[%s2 + $0xf20] sm:$0xff]
  %v4465 = vld [vmem:[%s2 + $0xf28] sm:$0xff]
  %v4466 = vld [vmem:[%s2 + $0xf30] sm:$0xff]
  %v4467 = vld [vmem:[%s2 + $0xf38] sm:$0xff]
  %v4468 = vld [vmem:[%s2 + $0xf40] sm:$0xff]
  %v4469 = vld [vmem:[%s2 + $0xf48] sm:$0xff]
  %v4470 = vld [vmem:[%s2 + $0xf50] sm:$0xff]
  %v4471 = vld [vmem:[%s2 + $0xf58] sm:$0xff]
  %v4472 = vld [vmem:[%s2 + $0xf60] sm:$0xff]
  %v4473 = vld [vmem:[%s2 + $0xf68] sm:$0xff]
  %v4474 = vld [vmem:[%s2 + $0xf70] sm:$0xff]
  %v4475 = vld [vmem:[%s2 + $0xf78] sm:$0xff]
  %v4476 = vld [vmem:[%s2 + $0xf80] sm:$0xff]
  %v4477 = vld [vmem:[%s2 + $0xf88] sm:$0xff]
  %v4478 = vld [vmem:[%s2 + $0xf90] sm:$0xff]
  %v4479 = vld [vmem:[%s2 + $0xf98] sm:$0xff]
  %v4480 = vld [vmem:[%s2 + $0xfa0] sm:$0xff]
  %v4481 = vld [vmem:[%s2 + $0xfa8] sm:$0xff]
  %v4482 = vld [vmem:[%s2 + $0xfb0] sm:$0xff]
  %v4483 = vld [vmem:[%s2 + $0xfb8] sm:$0xff]
  %v4484 = vld [vmem:[%s2 + $0xfc0] sm:$0xff]
  %v4485 = vld [vmem:[%s2 + $0xfc8] sm:$0xff]
  %v4486 = vld [vmem:[%s2 + $0xfd0] sm:$0xff]
  %v4487 = vld [vmem:[%s2 + $0xfd8] sm:$0xff]
  %v4488 = vld [vmem:[%s2 + $0xfe0] sm:$0xff]
  %v4489 = vld [vmem:[%s2 + $0xfe8] sm:$0xff]
  %v4490 = vld [vmem:[%s2 + $0xff0] sm:$0xff]
  %v4491 = vld [vmem:[%s2 + $0xff8] sm:$0xff]
  %v4492 = vld [vmem:[%s3] sm:$0xff]
  %v4494 = vperm.slane %v4492, 0
  %v4495 = vperm.slane %v4492, 1
  %v4496 = vperm.slane %v4492, 2
  %v4497 = vperm.slane %v4492, 3
  %v4498 = vperm.slane %v4492, 4
  %v4499 = vperm.slane %v4492, 5
  %v4500 = vperm.slane %v4492, 6
  %v4501 = vperm.slane %v4492, 7
  %v5022 = vunpack.c.l.b16 %v3980
  %v5023 = vunpack.c.h.b16 %v3980
  %v5024 = vunpack.c.l.b16 %v3981
  %v5025 = vunpack.c.h.b16 %v3981
  %v5026 = vunpack.c.l.b16 %v3982
  %v5027 = vunpack.c.h.b16 %v3982
  %v5028 = vunpack.c.l.b16 %v3983
  %v5029 = vunpack.c.h.b16 %v3983
  %v5030 = vunpack.c.l.b16 %v3984
  %v5031 = vunpack.c.h.b16 %v3984
  %v5032 = vunpack.c.l.b16 %v3985
  %v5033 = vunpack.c.h.b16 %v3985
  %v5034 = vunpack.c.l.b16 %v3986
  %v5035 = vunpack.c.h.b16 %v3986
  %v5036 = vunpack.c.l.b16 %v3987
  %v5037 = vunpack.c.h.b16 %v3987
  %v5038 = vunpack.c.l.b16 %v3988
  %v5039 = vunpack.c.h.b16 %v3988
  %v5040 = vunpack.c.l.b16 %v3989
  %v5041 = vunpack.c.h.b16 %v3989
  %v5042 = vunpack.c.l.b16 %v3990
  %v5043 = vunpack.c.h.b16 %v3990
  %v5044 = vunpack.c.l.b16 %v3991
  %v5045 = vunpack.c.h.b16 %v3991
  %v5046 = vunpack.c.l.b16 %v3992
  %v5047 = vunpack.c.h.b16 %v3992
  %v5048 = vunpack.c.l.b16 %v3993
  %v5049 = vunpack.c.h.b16 %v3993
  %v5050 = vunpack.c.l.b16 %v3994
  %v5051 = vunpack.c.h.b16 %v3994
  %v5052 = vunpack.c.l.b16 %v3995
  %v5053 = vunpack.c.h.b16 %v3995
  %v5054 = vunpack.c.l.b16 %v3996
  %v5055 = vunpack.c.h.b16 %v3996
  %v5056 = vunpack.c.l.b16 %v3997
  %v5057 = vunpack.c.h.b16 %v3997
  %v5058 = vunpack.c.l.b16 %v3998
  %v5059 = vunpack.c.h.b16 %v3998
  %v5060 = vunpack.c.l.b16 %v3999
  %v5061 = vunpack.c.h.b16 %v3999
  %v5062 = vunpack.c.l.b16 %v4000
  %v5063 = vunpack.c.h.b16 %v4000
  %v5064 = vunpack.c.l.b16 %v4001
  %v5065 = vunpack.c.h.b16 %v4001
  %v5066 = vunpack.c.l.b16 %v4002
  %v5067 = vunpack.c.h.b16 %v4002
  %v5068 = vunpack.c.l.b16 %v4003
  %v5069 = vunpack.c.h.b16 %v4003
  %v5070 = vunpack.c.l.b16 %v4004
  %v5071 = vunpack.c.h.b16 %v4004
  %v5072 = vunpack.c.l.b16 %v4005
  %v5073 = vunpack.c.h.b16 %v4005
  %v5074 = vunpack.c.l.b16 %v4006
  %v5075 = vunpack.c.h.b16 %v4006
  %v5076 = vunpack.c.l.b16 %v4007
  %v5077 = vunpack.c.h.b16 %v4007
  %v5078 = vunpack.c.l.b16 %v4008
  %v5079 = vunpack.c.h.b16 %v4008
  %v5080 = vunpack.c.l.b16 %v4009
  %v5081 = vunpack.c.h.b16 %v4009
  %v5082 = vunpack.c.l.b16 %v4010
  %v5083 = vunpack.c.h.b16 %v4010
  %v5084 = vunpack.c.l.b16 %v4011
  %v5085 = vunpack.c.h.b16 %v4011
  %v5086 = vunpack.c.l.b16 %v4012
  %v5087 = vunpack.c.h.b16 %v4012
  %v5088 = vunpack.c.l.b16 %v4013
  %v5089 = vunpack.c.h.b16 %v4013
  %v5090 = vunpack.c.l.b16 %v4014
  %v5091 = vunpack.c.h.b16 %v4014
  %v5092 = vunpack.c.l.b16 %v4015
  %v5093 = vunpack.c.h.b16 %v4015
  %v5094 = vunpack.c.l.b16 %v4016
  %v5095 = vunpack.c.h.b16 %v4016
  %v5096 = vunpack.c.l.b16 %v4017
  %v5097 = vunpack.c.h.b16 %v4017
  %v5098 = vunpack.c.l.b16 %v4018
  %v5099 = vunpack.c.h.b16 %v4018
  %v5100 = vunpack.c.l.b16 %v4019
  %v5101 = vunpack.c.h.b16 %v4019
  %v5102 = vunpack.c.l.b16 %v4020
  %v5103 = vunpack.c.h.b16 %v4020
  %v5104 = vunpack.c.l.b16 %v4021
  %v5105 = vunpack.c.h.b16 %v4021
  %v5106 = vunpack.c.l.b16 %v4022
  %v5107 = vunpack.c.h.b16 %v4022
  %v5108 = vunpack.c.l.b16 %v4023
  %v5109 = vunpack.c.h.b16 %v4023
  %v5110 = vunpack.c.l.b16 %v4024
  %v5111 = vunpack.c.h.b16 %v4024
  %v5112 = vunpack.c.l.b16 %v4025
  %v5113 = vunpack.c.h.b16 %v4025
  %v5114 = vunpack.c.l.b16 %v4026
  %v5115 = vunpack.c.h.b16 %v4026
  %v5116 = vunpack.c.l.b16 %v4027
  %v5117 = vunpack.c.h.b16 %v4027
  %v5118 = vunpack.c.l.b16 %v4028
  %v5119 = vunpack.c.h.b16 %v4028
  %v5120 = vunpack.c.l.b16 %v4029
  %v5121 = vunpack.c.h.b16 %v4029
  %v5122 = vunpack.c.l.b16 %v4030
  %v5123 = vunpack.c.h.b16 %v4030
  %v5124 = vunpack.c.l.b16 %v4031
  %v5125 = vunpack.c.h.b16 %v4031
  %v5126 = vunpack.c.l.b16 %v4032
  %v5127 = vunpack.c.h.b16 %v4032
  %v5128 = vunpack.c.l.b16 %v4033
  %v5129 = vunpack.c.h.b16 %v4033
  %v5130 = vunpack.c.l.b16 %v4034
  %v5131 = vunpack.c.h.b16 %v4034
  %v5132 = vunpack.c.l.b16 %v4035
  %v5133 = vunpack.c.h.b16 %v4035
  %v5134 = vunpack.c.l.b16 %v4036
  %v5135 = vunpack.c.h.b16 %v4036
  %v5136 = vunpack.c.l.b16 %v4037
  %v5137 = vunpack.c.h.b16 %v4037
  %v5138 = vunpack.c.l.b16 %v4038
  %v5139 = vunpack.c.h.b16 %v4038
  %v5140 = vunpack.c.l.b16 %v4039
  %v5141 = vunpack.c.h.b16 %v4039
  %v5142 = vunpack.c.l.b16 %v4040
  %v5143 = vunpack.c.h.b16 %v4040
  %v5144 = vunpack.c.l.b16 %v4041
  %v5145 = vunpack.c.h.b16 %v4041
  %v5146 = vunpack.c.l.b16 %v4042
  %v5147 = vunpack.c.h.b16 %v4042
  %v5148 = vunpack.c.l.b16 %v4043
  %v5149 = vunpack.c.h.b16 %v4043
  %v5150 = vunpack.c.l.b16 %v4044
  %v5151 = vunpack.c.h.b16 %v4044
  %v5152 = vunpack.c.l.b16 %v4045
  %v5153 = vunpack.c.h.b16 %v4045
  %v5154 = vunpack.c.l.b16 %v4046
  %v5155 = vunpack.c.h.b16 %v4046
  %v5156 = vunpack.c.l.b16 %v4047
  %v5157 = vunpack.c.h.b16 %v4047
  %v5158 = vunpack.c.l.b16 %v4048
  %v5159 = vunpack.c.h.b16 %v4048
  %v5160 = vunpack.c.l.b16 %v4049
  %v5161 = vunpack.c.h.b16 %v4049
  %v5162 = vunpack.c.l.b16 %v4050
  %v5163 = vunpack.c.h.b16 %v4050
  %v5164 = vunpack.c.l.b16 %v4051
  %v5165 = vunpack.c.h.b16 %v4051
  %v5166 = vunpack.c.l.b16 %v4052
  %v5167 = vunpack.c.h.b16 %v4052
  %v5168 = vunpack.c.l.b16 %v4053
  %v5169 = vunpack.c.h.b16 %v4053
  %v5170 = vunpack.c.l.b16 %v4054
  %v5171 = vunpack.c.h.b16 %v4054
  %v5172 = vunpack.c.l.b16 %v4055
  %v5173 = vunpack.c.h.b16 %v4055
  %v5174 = vunpack.c.l.b16 %v4056
  %v5175 = vunpack.c.h.b16 %v4056
  %v5176 = vunpack.c.l.b16 %v4057
  %v5177 = vunpack.c.h.b16 %v4057
  %v5178 = vunpack.c.l.b16 %v4058
  %v5179 = vunpack.c.h.b16 %v4058
  %v5180 = vunpack.c.l.b16 %v4059
  %v5181 = vunpack.c.h.b16 %v4059
  %v5182 = vunpack.c.l.b16 %v4060
  %v5183 = vunpack.c.h.b16 %v4060
  %v5184 = vunpack.c.l.b16 %v4061
  %v5185 = vunpack.c.h.b16 %v4061
  %v5186 = vunpack.c.l.b16 %v4062
  %v5187 = vunpack.c.h.b16 %v4062
  %v5188 = vunpack.c.l.b16 %v4063
  %v5189 = vunpack.c.h.b16 %v4063
  %v5190 = vunpack.c.l.b16 %v4064
  %v5191 = vunpack.c.h.b16 %v4064
  %v5192 = vunpack.c.l.b16 %v4065
  %v5193 = vunpack.c.h.b16 %v4065
  %v5194 = vunpack.c.l.b16 %v4066
  %v5195 = vunpack.c.h.b16 %v4066
  %v5196 = vunpack.c.l.b16 %v4067
  %v5197 = vunpack.c.h.b16 %v4067
  %v5198 = vunpack.c.l.b16 %v4068
  %v5199 = vunpack.c.h.b16 %v4068
  %v5200 = vunpack.c.l.b16 %v4069
  %v5201 = vunpack.c.h.b16 %v4069
  %v5202 = vunpack.c.l.b16 %v4070
  %v5203 = vunpack.c.h.b16 %v4070
  %v5204 = vunpack.c.l.b16 %v4071
  %v5205 = vunpack.c.h.b16 %v4071
  %v5206 = vunpack.c.l.b16 %v4072
  %v5207 = vunpack.c.h.b16 %v4072
  %v5208 = vunpack.c.l.b16 %v4073
  %v5209 = vunpack.c.h.b16 %v4073
  %v5210 = vunpack.c.l.b16 %v4074
  %v5211 = vunpack.c.h.b16 %v4074
  %v5212 = vunpack.c.l.b16 %v4075
  %v5213 = vunpack.c.h.b16 %v4075
  %v5214 = vunpack.c.l.b16 %v4076
  %v5215 = vunpack.c.h.b16 %v4076
  %v5216 = vunpack.c.l.b16 %v4077
  %v5217 = vunpack.c.h.b16 %v4077
  %v5218 = vunpack.c.l.b16 %v4078
  %v5219 = vunpack.c.h.b16 %v4078
  %v5220 = vunpack.c.l.b16 %v4079
  %v5221 = vunpack.c.h.b16 %v4079
  %v5222 = vunpack.c.l.b16 %v4080
  %v5223 = vunpack.c.h.b16 %v4080
  %v5224 = vunpack.c.l.b16 %v4081
  %v5225 = vunpack.c.h.b16 %v4081
  %v5226 = vunpack.c.l.b16 %v4082
  %v5227 = vunpack.c.h.b16 %v4082
  %v5228 = vunpack.c.l.b16 %v4083
  %v5229 = vunpack.c.h.b16 %v4083
  %v5230 = vunpack.c.l.b16 %v4084
  %v5231 = vunpack.c.h.b16 %v4084
  %v5232 = vunpack.c.l.b16 %v4085
  %v5233 = vunpack.c.h.b16 %v4085
  %v5234 = vunpack.c.l.b16 %v4086
  %v5235 = vunpack.c.h.b16 %v4086
  %v5236 = vunpack.c.l.b16 %v4087
  %v5237 = vunpack.c.h.b16 %v4087
  %v5238 = vunpack.c.l.b16 %v4088
  %v5239 = vunpack.c.h.b16 %v4088
  %v5240 = vunpack.c.l.b16 %v4089
  %v5241 = vunpack.c.h.b16 %v4089
  %v5242 = vunpack.c.l.b16 %v4090
  %v5243 = vunpack.c.h.b16 %v4090
  %v5244 = vunpack.c.l.b16 %v4091
  %v5245 = vunpack.c.h.b16 %v4091
  %v5246 = vunpack.c.l.b16 %v4092
  %v5247 = vunpack.c.h.b16 %v4092
  %v5248 = vunpack.c.l.b16 %v4093
  %v5249 = vunpack.c.h.b16 %v4093
  %v5250 = vunpack.c.l.b16 %v4094
  %v5251 = vunpack.c.h.b16 %v4094
  %v5252 = vunpack.c.l.b16 %v4095
  %v5253 = vunpack.c.h.b16 %v4095
  %v5254 = vunpack.c.l.b16 %v4096
  %v5255 = vunpack.c.h.b16 %v4096
  %v5256 = vunpack.c.l.b16 %v4097
  %v5257 = vunpack.c.h.b16 %v4097
  %v5258 = vunpack.c.l.b16 %v4098
  %v5259 = vunpack.c.h.b16 %v4098
  %v5260 = vunpack.c.l.b16 %v4099
  %v5261 = vunpack.c.h.b16 %v4099
  %v5262 = vunpack.c.l.b16 %v4100
  %v5263 = vunpack.c.h.b16 %v4100
  %v5264 = vunpack.c.l.b16 %v4101
  %v5265 = vunpack.c.h.b16 %v4101
  %v5266 = vunpack.c.l.b16 %v4102
  %v5267 = vunpack.c.h.b16 %v4102
  %v5268 = vunpack.c.l.b16 %v4103
  %v5269 = vunpack.c.h.b16 %v4103
  %v5270 = vunpack.c.l.b16 %v4104
  %v5271 = vunpack.c.h.b16 %v4104
  %v5272 = vunpack.c.l.b16 %v4105
  %v5273 = vunpack.c.h.b16 %v4105
  %v5274 = vunpack.c.l.b16 %v4106
  %v5275 = vunpack.c.h.b16 %v4106
  %v5276 = vunpack.c.l.b16 %v4107
  %v5277 = vunpack.c.h.b16 %v4107
  %v5278 = vunpack.c.l.b16 %v4108
  %v5279 = vunpack.c.h.b16 %v4108
  %v5280 = vunpack.c.l.b16 %v4109
  %v5281 = vunpack.c.h.b16 %v4109
  %v5282 = vunpack.c.l.b16 %v4110
  %v5283 = vunpack.c.h.b16 %v4110
  %v5284 = vunpack.c.l.b16 %v4111
  %v5285 = vunpack.c.h.b16 %v4111
  %v5286 = vunpack.c.l.b16 %v4112
  %v5287 = vunpack.c.h.b16 %v4112
  %v5288 = vunpack.c.l.b16 %v4113
  %v5289 = vunpack.c.h.b16 %v4113
  %v5290 = vunpack.c.l.b16 %v4114
  %v5291 = vunpack.c.h.b16 %v4114
  %v5292 = vunpack.c.l.b16 %v4115
  %v5293 = vunpack.c.h.b16 %v4115
  %v5294 = vunpack.c.l.b16 %v4116
  %v5295 = vunpack.c.h.b16 %v4116
  %v5296 = vunpack.c.l.b16 %v4117
  %v5297 = vunpack.c.h.b16 %v4117
  %v5298 = vunpack.c.l.b16 %v4118
  %v5299 = vunpack.c.h.b16 %v4118
  %v5300 = vunpack.c.l.b16 %v4119
  %v5301 = vunpack.c.h.b16 %v4119
  %v5302 = vunpack.c.l.b16 %v4120
  %v5303 = vunpack.c.h.b16 %v4120
  %v5304 = vunpack.c.l.b16 %v4121
  %v5305 = vunpack.c.h.b16 %v4121
  %v5306 = vunpack.c.l.b16 %v4122
  %v5307 = vunpack.c.h.b16 %v4122
  %v5308 = vunpack.c.l.b16 %v4123
  %v5309 = vunpack.c.h.b16 %v4123
  %v5310 = vunpack.c.l.b16 %v4124
  %v5311 = vunpack.c.h.b16 %v4124
  %v5312 = vunpack.c.l.b16 %v4125
  %v5313 = vunpack.c.h.b16 %v4125
  %v5314 = vunpack.c.l.b16 %v4126
  %v5315 = vunpack.c.h.b16 %v4126
  %v5316 = vunpack.c.l.b16 %v4127
  %v5317 = vunpack.c.h.b16 %v4127
  %v5318 = vunpack.c.l.b16 %v4128
  %v5319 = vunpack.c.h.b16 %v4128
  %v5320 = vunpack.c.l.b16 %v4129
  %v5321 = vunpack.c.h.b16 %v4129
  %v5322 = vunpack.c.l.b16 %v4130
  %v5323 = vunpack.c.h.b16 %v4130
  %v5324 = vunpack.c.l.b16 %v4131
  %v5325 = vunpack.c.h.b16 %v4131
  %v5326 = vunpack.c.l.b16 %v4132
  %v5327 = vunpack.c.h.b16 %v4132
  %v5328 = vunpack.c.l.b16 %v4133
  %v5329 = vunpack.c.h.b16 %v4133
  %v5330 = vunpack.c.l.b16 %v4134
  %v5331 = vunpack.c.h.b16 %v4134
  %v5332 = vunpack.c.l.b16 %v4135
  %v5333 = vunpack.c.h.b16 %v4135
  %v5334 = vunpack.c.l.b16 %v4136
  %v5335 = vunpack.c.h.b16 %v4136
  %v5336 = vunpack.c.l.b16 %v4137
  %v5337 = vunpack.c.h.b16 %v4137
  %v5338 = vunpack.c.l.b16 %v4138
  %v5339 = vunpack.c.h.b16 %v4138
  %v5340 = vunpack.c.l.b16 %v4139
  %v5341 = vunpack.c.h.b16 %v4139
  %v5342 = vunpack.c.l.b16 %v4140
  %v5343 = vunpack.c.h.b16 %v4140
  %v5344 = vunpack.c.l.b16 %v4141
  %v5345 = vunpack.c.h.b16 %v4141
  %v5346 = vunpack.c.l.b16 %v4142
  %v5347 = vunpack.c.h.b16 %v4142
  %v5348 = vunpack.c.l.b16 %v4143
  %v5349 = vunpack.c.h.b16 %v4143
  %v5350 = vunpack.c.l.b16 %v4144
  %v5351 = vunpack.c.h.b16 %v4144
  %v5352 = vunpack.c.l.b16 %v4145
  %v5353 = vunpack.c.h.b16 %v4145
  %v5354 = vunpack.c.l.b16 %v4146
  %v5355 = vunpack.c.h.b16 %v4146
  %v5356 = vunpack.c.l.b16 %v4147
  %v5357 = vunpack.c.h.b16 %v4147
  %v5358 = vunpack.c.l.b16 %v4148
  %v5359 = vunpack.c.h.b16 %v4148
  %v5360 = vunpack.c.l.b16 %v4149
  %v5361 = vunpack.c.h.b16 %v4149
  %v5362 = vunpack.c.l.b16 %v4150
  %v5363 = vunpack.c.h.b16 %v4150
  %v5364 = vunpack.c.l.b16 %v4151
  %v5365 = vunpack.c.h.b16 %v4151
  %v5366 = vunpack.c.l.b16 %v4152
  %v5367 = vunpack.c.h.b16 %v4152
  %v5368 = vunpack.c.l.b16 %v4153
  %v5369 = vunpack.c.h.b16 %v4153
  %v5370 = vunpack.c.l.b16 %v4154
  %v5371 = vunpack.c.h.b16 %v4154
  %v5372 = vunpack.c.l.b16 %v4155
  %v5373 = vunpack.c.h.b16 %v4155
  %v5374 = vunpack.c.l.b16 %v4156
  %v5375 = vunpack.c.h.b16 %v4156
  %v5376 = vunpack.c.l.b16 %v4157
  %v5377 = vunpack.c.h.b16 %v4157
  %v5378 = vunpack.c.l.b16 %v4158
  %v5379 = vunpack.c.h.b16 %v4158
  %v5380 = vunpack.c.l.b16 %v4159
  %v5381 = vunpack.c.h.b16 %v4159
  %v5382 = vunpack.c.l.b16 %v4160
  %v5383 = vunpack.c.h.b16 %v4160
  %v5384 = vunpack.c.l.b16 %v4161
  %v5385 = vunpack.c.h.b16 %v4161
  %v5386 = vunpack.c.l.b16 %v4162
  %v5387 = vunpack.c.h.b16 %v4162
  %v5388 = vunpack.c.l.b16 %v4163
  %v5389 = vunpack.c.h.b16 %v4163
  %v5390 = vunpack.c.l.b16 %v4164
  %v5391 = vunpack.c.h.b16 %v4164
  %v5392 = vunpack.c.l.b16 %v4165
  %v5393 = vunpack.c.h.b16 %v4165
  %v5394 = vunpack.c.l.b16 %v4166
  %v5395 = vunpack.c.h.b16 %v4166
  %v5396 = vunpack.c.l.b16 %v4167
  %v5397 = vunpack.c.h.b16 %v4167
  %v5398 = vunpack.c.l.b16 %v4168
  %v5399 = vunpack.c.h.b16 %v4168
  %v5400 = vunpack.c.l.b16 %v4169
  %v5401 = vunpack.c.h.b16 %v4169
  %v5402 = vunpack.c.l.b16 %v4170
  %v5403 = vunpack.c.h.b16 %v4170
  %v5404 = vunpack.c.l.b16 %v4171
  %v5405 = vunpack.c.h.b16 %v4171
  %v5406 = vunpack.c.l.b16 %v4172
  %v5407 = vunpack.c.h.b16 %v4172
  %v5408 = vunpack.c.l.b16 %v4173
  %v5409 = vunpack.c.h.b16 %v4173
  %v5410 = vunpack.c.l.b16 %v4174
  %v5411 = vunpack.c.h.b16 %v4174
  %v5412 = vunpack.c.l.b16 %v4175
  %v5413 = vunpack.c.h.b16 %v4175
  %v5414 = vunpack.c.l.b16 %v4176
  %v5415 = vunpack.c.h.b16 %v4176
  %v5416 = vunpack.c.l.b16 %v4177
  %v5417 = vunpack.c.h.b16 %v4177
  %v5418 = vunpack.c.l.b16 %v4178
  %v5419 = vunpack.c.h.b16 %v4178
  %v5420 = vunpack.c.l.b16 %v4179
  %v5421 = vunpack.c.h.b16 %v4179
  %v5422 = vunpack.c.l.b16 %v4180
  %v5423 = vunpack.c.h.b16 %v4180
  %v5424 = vunpack.c.l.b16 %v4181
  %v5425 = vunpack.c.h.b16 %v4181
  %v5426 = vunpack.c.l.b16 %v4182
  %v5427 = vunpack.c.h.b16 %v4182
  %v5428 = vunpack.c.l.b16 %v4183
  %v5429 = vunpack.c.h.b16 %v4183
  %v5430 = vunpack.c.l.b16 %v4184
  %v5431 = vunpack.c.h.b16 %v4184
  %v5432 = vunpack.c.l.b16 %v4185
  %v5433 = vunpack.c.h.b16 %v4185
  %v5434 = vunpack.c.l.b16 %v4186
  %v5435 = vunpack.c.h.b16 %v4186
  %v5436 = vunpack.c.l.b16 %v4187
  %v5437 = vunpack.c.h.b16 %v4187
  %v5438 = vunpack.c.l.b16 %v4188
  %v5439 = vunpack.c.h.b16 %v4188
  %v5440 = vunpack.c.l.b16 %v4189
  %v5441 = vunpack.c.h.b16 %v4189
  %v5442 = vunpack.c.l.b16 %v4190
  %v5443 = vunpack.c.h.b16 %v4190
  %v5444 = vunpack.c.l.b16 %v4191
  %v5445 = vunpack.c.h.b16 %v4191
  %v5446 = vunpack.c.l.b16 %v4192
  %v5447 = vunpack.c.h.b16 %v4192
  %v5448 = vunpack.c.l.b16 %v4193
  %v5449 = vunpack.c.h.b16 %v4193
  %v5450 = vunpack.c.l.b16 %v4194
  %v5451 = vunpack.c.h.b16 %v4194
  %v5452 = vunpack.c.l.b16 %v4195
  %v5453 = vunpack.c.h.b16 %v4195
  %v5454 = vunpack.c.l.b16 %v4196
  %v5455 = vunpack.c.h.b16 %v4196
  %v5456 = vunpack.c.l.b16 %v4197
  %v5457 = vunpack.c.h.b16 %v4197
  %v5458 = vunpack.c.l.b16 %v4198
  %v5459 = vunpack.c.h.b16 %v4198
  %v5460 = vunpack.c.l.b16 %v4199
  %v5461 = vunpack.c.h.b16 %v4199
  %v5462 = vunpack.c.l.b16 %v4200
  %v5463 = vunpack.c.h.b16 %v4200
  %v5464 = vunpack.c.l.b16 %v4201
  %v5465 = vunpack.c.h.b16 %v4201
  %v5466 = vunpack.c.l.b16 %v4202
  %v5467 = vunpack.c.h.b16 %v4202
  %v5468 = vunpack.c.l.b16 %v4203
  %v5469 = vunpack.c.h.b16 %v4203
  %v5470 = vunpack.c.l.b16 %v4204
  %v5471 = vunpack.c.h.b16 %v4204
  %v5472 = vunpack.c.l.b16 %v4205
  %v5473 = vunpack.c.h.b16 %v4205
  %v5474 = vunpack.c.l.b16 %v4206
  %v5475 = vunpack.c.h.b16 %v4206
  %v5476 = vunpack.c.l.b16 %v4207
  %v5477 = vunpack.c.h.b16 %v4207
  %v5478 = vunpack.c.l.b16 %v4208
  %v5479 = vunpack.c.h.b16 %v4208
  %v5480 = vunpack.c.l.b16 %v4209
  %v5481 = vunpack.c.h.b16 %v4209
  %v5482 = vunpack.c.l.b16 %v4210
  %v5483 = vunpack.c.h.b16 %v4210
  %v5484 = vunpack.c.l.b16 %v4211
  %v5485 = vunpack.c.h.b16 %v4211
  %v5486 = vunpack.c.l.b16 %v4212
  %v5487 = vunpack.c.h.b16 %v4212
  %v5488 = vunpack.c.l.b16 %v4213
  %v5489 = vunpack.c.h.b16 %v4213
  %v5490 = vunpack.c.l.b16 %v4214
  %v5491 = vunpack.c.h.b16 %v4214
  %v5492 = vunpack.c.l.b16 %v4215
  %v5493 = vunpack.c.h.b16 %v4215
  %v5494 = vunpack.c.l.b16 %v4216
  %v5495 = vunpack.c.h.b16 %v4216
  %v5496 = vunpack.c.l.b16 %v4217
  %v5497 = vunpack.c.h.b16 %v4217
  %v5498 = vunpack.c.l.b16 %v4218
  %v5499 = vunpack.c.h.b16 %v4218
  %v5500 = vunpack.c.l.b16 %v4219
  %v5501 = vunpack.c.h.b16 %v4219
  %v5502 = vunpack.c.l.b16 %v4220
  %v5503 = vunpack.c.h.b16 %v4220
  %v5504 = vunpack.c.l.b16 %v4221
  %v5505 = vunpack.c.h.b16 %v4221
  %v5506 = vunpack.c.l.b16 %v4222
  %v5507 = vunpack.c.h.b16 %v4222
  %v5508 = vunpack.c.l.b16 %v4223
  %v5509 = vunpack.c.h.b16 %v4223
  %v5510 = vunpack.c.l.b16 %v4224
  %v5511 = vunpack.c.h.b16 %v4224
  %v5512 = vunpack.c.l.b16 %v4225
  %v5513 = vunpack.c.h.b16 %v4225
  %v5514 = vunpack.c.l.b16 %v4226
  %v5515 = vunpack.c.h.b16 %v4226
  %v5516 = vunpack.c.l.b16 %v4227
  %v5517 = vunpack.c.h.b16 %v4227
  %v5518 = vunpack.c.l.b16 %v4228
  %v5519 = vunpack.c.h.b16 %v4228
  %v5520 = vunpack.c.l.b16 %v4229
  %v5521 = vunpack.c.h.b16 %v4229
  %v5522 = vunpack.c.l.b16 %v4230
  %v5523 = vunpack.c.h.b16 %v4230
  %v5524 = vunpack.c.l.b16 %v4231
  %v5525 = vunpack.c.h.b16 %v4231
  %v5526 = vunpack.c.l.b16 %v4232
  %v5527 = vunpack.c.h.b16 %v4232
  %v5528 = vunpack.c.l.b16 %v4233
  %v5529 = vunpack.c.h.b16 %v4233
  %v5530 = vunpack.c.l.b16 %v4234
  %v5531 = vunpack.c.h.b16 %v4234
  %v5532 = vunpack.c.l.b16 %v4235
  %v5533 = vunpack.c.h.b16 %v4235
  %v5534 = vunpack.c.l.b16 %v4236
  %v5535 = vunpack.c.h.b16 %v4236
  %v5536 = vunpack.c.l.b16 %v4237
  %v5537 = vunpack.c.h.b16 %v4237
  %v5538 = vunpack.c.l.b16 %v4238
  %v5539 = vunpack.c.h.b16 %v4238
  %v5540 = vunpack.c.l.b16 %v4239
  %v5541 = vunpack.c.h.b16 %v4239
  %v5542 = vunpack.c.l.b16 %v4240
  %v5543 = vunpack.c.h.b16 %v4240
  %v5544 = vunpack.c.l.b16 %v4241
  %v5545 = vunpack.c.h.b16 %v4241
  %v5546 = vunpack.c.l.b16 %v4242
  %v5547 = vunpack.c.h.b16 %v4242
  %v5548 = vunpack.c.l.b16 %v4243
  %v5549 = vunpack.c.h.b16 %v4243
  %v5550 = vunpack.c.l.b16 %v4244
  %v5551 = vunpack.c.h.b16 %v4244
  %v5552 = vunpack.c.l.b16 %v4245
  %v5553 = vunpack.c.h.b16 %v4245
  %v5554 = vunpack.c.l.b16 %v4246
  %v5555 = vunpack.c.h.b16 %v4246
  %v5556 = vunpack.c.l.b16 %v4247
  %v5557 = vunpack.c.h.b16 %v4247
  %v5558 = vunpack.c.l.b16 %v4248
  %v5559 = vunpack.c.h.b16 %v4248
  %v5560 = vunpack.c.l.b16 %v4249
  %v5561 = vunpack.c.h.b16 %v4249
  %v5562 = vunpack.c.l.b16 %v4250
  %v5563 = vunpack.c.h.b16 %v4250
  %v5564 = vunpack.c.l.b16 %v4251
  %v5565 = vunpack.c.h.b16 %v4251
  %v5566 = vunpack.c.l.b16 %v4252
  %v5567 = vunpack.c.h.b16 %v4252
  %v5568 = vunpack.c.l.b16 %v4253
  %v5569 = vunpack.c.h.b16 %v4253
  %v5570 = vunpack.c.l.b16 %v4254
  %v5571 = vunpack.c.h.b16 %v4254
  %v5572 = vunpack.c.l.b16 %v4255
  %v5573 = vunpack.c.h.b16 %v4255
  %v5574 = vunpack.c.l.b16 %v4256
  %v5575 = vunpack.c.h.b16 %v4256
  %v5576 = vunpack.c.l.b16 %v4257
  %v5577 = vunpack.c.h.b16 %v4257
  %v5578 = vunpack.c.l.b16 %v4258
  %v5579 = vunpack.c.h.b16 %v4258
  %v5580 = vunpack.c.l.b16 %v4259
  %v5581 = vunpack.c.h.b16 %v4259
  %v5582 = vunpack.c.l.b16 %v4260
  %v5583 = vunpack.c.h.b16 %v4260
  %v5584 = vunpack.c.l.b16 %v4261
  %v5585 = vunpack.c.h.b16 %v4261
  %v5586 = vunpack.c.l.b16 %v4262
  %v5587 = vunpack.c.h.b16 %v4262
  %v5588 = vunpack.c.l.b16 %v4263
  %v5589 = vunpack.c.h.b16 %v4263
  %v5590 = vunpack.c.l.b16 %v4264
  %v5591 = vunpack.c.h.b16 %v4264
  %v5592 = vunpack.c.l.b16 %v4265
  %v5593 = vunpack.c.h.b16 %v4265
  %v5594 = vunpack.c.l.b16 %v4266
  %v5595 = vunpack.c.h.b16 %v4266
  %v5596 = vunpack.c.l.b16 %v4267
  %v5597 = vunpack.c.h.b16 %v4267
  %v5598 = vunpack.c.l.b16 %v4268
  %v5599 = vunpack.c.h.b16 %v4268
  %v5600 = vunpack.c.l.b16 %v4269
  %v5601 = vunpack.c.h.b16 %v4269
  %v5602 = vunpack.c.l.b16 %v4270
  %v5603 = vunpack.c.h.b16 %v4270
  %v5604 = vunpack.c.l.b16 %v4271
  %v5605 = vunpack.c.h.b16 %v4271
  %v5606 = vunpack.c.l.b16 %v4272
  %v5607 = vunpack.c.h.b16 %v4272
  %v5608 = vunpack.c.l.b16 %v4273
  %v5609 = vunpack.c.h.b16 %v4273
  %v5610 = vunpack.c.l.b16 %v4274
  %v5611 = vunpack.c.h.b16 %v4274
  %v5612 = vunpack.c.l.b16 %v4275
  %v5613 = vunpack.c.h.b16 %v4275
  %v5614 = vunpack.c.l.b16 %v4276
  %v5615 = vunpack.c.h.b16 %v4276
  %v5616 = vunpack.c.l.b16 %v4277
  %v5617 = vunpack.c.h.b16 %v4277
  %v5618 = vunpack.c.l.b16 %v4278
  %v5619 = vunpack.c.h.b16 %v4278
  %v5620 = vunpack.c.l.b16 %v4279
  %v5621 = vunpack.c.h.b16 %v4279
  %v5622 = vunpack.c.l.b16 %v4280
  %v5623 = vunpack.c.h.b16 %v4280
  %v5624 = vunpack.c.l.b16 %v4281
  %v5625 = vunpack.c.h.b16 %v4281
  %v5626 = vunpack.c.l.b16 %v4282
  %v5627 = vunpack.c.h.b16 %v4282
  %v5628 = vunpack.c.l.b16 %v4283
  %v5629 = vunpack.c.h.b16 %v4283
  %v5630 = vunpack.c.l.b16 %v4284
  %v5631 = vunpack.c.h.b16 %v4284
  %v5632 = vunpack.c.l.b16 %v4285
  %v5633 = vunpack.c.h.b16 %v4285
  %v5634 = vunpack.c.l.b16 %v4286
  %v5635 = vunpack.c.h.b16 %v4286
  %v5636 = vunpack.c.l.b16 %v4287
  %v5637 = vunpack.c.h.b16 %v4287
  %v5638 = vunpack.c.l.b16 %v4288
  %v5639 = vunpack.c.h.b16 %v4288
  %v5640 = vunpack.c.l.b16 %v4289
  %v5641 = vunpack.c.h.b16 %v4289
  %v5642 = vunpack.c.l.b16 %v4290
  %v5643 = vunpack.c.h.b16 %v4290
  %v5644 = vunpack.c.l.b16 %v4291
  %v5645 = vunpack.c.h.b16 %v4291
  %v5646 = vunpack.c.l.b16 %v4292
  %v5647 = vunpack.c.h.b16 %v4292
  %v5648 = vunpack.c.l.b16 %v4293
  %v5649 = vunpack.c.h.b16 %v4293
  %v5650 = vunpack.c.l.b16 %v4294
  %v5651 = vunpack.c.h.b16 %v4294
  %v5652 = vunpack.c.l.b16 %v4295
  %v5653 = vunpack.c.h.b16 %v4295
  %v5654 = vunpack.c.l.b16 %v4296
  %v5655 = vunpack.c.h.b16 %v4296
  %v5656 = vunpack.c.l.b16 %v4297
  %v5657 = vunpack.c.h.b16 %v4297
  %v5658 = vunpack.c.l.b16 %v4298
  %v5659 = vunpack.c.h.b16 %v4298
  %v5660 = vunpack.c.l.b16 %v4299
  %v5661 = vunpack.c.h.b16 %v4299
  %v5662 = vunpack.c.l.b16 %v4300
  %v5663 = vunpack.c.h.b16 %v4300
  %v5664 = vunpack.c.l.b16 %v4301
  %v5665 = vunpack.c.h.b16 %v4301
  %v5666 = vunpack.c.l.b16 %v4302
  %v5667 = vunpack.c.h.b16 %v4302
  %v5668 = vunpack.c.l.b16 %v4303
  %v5669 = vunpack.c.h.b16 %v4303
  %v5670 = vunpack.c.l.b16 %v4304
  %v5671 = vunpack.c.h.b16 %v4304
  %v5672 = vunpack.c.l.b16 %v4305
  %v5673 = vunpack.c.h.b16 %v4305
  %v5674 = vunpack.c.l.b16 %v4306
  %v5675 = vunpack.c.h.b16 %v4306
  %v5676 = vunpack.c.l.b16 %v4307
  %v5677 = vunpack.c.h.b16 %v4307
  %v5678 = vunpack.c.l.b16 %v4308
  %v5679 = vunpack.c.h.b16 %v4308
  %v5680 = vunpack.c.l.b16 %v4309
  %v5681 = vunpack.c.h.b16 %v4309
  %v5682 = vunpack.c.l.b16 %v4310
  %v5683 = vunpack.c.h.b16 %v4310
  %v5684 = vunpack.c.l.b16 %v4311
  %v5685 = vunpack.c.h.b16 %v4311
  %v5686 = vunpack.c.l.b16 %v4312
  %v5687 = vunpack.c.h.b16 %v4312
  %v5688 = vunpack.c.l.b16 %v4313
  %v5689 = vunpack.c.h.b16 %v4313
  %v5690 = vunpack.c.l.b16 %v4314
  %v5691 = vunpack.c.h.b16 %v4314
  %v5692 = vunpack.c.l.b16 %v4315
  %v5693 = vunpack.c.h.b16 %v4315
  %v5694 = vunpack.c.l.b16 %v4316
  %v5695 = vunpack.c.h.b16 %v4316
  %v5696 = vunpack.c.l.b16 %v4317
  %v5697 = vunpack.c.h.b16 %v4317
  %v5698 = vunpack.c.l.b16 %v4318
  %v5699 = vunpack.c.h.b16 %v4318
  %v5700 = vunpack.c.l.b16 %v4319
  %v5701 = vunpack.c.h.b16 %v4319
  %v5702 = vunpack.c.l.b16 %v4320
  %v5703 = vunpack.c.h.b16 %v4320
  %v5704 = vunpack.c.l.b16 %v4321
  %v5705 = vunpack.c.h.b16 %v4321
  %v5706 = vunpack.c.l.b16 %v4322
  %v5707 = vunpack.c.h.b16 %v4322
  %v5708 = vunpack.c.l.b16 %v4323
  %v5709 = vunpack.c.h.b16 %v4323
  %v5710 = vunpack.c.l.b16 %v4324
  %v5711 = vunpack.c.h.b16 %v4324
  %v5712 = vunpack.c.l.b16 %v4325
  %v5713 = vunpack.c.h.b16 %v4325
  %v5714 = vunpack.c.l.b16 %v4326
  %v5715 = vunpack.c.h.b16 %v4326
  %v5716 = vunpack.c.l.b16 %v4327
  %v5717 = vunpack.c.h.b16 %v4327
  %v5718 = vunpack.c.l.b16 %v4328
  %v5719 = vunpack.c.h.b16 %v4328
  %v5720 = vunpack.c.l.b16 %v4329
  %v5721 = vunpack.c.h.b16 %v4329
  %v5722 = vunpack.c.l.b16 %v4330
  %v5723 = vunpack.c.h.b16 %v4330
  %v5724 = vunpack.c.l.b16 %v4331
  %v5725 = vunpack.c.h.b16 %v4331
  %v5726 = vunpack.c.l.b16 %v4332
  %v5727 = vunpack.c.h.b16 %v4332
  %v5728 = vunpack.c.l.b16 %v4333
  %v5729 = vunpack.c.h.b16 %v4333
  %v5730 = vunpack.c.l.b16 %v4334
  %v5731 = vunpack.c.h.b16 %v4334
  %v5732 = vunpack.c.l.b16 %v4335
  %v5733 = vunpack.c.h.b16 %v4335
  %v5734 = vunpack.c.l.b16 %v4336
  %v5735 = vunpack.c.h.b16 %v4336
  %v5736 = vunpack.c.l.b16 %v4337
  %v5737 = vunpack.c.h.b16 %v4337
  %v5738 = vunpack.c.l.b16 %v4338
  %v5739 = vunpack.c.h.b16 %v4338
  %v5740 = vunpack.c.l.b16 %v4339
  %v5741 = vunpack.c.h.b16 %v4339
  %v5742 = vunpack.c.l.b16 %v4340
  %v5743 = vunpack.c.h.b16 %v4340
  %v5744 = vunpack.c.l.b16 %v4341
  %v5745 = vunpack.c.h.b16 %v4341
  %v5746 = vunpack.c.l.b16 %v4342
  %v5747 = vunpack.c.h.b16 %v4342
  %v5748 = vunpack.c.l.b16 %v4343
  %v5749 = vunpack.c.h.b16 %v4343
  %v5750 = vunpack.c.l.b16 %v4344
  %v5751 = vunpack.c.h.b16 %v4344
  %v5752 = vunpack.c.l.b16 %v4345
  %v5753 = vunpack.c.h.b16 %v4345
  %v5754 = vunpack.c.l.b16 %v4346
  %v5755 = vunpack.c.h.b16 %v4346
  %v5756 = vunpack.c.l.b16 %v4347
  %v5757 = vunpack.c.h.b16 %v4347
  %v5758 = vunpack.c.l.b16 %v4348
  %v5759 = vunpack.c.h.b16 %v4348
  %v5760 = vunpack.c.l.b16 %v4349
  %v5761 = vunpack.c.h.b16 %v4349
  %v5762 = vunpack.c.l.b16 %v4350
  %v5763 = vunpack.c.h.b16 %v4350
  %v5764 = vunpack.c.l.b16 %v4351
  %v5765 = vunpack.c.h.b16 %v4351
  %v5766 = vunpack.c.l.b16 %v4352
  %v5767 = vunpack.c.h.b16 %v4352
  %v5768 = vunpack.c.l.b16 %v4353
  %v5769 = vunpack.c.h.b16 %v4353
  %v5770 = vunpack.c.l.b16 %v4354
  %v5771 = vunpack.c.h.b16 %v4354
  %v5772 = vunpack.c.l.b16 %v4355
  %v5773 = vunpack.c.h.b16 %v4355
  %v5774 = vunpack.c.l.b16 %v4356
  %v5775 = vunpack.c.h.b16 %v4356
  %v5776 = vunpack.c.l.b16 %v4357
  %v5777 = vunpack.c.h.b16 %v4357
  %v5778 = vunpack.c.l.b16 %v4358
  %v5779 = vunpack.c.h.b16 %v4358
  %v5780 = vunpack.c.l.b16 %v4359
  %v5781 = vunpack.c.h.b16 %v4359
  %v5782 = vunpack.c.l.b16 %v4360
  %v5783 = vunpack.c.h.b16 %v4360
  %v5784 = vunpack.c.l.b16 %v4361
  %v5785 = vunpack.c.h.b16 %v4361
  %v5786 = vunpack.c.l.b16 %v4362
  %v5787 = vunpack.c.h.b16 %v4362
  %v5788 = vunpack.c.l.b16 %v4363
  %v5789 = vunpack.c.h.b16 %v4363
  %v5790 = vunpack.c.l.b16 %v4364
  %v5791 = vunpack.c.h.b16 %v4364
  %v5792 = vunpack.c.l.b16 %v4365
  %v5793 = vunpack.c.h.b16 %v4365
  %v5794 = vunpack.c.l.b16 %v4366
  %v5795 = vunpack.c.h.b16 %v4366
  %v5796 = vunpack.c.l.b16 %v4367
  %v5797 = vunpack.c.h.b16 %v4367
  %v5798 = vunpack.c.l.b16 %v4368
  %v5799 = vunpack.c.h.b16 %v4368
  %v5800 = vunpack.c.l.b16 %v4369
  %v5801 = vunpack.c.h.b16 %v4369
  %v5802 = vunpack.c.l.b16 %v4370
  %v5803 = vunpack.c.h.b16 %v4370
  %v5804 = vunpack.c.l.b16 %v4371
  %v5805 = vunpack.c.h.b16 %v4371
  %v5806 = vunpack.c.l.b16 %v4372
  %v5807 = vunpack.c.h.b16 %v4372
  %v5808 = vunpack.c.l.b16 %v4373
  %v5809 = vunpack.c.h.b16 %v4373
  %v5810 = vunpack.c.l.b16 %v4374
  %v5811 = vunpack.c.h.b16 %v4374
  %v5812 = vunpack.c.l.b16 %v4375
  %v5813 = vunpack.c.h.b16 %v4375
  %v5814 = vunpack.c.l.b16 %v4376
  %v5815 = vunpack.c.h.b16 %v4376
  %v5816 = vunpack.c.l.b16 %v4377
  %v5817 = vunpack.c.h.b16 %v4377
  %v5818 = vunpack.c.l.b16 %v4378
  %v5819 = vunpack.c.h.b16 %v4378
  %v5820 = vunpack.c.l.b16 %v4379
  %v5821 = vunpack.c.h.b16 %v4379
  %v5822 = vunpack.c.l.b16 %v4380
  %v5823 = vunpack.c.h.b16 %v4380
  %v5824 = vunpack.c.l.b16 %v4381
  %v5825 = vunpack.c.h.b16 %v4381
  %v5826 = vunpack.c.l.b16 %v4382
  %v5827 = vunpack.c.h.b16 %v4382
  %v5828 = vunpack.c.l.b16 %v4383
  %v5829 = vunpack.c.h.b16 %v4383
  %v5830 = vunpack.c.l.b16 %v4384
  %v5831 = vunpack.c.h.b16 %v4384
  %v5832 = vunpack.c.l.b16 %v4385
  %v5833 = vunpack.c.h.b16 %v4385
  %v5834 = vunpack.c.l.b16 %v4386
  %v5835 = vunpack.c.h.b16 %v4386
  %v5836 = vunpack.c.l.b16 %v4387
  %v5837 = vunpack.c.h.b16 %v4387
  %v5838 = vunpack.c.l.b16 %v4388
  %v5839 = vunpack.c.h.b16 %v4388
  %v5840 = vunpack.c.l.b16 %v4389
  %v5841 = vunpack.c.h.b16 %v4389
  %v5842 = vunpack.c.l.b16 %v4390
  %v5843 = vunpack.c.h.b16 %v4390
  %v5844 = vunpack.c.l.b16 %v4391
  %v5845 = vunpack.c.h.b16 %v4391
  %v5846 = vunpack.c.l.b16 %v4392
  %v5847 = vunpack.c.h.b16 %v4392
  %v5848 = vunpack.c.l.b16 %v4393
  %v5849 = vunpack.c.h.b16 %v4393
  %v5850 = vunpack.c.l.b16 %v4394
  %v5851 = vunpack.c.h.b16 %v4394
  %v5852 = vunpack.c.l.b16 %v4395
  %v5853 = vunpack.c.h.b16 %v4395
  %v5854 = vunpack.c.l.b16 %v4396
  %v5855 = vunpack.c.h.b16 %v4396
  %v5856 = vunpack.c.l.b16 %v4397
  %v5857 = vunpack.c.h.b16 %v4397
  %v5858 = vunpack.c.l.b16 %v4398
  %v5859 = vunpack.c.h.b16 %v4398
  %v5860 = vunpack.c.l.b16 %v4399
  %v5861 = vunpack.c.h.b16 %v4399
  %v5862 = vunpack.c.l.b16 %v4400
  %v5863 = vunpack.c.h.b16 %v4400
  %v5864 = vunpack.c.l.b16 %v4401
  %v5865 = vunpack.c.h.b16 %v4401
  %v5866 = vunpack.c.l.b16 %v4402
  %v5867 = vunpack.c.h.b16 %v4402
  %v5868 = vunpack.c.l.b16 %v4403
  %v5869 = vunpack.c.h.b16 %v4403
  %v5870 = vunpack.c.l.b16 %v4404
  %v5871 = vunpack.c.h.b16 %v4404
  %v5872 = vunpack.c.l.b16 %v4405
  %v5873 = vunpack.c.h.b16 %v4405
  %v5874 = vunpack.c.l.b16 %v4406
  %v5875 = vunpack.c.h.b16 %v4406
  %v5876 = vunpack.c.l.b16 %v4407
  %v5877 = vunpack.c.h.b16 %v4407
  %v5878 = vunpack.c.l.b16 %v4408
  %v5879 = vunpack.c.h.b16 %v4408
  %v5880 = vunpack.c.l.b16 %v4409
  %v5881 = vunpack.c.h.b16 %v4409
  %v5882 = vunpack.c.l.b16 %v4410
  %v5883 = vunpack.c.h.b16 %v4410
  %v5884 = vunpack.c.l.b16 %v4411
  %v5885 = vunpack.c.h.b16 %v4411
  %v5886 = vunpack.c.l.b16 %v4412
  %v5887 = vunpack.c.h.b16 %v4412
  %v5888 = vunpack.c.l.b16 %v4413
  %v5889 = vunpack.c.h.b16 %v4413
  %v5890 = vunpack.c.l.b16 %v4414
  %v5891 = vunpack.c.h.b16 %v4414
  %v5892 = vunpack.c.l.b16 %v4415
  %v5893 = vunpack.c.h.b16 %v4415
  %v5894 = vunpack.c.l.b16 %v4416
  %v5895 = vunpack.c.h.b16 %v4416
  %v5896 = vunpack.c.l.b16 %v4417
  %v5897 = vunpack.c.h.b16 %v4417
  %v5898 = vunpack.c.l.b16 %v4418
  %v5899 = vunpack.c.h.b16 %v4418
  %v5900 = vunpack.c.l.b16 %v4419
  %v5901 = vunpack.c.h.b16 %v4419
  %v5902 = vunpack.c.l.b16 %v4420
  %v5903 = vunpack.c.h.b16 %v4420
  %v5904 = vunpack.c.l.b16 %v4421
  %v5905 = vunpack.c.h.b16 %v4421
  %v5906 = vunpack.c.l.b16 %v4422
  %v5907 = vunpack.c.h.b16 %v4422
  %v5908 = vunpack.c.l.b16 %v4423
  %v5909 = vunpack.c.h.b16 %v4423
  %v5910 = vunpack.c.l.b16 %v4424
  %v5911 = vunpack.c.h.b16 %v4424
  %v5912 = vunpack.c.l.b16 %v4425
  %v5913 = vunpack.c.h.b16 %v4425
  %v5914 = vunpack.c.l.b16 %v4426
  %v5915 = vunpack.c.h.b16 %v4426
  %v5916 = vunpack.c.l.b16 %v4427
  %v5917 = vunpack.c.h.b16 %v4427
  %v5918 = vunpack.c.l.b16 %v4428
  %v5919 = vunpack.c.h.b16 %v4428
  %v5920 = vunpack.c.l.b16 %v4429
  %v5921 = vunpack.c.h.b16 %v4429
  %v5922 = vunpack.c.l.b16 %v4430
  %v5923 = vunpack.c.h.b16 %v4430
  %v5924 = vunpack.c.l.b16 %v4431
  %v5925 = vunpack.c.h.b16 %v4431
  %v5926 = vunpack.c.l.b16 %v4432
  %v5927 = vunpack.c.h.b16 %v4432
  %v5928 = vunpack.c.l.b16 %v4433
  %v5929 = vunpack.c.h.b16 %v4433
  %v5930 = vunpack.c.l.b16 %v4434
  %v5931 = vunpack.c.h.b16 %v4434
  %v5932 = vunpack.c.l.b16 %v4435
  %v5933 = vunpack.c.h.b16 %v4435
  %v5934 = vunpack.c.l.b16 %v4436
  %v5935 = vunpack.c.h.b16 %v4436
  %v5936 = vunpack.c.l.b16 %v4437
  %v5937 = vunpack.c.h.b16 %v4437
  %v5938 = vunpack.c.l.b16 %v4438
  %v5939 = vunpack.c.h.b16 %v4438
  %v5940 = vunpack.c.l.b16 %v4439
  %v5941 = vunpack.c.h.b16 %v4439
  %v5942 = vunpack.c.l.b16 %v4440
  %v5943 = vunpack.c.h.b16 %v4440
  %v5944 = vunpack.c.l.b16 %v4441
  %v5945 = vunpack.c.h.b16 %v4441
  %v5946 = vunpack.c.l.b16 %v4442
  %v5947 = vunpack.c.h.b16 %v4442
  %v5948 = vunpack.c.l.b16 %v4443
  %v5949 = vunpack.c.h.b16 %v4443
  %v5950 = vunpack.c.l.b16 %v4444
  %v5951 = vunpack.c.h.b16 %v4444
  %v5952 = vunpack.c.l.b16 %v4445
  %v5953 = vunpack.c.h.b16 %v4445
  %v5954 = vunpack.c.l.b16 %v4446
  %v5955 = vunpack.c.h.b16 %v4446
  %v5956 = vunpack.c.l.b16 %v4447
  %v5957 = vunpack.c.h.b16 %v4447
  %v5958 = vunpack.c.l.b16 %v4448
  %v5959 = vunpack.c.h.b16 %v4448
  %v5960 = vunpack.c.l.b16 %v4449
  %v5961 = vunpack.c.h.b16 %v4449
  %v5962 = vunpack.c.l.b16 %v4450
  %v5963 = vunpack.c.h.b16 %v4450
  %v5964 = vunpack.c.l.b16 %v4451
  %v5965 = vunpack.c.h.b16 %v4451
  %v5966 = vunpack.c.l.b16 %v4452
  %v5967 = vunpack.c.h.b16 %v4452
  %v5968 = vunpack.c.l.b16 %v4453
  %v5969 = vunpack.c.h.b16 %v4453
  %v5970 = vunpack.c.l.b16 %v4454
  %v5971 = vunpack.c.h.b16 %v4454
  %v5972 = vunpack.c.l.b16 %v4455
  %v5973 = vunpack.c.h.b16 %v4455
  %v5974 = vunpack.c.l.b16 %v4456
  %v5975 = vunpack.c.h.b16 %v4456
  %v5976 = vunpack.c.l.b16 %v4457
  %v5977 = vunpack.c.h.b16 %v4457
  %v5978 = vunpack.c.l.b16 %v4458
  %v5979 = vunpack.c.h.b16 %v4458
  %v5980 = vunpack.c.l.b16 %v4459
  %v5981 = vunpack.c.h.b16 %v4459
  %v5982 = vunpack.c.l.b16 %v4460
  %v5983 = vunpack.c.h.b16 %v4460
  %v5984 = vunpack.c.l.b16 %v4461
  %v5985 = vunpack.c.h.b16 %v4461
  %v5986 = vunpack.c.l.b16 %v4462
  %v5987 = vunpack.c.h.b16 %v4462
  %v5988 = vunpack.c.l.b16 %v4463
  %v5989 = vunpack.c.h.b16 %v4463
  %v5990 = vunpack.c.l.b16 %v4464
  %v5991 = vunpack.c.h.b16 %v4464
  %v5992 = vunpack.c.l.b16 %v4465
  %v5993 = vunpack.c.h.b16 %v4465
  %v5994 = vunpack.c.l.b16 %v4466
  %v5995 = vunpack.c.h.b16 %v4466
  %v5996 = vunpack.c.l.b16 %v4467
  %v5997 = vunpack.c.h.b16 %v4467
  %v5998 = vunpack.c.l.b16 %v4468
  %v5999 = vunpack.c.h.b16 %v4468
  %v6000 = vunpack.c.l.b16 %v4469
  %v6001 = vunpack.c.h.b16 %v4469
  %v6002 = vunpack.c.l.b16 %v4470
  %v6003 = vunpack.c.h.b16 %v4470
  %v6004 = vunpack.c.l.b16 %v4471
  %v6005 = vunpack.c.h.b16 %v4471
  %v6006 = vunpack.c.l.b16 %v4472
  %v6007 = vunpack.c.h.b16 %v4472
  %v6008 = vunpack.c.l.b16 %v4473
  %v6009 = vunpack.c.h.b16 %v4473
  %v6010 = vunpack.c.l.b16 %v4474
  %v6011 = vunpack.c.h.b16 %v4474
  %v6012 = vunpack.c.l.b16 %v4475
  %v6013 = vunpack.c.h.b16 %v4475
  %v6014 = vunpack.c.l.b16 %v4476
  %v6015 = vunpack.c.h.b16 %v4476
  %v6016 = vunpack.c.l.b16 %v4477
  %v6017 = vunpack.c.h.b16 %v4477
  %v6018 = vunpack.c.l.b16 %v4478
  %v6019 = vunpack.c.h.b16 %v4478
  %v6020 = vunpack.c.l.b16 %v4479
  %v6021 = vunpack.c.h.b16 %v4479
  %v6022 = vunpack.c.l.b16 %v4480
  %v6023 = vunpack.c.h.b16 %v4480
  %v6024 = vunpack.c.l.b16 %v4481
  %v6025 = vunpack.c.h.b16 %v4481
  %v6026 = vunpack.c.l.b16 %v4482
  %v6027 = vunpack.c.h.b16 %v4482
  %v6028 = vunpack.c.l.b16 %v4483
  %v6029 = vunpack.c.h.b16 %v4483
  %v6030 = vunpack.c.l.b16 %v4484
  %v6031 = vunpack.c.h.b16 %v4484
  %v6032 = vunpack.c.l.b16 %v4485
  %v6033 = vunpack.c.h.b16 %v4485
  %v6034 = vunpack.c.l.b16 %v4486
  %v6035 = vunpack.c.h.b16 %v4486
  %v6036 = vunpack.c.l.b16 %v4487
  %v6037 = vunpack.c.h.b16 %v4487
  %v6038 = vunpack.c.l.b16 %v4488
  %v6039 = vunpack.c.h.b16 %v4488
  %v6040 = vunpack.c.l.b16 %v4489
  %v6041 = vunpack.c.h.b16 %v4489
  %v6042 = vunpack.c.l.b16 %v4490
  %v6043 = vunpack.c.h.b16 %v4490
  %v6044 = vunpack.c.l.b16 %v4491
  %v6045 = vunpack.c.h.b16 %v4491
  %v6046 = vpack.c.b16 %v5030, %v5022
  %v6047 = vpack.c.b16 %v5031, %v5023
  %v6048 = vpack.c.b16 %v5032, %v5024
  %v6049 = vpack.c.b16 %v5033, %v5025
  %v6050 = vpack.c.b16 %v5034, %v5026
  %v6051 = vpack.c.b16 %v5035, %v5027
  %v6052 = vpack.c.b16 %v5036, %v5028
  %v6053 = vpack.c.b16 %v5037, %v5029
  %v6054 = vpack.c.b16 %v5046, %v5038
  %v6055 = vpack.c.b16 %v5047, %v5039
  %v6056 = vpack.c.b16 %v5048, %v5040
  %v6057 = vpack.c.b16 %v5049, %v5041
  %v6058 = vpack.c.b16 %v5050, %v5042
  %v6059 = vpack.c.b16 %v5051, %v5043
  %v6060 = vpack.c.b16 %v5052, %v5044
  %v6061 = vpack.c.b16 %v5053, %v5045
  %v6062 = vpack.c.b16 %v5062, %v5054
  %v6063 = vpack.c.b16 %v5063, %v5055
  %v6064 = vpack.c.b16 %v5064, %v5056
  %v6065 = vpack.c.b16 %v5065, %v5057
  %v6066 = vpack.c.b16 %v5066, %v5058
  %v6067 = vpack.c.b16 %v5067, %v5059
  %v6068 = vpack.c.b16 %v5068, %v5060
  %v6069 = vpack.c.b16 %v5069, %v5061
  %v6070 = vpack.c.b16 %v5078, %v5070
  %v6071 = vpack.c.b16 %v5079, %v5071
  %v6072 = vpack.c.b16 %v5080, %v5072
  %v6073 = vpack.c.b16 %v5081, %v5073
  %v6074 = vpack.c.b16 %v5082, %v5074
  %v6075 = vpack.c.b16 %v5083, %v5075
  %v6076 = vpack.c.b16 %v5084, %v5076
  %v6077 = vpack.c.b16 %v5085, %v5077
  %v6078 = vpack.c.b16 %v5094, %v5086
  %v6079 = vpack.c.b16 %v5095, %v5087
  %v6080 = vpack.c.b16 %v5096, %v5088
  %v6081 = vpack.c.b16 %v5097, %v5089
  %v6082 = vpack.c.b16 %v5098, %v5090
  %v6083 = vpack.c.b16 %v5099, %v5091
  %v6084 = vpack.c.b16 %v5100, %v5092
  %v6085 = vpack.c.b16 %v5101, %v5093
  %v6086 = vpack.c.b16 %v5110, %v5102
  %v6087 = vpack.c.b16 %v5111, %v5103
  %v6088 = vpack.c.b16 %v5112, %v5104
  %v6089 = vpack.c.b16 %v5113, %v5105
  %v6090 = vpack.c.b16 %v5114, %v5106
  %v6091 = vpack.c.b16 %v5115, %v5107
  %v6092 = vpack.c.b16 %v5116, %v5108
  %v6093 = vpack.c.b16 %v5117, %v5109
  %v6094 = vpack.c.b16 %v5126, %v5118
  %v6095 = vpack.c.b16 %v5127, %v5119
  %v6096 = vpack.c.b16 %v5128, %v5120
  %v6097 = vpack.c.b16 %v5129, %v5121
  %v6098 = vpack.c.b16 %v5130, %v5122
  %v6099 = vpack.c.b16 %v5131, %v5123
  %v6100 = vpack.c.b16 %v5132, %v5124
  %v6101 = vpack.c.b16 %v5133, %v5125
  %v6102 = vpack.c.b16 %v5142, %v5134
  %v6103 = vpack.c.b16 %v5143, %v5135
  %v6104 = vpack.c.b16 %v5144, %v5136
  %v6105 = vpack.c.b16 %v5145, %v5137
  %v6106 = vpack.c.b16 %v5146, %v5138
  %v6107 = vpack.c.b16 %v5147, %v5139
  %v6108 = vpack.c.b16 %v5148, %v5140
  %v6109 = vpack.c.b16 %v5149, %v5141
  %v6110 = vpack.c.b16 %v5158, %v5150
  %v6111 = vpack.c.b16 %v5159, %v5151
  %v6112 = vpack.c.b16 %v5160, %v5152
  %v6113 = vpack.c.b16 %v5161, %v5153
  %v6114 = vpack.c.b16 %v5162, %v5154
  %v6115 = vpack.c.b16 %v5163, %v5155
  %v6116 = vpack.c.b16 %v5164, %v5156
  %v6117 = vpack.c.b16 %v5165, %v5157
  %v6118 = vpack.c.b16 %v5174, %v5166
  %v6119 = vpack.c.b16 %v5175, %v5167
  %v6120 = vpack.c.b16 %v5176, %v5168
  %v6121 = vpack.c.b16 %v5177, %v5169
  %v6122 = vpack.c.b16 %v5178, %v5170
  %v6123 = vpack.c.b16 %v5179, %v5171
  %v6124 = vpack.c.b16 %v5180, %v5172
  %v6125 = vpack.c.b16 %v5181, %v5173
  %v6126 = vpack.c.b16 %v5190, %v5182
  %v6127 = vpack.c.b16 %v5191, %v5183
  %v6128 = vpack.c.b16 %v5192, %v5184
  %v6129 = vpack.c.b16 %v5193, %v5185
  %v6130 = vpack.c.b16 %v5194, %v5186
  %v6131 = vpack.c.b16 %v5195, %v5187
  %v6132 = vpack.c.b16 %v5196, %v5188
  %v6133 = vpack.c.b16 %v5197, %v5189
  %v6134 = vpack.c.b16 %v5206, %v5198
  %v6135 = vpack.c.b16 %v5207, %v5199
  %v6136 = vpack.c.b16 %v5208, %v5200
  %v6137 = vpack.c.b16 %v5209, %v5201
  %v6138 = vpack.c.b16 %v5210, %v5202
  %v6139 = vpack.c.b16 %v5211, %v5203
  %v6140 = vpack.c.b16 %v5212, %v5204
  %v6141 = vpack.c.b16 %v5213, %v5205
  %v6142 = vpack.c.b16 %v5222, %v5214
  %v6143 = vpack.c.b16 %v5223, %v5215
  %v6144 = vpack.c.b16 %v5224, %v5216
  %v6145 = vpack.c.b16 %v5225, %v5217
  %v6146 = vpack.c.b16 %v5226, %v5218
  %v6147 = vpack.c.b16 %v5227, %v5219
  %v6148 = vpack.c.b16 %v5228, %v5220
  %v6149 = vpack.c.b16 %v5229, %v5221
  %v6150 = vpack.c.b16 %v5238, %v5230
  %v6151 = vpack.c.b16 %v5239, %v5231
  %v6152 = vpack.c.b16 %v5240, %v5232
  %v6153 = vpack.c.b16 %v5241, %v5233
  %v6154 = vpack.c.b16 %v5242, %v5234
  %v6155 = vpack.c.b16 %v5243, %v5235
  %v6156 = vpack.c.b16 %v5244, %v5236
  %v6157 = vpack.c.b16 %v5245, %v5237
  %v6158 = vpack.c.b16 %v5254, %v5246
  %v6159 = vpack.c.b16 %v5255, %v5247
  %v6160 = vpack.c.b16 %v5256, %v5248
  %v6161 = vpack.c.b16 %v5257, %v5249
  %v6162 = vpack.c.b16 %v5258, %v5250
  %v6163 = vpack.c.b16 %v5259, %v5251
  %v6164 = vpack.c.b16 %v5260, %v5252
  %v6165 = vpack.c.b16 %v5261, %v5253
  %v6166 = vpack.c.b16 %v5270, %v5262
  %v6167 = vpack.c.b16 %v5271, %v5263
  %v6168 = vpack.c.b16 %v5272, %v5264
  %v6169 = vpack.c.b16 %v5273, %v5265
  %v6170 = vpack.c.b16 %v5274, %v5266
  %v6171 = vpack.c.b16 %v5275, %v5267
  %v6172 = vpack.c.b16 %v5276, %v5268
  %v6173 = vpack.c.b16 %v5277, %v5269
  %v6174 = vpack.c.b16 %v5286, %v5278
  %v6175 = vpack.c.b16 %v5287, %v5279
  %v6176 = vpack.c.b16 %v5288, %v5280
  %v6177 = vpack.c.b16 %v5289, %v5281
  %v6178 = vpack.c.b16 %v5290, %v5282
  %v6179 = vpack.c.b16 %v5291, %v5283
  %v6180 = vpack.c.b16 %v5292, %v5284
  %v6181 = vpack.c.b16 %v5293, %v5285
  %v6182 = vpack.c.b16 %v5302, %v5294
  %v6183 = vpack.c.b16 %v5303, %v5295
  %v6184 = vpack.c.b16 %v5304, %v5296
  %v6185 = vpack.c.b16 %v5305, %v5297
  %v6186 = vpack.c.b16 %v5306, %v5298
  %v6187 = vpack.c.b16 %v5307, %v5299
  %v6188 = vpack.c.b16 %v5308, %v5300
  %v6189 = vpack.c.b16 %v5309, %v5301
  %v6190 = vpack.c.b16 %v5318, %v5310
  %v6191 = vpack.c.b16 %v5319, %v5311
  %v6192 = vpack.c.b16 %v5320, %v5312
  %v6193 = vpack.c.b16 %v5321, %v5313
  %v6194 = vpack.c.b16 %v5322, %v5314
  %v6195 = vpack.c.b16 %v5323, %v5315
  %v6196 = vpack.c.b16 %v5324, %v5316
  %v6197 = vpack.c.b16 %v5325, %v5317
  %v6198 = vpack.c.b16 %v5334, %v5326
  %v6199 = vpack.c.b16 %v5335, %v5327
  %v6200 = vpack.c.b16 %v5336, %v5328
  %v6201 = vpack.c.b16 %v5337, %v5329
  %v6202 = vpack.c.b16 %v5338, %v5330
  %v6203 = vpack.c.b16 %v5339, %v5331
  %v6204 = vpack.c.b16 %v5340, %v5332
  %v6205 = vpack.c.b16 %v5341, %v5333
  %v6206 = vpack.c.b16 %v5350, %v5342
  %v6207 = vpack.c.b16 %v5351, %v5343
  %v6208 = vpack.c.b16 %v5352, %v5344
  %v6209 = vpack.c.b16 %v5353, %v5345
  %v6210 = vpack.c.b16 %v5354, %v5346
  %v6211 = vpack.c.b16 %v5355, %v5347
  %v6212 = vpack.c.b16 %v5356, %v5348
  %v6213 = vpack.c.b16 %v5357, %v5349
  %v6214 = vpack.c.b16 %v5366, %v5358
  %v6215 = vpack.c.b16 %v5367, %v5359
  %v6216 = vpack.c.b16 %v5368, %v5360
  %v6217 = vpack.c.b16 %v5369, %v5361
  %v6218 = vpack.c.b16 %v5370, %v5362
  %v6219 = vpack.c.b16 %v5371, %v5363
  %v6220 = vpack.c.b16 %v5372, %v5364
  %v6221 = vpack.c.b16 %v5373, %v5365
  %v6222 = vpack.c.b16 %v5382, %v5374
  %v6223 = vpack.c.b16 %v5383, %v5375
  %v6224 = vpack.c.b16 %v5384, %v5376
  %v6225 = vpack.c.b16 %v5385, %v5377
  %v6226 = vpack.c.b16 %v5386, %v5378
  %v6227 = vpack.c.b16 %v5387, %v5379
  %v6228 = vpack.c.b16 %v5388, %v5380
  %v6229 = vpack.c.b16 %v5389, %v5381
  %v6230 = vpack.c.b16 %v5398, %v5390
  %v6231 = vpack.c.b16 %v5399, %v5391
  %v6232 = vpack.c.b16 %v5400, %v5392
  %v6233 = vpack.c.b16 %v5401, %v5393
  %v6234 = vpack.c.b16 %v5402, %v5394
  %v6235 = vpack.c.b16 %v5403, %v5395
  %v6236 = vpack.c.b16 %v5404, %v5396
  %v6237 = vpack.c.b16 %v5405, %v5397
  %v6238 = vpack.c.b16 %v5414, %v5406
  %v6239 = vpack.c.b16 %v5415, %v5407
  %v6240 = vpack.c.b16 %v5416, %v5408
  %v6241 = vpack.c.b16 %v5417, %v5409
  %v6242 = vpack.c.b16 %v5418, %v5410
  %v6243 = vpack.c.b16 %v5419, %v5411
  %v6244 = vpack.c.b16 %v5420, %v5412
  %v6245 = vpack.c.b16 %v5421, %v5413
  %v6246 = vpack.c.b16 %v5430, %v5422
  %v6247 = vpack.c.b16 %v5431, %v5423
  %v6248 = vpack.c.b16 %v5432, %v5424
  %v6249 = vpack.c.b16 %v5433, %v5425
  %v6250 = vpack.c.b16 %v5434, %v5426
  %v6251 = vpack.c.b16 %v5435, %v5427
  %v6252 = vpack.c.b16 %v5436, %v5428
  %v6253 = vpack.c.b16 %v5437, %v5429
  %v6254 = vpack.c.b16 %v5446, %v5438
  %v6255 = vpack.c.b16 %v5447, %v5439
  %v6256 = vpack.c.b16 %v5448, %v5440
  %v6257 = vpack.c.b16 %v5449, %v5441
  %v6258 = vpack.c.b16 %v5450, %v5442
  %v6259 = vpack.c.b16 %v5451, %v5443
  %v6260 = vpack.c.b16 %v5452, %v5444
  %v6261 = vpack.c.b16 %v5453, %v5445
  %v6262 = vpack.c.b16 %v5462, %v5454
  %v6263 = vpack.c.b16 %v5463, %v5455
  %v6264 = vpack.c.b16 %v5464, %v5456
  %v6265 = vpack.c.b16 %v5465, %v5457
  %v6266 = vpack.c.b16 %v5466, %v5458
  %v6267 = vpack.c.b16 %v5467, %v5459
  %v6268 = vpack.c.b16 %v5468, %v5460
  %v6269 = vpack.c.b16 %v5469, %v5461
  %v6270 = vpack.c.b16 %v5478, %v5470
  %v6271 = vpack.c.b16 %v5479, %v5471
  %v6272 = vpack.c.b16 %v5480, %v5472
  %v6273 = vpack.c.b16 %v5481, %v5473
  %v6274 = vpack.c.b16 %v5482, %v5474
  %v6275 = vpack.c.b16 %v5483, %v5475
  %v6276 = vpack.c.b16 %v5484, %v5476
  %v6277 = vpack.c.b16 %v5485, %v5477
  %v6278 = vpack.c.b16 %v5494, %v5486
  %v6279 = vpack.c.b16 %v5495, %v5487
  %v6280 = vpack.c.b16 %v5496, %v5488
  %v6281 = vpack.c.b16 %v5497, %v5489
  %v6282 = vpack.c.b16 %v5498, %v5490
  %v6283 = vpack.c.b16 %v5499, %v5491
  %v6284 = vpack.c.b16 %v5500, %v5492
  %v6285 = vpack.c.b16 %v5501, %v5493
  %v6286 = vpack.c.b16 %v5510, %v5502
  %v6287 = vpack.c.b16 %v5511, %v5503
  %v6288 = vpack.c.b16 %v5512, %v5504
  %v6289 = vpack.c.b16 %v5513, %v5505
  %v6290 = vpack.c.b16 %v5514, %v5506
  %v6291 = vpack.c.b16 %v5515, %v5507
  %v6292 = vpack.c.b16 %v5516, %v5508
  %v6293 = vpack.c.b16 %v5517, %v5509
  %v6294 = vpack.c.b16 %v5526, %v5518
  %v6295 = vpack.c.b16 %v5527, %v5519
  %v6296 = vpack.c.b16 %v5528, %v5520
  %v6297 = vpack.c.b16 %v5529, %v5521
  %v6298 = vpack.c.b16 %v5530, %v5522
  %v6299 = vpack.c.b16 %v5531, %v5523
  %v6300 = vpack.c.b16 %v5532, %v5524
  %v6301 = vpack.c.b16 %v5533, %v5525
  %v6302 = vpack.c.b16 %v5542, %v5534
  %v6303 = vpack.c.b16 %v5543, %v5535
  %v6304 = vpack.c.b16 %v5544, %v5536
  %v6305 = vpack.c.b16 %v5545, %v5537
  %v6306 = vpack.c.b16 %v5546, %v5538
  %v6307 = vpack.c.b16 %v5547, %v5539
  %v6308 = vpack.c.b16 %v5548, %v5540
  %v6309 = vpack.c.b16 %v5549, %v5541
  %v6310 = vpack.c.b16 %v5558, %v5550
  %v6311 = vpack.c.b16 %v5559, %v5551
  %v6312 = vpack.c.b16 %v5560, %v5552
  %v6313 = vpack.c.b16 %v5561, %v5553
  %v6314 = vpack.c.b16 %v5562, %v5554
  %v6315 = vpack.c.b16 %v5563, %v5555
  %v6316 = vpack.c.b16 %v5564, %v5556
  %v6317 = vpack.c.b16 %v5565, %v5557
  %v6318 = vpack.c.b16 %v5574, %v5566
  %v6319 = vpack.c.b16 %v5575, %v5567
  %v6320 = vpack.c.b16 %v5576, %v5568
  %v6321 = vpack.c.b16 %v5577, %v5569
  %v6322 = vpack.c.b16 %v5578, %v5570
  %v6323 = vpack.c.b16 %v5579, %v5571
  %v6324 = vpack.c.b16 %v5580, %v5572
  %v6325 = vpack.c.b16 %v5581, %v5573
  %v6326 = vpack.c.b16 %v5590, %v5582
  %v6327 = vpack.c.b16 %v5591, %v5583
  %v6328 = vpack.c.b16 %v5592, %v5584
  %v6329 = vpack.c.b16 %v5593, %v5585
  %v6330 = vpack.c.b16 %v5594, %v5586
  %v6331 = vpack.c.b16 %v5595, %v5587
  %v6332 = vpack.c.b16 %v5596, %v5588
  %v6333 = vpack.c.b16 %v5597, %v5589
  %v6334 = vpack.c.b16 %v5606, %v5598
  %v6335 = vpack.c.b16 %v5607, %v5599
  %v6336 = vpack.c.b16 %v5608, %v5600
  %v6337 = vpack.c.b16 %v5609, %v5601
  %v6338 = vpack.c.b16 %v5610, %v5602
  %v6339 = vpack.c.b16 %v5611, %v5603
  %v6340 = vpack.c.b16 %v5612, %v5604
  %v6341 = vpack.c.b16 %v5613, %v5605
  %v6342 = vpack.c.b16 %v5622, %v5614
  %v6343 = vpack.c.b16 %v5623, %v5615
  %v6344 = vpack.c.b16 %v5624, %v5616
  %v6345 = vpack.c.b16 %v5625, %v5617
  %v6346 = vpack.c.b16 %v5626, %v5618
  %v6347 = vpack.c.b16 %v5627, %v5619
  %v6348 = vpack.c.b16 %v5628, %v5620
  %v6349 = vpack.c.b16 %v5629, %v5621
  %v6350 = vpack.c.b16 %v5638, %v5630
  %v6351 = vpack.c.b16 %v5639, %v5631
  %v6352 = vpack.c.b16 %v5640, %v5632
  %v6353 = vpack.c.b16 %v5641, %v5633
  %v6354 = vpack.c.b16 %v5642, %v5634
  %v6355 = vpack.c.b16 %v5643, %v5635
  %v6356 = vpack.c.b16 %v5644, %v5636
  %v6357 = vpack.c.b16 %v5645, %v5637
  %v6358 = vpack.c.b16 %v5654, %v5646
  %v6359 = vpack.c.b16 %v5655, %v5647
  %v6360 = vpack.c.b16 %v5656, %v5648
  %v6361 = vpack.c.b16 %v5657, %v5649
  %v6362 = vpack.c.b16 %v5658, %v5650
  %v6363 = vpack.c.b16 %v5659, %v5651
  %v6364 = vpack.c.b16 %v5660, %v5652
  %v6365 = vpack.c.b16 %v5661, %v5653
  %v6366 = vpack.c.b16 %v5670, %v5662
  %v6367 = vpack.c.b16 %v5671, %v5663
  %v6368 = vpack.c.b16 %v5672, %v5664
  %v6369 = vpack.c.b16 %v5673, %v5665
  %v6370 = vpack.c.b16 %v5674, %v5666
  %v6371 = vpack.c.b16 %v5675, %v5667
  %v6372 = vpack.c.b16 %v5676, %v5668
  %v6373 = vpack.c.b16 %v5677, %v5669
  %v6374 = vpack.c.b16 %v5686, %v5678
  %v6375 = vpack.c.b16 %v5687, %v5679
  %v6376 = vpack.c.b16 %v5688, %v5680
  %v6377 = vpack.c.b16 %v5689, %v5681
  %v6378 = vpack.c.b16 %v5690, %v5682
  %v6379 = vpack.c.b16 %v5691, %v5683
  %v6380 = vpack.c.b16 %v5692, %v5684
  %v6381 = vpack.c.b16 %v5693, %v5685
  %v6382 = vpack.c.b16 %v5702, %v5694
  %v6383 = vpack.c.b16 %v5703, %v5695
  %v6384 = vpack.c.b16 %v5704, %v5696
  %v6385 = vpack.c.b16 %v5705, %v5697
  %v6386 = vpack.c.b16 %v5706, %v5698
  %v6387 = vpack.c.b16 %v5707, %v5699
  %v6388 = vpack.c.b16 %v5708, %v5700
  %v6389 = vpack.c.b16 %v5709, %v5701
  %v6390 = vpack.c.b16 %v5718, %v5710
  %v6391 = vpack.c.b16 %v5719, %v5711
  %v6392 = vpack.c.b16 %v5720, %v5712
  %v6393 = vpack.c.b16 %v5721, %v5713
  %v6394 = vpack.c.b16 %v5722, %v5714
  %v6395 = vpack.c.b16 %v5723, %v5715
  %v6396 = vpack.c.b16 %v5724, %v5716
  %v6397 = vpack.c.b16 %v5725, %v5717
  %v6398 = vpack.c.b16 %v5734, %v5726
  %v6399 = vpack.c.b16 %v5735, %v5727
  %v6400 = vpack.c.b16 %v5736, %v5728
  %v6401 = vpack.c.b16 %v5737, %v5729
  %v6402 = vpack.c.b16 %v5738, %v5730
  %v6403 = vpack.c.b16 %v5739, %v5731
  %v6404 = vpack.c.b16 %v5740, %v5732
  %v6405 = vpack.c.b16 %v5741, %v5733
  %v6406 = vpack.c.b16 %v5750, %v5742
  %v6407 = vpack.c.b16 %v5751, %v5743
  %v6408 = vpack.c.b16 %v5752, %v5744
  %v6409 = vpack.c.b16 %v5753, %v5745
  %v6410 = vpack.c.b16 %v5754, %v5746
  %v6411 = vpack.c.b16 %v5755, %v5747
  %v6412 = vpack.c.b16 %v5756, %v5748
  %v6413 = vpack.c.b16 %v5757, %v5749
  %v6414 = vpack.c.b16 %v5766, %v5758
  %v6415 = vpack.c.b16 %v5767, %v5759
  %v6416 = vpack.c.b16 %v5768, %v5760
  %v6417 = vpack.c.b16 %v5769, %v5761
  %v6418 = vpack.c.b16 %v5770, %v5762
  %v6419 = vpack.c.b16 %v5771, %v5763
  %v6420 = vpack.c.b16 %v5772, %v5764
  %v6421 = vpack.c.b16 %v5773, %v5765
  %v6422 = vpack.c.b16 %v5782, %v5774
  %v6423 = vpack.c.b16 %v5783, %v5775
  %v6424 = vpack.c.b16 %v5784, %v5776
  %v6425 = vpack.c.b16 %v5785, %v5777
  %v6426 = vpack.c.b16 %v5786, %v5778
  %v6427 = vpack.c.b16 %v5787, %v5779
  %v6428 = vpack.c.b16 %v5788, %v5780
  %v6429 = vpack.c.b16 %v5789, %v5781
  %v6430 = vpack.c.b16 %v5798, %v5790
  %v6431 = vpack.c.b16 %v5799, %v5791
  %v6432 = vpack.c.b16 %v5800, %v5792
  %v6433 = vpack.c.b16 %v5801, %v5793
  %v6434 = vpack.c.b16 %v5802, %v5794
  %v6435 = vpack.c.b16 %v5803, %v5795
  %v6436 = vpack.c.b16 %v5804, %v5796
  %v6437 = vpack.c.b16 %v5805, %v5797
  %v6438 = vpack.c.b16 %v5814, %v5806
  %v6439 = vpack.c.b16 %v5815, %v5807
  %v6440 = vpack.c.b16 %v5816, %v5808
  %v6441 = vpack.c.b16 %v5817, %v5809
  %v6442 = vpack.c.b16 %v5818, %v5810
  %v6443 = vpack.c.b16 %v5819, %v5811
  %v6444 = vpack.c.b16 %v5820, %v5812
  %v6445 = vpack.c.b16 %v5821, %v5813
  %v6446 = vpack.c.b16 %v5830, %v5822
  %v6447 = vpack.c.b16 %v5831, %v5823
  %v6448 = vpack.c.b16 %v5832, %v5824
  %v6449 = vpack.c.b16 %v5833, %v5825
  %v6450 = vpack.c.b16 %v5834, %v5826
  %v6451 = vpack.c.b16 %v5835, %v5827
  %v6452 = vpack.c.b16 %v5836, %v5828
  %v6453 = vpack.c.b16 %v5837, %v5829
  %v6454 = vpack.c.b16 %v5846, %v5838
  %v6455 = vpack.c.b16 %v5847, %v5839
  %v6456 = vpack.c.b16 %v5848, %v5840
  %v6457 = vpack.c.b16 %v5849, %v5841
  %v6458 = vpack.c.b16 %v5850, %v5842
  %v6459 = vpack.c.b16 %v5851, %v5843
  %v6460 = vpack.c.b16 %v5852, %v5844
  %v6461 = vpack.c.b16 %v5853, %v5845
  %v6462 = vpack.c.b16 %v5862, %v5854
  %v6463 = vpack.c.b16 %v5863, %v5855
  %v6464 = vpack.c.b16 %v5864, %v5856
  %v6465 = vpack.c.b16 %v5865, %v5857
  %v6466 = vpack.c.b16 %v5866, %v5858
  %v6467 = vpack.c.b16 %v5867, %v5859
  %v6468 = vpack.c.b16 %v5868, %v5860
  %v6469 = vpack.c.b16 %v5869, %v5861
  %v6470 = vpack.c.b16 %v5878, %v5870
  %v6471 = vpack.c.b16 %v5879, %v5871
  %v6472 = vpack.c.b16 %v5880, %v5872
  %v6473 = vpack.c.b16 %v5881, %v5873
  %v6474 = vpack.c.b16 %v5882, %v5874
  %v6475 = vpack.c.b16 %v5883, %v5875
  %v6476 = vpack.c.b16 %v5884, %v5876
  %v6477 = vpack.c.b16 %v5885, %v5877
  %v6478 = vpack.c.b16 %v5894, %v5886
  %v6479 = vpack.c.b16 %v5895, %v5887
  %v6480 = vpack.c.b16 %v5896, %v5888
  %v6481 = vpack.c.b16 %v5897, %v5889
  %v6482 = vpack.c.b16 %v5898, %v5890
  %v6483 = vpack.c.b16 %v5899, %v5891
  %v6484 = vpack.c.b16 %v5900, %v5892
  %v6485 = vpack.c.b16 %v5901, %v5893
  %v6486 = vpack.c.b16 %v5910, %v5902
  %v6487 = vpack.c.b16 %v5911, %v5903
  %v6488 = vpack.c.b16 %v5912, %v5904
  %v6489 = vpack.c.b16 %v5913, %v5905
  %v6490 = vpack.c.b16 %v5914, %v5906
  %v6491 = vpack.c.b16 %v5915, %v5907
  %v6492 = vpack.c.b16 %v5916, %v5908
  %v6493 = vpack.c.b16 %v5917, %v5909
  %v6494 = vpack.c.b16 %v5926, %v5918
  %v6495 = vpack.c.b16 %v5927, %v5919
  %v6496 = vpack.c.b16 %v5928, %v5920
  %v6497 = vpack.c.b16 %v5929, %v5921
  %v6498 = vpack.c.b16 %v5930, %v5922
  %v6499 = vpack.c.b16 %v5931, %v5923
  %v6500 = vpack.c.b16 %v5932, %v5924
  %v6501 = vpack.c.b16 %v5933, %v5925
  %v6502 = vpack.c.b16 %v5942, %v5934
  %v6503 = vpack.c.b16 %v5943, %v5935
  %v6504 = vpack.c.b16 %v5944, %v5936
  %v6505 = vpack.c.b16 %v5945, %v5937
  %v6506 = vpack.c.b16 %v5946, %v5938
  %v6507 = vpack.c.b16 %v5947, %v5939
  %v6508 = vpack.c.b16 %v5948, %v5940
  %v6509 = vpack.c.b16 %v5949, %v5941
  %v6510 = vpack.c.b16 %v5958, %v5950
  %v6511 = vpack.c.b16 %v5959, %v5951
  %v6512 = vpack.c.b16 %v5960, %v5952
  %v6513 = vpack.c.b16 %v5961, %v5953
  %v6514 = vpack.c.b16 %v5962, %v5954
  %v6515 = vpack.c.b16 %v5963, %v5955
  %v6516 = vpack.c.b16 %v5964, %v5956
  %v6517 = vpack.c.b16 %v5965, %v5957
  %v6518 = vpack.c.b16 %v5974, %v5966
  %v6519 = vpack.c.b16 %v5975, %v5967
  %v6520 = vpack.c.b16 %v5976, %v5968
  %v6521 = vpack.c.b16 %v5977, %v5969
  %v6522 = vpack.c.b16 %v5978, %v5970
  %v6523 = vpack.c.b16 %v5979, %v5971
  %v6524 = vpack.c.b16 %v5980, %v5972
  %v6525 = vpack.c.b16 %v5981, %v5973
  %v6526 = vpack.c.b16 %v5990, %v5982
  %v6527 = vpack.c.b16 %v5991, %v5983
  %v6528 = vpack.c.b16 %v5992, %v5984
  %v6529 = vpack.c.b16 %v5993, %v5985
  %v6530 = vpack.c.b16 %v5994, %v5986
  %v6531 = vpack.c.b16 %v5995, %v5987
  %v6532 = vpack.c.b16 %v5996, %v5988
  %v6533 = vpack.c.b16 %v5997, %v5989
  %v6534 = vpack.c.b16 %v6006, %v5998
  %v6535 = vpack.c.b16 %v6007, %v5999
  %v6536 = vpack.c.b16 %v6008, %v6000
  %v6537 = vpack.c.b16 %v6009, %v6001
  %v6538 = vpack.c.b16 %v6010, %v6002
  %v6539 = vpack.c.b16 %v6011, %v6003
  %v6540 = vpack.c.b16 %v6012, %v6004
  %v6541 = vpack.c.b16 %v6013, %v6005
  %v6542 = vpack.c.b16 %v6022, %v6014
  %v6543 = vpack.c.b16 %v6023, %v6015
  %v6544 = vpack.c.b16 %v6024, %v6016
  %v6545 = vpack.c.b16 %v6025, %v6017
  %v6546 = vpack.c.b16 %v6026, %v6018
  %v6547 = vpack.c.b16 %v6027, %v6019
  %v6548 = vpack.c.b16 %v6028, %v6020
  %v6549 = vpack.c.b16 %v6029, %v6021
  %v6550 = vpack.c.b16 %v6038, %v6030
  %v6551 = vpack.c.b16 %v6039, %v6031
  %v6552 = vpack.c.b16 %v6040, %v6032
  %v6553 = vpack.c.b16 %v6041, %v6033
  %v6554 = vpack.c.b16 %v6042, %v6034
  %v6555 = vpack.c.b16 %v6043, %v6035
  %v6556 = vpack.c.b16 %v6044, %v6036
  %v6557 = vpack.c.b16 %v6045, %v6037
  %7070 = vmatpush.bf16.msra.mxu0 %v6102
  %7071 = vmatpush.bf16.msra.mxu0 %v6094
  %7072 = vmatpush.bf16.msra.mxu0 %v6086
  %7073 = vmatpush.bf16.msra.mxu0 %v6078
  %7074 = vmatpush.bf16.msra.mxu0 %v6070
  %7075 = vmatpush.bf16.msra.mxu0 %v6062
  %7076 = vmatpush.bf16.msra.mxu0 %v6054
  %7077 = vmatpush.bf16.msra.mxu0 %v6046
  %7078 = vmatmul.bf16.gmra.mxu0 %v3972
  %v7079 = vpop.f32.mrf.mxu0
  %v7080 = vadd.f32 %v4494, %v7079
  %v7081 = vpop.f32.mrf.mxu0
  %7082 = vdwg.mxu0
  %7083 = vmatpush.bf16.msra.mxu0 %v6166
  %7084 = vmatpush.bf16.msra.mxu0 %v6158
  %7085 = vmatpush.bf16.msra.mxu0 %v6150
  %7086 = vmatpush.bf16.msra.mxu0 %v6142
  %7087 = vmatpush.bf16.msra.mxu0 %v6134
  %7088 = vmatpush.bf16.msra.mxu0 %v6126
  %7089 = vmatpush.bf16.msra.mxu0 %v6118
  %7090 = vmatpush.bf16.msra.mxu0 %v6110
  %7091 = vmatmul.bf16.gmra.mxu0 %v3973
  %v7092 = vpop.f32.mrf.mxu0
  %v7093 = vadd.f32 %v7080, %v7092
  %v7094 = vpop.f32.mrf.mxu0
  %7095 = vdwg.mxu0
  %7096 = vmatpush.bf16.msra.mxu0 %v6230
  %7097 = vmatpush.bf16.msra.mxu0 %v6222
  %7098 = vmatpush.bf16.msra.mxu0 %v6214
  %7099 = vmatpush.bf16.msra.mxu0 %v6206
  %7100 = vmatpush.bf16.msra.mxu0 %v6198
  %7101 = vmatpush.bf16.msra.mxu0 %v6190
  %7102 = vmatpush.bf16.msra.mxu0 %v6182
  %7103 = vmatpush.bf16.msra.mxu0 %v6174
  %7104 = vmatmul.bf16.gmra.mxu0 %v3974
  %v7105 = vpop.f32.mrf.mxu0
  %v7106 = vadd.f32 %v7093, %v7105
  %v7107 = vpop.f32.mrf.mxu0
  %7108 = vdwg.mxu0
  %7109 = vmatpush.bf16.msra.mxu0 %v6294
  %7110 = vmatpush.bf16.msra.mxu0 %v6286
  %7111 = vmatpush.bf16.msra.mxu0 %v6278
  %7112 = vmatpush.bf16.msra.mxu0 %v6270
  %7113 = vmatpush.bf16.msra.mxu0 %v6262
  %7114 = vmatpush.bf16.msra.mxu0 %v6254
  %7115 = vmatpush.bf16.msra.mxu0 %v6246
  %7116 = vmatpush.bf16.msra.mxu0 %v6238
  %7117 = vmatmul.bf16.gmra.mxu0 %v3975
  %v7118 = vpop.f32.mrf.mxu0
  %v7119 = vadd.f32 %v7106, %v7118
  %v7120 = vpop.f32.mrf.mxu0
  %7121 = vdwg.mxu0
  %7122 = vmatpush.bf16.msra.mxu0 %v6358
  %7123 = vmatpush.bf16.msra.mxu0 %v6350
  %7124 = vmatpush.bf16.msra.mxu0 %v6342
  %7125 = vmatpush.bf16.msra.mxu0 %v6334
  %7126 = vmatpush.bf16.msra.mxu0 %v6326
  %7127 = vmatpush.bf16.msra.mxu0 %v6318
  %7128 = vmatpush.bf16.msra.mxu0 %v6310
  %7129 = vmatpush.bf16.msra.mxu0 %v6302
  %7130 = vmatmul.bf16.gmra.mxu0 %v3976
  %v7131 = vpop.f32.mrf.mxu0
  %v7132 = vadd.f32 %v7119, %v7131
  %v7133 = vpop.f32.mrf.mxu0
  %7134 = vdwg.mxu0
  %7135 = vmatpush.bf16.msra.mxu0 %v6422
  %7136 = vmatpush.bf16.msra.mxu0 %v6414
  %7137 = vmatpush.bf16.msra.mxu0 %v6406
  %7138 = vmatpush.bf16.msra.mxu0 %v6398
  %7139 = vmatpush.bf16.msra.mxu0 %v6390
  %7140 = vmatpush.bf16.msra.mxu0 %v6382
  %7141 = vmatpush.bf16.msra.mxu0 %v6374
  %7142 = vmatpush.bf16.msra.mxu0 %v6366
  %7143 = vmatmul.bf16.gmra.mxu0 %v3977
  %v7144 = vpop.f32.mrf.mxu0
  %v7145 = vadd.f32 %v7132, %v7144
  %v7146 = vpop.f32.mrf.mxu0
  %7147 = vdwg.mxu0
  %7148 = vmatpush.bf16.msra.mxu0 %v6486
  %7149 = vmatpush.bf16.msra.mxu0 %v6478
  %7150 = vmatpush.bf16.msra.mxu0 %v6470
  %7151 = vmatpush.bf16.msra.mxu0 %v6462
  %7152 = vmatpush.bf16.msra.mxu0 %v6454
  %7153 = vmatpush.bf16.msra.mxu0 %v6446
  %7154 = vmatpush.bf16.msra.mxu0 %v6438
  %7155 = vmatpush.bf16.msra.mxu0 %v6430
  %7156 = vmatmul.bf16.gmra.mxu0 %v3978
  %v7157 = vpop.f32.mrf.mxu0
  %v7158 = vadd.f32 %v7145, %v7157
  %v7159 = vpop.f32.mrf.mxu0
  %7160 = vdwg.mxu0
  %7161 = vmatpush.bf16.msra.mxu0 %v6550
  %7162 = vmatpush.bf16.msra.mxu0 %v6542
  %7163 = vmatpush.bf16.msra.mxu0 %v6534
  %7164 = vmatpush.bf16.msra.mxu0 %v6526
  %7165 = vmatpush.bf16.msra.mxu0 %v6518
  %7166 = vmatpush.bf16.msra.mxu0 %v6510
  %7167 = vmatpush.bf16.msra.mxu0 %v6502
  %7168 = vmatpush.bf16.msra.mxu0 %v6494
  %7169 = vmatmul.bf16.gmra.mxu0 %v3979
  %v7170 = vpop.f32.mrf.mxu0
  %v7171 = vadd.f32 %v7158, %v7170
  %v7172 = vpop.f32.mrf.mxu0
  %7173 = vdwg.mxu0
  %7174 = vmatpush.bf16.msra.mxu0 %v6103
  %7175 = vmatpush.bf16.msra.mxu0 %v6095
  %7176 = vmatpush.bf16.msra.mxu0 %v6087
  %7177 = vmatpush.bf16.msra.mxu0 %v6079
  %7178 = vmatpush.bf16.msra.mxu0 %v6071
  %7179 = vmatpush.bf16.msra.mxu0 %v6063
  %7180 = vmatpush.bf16.msra.mxu0 %v6055
  %7181 = vmatpush.bf16.msra.mxu0 %v6047
  %7182 = vmatmul.bf16.gmra.mxu0 %v3972
  %v7183 = vpop.f32.mrf.mxu0
  %v7184 = vadd.f32 %v4495, %v7183
  %v7185 = vpop.f32.mrf.mxu0
  %7186 = vdwg.mxu0
  %7187 = vmatpush.bf16.msra.mxu0 %v6167
  %7188 = vmatpush.bf16.msra.mxu0 %v6159
  %7189 = vmatpush.bf16.msra.mxu0 %v6151
  %7190 = vmatpush.bf16.msra.mxu0 %v6143
  %7191 = vmatpush.bf16.msra.mxu0 %v6135
  %7192 = vmatpush.bf16.msra.mxu0 %v6127
  %7193 = vmatpush.bf16.msra.mxu0 %v6119
  %7194 = vmatpush.bf16.msra.mxu0 %v6111
  %7195 = vmatmul.bf16.gmra.mxu0 %v3973
  %v7196 = vpop.f32.mrf.mxu0
  %v7197 = vadd.f32 %v7184, %v7196
  %v7198 = vpop.f32.mrf.mxu0
  %7199 = vdwg.mxu0
  %7200 = vmatpush.bf16.msra.mxu0 %v6231
  %7201 = vmatpush.bf16.msra.mxu0 %v6223
  %7202 = vmatpush.bf16.msra.mxu0 %v6215
  %7203 = vmatpush.bf16.msra.mxu0 %v6207
  %7204 = vmatpush.bf16.msra.mxu0 %v6199
  %7205 = vmatpush.bf16.msra.mxu0 %v6191
  %7206 = vmatpush.bf16.msra.mxu0 %v6183
  %7207 = vmatpush.bf16.msra.mxu0 %v6175
  %7208 = vmatmul.bf16.gmra.mxu0 %v3974
  %v7209 = vpop.f32.mrf.mxu0
  %v7210 = vadd.f32 %v7197, %v7209
  %v7211 = vpop.f32.mrf.mxu0
  %7212 = vdwg.mxu0
  %7213 = vmatpush.bf16.msra.mxu0 %v6295
  %7214 = vmatpush.bf16.msra.mxu0 %v6287
  %7215 = vmatpush.bf16.msra.mxu0 %v6279
  %7216 = vmatpush.bf16.msra.mxu0 %v6271
  %7217 = vmatpush.bf16.msra.mxu0 %v6263
  %7218 = vmatpush.bf16.msra.mxu0 %v6255
  %7219 = vmatpush.bf16.msra.mxu0 %v6247
  %7220 = vmatpush.bf16.msra.mxu0 %v6239
  %7221 = vmatmul.bf16.gmra.mxu0 %v3975
  %v7222 = vpop.f32.mrf.mxu0
  %v7223 = vadd.f32 %v7210, %v7222
  %v7224 = vpop.f32.mrf.mxu0
  %7225 = vdwg.mxu0
  %7226 = vmatpush.bf16.msra.mxu0 %v6359
  %7227 = vmatpush.bf16.msra.mxu0 %v6351
  %7228 = vmatpush.bf16.msra.mxu0 %v6343
  %7229 = vmatpush.bf16.msra.mxu0 %v6335
  %7230 = vmatpush.bf16.msra.mxu0 %v6327
  %7231 = vmatpush.bf16.msra.mxu0 %v6319
  %7232 = vmatpush.bf16.msra.mxu0 %v6311
  %7233 = vmatpush.bf16.msra.mxu0 %v6303
  %7234 = vmatmul.bf16.gmra.mxu0 %v3976
  %v7235 = vpop.f32.mrf.mxu0
  %v7236 = vadd.f32 %v7223, %v7235
  %v7237 = vpop.f32.mrf.mxu0
  %7238 = vdwg.mxu0
  %7239 = vmatpush.bf16.msra.mxu0 %v6423
  %7240 = vmatpush.bf16.msra.mxu0 %v6415
  %7241 = vmatpush.bf16.msra.mxu0 %v6407
  %7242 = vmatpush.bf16.msra.mxu0 %v6399
  %7243 = vmatpush.bf16.msra.mxu0 %v6391
  %7244 = vmatpush.bf16.msra.mxu0 %v6383
  %7245 = vmatpush.bf16.msra.mxu0 %v6375
  %7246 = vmatpush.bf16.msra.mxu0 %v6367
  %7247 = vmatmul.bf16.gmra.mxu0 %v3977
  %v7248 = vpop.f32.mrf.mxu0
  %v7249 = vadd.f32 %v7236, %v7248
  %v7250 = vpop.f32.mrf.mxu0
  %7251 = vdwg.mxu0
  %7252 = vmatpush.bf16.msra.mxu0 %v6487
  %7253 = vmatpush.bf16.msra.mxu0 %v6479
  %7254 = vmatpush.bf16.msra.mxu0 %v6471
  %7255 = vmatpush.bf16.msra.mxu0 %v6463
  %7256 = vmatpush.bf16.msra.mxu0 %v6455
  %7257 = vmatpush.bf16.msra.mxu0 %v6447
  %7258 = vmatpush.bf16.msra.mxu0 %v6439
  %7259 = vmatpush.bf16.msra.mxu0 %v6431
  %7260 = vmatmul.bf16.gmra.mxu0 %v3978
  %v7261 = vpop.f32.mrf.mxu0
  %v7262 = vadd.f32 %v7249, %v7261
  %v7263 = vpop.f32.mrf.mxu0
  %7264 = vdwg.mxu0
  %7265 = vmatpush.bf16.msra.mxu0 %v6551
  %7266 = vmatpush.bf16.msra.mxu0 %v6543
  %7267 = vmatpush.bf16.msra.mxu0 %v6535
  %7268 = vmatpush.bf16.msra.mxu0 %v6527
  %7269 = vmatpush.bf16.msra.mxu0 %v6519
  %7270 = vmatpush.bf16.msra.mxu0 %v6511
  %7271 = vmatpush.bf16.msra.mxu0 %v6503
  %7272 = vmatpush.bf16.msra.mxu0 %v6495
  %7273 = vmatmul.bf16.gmra.mxu0 %v3979
  %v7274 = vpop.f32.mrf.mxu0
  %v7275 = vadd.f32 %v7262, %v7274
  %v7276 = vpop.f32.mrf.mxu0
  %7277 = vdwg.mxu0
  %7278 = vmatpush.bf16.msra.mxu0 %v6104
  %7279 = vmatpush.bf16.msra.mxu0 %v6096
  %7280 = vmatpush.bf16.msra.mxu0 %v6088
  %7281 = vmatpush.bf16.msra.mxu0 %v6080
  %7282 = vmatpush.bf16.msra.mxu0 %v6072
  %7283 = vmatpush.bf16.msra.mxu0 %v6064
  %7284 = vmatpush.bf16.msra.mxu0 %v6056
  %7285 = vmatpush.bf16.msra.mxu0 %v6048
  %7286 = vmatmul.bf16.gmra.mxu0 %v3972
  %v7287 = vpop.f32.mrf.mxu0
  %v7288 = vadd.f32 %v4496, %v7287
  %v7289 = vpop.f32.mrf.mxu0
  %7290 = vdwg.mxu0
  %7291 = vmatpush.bf16.msra.mxu0 %v6168
  %7292 = vmatpush.bf16.msra.mxu0 %v6160
  %7293 = vmatpush.bf16.msra.mxu0 %v6152
  %7294 = vmatpush.bf16.msra.mxu0 %v6144
  %7295 = vmatpush.bf16.msra.mxu0 %v6136
  %7296 = vmatpush.bf16.msra.mxu0 %v6128
  %7297 = vmatpush.bf16.msra.mxu0 %v6120
  %7298 = vmatpush.bf16.msra.mxu0 %v6112
  %7299 = vmatmul.bf16.gmra.mxu0 %v3973
  %v7300 = vpop.f32.mrf.mxu0
  %v7301 = vadd.f32 %v7288, %v7300
  %v7302 = vpop.f32.mrf.mxu0
  %7303 = vdwg.mxu0
  %7304 = vmatpush.bf16.msra.mxu0 %v6232
  %7305 = vmatpush.bf16.msra.mxu0 %v6224
  %7306 = vmatpush.bf16.msra.mxu0 %v6216
  %7307 = vmatpush.bf16.msra.mxu0 %v6208
  %7308 = vmatpush.bf16.msra.mxu0 %v6200
  %7309 = vmatpush.bf16.msra.mxu0 %v6192
  %7310 = vmatpush.bf16.msra.mxu0 %v6184
  %7311 = vmatpush.bf16.msra.mxu0 %v6176
  %7312 = vmatmul.bf16.gmra.mxu0 %v3974
  %v7313 = vpop.f32.mrf.mxu0
  %v7314 = vadd.f32 %v7301, %v7313
  %v7315 = vpop.f32.mrf.mxu0
  %7316 = vdwg.mxu0
  %7317 = vmatpush.bf16.msra.mxu0 %v6296
  %7318 = vmatpush.bf16.msra.mxu0 %v6288
  %7319 = vmatpush.bf16.msra.mxu0 %v6280
  %7320 = vmatpush.bf16.msra.mxu0 %v6272
  %7321 = vmatpush.bf16.msra.mxu0 %v6264
  %7322 = vmatpush.bf16.msra.mxu0 %v6256
  %7323 = vmatpush.bf16.msra.mxu0 %v6248
  %7324 = vmatpush.bf16.msra.mxu0 %v6240
  %7325 = vmatmul.bf16.gmra.mxu0 %v3975
  %v7326 = vpop.f32.mrf.mxu0
  %v7327 = vadd.f32 %v7314, %v7326
  %v7328 = vpop.f32.mrf.mxu0
  %7329 = vdwg.mxu0
  %7330 = vmatpush.bf16.msra.mxu0 %v6360
  %7331 = vmatpush.bf16.msra.mxu0 %v6352
  %7332 = vmatpush.bf16.msra.mxu0 %v6344
  %7333 = vmatpush.bf16.msra.mxu0 %v6336
  %7334 = vmatpush.bf16.msra.mxu0 %v6328
  %7335 = vmatpush.bf16.msra.mxu0 %v6320
  %7336 = vmatpush.bf16.msra.mxu0 %v6312
  %7337 = vmatpush.bf16.msra.mxu0 %v6304
  %7338 = vmatmul.bf16.gmra.mxu0 %v3976
  %v7339 = vpop.f32.mrf.mxu0
  %v7340 = vadd.f32 %v7327, %v7339
  %v7341 = vpop.f32.mrf.mxu0
  %7342 = vdwg.mxu0
  %7343 = vmatpush.bf16.msra.mxu0 %v6424
  %7344 = vmatpush.bf16.msra.mxu0 %v6416
  %7345 = vmatpush.bf16.msra.mxu0 %v6408
  %7346 = vmatpush.bf16.msra.mxu0 %v6400
  %7347 = vmatpush.bf16.msra.mxu0 %v6392
  %7348 = vmatpush.bf16.msra.mxu0 %v6384
  %7349 = vmatpush.bf16.msra.mxu0 %v6376
  %7350 = vmatpush.bf16.msra.mxu0 %v6368
  %7351 = vmatmul.bf16.gmra.mxu0 %v3977
  %v7352 = vpop.f32.mrf.mxu0
  %v7353 = vadd.f32 %v7340, %v7352
  %v7354 = vpop.f32.mrf.mxu0
  %7355 = vdwg.mxu0
  %7356 = vmatpush.bf16.msra.mxu0 %v6488
  %7357 = vmatpush.bf16.msra.mxu0 %v6480
  %7358 = vmatpush.bf16.msra.mxu0 %v6472
  %7359 = vmatpush.bf16.msra.mxu0 %v6464
  %7360 = vmatpush.bf16.msra.mxu0 %v6456
  %7361 = vmatpush.bf16.msra.mxu0 %v6448
  %7362 = vmatpush.bf16.msra.mxu0 %v6440
  %7363 = vmatpush.bf16.msra.mxu0 %v6432
  %7364 = vmatmul.bf16.gmra.mxu0 %v3978
  %v7365 = vpop.f32.mrf.mxu0
  %v7366 = vadd.f32 %v7353, %v7365
  %v7367 = vpop.f32.mrf.mxu0
  %7368 = vdwg.mxu0
  %7369 = vmatpush.bf16.msra.mxu0 %v6552
  %7370 = vmatpush.bf16.msra.mxu0 %v6544
  %7371 = vmatpush.bf16.msra.mxu0 %v6536
  %7372 = vmatpush.bf16.msra.mxu0 %v6528
  %7373 = vmatpush.bf16.msra.mxu0 %v6520
  %7374 = vmatpush.bf16.msra.mxu0 %v6512
  %7375 = vmatpush.bf16.msra.mxu0 %v6504
  %7376 = vmatpush.bf16.msra.mxu0 %v6496
  %7377 = vmatmul.bf16.gmra.mxu0 %v3979
  %v7378 = vpop.f32.mrf.mxu0
  %v7379 = vadd.f32 %v7366, %v7378
  %v7380 = vpop.f32.mrf.mxu0
  %7381 = vdwg.mxu0
  %7382 = vmatpush.bf16.msra.mxu0 %v6105
  %7383 = vmatpush.bf16.msra.mxu0 %v6097
  %7384 = vmatpush.bf16.msra.mxu0 %v6089
  %7385 = vmatpush.bf16.msra.mxu0 %v6081
  %7386 = vmatpush.bf16.msra.mxu0 %v6073
  %7387 = vmatpush.bf16.msra.mxu0 %v6065
  %7388 = vmatpush.bf16.msra.mxu0 %v6057
  %7389 = vmatpush.bf16.msra.mxu0 %v6049
  %7390 = vmatmul.bf16.gmra.mxu0 %v3972
  %v7391 = vpop.f32.mrf.mxu0
  %v7392 = vadd.f32 %v4497, %v7391
  %v7393 = vpop.f32.mrf.mxu0
  %7394 = vdwg.mxu0
  %7395 = vmatpush.bf16.msra.mxu0 %v6169
  %7396 = vmatpush.bf16.msra.mxu0 %v6161
  %7397 = vmatpush.bf16.msra.mxu0 %v6153
  %7398 = vmatpush.bf16.msra.mxu0 %v6145
  %7399 = vmatpush.bf16.msra.mxu0 %v6137
  %7400 = vmatpush.bf16.msra.mxu0 %v6129
  %7401 = vmatpush.bf16.msra.mxu0 %v6121
  %7402 = vmatpush.bf16.msra.mxu0 %v6113
  %7403 = vmatmul.bf16.gmra.mxu0 %v3973
  %v7404 = vpop.f32.mrf.mxu0
  %v7405 = vadd.f32 %v7392, %v7404
  %v7406 = vpop.f32.mrf.mxu0
  %7407 = vdwg.mxu0
  %7408 = vmatpush.bf16.msra.mxu0 %v6233
  %7409 = vmatpush.bf16.msra.mxu0 %v6225
  %7410 = vmatpush.bf16.msra.mxu0 %v6217
  %7411 = vmatpush.bf16.msra.mxu0 %v6209
  %7412 = vmatpush.bf16.msra.mxu0 %v6201
  %7413 = vmatpush.bf16.msra.mxu0 %v6193
  %7414 = vmatpush.bf16.msra.mxu0 %v6185
  %7415 = vmatpush.bf16.msra.mxu0 %v6177
  %7416 = vmatmul.bf16.gmra.mxu0 %v3974
  %v7417 = vpop.f32.mrf.mxu0
  %v7418 = vadd.f32 %v7405, %v7417
  %v7419 = vpop.f32.mrf.mxu0
  %7420 = vdwg.mxu0
  %7421 = vmatpush.bf16.msra.mxu0 %v6297
  %7422 = vmatpush.bf16.msra.mxu0 %v6289
  %7423 = vmatpush.bf16.msra.mxu0 %v6281
  %7424 = vmatpush.bf16.msra.mxu0 %v6273
  %7425 = vmatpush.bf16.msra.mxu0 %v6265
  %7426 = vmatpush.bf16.msra.mxu0 %v6257
  %7427 = vmatpush.bf16.msra.mxu0 %v6249
  %7428 = vmatpush.bf16.msra.mxu0 %v6241
  %7429 = vmatmul.bf16.gmra.mxu0 %v3975
  %v7430 = vpop.f32.mrf.mxu0
  %v7431 = vadd.f32 %v7418, %v7430
  %v7432 = vpop.f32.mrf.mxu0
  %7433 = vdwg.mxu0
  %7434 = vmatpush.bf16.msra.mxu0 %v6361
  %7435 = vmatpush.bf16.msra.mxu0 %v6353
  %7436 = vmatpush.bf16.msra.mxu0 %v6345
  %7437 = vmatpush.bf16.msra.mxu0 %v6337
  %7438 = vmatpush.bf16.msra.mxu0 %v6329
  %7439 = vmatpush.bf16.msra.mxu0 %v6321
  %7440 = vmatpush.bf16.msra.mxu0 %v6313
  %7441 = vmatpush.bf16.msra.mxu0 %v6305
  %7442 = vmatmul.bf16.gmra.mxu0 %v3976
  %v7443 = vpop.f32.mrf.mxu0
  %v7444 = vadd.f32 %v7431, %v7443
  %v7445 = vpop.f32.mrf.mxu0
  %7446 = vdwg.mxu0
  %7447 = vmatpush.bf16.msra.mxu0 %v6425
  %7448 = vmatpush.bf16.msra.mxu0 %v6417
  %7449 = vmatpush.bf16.msra.mxu0 %v6409
  %7450 = vmatpush.bf16.msra.mxu0 %v6401
  %7451 = vmatpush.bf16.msra.mxu0 %v6393
  %7452 = vmatpush.bf16.msra.mxu0 %v6385
  %7453 = vmatpush.bf16.msra.mxu0 %v6377
  %7454 = vmatpush.bf16.msra.mxu0 %v6369
  %7455 = vmatmul.bf16.gmra.mxu0 %v3977
  %v7456 = vpop.f32.mrf.mxu0
  %v7457 = vadd.f32 %v7444, %v7456
  %v7458 = vpop.f32.mrf.mxu0
  %7459 = vdwg.mxu0
  %7460 = vmatpush.bf16.msra.mxu0 %v6489
  %7461 = vmatpush.bf16.msra.mxu0 %v6481
  %7462 = vmatpush.bf16.msra.mxu0 %v6473
  %7463 = vmatpush.bf16.msra.mxu0 %v6465
  %7464 = vmatpush.bf16.msra.mxu0 %v6457
  %7465 = vmatpush.bf16.msra.mxu0 %v6449
  %7466 = vmatpush.bf16.msra.mxu0 %v6441
  %7467 = vmatpush.bf16.msra.mxu0 %v6433
  %7468 = vmatmul.bf16.gmra.mxu0 %v3978
  %v7469 = vpop.f32.mrf.mxu0
  %v7470 = vadd.f32 %v7457, %v7469
  %v7471 = vpop.f32.mrf.mxu0
  %7472 = vdwg.mxu0
  %7473 = vmatpush.bf16.msra.mxu0 %v6553
  %7474 = vmatpush.bf16.msra.mxu0 %v6545
  %7475 = vmatpush.bf16.msra.mxu0 %v6537
  %7476 = vmatpush.bf16.msra.mxu0 %v6529
  %7477 = vmatpush.bf16.msra.mxu0 %v6521
  %7478 = vmatpush.bf16.msra.mxu0 %v6513
  %7479 = vmatpush.bf16.msra.mxu0 %v6505
  %7480 = vmatpush.bf16.msra.mxu0 %v6497
  %7481 = vmatmul.bf16.gmra.mxu0 %v3979
  %v7482 = vpop.f32.mrf.mxu0
  %v7483 = vadd.f32 %v7470, %v7482
  %v7484 = vpop.f32.mrf.mxu0
  %7485 = vdwg.mxu0
  %7486 = vmatpush.bf16.msra.mxu0 %v6106
  %7487 = vmatpush.bf16.msra.mxu0 %v6098
  %7488 = vmatpush.bf16.msra.mxu0 %v6090
  %7489 = vmatpush.bf16.msra.mxu0 %v6082
  %7490 = vmatpush.bf16.msra.mxu0 %v6074
  %7491 = vmatpush.bf16.msra.mxu0 %v6066
  %7492 = vmatpush.bf16.msra.mxu0 %v6058
  %7493 = vmatpush.bf16.msra.mxu0 %v6050
  %7494 = vmatmul.bf16.gmra.mxu0 %v3972
  %v7495 = vpop.f32.mrf.mxu0
  %v7496 = vadd.f32 %v4498, %v7495
  %v7497 = vpop.f32.mrf.mxu0
  %7498 = vdwg.mxu0
  %7499 = vmatpush.bf16.msra.mxu0 %v6170
  %7500 = vmatpush.bf16.msra.mxu0 %v6162
  %7501 = vmatpush.bf16.msra.mxu0 %v6154
  %7502 = vmatpush.bf16.msra.mxu0 %v6146
  %7503 = vmatpush.bf16.msra.mxu0 %v6138
  %7504 = vmatpush.bf16.msra.mxu0 %v6130
  %7505 = vmatpush.bf16.msra.mxu0 %v6122
  %7506 = vmatpush.bf16.msra.mxu0 %v6114
  %7507 = vmatmul.bf16.gmra.mxu0 %v3973
  %v7508 = vpop.f32.mrf.mxu0
  %v7509 = vadd.f32 %v7496, %v7508
  %v7510 = vpop.f32.mrf.mxu0
  %7511 = vdwg.mxu0
  %7512 = vmatpush.bf16.msra.mxu0 %v6234
  %7513 = vmatpush.bf16.msra.mxu0 %v6226
  %7514 = vmatpush.bf16.msra.mxu0 %v6218
  %7515 = vmatpush.bf16.msra.mxu0 %v6210
  %7516 = vmatpush.bf16.msra.mxu0 %v6202
  %7517 = vmatpush.bf16.msra.mxu0 %v6194
  %7518 = vmatpush.bf16.msra.mxu0 %v6186
  %7519 = vmatpush.bf16.msra.mxu0 %v6178
  %7520 = vmatmul.bf16.gmra.mxu0 %v3974
  %v7521 = vpop.f32.mrf.mxu0
  %v7522 = vadd.f32 %v7509, %v7521
  %v7523 = vpop.f32.mrf.mxu0
  %7524 = vdwg.mxu0
  %7525 = vmatpush.bf16.msra.mxu0 %v6298
  %7526 = vmatpush.bf16.msra.mxu0 %v6290
  %7527 = vmatpush.bf16.msra.mxu0 %v6282
  %7528 = vmatpush.bf16.msra.mxu0 %v6274
  %7529 = vmatpush.bf16.msra.mxu0 %v6266
  %7530 = vmatpush.bf16.msra.mxu0 %v6258
  %7531 = vmatpush.bf16.msra.mxu0 %v6250
  %7532 = vmatpush.bf16.msra.mxu0 %v6242
  %7533 = vmatmul.bf16.gmra.mxu0 %v3975
  %v7534 = vpop.f32.mrf.mxu0
  %v7535 = vadd.f32 %v7522, %v7534
  %v7536 = vpop.f32.mrf.mxu0
  %7537 = vdwg.mxu0
  %7538 = vmatpush.bf16.msra.mxu0 %v6362
  %7539 = vmatpush.bf16.msra.mxu0 %v6354
  %7540 = vmatpush.bf16.msra.mxu0 %v6346
  %7541 = vmatpush.bf16.msra.mxu0 %v6338
  %7542 = vmatpush.bf16.msra.mxu0 %v6330
  %7543 = vmatpush.bf16.msra.mxu0 %v6322
  %7544 = vmatpush.bf16.msra.mxu0 %v6314
  %7545 = vmatpush.bf16.msra.mxu0 %v6306
  %7546 = vmatmul.bf16.gmra.mxu0 %v3976
  %v7547 = vpop.f32.mrf.mxu0
  %v7548 = vadd.f32 %v7535, %v7547
  %v7549 = vpop.f32.mrf.mxu0
  %7550 = vdwg.mxu0
  %7551 = vmatpush.bf16.msra.mxu0 %v6426
  %7552 = vmatpush.bf16.msra.mxu0 %v6418
  %7553 = vmatpush.bf16.msra.mxu0 %v6410
  %7554 = vmatpush.bf16.msra.mxu0 %v6402
  %7555 = vmatpush.bf16.msra.mxu0 %v6394
  %7556 = vmatpush.bf16.msra.mxu0 %v6386
  %7557 = vmatpush.bf16.msra.mxu0 %v6378
  %7558 = vmatpush.bf16.msra.mxu0 %v6370
  %7559 = vmatmul.bf16.gmra.mxu0 %v3977
  %v7560 = vpop.f32.mrf.mxu0
  %v7561 = vadd.f32 %v7548, %v7560
  %v7562 = vpop.f32.mrf.mxu0
  %7563 = vdwg.mxu0
  %7564 = vmatpush.bf16.msra.mxu0 %v6490
  %7565 = vmatpush.bf16.msra.mxu0 %v6482
  %7566 = vmatpush.bf16.msra.mxu0 %v6474
  %7567 = vmatpush.bf16.msra.mxu0 %v6466
  %7568 = vmatpush.bf16.msra.mxu0 %v6458
  %7569 = vmatpush.bf16.msra.mxu0 %v6450
  %7570 = vmatpush.bf16.msra.mxu0 %v6442
  %7571 = vmatpush.bf16.msra.mxu0 %v6434
  %7572 = vmatmul.bf16.gmra.mxu0 %v3978
  %v7573 = vpop.f32.mrf.mxu0
  %v7574 = vadd.f32 %v7561, %v7573
  %v7575 = vpop.f32.mrf.mxu0
  %7576 = vdwg.mxu0
  %7577 = vmatpush.bf16.msra.mxu0 %v6554
  %7578 = vmatpush.bf16.msra.mxu0 %v6546
  %7579 = vmatpush.bf16.msra.mxu0 %v6538
  %7580 = vmatpush.bf16.msra.mxu0 %v6530
  %7581 = vmatpush.bf16.msra.mxu0 %v6522
  %7582 = vmatpush.bf16.msra.mxu0 %v6514
  %7583 = vmatpush.bf16.msra.mxu0 %v6506
  %7584 = vmatpush.bf16.msra.mxu0 %v6498
  %7585 = vmatmul.bf16.gmra.mxu0 %v3979
  %v7586 = vpop.f32.mrf.mxu0
  %v7587 = vadd.f32 %v7574, %v7586
  %v7588 = vpop.f32.mrf.mxu0
  %7589 = vdwg.mxu0
  %7590 = vmatpush.bf16.msra.mxu0 %v6107
  %7591 = vmatpush.bf16.msra.mxu0 %v6099
  %7592 = vmatpush.bf16.msra.mxu0 %v6091
  %7593 = vmatpush.bf16.msra.mxu0 %v6083
  %7594 = vmatpush.bf16.msra.mxu0 %v6075
  %7595 = vmatpush.bf16.msra.mxu0 %v6067
  %7596 = vmatpush.bf16.msra.mxu0 %v6059
  %7597 = vmatpush.bf16.msra.mxu0 %v6051
  %7598 = vmatmul.bf16.gmra.mxu0 %v3972
  %v7599 = vpop.f32.mrf.mxu0
  %v7600 = vadd.f32 %v4499, %v7599
  %v7601 = vpop.f32.mrf.mxu0
  %7602 = vdwg.mxu0
  %7603 = vmatpush.bf16.msra.mxu0 %v6171
  %7604 = vmatpush.bf16.msra.mxu0 %v6163
  %7605 = vmatpush.bf16.msra.mxu0 %v6155
  %7606 = vmatpush.bf16.msra.mxu0 %v6147
  %7607 = vmatpush.bf16.msra.mxu0 %v6139
  %7608 = vmatpush.bf16.msra.mxu0 %v6131
  %7609 = vmatpush.bf16.msra.mxu0 %v6123
  %7610 = vmatpush.bf16.msra.mxu0 %v6115
  %7611 = vmatmul.bf16.gmra.mxu0 %v3973
  %v7612 = vpop.f32.mrf.mxu0
  %v7613 = vadd.f32 %v7600, %v7612
  %v7614 = vpop.f32.mrf.mxu0
  %7615 = vdwg.mxu0
  %7616 = vmatpush.bf16.msra.mxu0 %v6235
  %7617 = vmatpush.bf16.msra.mxu0 %v6227
  %7618 = vmatpush.bf16.msra.mxu0 %v6219
  %7619 = vmatpush.bf16.msra.mxu0 %v6211
  %7620 = vmatpush.bf16.msra.mxu0 %v6203
  %7621 = vmatpush.bf16.msra.mxu0 %v6195
  %7622 = vmatpush.bf16.msra.mxu0 %v6187
  %7623 = vmatpush.bf16.msra.mxu0 %v6179
  %7624 = vmatmul.bf16.gmra.mxu0 %v3974
  %v7625 = vpop.f32.mrf.mxu0
  %v7626 = vadd.f32 %v7613, %v7625
  %v7627 = vpop.f32.mrf.mxu0
  %7628 = vdwg.mxu0
  %7629 = vmatpush.bf16.msra.mxu0 %v6299
  %7630 = vmatpush.bf16.msra.mxu0 %v6291
  %7631 = vmatpush.bf16.msra.mxu0 %v6283
  %7632 = vmatpush.bf16.msra.mxu0 %v6275
  %7633 = vmatpush.bf16.msra.mxu0 %v6267
  %7634 = vmatpush.bf16.msra.mxu0 %v6259
  %7635 = vmatpush.bf16.msra.mxu0 %v6251
  %7636 = vmatpush.bf16.msra.mxu0 %v6243
  %7637 = vmatmul.bf16.gmra.mxu0 %v3975
  %v7638 = vpop.f32.mrf.mxu0
  %v7639 = vadd.f32 %v7626, %v7638
  %v7640 = vpop.f32.mrf.mxu0
  %7641 = vdwg.mxu0
  %7642 = vmatpush.bf16.msra.mxu0 %v6363
  %7643 = vmatpush.bf16.msra.mxu0 %v6355
  %7644 = vmatpush.bf16.msra.mxu0 %v6347
  %7645 = vmatpush.bf16.msra.mxu0 %v6339
  %7646 = vmatpush.bf16.msra.mxu0 %v6331
  %7647 = vmatpush.bf16.msra.mxu0 %v6323
  %7648 = vmatpush.bf16.msra.mxu0 %v6315
  %7649 = vmatpush.bf16.msra.mxu0 %v6307
  %7650 = vmatmul.bf16.gmra.mxu0 %v3976
  %v7651 = vpop.f32.mrf.mxu0
  %v7652 = vadd.f32 %v7639, %v7651
  %v7653 = vpop.f32.mrf.mxu0
  %7654 = vdwg.mxu0
  %7655 = vmatpush.bf16.msra.mxu0 %v6427
  %7656 = vmatpush.bf16.msra.mxu0 %v6419
  %7657 = vmatpush.bf16.msra.mxu0 %v6411
  %7658 = vmatpush.bf16.msra.mxu0 %v6403
  %7659 = vmatpush.bf16.msra.mxu0 %v6395
  %7660 = vmatpush.bf16.msra.mxu0 %v6387
  %7661 = vmatpush.bf16.msra.mxu0 %v6379
  %7662 = vmatpush.bf16.msra.mxu0 %v6371
  %7663 = vmatmul.bf16.gmra.mxu0 %v3977
  %v7664 = vpop.f32.mrf.mxu0
  %v7665 = vadd.f32 %v7652, %v7664
  %v7666 = vpop.f32.mrf.mxu0
  %7667 = vdwg.mxu0
  %7668 = vmatpush.bf16.msra.mxu0 %v6491
  %7669 = vmatpush.bf16.msra.mxu0 %v6483
  %7670 = vmatpush.bf16.msra.mxu0 %v6475
  %7671 = vmatpush.bf16.msra.mxu0 %v6467
  %7672 = vmatpush.bf16.msra.mxu0 %v6459
  %7673 = vmatpush.bf16.msra.mxu0 %v6451
  %7674 = vmatpush.bf16.msra.mxu0 %v6443
  %7675 = vmatpush.bf16.msra.mxu0 %v6435
  %7676 = vmatmul.bf16.gmra.mxu0 %v3978
  %v7677 = vpop.f32.mrf.mxu0
  %v7678 = vadd.f32 %v7665, %v7677
  %v7679 = vpop.f32.mrf.mxu0
  %7680 = vdwg.mxu0
  %7681 = vmatpush.bf16.msra.mxu0 %v6555
  %7682 = vmatpush.bf16.msra.mxu0 %v6547
  %7683 = vmatpush.bf16.msra.mxu0 %v6539
  %7684 = vmatpush.bf16.msra.mxu0 %v6531
  %7685 = vmatpush.bf16.msra.mxu0 %v6523
  %7686 = vmatpush.bf16.msra.mxu0 %v6515
  %7687 = vmatpush.bf16.msra.mxu0 %v6507
  %7688 = vmatpush.bf16.msra.mxu0 %v6499
  %7689 = vmatmul.bf16.gmra.mxu0 %v3979
  %v7690 = vpop.f32.mrf.mxu0
  %v7691 = vadd.f32 %v7678, %v7690
  %v7692 = vpop.f32.mrf.mxu0
  %7693 = vdwg.mxu0
  %7694 = vmatpush.bf16.msra.mxu0 %v6108
  %7695 = vmatpush.bf16.msra.mxu0 %v6100
  %7696 = vmatpush.bf16.msra.mxu0 %v6092
  %7697 = vmatpush.bf16.msra.mxu0 %v6084
  %7698 = vmatpush.bf16.msra.mxu0 %v6076
  %7699 = vmatpush.bf16.msra.mxu0 %v6068
  %7700 = vmatpush.bf16.msra.mxu0 %v6060
  %7701 = vmatpush.bf16.msra.mxu0 %v6052
  %7702 = vmatmul.bf16.gmra.mxu0 %v3972
  %v7703 = vpop.f32.mrf.mxu0
  %v7704 = vadd.f32 %v4500, %v7703
  %v7705 = vpop.f32.mrf.mxu0
  %7706 = vdwg.mxu0
  %7707 = vmatpush.bf16.msra.mxu0 %v6172
  %7708 = vmatpush.bf16.msra.mxu0 %v6164
  %7709 = vmatpush.bf16.msra.mxu0 %v6156
  %7710 = vmatpush.bf16.msra.mxu0 %v6148
  %7711 = vmatpush.bf16.msra.mxu0 %v6140
  %7712 = vmatpush.bf16.msra.mxu0 %v6132
  %7713 = vmatpush.bf16.msra.mxu0 %v6124
  %7714 = vmatpush.bf16.msra.mxu0 %v6116
  %7715 = vmatmul.bf16.gmra.mxu0 %v3973
  %v7716 = vpop.f32.mrf.mxu0
  %v7717 = vadd.f32 %v7704, %v7716
  %v7718 = vpop.f32.mrf.mxu0
  %7719 = vdwg.mxu0
  %7720 = vmatpush.bf16.msra.mxu0 %v6236
  %7721 = vmatpush.bf16.msra.mxu0 %v6228
  %7722 = vmatpush.bf16.msra.mxu0 %v6220
  %7723 = vmatpush.bf16.msra.mxu0 %v6212
  %7724 = vmatpush.bf16.msra.mxu0 %v6204
  %7725 = vmatpush.bf16.msra.mxu0 %v6196
  %7726 = vmatpush.bf16.msra.mxu0 %v6188
  %7727 = vmatpush.bf16.msra.mxu0 %v6180
  %7728 = vmatmul.bf16.gmra.mxu0 %v3974
  %v7729 = vpop.f32.mrf.mxu0
  %v7730 = vadd.f32 %v7717, %v7729
  %v7731 = vpop.f32.mrf.mxu0
  %7732 = vdwg.mxu0
  %7733 = vmatpush.bf16.msra.mxu0 %v6300
  %7734 = vmatpush.bf16.msra.mxu0 %v6292
  %7735 = vmatpush.bf16.msra.mxu0 %v6284
  %7736 = vmatpush.bf16.msra.mxu0 %v6276
  %7737 = vmatpush.bf16.msra.mxu0 %v6268
  %7738 = vmatpush.bf16.msra.mxu0 %v6260
  %7739 = vmatpush.bf16.msra.mxu0 %v6252
  %7740 = vmatpush.bf16.msra.mxu0 %v6244
  %7741 = vmatmul.bf16.gmra.mxu0 %v3975
  %v7742 = vpop.f32.mrf.mxu0
  %v7743 = vadd.f32 %v7730, %v7742
  %v7744 = vpop.f32.mrf.mxu0
  %7745 = vdwg.mxu0
  %7746 = vmatpush.bf16.msra.mxu0 %v6364
  %7747 = vmatpush.bf16.msra.mxu0 %v6356
  %7748 = vmatpush.bf16.msra.mxu0 %v6348
  %7749 = vmatpush.bf16.msra.mxu0 %v6340
  %7750 = vmatpush.bf16.msra.mxu0 %v6332
  %7751 = vmatpush.bf16.msra.mxu0 %v6324
  %7752 = vmatpush.bf16.msra.mxu0 %v6316
  %7753 = vmatpush.bf16.msra.mxu0 %v6308
  %7754 = vmatmul.bf16.gmra.mxu0 %v3976
  %v7755 = vpop.f32.mrf.mxu0
  %v7756 = vadd.f32 %v7743, %v7755
  %v7757 = vpop.f32.mrf.mxu0
  %7758 = vdwg.mxu0
  %7759 = vmatpush.bf16.msra.mxu0 %v6428
  %7760 = vmatpush.bf16.msra.mxu0 %v6420
  %7761 = vmatpush.bf16.msra.mxu0 %v6412
  %7762 = vmatpush.bf16.msra.mxu0 %v6404
  %7763 = vmatpush.bf16.msra.mxu0 %v6396
  %7764 = vmatpush.bf16.msra.mxu0 %v6388
  %7765 = vmatpush.bf16.msra.mxu0 %v6380
  %7766 = vmatpush.bf16.msra.mxu0 %v6372
  %7767 = vmatmul.bf16.gmra.mxu0 %v3977
  %v7768 = vpop.f32.mrf.mxu0
  %v7769 = vadd.f32 %v7756, %v7768
  %v7770 = vpop.f32.mrf.mxu0
  %7771 = vdwg.mxu0
  %7772 = vmatpush.bf16.msra.mxu0 %v6492
  %7773 = vmatpush.bf16.msra.mxu0 %v6484
  %7774 = vmatpush.bf16.msra.mxu0 %v6476
  %7775 = vmatpush.bf16.msra.mxu0 %v6468
  %7776 = vmatpush.bf16.msra.mxu0 %v6460
  %7777 = vmatpush.bf16.msra.mxu0 %v6452
  %7778 = vmatpush.bf16.msra.mxu0 %v6444
  %7779 = vmatpush.bf16.msra.mxu0 %v6436
  %7780 = vmatmul.bf16.gmra.mxu0 %v3978
  %v7781 = vpop.f32.mrf.mxu0
  %v7782 = vadd.f32 %v7769, %v7781
  %v7783 = vpop.f32.mrf.mxu0
  %7784 = vdwg.mxu0
  %7785 = vmatpush.bf16.msra.mxu0 %v6556
  %7786 = vmatpush.bf16.msra.mxu0 %v6548
  %7787 = vmatpush.bf16.msra.mxu0 %v6540
  %7788 = vmatpush.bf16.msra.mxu0 %v6532
  %7789 = vmatpush.bf16.msra.mxu0 %v6524
  %7790 = vmatpush.bf16.msra.mxu0 %v6516
  %7791 = vmatpush.bf16.msra.mxu0 %v6508
  %7792 = vmatpush.bf16.msra.mxu0 %v6500
  %7793 = vmatmul.bf16.gmra.mxu0 %v3979
  %v7794 = vpop.f32.mrf.mxu0
  %v7795 = vadd.f32 %v7782, %v7794
  %v7796 = vpop.f32.mrf.mxu0
  %7797 = vdwg.mxu0
  %7798 = vmatpush.bf16.msra.mxu0 %v6109
  %7799 = vmatpush.bf16.msra.mxu0 %v6101
  %7800 = vmatpush.bf16.msra.mxu0 %v6093
  %7801 = vmatpush.bf16.msra.mxu0 %v6085
  %7802 = vmatpush.bf16.msra.mxu0 %v6077
  %7803 = vmatpush.bf16.msra.mxu0 %v6069
  %7804 = vmatpush.bf16.msra.mxu0 %v6061
  %7805 = vmatpush.bf16.msra.mxu0 %v6053
  %7806 = vmatmul.bf16.gmra.mxu0 %v3972
  %v7807 = vpop.f32.mrf.mxu0
  %v7808 = vadd.f32 %v4501, %v7807
  %v7809 = vpop.f32.mrf.mxu0
  %7810 = vdwg.mxu0
  %7811 = vmatpush.bf16.msra.mxu0 %v6173
  %7812 = vmatpush.bf16.msra.mxu0 %v6165
  %7813 = vmatpush.bf16.msra.mxu0 %v6157
  %7814 = vmatpush.bf16.msra.mxu0 %v6149
  %7815 = vmatpush.bf16.msra.mxu0 %v6141
  %7816 = vmatpush.bf16.msra.mxu0 %v6133
  %7817 = vmatpush.bf16.msra.mxu0 %v6125
  %7818 = vmatpush.bf16.msra.mxu0 %v6117
  %7819 = vmatmul.bf16.gmra.mxu0 %v3973
  %v7820 = vpop.f32.mrf.mxu0
  %v7821 = vadd.f32 %v7808, %v7820
  %v7822 = vpop.f32.mrf.mxu0
  %7823 = vdwg.mxu0
  %7824 = vmatpush.bf16.msra.mxu0 %v6237
  %7825 = vmatpush.bf16.msra.mxu0 %v6229
  %7826 = vmatpush.bf16.msra.mxu0 %v6221
  %7827 = vmatpush.bf16.msra.mxu0 %v6213
  %7828 = vmatpush.bf16.msra.mxu0 %v6205
  %7829 = vmatpush.bf16.msra.mxu0 %v6197
  %7830 = vmatpush.bf16.msra.mxu0 %v6189
  %7831 = vmatpush.bf16.msra.mxu0 %v6181
  %7832 = vmatmul.bf16.gmra.mxu0 %v3974
  %v7833 = vpop.f32.mrf.mxu0
  %v7834 = vadd.f32 %v7821, %v7833
  %v7835 = vpop.f32.mrf.mxu0
  %7836 = vdwg.mxu0
  %7837 = vmatpush.bf16.msra.mxu0 %v6301
  %7838 = vmatpush.bf16.msra.mxu0 %v6293
  %7839 = vmatpush.bf16.msra.mxu0 %v6285
  %7840 = vmatpush.bf16.msra.mxu0 %v6277
  %7841 = vmatpush.bf16.msra.mxu0 %v6269
  %7842 = vmatpush.bf16.msra.mxu0 %v6261
  %7843 = vmatpush.bf16.msra.mxu0 %v6253
  %7844 = vmatpush.bf16.msra.mxu0 %v6245
  %7845 = vmatmul.bf16.gmra.mxu0 %v3975
  %v7846 = vpop.f32.mrf.mxu0
  %v7847 = vadd.f32 %v7834, %v7846
  %v7848 = vpop.f32.mrf.mxu0
  %7849 = vdwg.mxu0
  %7850 = vmatpush.bf16.msra.mxu0 %v6365
  %7851 = vmatpush.bf16.msra.mxu0 %v6357
  %7852 = vmatpush.bf16.msra.mxu0 %v6349
  %7853 = vmatpush.bf16.msra.mxu0 %v6341
  %7854 = vmatpush.bf16.msra.mxu0 %v6333
  %7855 = vmatpush.bf16.msra.mxu0 %v6325
  %7856 = vmatpush.bf16.msra.mxu0 %v6317
  %7857 = vmatpush.bf16.msra.mxu0 %v6309
  %7858 = vmatmul.bf16.gmra.mxu0 %v3976
  %v7859 = vpop.f32.mrf.mxu0
  %v7860 = vadd.f32 %v7847, %v7859
  %v7861 = vpop.f32.mrf.mxu0
  %7862 = vdwg.mxu0
  %7863 = vmatpush.bf16.msra.mxu0 %v6429
  %7864 = vmatpush.bf16.msra.mxu0 %v6421
  %7865 = vmatpush.bf16.msra.mxu0 %v6413
  %7866 = vmatpush.bf16.msra.mxu0 %v6405
  %7867 = vmatpush.bf16.msra.mxu0 %v6397
  %7868 = vmatpush.bf16.msra.mxu0 %v6389
  %7869 = vmatpush.bf16.msra.mxu0 %v6381
  %7870 = vmatpush.bf16.msra.mxu0 %v6373
  %7871 = vmatmul.bf16.gmra.mxu0 %v3977
  %v7872 = vpop.f32.mrf.mxu0
  %v7873 = vadd.f32 %v7860, %v7872
  %v7874 = vpop.f32.mrf.mxu0
  %7875 = vdwg.mxu0
  %7876 = vmatpush.bf16.msra.mxu0 %v6493
  %7877 = vmatpush.bf16.msra.mxu0 %v6485
  %7878 = vmatpush.bf16.msra.mxu0 %v6477
  %7879 = vmatpush.bf16.msra.mxu0 %v6469
  %7880 = vmatpush.bf16.msra.mxu0 %v6461
  %7881 = vmatpush.bf16.msra.mxu0 %v6453
  %7882 = vmatpush.bf16.msra.mxu0 %v6445
  %7883 = vmatpush.bf16.msra.mxu0 %v6437
  %7884 = vmatmul.bf16.gmra.mxu0 %v3978
  %v7885 = vpop.f32.mrf.mxu0
  %v7886 = vadd.f32 %v7873, %v7885
  %v7887 = vpop.f32.mrf.mxu0
  %7888 = vdwg.mxu0
  %7889 = vmatpush.bf16.msra.mxu0 %v6557
  %7890 = vmatpush.bf16.msra.mxu0 %v6549
  %7891 = vmatpush.bf16.msra.mxu0 %v6541
  %7892 = vmatpush.bf16.msra.mxu0 %v6533
  %7893 = vmatpush.bf16.msra.mxu0 %v6525
  %7894 = vmatpush.bf16.msra.mxu0 %v6517
  %7895 = vmatpush.bf16.msra.mxu0 %v6509
  %7896 = vmatpush.bf16.msra.mxu0 %v6501
  %7897 = vmatmul.bf16.gmra.mxu0 %v3979
  %v7898 = vpop.f32.mrf.mxu0
  %v7899 = vadd.f32 %v7886, %v7898
  %v7900 = vpop.f32.mrf.mxu0
  %7901 = vdwg.mxu0
  %vm7902 = vcmp.ge.f32.partialorder %v7171, 0.0
  %vm7903 = vcmp.ge.f32.partialorder %v7275, 0.0
  %vm7904 = vcmp.ge.f32.partialorder %v7379, 0.0
  %vm7905 = vcmp.ge.f32.partialorder %v7483, 0.0
  %vm7906 = vcmp.ge.f32.partialorder %v7587, 0.0
  %vm7907 = vcmp.ge.f32.partialorder %v7691, 0.0
  %vm7908 = vcmp.ge.f32.partialorder %v7795, 0.0
  %vm7909 = vcmp.ge.f32.partialorder %v7899, 0.0
  %v7910 = vmul.f32 %v7171, 0.01
  %v7911 = vmul.f32 %v7275, 0.01
  %v7912 = vmul.f32 %v7379, 0.01
  %v7913 = vmul.f32 %v7483, 0.01
  %v7914 = vmul.f32 %v7587, 0.01
  %v7915 = vmul.f32 %v7691, 0.01
  %v7916 = vmul.f32 %v7795, 0.01
  %v7917 = vmul.f32 %v7899, 0.01
  %v7918 = vsel %vm7902, %v7171, %v7910
  %v7919 = vsel %vm7903, %v7275, %v7911
  %v7920 = vsel %vm7904, %v7379, %v7912
  %v7921 = vsel %vm7905, %v7483, %v7913
  %v7922 = vsel %vm7906, %v7587, %v7914
  %v7923 = vsel %vm7907, %v7691, %v7915
  %v7924 = vsel %vm7908, %v7795, %v7916
  %v7925 = vsel %vm7909, %v7899, %v7917
  %v7926 = vpack.c.bf16 %v7918, %v7918
  %v7927 = vpack.c.bf16 %v7919, %v7919
  %v7928 = vpack.c.bf16 %v7920, %v7920
  %v7929 = vpack.c.bf16 %v7921, %v7921
  %v7930 = vpack.c.bf16 %v7922, %v7922
  %v7931 = vpack.c.bf16 %v7923, %v7923
  %v7932 = vpack.c.bf16 %v7924, %v7924
  %v7933 = vpack.c.bf16 %v7925, %v7925
  %v7934 = vld [vmem:[%s4] sm:$0xf]
  %v7935 = vld [vmem:[%s4 + $0x4] sm:$0xf]
  %v7936 = vld [vmem:[%s4 + $0x8] sm:$0xf]
  %v7937 = vld [vmem:[%s4 + $0xc] sm:$0xf]
  %v7938 = vld [vmem:[%s4 + $0x10] sm:$0xf]
  %v7939 = vld [vmem:[%s4 + $0x14] sm:$0xf]
  %v7940 = vld [vmem:[%s4 + $0x18] sm:$0xf]
  %v7941 = vld [vmem:[%s4 + $0x1c] sm:$0xf]
  %v7942 = vld [vmem:[%s4 + $0x20] sm:$0xf]
  %v7943 = vld [vmem:[%s4 + $0x24] sm:$0xf]
  %v7944 = vld [vmem:[%s4 + $0x28] sm:$0xf]
  %v7945 = vld [vmem:[%s4 + $0x2c] sm:$0xf]
  %v7946 = vld [vmem:[%s4 + $0x30] sm:$0xf]
  %v7947 = vld [vmem:[%s4 + $0x34] sm:$0xf]
  %v7948 = vld [vmem:[%s4 + $0x38] sm:$0xf]
  %v7949 = vld [vmem:[%s4 + $0x3c] sm:$0xf]
  %v7950 = vld [vmem:[%s4 + $0x40] sm:$0xf]
  %v7951 = vld [vmem:[%s4 + $0x44] sm:$0xf]
  %v7952 = vld [vmem:[%s4 + $0x48] sm:$0xf]
  %v7953 = vld [vmem:[%s4 + $0x4c] sm:$0xf]
  %v7954 = vld [vmem:[%s4 + $0x50] sm:$0xf]
  %v7955 = vld [vmem:[%s4 + $0x54] sm:$0xf]
  %v7956 = vld [vmem:[%s4 + $0x58] sm:$0xf]
  %v7957 = vld [vmem:[%s4 + $0x5c] sm:$0xf]
  %v7958 = vld [vmem:[%s4 + $0x60] sm:$0xf]
  %v7959 = vld [vmem:[%s4 + $0x64] sm:$0xf]
  %v7960 = vld [vmem:[%s4 + $0x68] sm:$0xf]
  %v7961 = vld [vmem:[%s4 + $0x6c] sm:$0xf]
  %v7962 = vld [vmem:[%s4 + $0x70] sm:$0xf]
  %v7963 = vld [vmem:[%s4 + $0x74] sm:$0xf]
  %v7964 = vld [vmem:[%s4 + $0x78] sm:$0xf]
  %v7965 = vld [vmem:[%s4 + $0x7c] sm:$0xf]
  %v7966 = vld [vmem:[%s4 + $0x80] sm:$0xf]
  %v7967 = vld [vmem:[%s4 + $0x84] sm:$0xf]
  %v7968 = vld [vmem:[%s4 + $0x88] sm:$0xf]
  %v7969 = vld [vmem:[%s4 + $0x8c] sm:$0xf]
  %v7970 = vld [vmem:[%s4 + $0x90] sm:$0xf]
  %v7971 = vld [vmem:[%s4 + $0x94] sm:$0xf]
  %v7972 = vld [vmem:[%s4 + $0x98] sm:$0xf]
  %v7973 = vld [vmem:[%s4 + $0x9c] sm:$0xf]
  %v7974 = vld [vmem:[%s4 + $0xa0] sm:$0xf]
  %v7975 = vld [vmem:[%s4 + $0xa4] sm:$0xf]
  %v7976 = vld [vmem:[%s4 + $0xa8] sm:$0xf]
  %v7977 = vld [vmem:[%s4 + $0xac] sm:$0xf]
  %v7978 = vld [vmem:[%s4 + $0xb0] sm:$0xf]
  %v7979 = vld [vmem:[%s4 + $0xb4] sm:$0xf]
  %v7980 = vld [vmem:[%s4 + $0xb8] sm:$0xf]
  %v7981 = vld [vmem:[%s4 + $0xbc] sm:$0xf]
  %v7982 = vld [vmem:[%s4 + $0xc0] sm:$0xf]
  %v7983 = vld [vmem:[%s4 + $0xc4] sm:$0xf]
  %v7984 = vld [vmem:[%s4 + $0xc8] sm:$0xf]
  %v7985 = vld [vmem:[%s4 + $0xcc] sm:$0xf]
  %v7986 = vld [vmem:[%s4 + $0xd0] sm:$0xf]
  %v7987 = vld [vmem:[%s4 + $0xd4] sm:$0xf]
  %v7988 = vld [vmem:[%s4 + $0xd8] sm:$0xf]
  %v7989 = vld [vmem:[%s4 + $0xdc] sm:$0xf]
  %v7990 = vld [vmem:[%s4 + $0xe0] sm:$0xf]
  %v7991 = vld [vmem:[%s4 + $0xe4] sm:$0xf]
  %v7992 = vld [vmem:[%s4 + $0xe8] sm:$0xf]
  %v7993 = vld [vmem:[%s4 + $0xec] sm:$0xf]
  %v7994 = vld [vmem:[%s4 + $0xf0] sm:$0xf]
  %v7995 = vld [vmem:[%s4 + $0xf4] sm:$0xf]
  %v7996 = vld [vmem:[%s4 + $0xf8] sm:$0xf]
  %v7997 = vld [vmem:[%s4 + $0xfc] sm:$0xf]
  %v7998 = vld [vmem:[%s4 + $0x100] sm:$0xf]
  %v7999 = vld [vmem:[%s4 + $0x104] sm:$0xf]
  %v8000 = vld [vmem:[%s4 + $0x108] sm:$0xf]
  %v8001 = vld [vmem:[%s4 + $0x10c] sm:$0xf]
  %v8002 = vld [vmem:[%s4 + $0x110] sm:$0xf]
  %v8003 = vld [vmem:[%s4 + $0x114] sm:$0xf]
  %v8004 = vld [vmem:[%s4 + $0x118] sm:$0xf]
  %v8005 = vld [vmem:[%s4 + $0x11c] sm:$0xf]
  %v8006 = vld [vmem:[%s4 + $0x120] sm:$0xf]
  %v8007 = vld [vmem:[%s4 + $0x124] sm:$0xf]
  %v8008 = vld [vmem:[%s4 + $0x128] sm:$0xf]
  %v8009 = vld [vmem:[%s4 + $0x12c] sm:$0xf]
  %v8010 = vld [vmem:[%s4 + $0x130] sm:$0xf]
  %v8011 = vld [vmem:[%s4 + $0x134] sm:$0xf]
  %v8012 = vld [vmem:[%s4 + $0x138] sm:$0xf]
  %v8013 = vld [vmem:[%s4 + $0x13c] sm:$0xf]
  %v8014 = vld [vmem:[%s4 + $0x140] sm:$0xf]
  %v8015 = vld [vmem:[%s4 + $0x144] sm:$0xf]
  %v8016 = vld [vmem:[%s4 + $0x148] sm:$0xf]
  %v8017 = vld [vmem:[%s4 + $0x14c] sm:$0xf]
  %v8018 = vld [vmem:[%s4 + $0x150] sm:$0xf]
  %v8019 = vld [vmem:[%s4 + $0x154] sm:$0xf]
  %v8020 = vld [vmem:[%s4 + $0x158] sm:$0xf]
  %v8021 = vld [vmem:[%s4 + $0x15c] sm:$0xf]
  %v8022 = vld [vmem:[%s4 + $0x160] sm:$0xf]
  %v8023 = vld [vmem:[%s4 + $0x164] sm:$0xf]
  %v8024 = vld [vmem:[%s4 + $0x168] sm:$0xf]
  %v8025 = vld [vmem:[%s4 + $0x16c] sm:$0xf]
  %v8026 = vld [vmem:[%s4 + $0x170] sm:$0xf]
  %v8027 = vld [vmem:[%s4 + $0x174] sm:$0xf]
  %v8028 = vld [vmem:[%s4 + $0x178] sm:$0xf]
  %v8029 = vld [vmem:[%s4 + $0x17c] sm:$0xf]
  %v8030 = vld [vmem:[%s4 + $0x180] sm:$0xf]
  %v8031 = vld [vmem:[%s4 + $0x184] sm:$0xf]
  %v8032 = vld [vmem:[%s4 + $0x188] sm:$0xf]
  %v8033 = vld [vmem:[%s4 + $0x18c] sm:$0xf]
  %v8034 = vld [vmem:[%s4 + $0x190] sm:$0xf]
  %v8035 = vld [vmem:[%s4 + $0x194] sm:$0xf]
  %v8036 = vld [vmem:[%s4 + $0x198] sm:$0xf]
  %v8037 = vld [vmem:[%s4 + $0x19c] sm:$0xf]
  %v8038 = vld [vmem:[%s4 + $0x1a0] sm:$0xf]
  %v8039 = vld [vmem:[%s4 + $0x1a4] sm:$0xf]
  %v8040 = vld [vmem:[%s4 + $0x1a8] sm:$0xf]
  %v8041 = vld [vmem:[%s4 + $0x1ac] sm:$0xf]
  %v8042 = vld [vmem:[%s4 + $0x1b0] sm:$0xf]
  %v8043 = vld [vmem:[%s4 + $0x1b4] sm:$0xf]
  %v8044 = vld [vmem:[%s4 + $0x1b8] sm:$0xf]
  %v8045 = vld [vmem:[%s4 + $0x1bc] sm:$0xf]
  %v8046 = vld [vmem:[%s4 + $0x1c0] sm:$0xf]
  %v8047 = vld [vmem:[%s4 + $0x1c4] sm:$0xf]
  %v8048 = vld [vmem:[%s4 + $0x1c8] sm:$0xf]
  %v8049 = vld [vmem:[%s4 + $0x1cc] sm:$0xf]
  %v8050 = vld [vmem:[%s4 + $0x1d0] sm:$0xf]
  %v8051 = vld [vmem:[%s4 + $0x1d4] sm:$0xf]
  %v8052 = vld [vmem:[%s4 + $0x1d8] sm:$0xf]
  %v8053 = vld [vmem:[%s4 + $0x1dc] sm:$0xf]
  %v8054 = vld [vmem:[%s4 + $0x1e0] sm:$0xf]
  %v8055 = vld [vmem:[%s4 + $0x1e4] sm:$0xf]
  %v8056 = vld [vmem:[%s4 + $0x1e8] sm:$0xf]
  %v8057 = vld [vmem:[%s4 + $0x1ec] sm:$0xf]
  %v8058 = vld [vmem:[%s4 + $0x1f0] sm:$0xf]
  %v8059 = vld [vmem:[%s4 + $0x1f4] sm:$0xf]
  %v8060 = vld [vmem:[%s4 + $0x1f8] sm:$0xf]
  %v8061 = vld [vmem:[%s4 + $0x1fc] sm:$0xf]
  %v8062 = vld [vmem:[#allocation2] sm:$0x1]
  %v8064 = vperm.slane %v8062, 0
  %v8194 = vunpack.c.l.b16 %v7934
  %v8195 = vunpack.c.l.b16 %v7935
  %v8196 = vunpack.c.l.b16 %v7936
  %v8197 = vunpack.c.l.b16 %v7937
  %v8198 = vunpack.c.l.b16 %v7938
  %v8199 = vunpack.c.l.b16 %v7939
  %v8200 = vunpack.c.l.b16 %v7940
  %v8201 = vunpack.c.l.b16 %v7941
  %v8202 = vunpack.c.l.b16 %v7942
  %v8203 = vunpack.c.l.b16 %v7943
  %v8204 = vunpack.c.l.b16 %v7944
  %v8205 = vunpack.c.l.b16 %v7945
  %v8206 = vunpack.c.l.b16 %v7946
  %v8207 = vunpack.c.l.b16 %v7947
  %v8208 = vunpack.c.l.b16 %v7948
  %v8209 = vunpack.c.l.b16 %v7949
  %v8210 = vunpack.c.l.b16 %v7950
  %v8211 = vunpack.c.l.b16 %v7951
  %v8212 = vunpack.c.l.b16 %v7952
  %v8213 = vunpack.c.l.b16 %v7953
  %v8214 = vunpack.c.l.b16 %v7954
  %v8215 = vunpack.c.l.b16 %v7955
  %v8216 = vunpack.c.l.b16 %v7956
  %v8217 = vunpack.c.l.b16 %v7957
  %v8218 = vunpack.c.l.b16 %v7958
  %v8219 = vunpack.c.l.b16 %v7959
  %v8220 = vunpack.c.l.b16 %v7960
  %v8221 = vunpack.c.l.b16 %v7961
  %v8222 = vunpack.c.l.b16 %v7962
  %v8223 = vunpack.c.l.b16 %v7963
  %v8224 = vunpack.c.l.b16 %v7964
  %v8225 = vunpack.c.l.b16 %v7965
  %v8226 = vunpack.c.l.b16 %v7966
  %v8227 = vunpack.c.l.b16 %v7967
  %v8228 = vunpack.c.l.b16 %v7968
  %v8229 = vunpack.c.l.b16 %v7969
  %v8230 = vunpack.c.l.b16 %v7970
  %v8231 = vunpack.c.l.b16 %v7971
  %v8232 = vunpack.c.l.b16 %v7972
  %v8233 = vunpack.c.l.b16 %v7973
  %v8234 = vunpack.c.l.b16 %v7974
  %v8235 = vunpack.c.l.b16 %v7975
  %v8236 = vunpack.c.l.b16 %v7976
  %v8237 = vunpack.c.l.b16 %v7977
  %v8238 = vunpack.c.l.b16 %v7978
  %v8239 = vunpack.c.l.b16 %v7979
  %v8240 = vunpack.c.l.b16 %v7980
  %v8241 = vunpack.c.l.b16 %v7981
  %v8242 = vunpack.c.l.b16 %v7982
  %v8243 = vunpack.c.l.b16 %v7983
  %v8244 = vunpack.c.l.b16 %v7984
  %v8245 = vunpack.c.l.b16 %v7985
  %v8246 = vunpack.c.l.b16 %v7986
  %v8247 = vunpack.c.l.b16 %v7987
  %v8248 = vunpack.c.l.b16 %v7988
  %v8249 = vunpack.c.l.b16 %v7989
  %v8250 = vunpack.c.l.b16 %v7990
  %v8251 = vunpack.c.l.b16 %v7991
  %v8252 = vunpack.c.l.b16 %v7992
  %v8253 = vunpack.c.l.b16 %v7993
  %v8254 = vunpack.c.l.b16 %v7994
  %v8255 = vunpack.c.l.b16 %v7995
  %v8256 = vunpack.c.l.b16 %v7996
  %v8257 = vunpack.c.l.b16 %v7997
  %v8258 = vunpack.c.l.b16 %v7998
  %v8259 = vunpack.c.l.b16 %v7999
  %v8260 = vunpack.c.l.b16 %v8000
  %v8261 = vunpack.c.l.b16 %v8001
  %v8262 = vunpack.c.l.b16 %v8002
  %v8263 = vunpack.c.l.b16 %v8003
  %v8264 = vunpack.c.l.b16 %v8004
  %v8265 = vunpack.c.l.b16 %v8005
  %v8266 = vunpack.c.l.b16 %v8006
  %v8267 = vunpack.c.l.b16 %v8007
  %v8268 = vunpack.c.l.b16 %v8008
  %v8269 = vunpack.c.l.b16 %v8009
  %v8270 = vunpack.c.l.b16 %v8010
  %v8271 = vunpack.c.l.b16 %v8011
  %v8272 = vunpack.c.l.b16 %v8012
  %v8273 = vunpack.c.l.b16 %v8013
  %v8274 = vunpack.c.l.b16 %v8014
  %v8275 = vunpack.c.l.b16 %v8015
  %v8276 = vunpack.c.l.b16 %v8016
  %v8277 = vunpack.c.l.b16 %v8017
  %v8278 = vunpack.c.l.b16 %v8018
  %v8279 = vunpack.c.l.b16 %v8019
  %v8280 = vunpack.c.l.b16 %v8020
  %v8281 = vunpack.c.l.b16 %v8021
  %v8282 = vunpack.c.l.b16 %v8022
  %v8283 = vunpack.c.l.b16 %v8023
  %v8284 = vunpack.c.l.b16 %v8024
  %v8285 = vunpack.c.l.b16 %v8025
  %v8286 = vunpack.c.l.b16 %v8026
  %v8287 = vunpack.c.l.b16 %v8027
  %v8288 = vunpack.c.l.b16 %v8028
  %v8289 = vunpack.c.l.b16 %v8029
  %v8290 = vunpack.c.l.b16 %v8030
  %v8291 = vunpack.c.l.b16 %v8031
  %v8292 = vunpack.c.l.b16 %v8032
  %v8293 = vunpack.c.l.b16 %v8033
  %v8294 = vunpack.c.l.b16 %v8034
  %v8295 = vunpack.c.l.b16 %v8035
  %v8296 = vunpack.c.l.b16 %v8036
  %v8297 = vunpack.c.l.b16 %v8037
  %v8298 = vunpack.c.l.b16 %v8038
  %v8299 = vunpack.c.l.b16 %v8039
  %v8300 = vunpack.c.l.b16 %v8040
  %v8301 = vunpack.c.l.b16 %v8041
  %v8302 = vunpack.c.l.b16 %v8042
  %v8303 = vunpack.c.l.b16 %v8043
  %v8304 = vunpack.c.l.b16 %v8044
  %v8305 = vunpack.c.l.b16 %v8045
  %v8306 = vunpack.c.l.b16 %v8046
  %v8307 = vunpack.c.l.b16 %v8047
  %v8308 = vunpack.c.l.b16 %v8048
  %v8309 = vunpack.c.l.b16 %v8049
  %v8310 = vunpack.c.l.b16 %v8050
  %v8311 = vunpack.c.l.b16 %v8051
  %v8312 = vunpack.c.l.b16 %v8052
  %v8313 = vunpack.c.l.b16 %v8053
  %v8314 = vunpack.c.l.b16 %v8054
  %v8315 = vunpack.c.l.b16 %v8055
  %v8316 = vunpack.c.l.b16 %v8056
  %v8317 = vunpack.c.l.b16 %v8057
  %v8318 = vunpack.c.l.b16 %v8058
  %v8319 = vunpack.c.l.b16 %v8059
  %v8320 = vunpack.c.l.b16 %v8060
  %v8321 = vunpack.c.l.b16 %v8061
  %v8322 = vpack.c.b16 %v8195, %v8194
  %v8323 = vpack.c.b16 %v8197, %v8196
  %v8324 = vpack.c.b16 %v8199, %v8198
  %v8325 = vpack.c.b16 %v8201, %v8200
  %v8326 = vpack.c.b16 %v8203, %v8202
  %v8327 = vpack.c.b16 %v8205, %v8204
  %v8328 = vpack.c.b16 %v8207, %v8206
  %v8329 = vpack.c.b16 %v8209, %v8208
  %v8330 = vpack.c.b16 %v8211, %v8210
  %v8331 = vpack.c.b16 %v8213, %v8212
  %v8332 = vpack.c.b16 %v8215, %v8214
  %v8333 = vpack.c.b16 %v8217, %v8216
  %v8334 = vpack.c.b16 %v8219, %v8218
  %v8335 = vpack.c.b16 %v8221, %v8220
  %v8336 = vpack.c.b16 %v8223, %v8222
  %v8337 = vpack.c.b16 %v8225, %v8224
  %v8338 = vpack.c.b16 %v8227, %v8226
  %v8339 = vpack.c.b16 %v8229, %v8228
  %v8340 = vpack.c.b16 %v8231, %v8230
  %v8341 = vpack.c.b16 %v8233, %v8232
  %v8342 = vpack.c.b16 %v8235, %v8234
  %v8343 = vpack.c.b16 %v8237, %v8236
  %v8344 = vpack.c.b16 %v8239, %v8238
  %v8345 = vpack.c.b16 %v8241, %v8240
  %v8346 = vpack.c.b16 %v8243, %v8242
  %v8347 = vpack.c.b16 %v8245, %v8244
  %v8348 = vpack.c.b16 %v8247, %v8246
  %v8349 = vpack.c.b16 %v8249, %v8248
  %v8350 = vpack.c.b16 %v8251, %v8250
  %v8351 = vpack.c.b16 %v8253, %v8252
  %v8352 = vpack.c.b16 %v8255, %v8254
  %v8353 = vpack.c.b16 %v8257, %v8256
  %v8354 = vpack.c.b16 %v8259, %v8258
  %v8355 = vpack.c.b16 %v8261, %v8260
  %v8356 = vpack.c.b16 %v8263, %v8262
  %v8357 = vpack.c.b16 %v8265, %v8264
  %v8358 = vpack.c.b16 %v8267, %v8266
  %v8359 = vpack.c.b16 %v8269, %v8268
  %v8360 = vpack.c.b16 %v8271, %v8270
  %v8361 = vpack.c.b16 %v8273, %v8272
  %v8362 = vpack.c.b16 %v8275, %v8274
  %v8363 = vpack.c.b16 %v8277, %v8276
  %v8364 = vpack.c.b16 %v8279, %v8278
  %v8365 = vpack.c.b16 %v8281, %v8280
  %v8366 = vpack.c.b16 %v8283, %v8282
  %v8367 = vpack.c.b16 %v8285, %v8284
  %v8368 = vpack.c.b16 %v8287, %v8286
  %v8369 = vpack.c.b16 %v8289, %v8288
  %v8370 = vpack.c.b16 %v8291, %v8290
  %v8371 = vpack.c.b16 %v8293, %v8292
  %v8372 = vpack.c.b16 %v8295, %v8294
  %v8373 = vpack.c.b16 %v8297, %v8296
  %v8374 = vpack.c.b16 %v8299, %v8298
  %v8375 = vpack.c.b16 %v8301, %v8300
  %v8376 = vpack.c.b16 %v8303, %v8302
  %v8377 = vpack.c.b16 %v8305, %v8304
  %v8378 = vpack.c.b16 %v8307, %v8306
  %v8379 = vpack.c.b16 %v8309, %v8308
  %v8380 = vpack.c.b16 %v8311, %v8310
  %v8381 = vpack.c.b16 %v8313, %v8312
  %v8382 = vpack.c.b16 %v8315, %v8314
  %v8383 = vpack.c.b16 %v8317, %v8316
  %v8384 = vpack.c.b16 %v8319, %v8318
  %v8385 = vpack.c.b16 %v8321, %v8320
  %8450 = vmatpush.bf16.msra.mxu0 %v8329
  %8451 = vmatpush.bf16.msra.mxu0 %v8328
  %8452 = vmatpush.bf16.msra.mxu0 %v8327
  %8453 = vmatpush.bf16.msra.mxu0 %v8326
  %8454 = vmatpush.bf16.msra.mxu0 %v8325
  %8455 = vmatpush.bf16.msra.mxu0 %v8324
  %8456 = vmatpush.bf16.msra.mxu0 %v8323
  %8457 = vmatpush.bf16.msra.mxu0 %v8322
  %8458 = vmatmul.bf16.gmra.mxu0 %v7926
  %v8459 = vpop.f32.mrf.mxu0
  %v8460 = vadd.f32 %v8064, %v8459
  %v8461 = vpop.f32.mrf.mxu0
  %8462 = vdwg.mxu0
  %8463 = vmatpush.bf16.msra.mxu0 %v8337
  %8464 = vmatpush.bf16.msra.mxu0 %v8336
  %8465 = vmatpush.bf16.msra.mxu0 %v8335
  %8466 = vmatpush.bf16.msra.mxu0 %v8334
  %8467 = vmatpush.bf16.msra.mxu0 %v8333
  %8468 = vmatpush.bf16.msra.mxu0 %v8332
  %8469 = vmatpush.bf16.msra.mxu0 %v8331
  %8470 = vmatpush.bf16.msra.mxu0 %v8330
  %8471 = vmatmul.bf16.gmra.mxu0 %v7927
  %v8472 = vpop.f32.mrf.mxu0
  %v8473 = vadd.f32 %v8460, %v8472
  %v8474 = vpop.f32.mrf.mxu0
  %8475 = vdwg.mxu0
  %8476 = vmatpush.bf16.msra.mxu0 %v8345
  %8477 = vmatpush.bf16.msra.mxu0 %v8344
  %8478 = vmatpush.bf16.msra.mxu0 %v8343
  %8479 = vmatpush.bf16.msra.mxu0 %v8342
  %8480 = vmatpush.bf16.msra.mxu0 %v8341
  %8481 = vmatpush.bf16.msra.mxu0 %v8340
  %8482 = vmatpush.bf16.msra.mxu0 %v8339
  %8483 = vmatpush.bf16.msra.mxu0 %v8338
  %8484 = vmatmul.bf16.gmra.mxu0 %v7928
  %v8485 = vpop.f32.mrf.mxu0
  %v8486 = vadd.f32 %v8473, %v8485
  %v8487 = vpop.f32.mrf.mxu0
  %8488 = vdwg.mxu0
  %8489 = vmatpush.bf16.msra.mxu0 %v8353
  %8490 = vmatpush.bf16.msra.mxu0 %v8352
  %8491 = vmatpush.bf16.msra.mxu0 %v8351
  %8492 = vmatpush.bf16.msra.mxu0 %v8350
  %8493 = vmatpush.bf16.msra.mxu0 %v8349
  %8494 = vmatpush.bf16.msra.mxu0 %v8348
  %8495 = vmatpush.bf16.msra.mxu0 %v8347
  %8496 = vmatpush.bf16.msra.mxu0 %v8346
  %8497 = vmatmul.bf16.gmra.mxu0 %v7929
  %v8498 = vpop.f32.mrf.mxu0
  %v8499 = vadd.f32 %v8486, %v8498
  %v8500 = vpop.f32.mrf.mxu0
  %8501 = vdwg.mxu0
  %8502 = vmatpush.bf16.msra.mxu0 %v8361
  %8503 = vmatpush.bf16.msra.mxu0 %v8360
  %8504 = vmatpush.bf16.msra.mxu0 %v8359
  %8505 = vmatpush.bf16.msra.mxu0 %v8358
  %8506 = vmatpush.bf16.msra.mxu0 %v8357
  %8507 = vmatpush.bf16.msra.mxu0 %v8356
  %8508 = vmatpush.bf16.msra.mxu0 %v8355
  %8509 = vmatpush.bf16.msra.mxu0 %v8354
  %8510 = vmatmul.bf16.gmra.mxu0 %v7930
  %v8511 = vpop.f32.mrf.mxu0
  %v8512 = vadd.f32 %v8499, %v8511
  %v8513 = vpop.f32.mrf.mxu0
  %8514 = vdwg.mxu0
  %8515 = vmatpush.bf16.msra.mxu0 %v8369
  %8516 = vmatpush.bf16.msra.mxu0 %v8368
  %8517 = vmatpush.bf16.msra.mxu0 %v8367
  %8518 = vmatpush.bf16.msra.mxu0 %v8366
  %8519 = vmatpush.bf16.msra.mxu0 %v8365
  %8520 = vmatpush.bf16.msra.mxu0 %v8364
  %8521 = vmatpush.bf16.msra.mxu0 %v8363
  %8522 = vmatpush.bf16.msra.mxu0 %v8362
  %8523 = vmatmul.bf16.gmra.mxu0 %v7931
  %v8524 = vpop.f32.mrf.mxu0
  %v8525 = vadd.f32 %v8512, %v8524
  %v8526 = vpop.f32.mrf.mxu0
  %8527 = vdwg.mxu0
  %8528 = vmatpush.bf16.msra.mxu0 %v8377
  %8529 = vmatpush.bf16.msra.mxu0 %v8376
  %8530 = vmatpush.bf16.msra.mxu0 %v8375
  %8531 = vmatpush.bf16.msra.mxu0 %v8374
  %8532 = vmatpush.bf16.msra.mxu0 %v8373
  %8533 = vmatpush.bf16.msra.mxu0 %v8372
  %8534 = vmatpush.bf16.msra.mxu0 %v8371
  %8535 = vmatpush.bf16.msra.mxu0 %v8370
  %8536 = vmatmul.bf16.gmra.mxu0 %v7932
  %v8537 = vpop.f32.mrf.mxu0
  %v8538 = vadd.f32 %v8525, %v8537
  %v8539 = vpop.f32.mrf.mxu0
  %8540 = vdwg.mxu0
  %8541 = vmatpush.bf16.msra.mxu0 %v8385
  %8542 = vmatpush.bf16.msra.mxu0 %v8384
  %8543 = vmatpush.bf16.msra.mxu0 %v8383
  %8544 = vmatpush.bf16.msra.mxu0 %v8382
  %8545 = vmatpush.bf16.msra.mxu0 %v8381
  %8546 = vmatpush.bf16.msra.mxu0 %v8380
  %8547 = vmatpush.bf16.msra.mxu0 %v8379
  %8548 = vmatpush.bf16.msra.mxu0 %v8378
  %8549 = vmatmul.bf16.gmra.mxu0 %v7933
  %v8550 = vpop.f32.mrf.mxu0
  %v8551 = vadd.f32 %v8538, %v8550
  %v8552 = vpop.f32.mrf.mxu0
  %8553 = vdwg.mxu0
  %v8554 = vxor.u32 %v8551, 2147483648
  %v8555 = vmul.f32 %v8554, 1.442695
  %v8556 = vpow.pop %v8555
  %v8557 = vadd.f32 %v8556, 1.0
  %v8558 = vrcp.pop %v8557
  %v8559 = vmul.f32 %v8557, %v8558
  %v8560 = vsub.f32 1.0, %v8559
  %v8561 = vmul.f32 %v8558, %v8560
  %v8562 = vadd.f32 %v8558, %v8561
  %vm8563 = vweird.f32 %v8557
  %vm8564 = vweird.f32 %v8558
  %vm8565 = vmor %vm8563, %vm8564
  %v8566 = vsel %vm8565, %v8558, %v8562
  %v8567 = vand.u32 2147483647, %v8557
  %vm8568 = vcmp.eq.f32.partialorder %v8567, 8.507059e+37
  %v8569 = vand.u32 %v8557, 2147483648
  %v8570 = vor.u32 1.1754944e-38, %v8569
  %v8571 = vsel %vm8568, %v8570, %v8566
  %v8572 = vmul.f32 1.0, %v8571
  %vm8573 = vcmask 1024
  %8574 = vst.msk [vmem:[%s6] sm:$0x3] %vm8573, %v8572
  // Predicated region
  $region26: #{netD2_forward.9} parent=0 // pred_check
    _
  $region27: #{netD2_forward.9} parent=0 // pred_check_branch
    %8576 = sbr.rel (0) target = $region29
  $region28: #{netD2_forward.9} parent=0 // pred_region
    _
  $region29: #{netD2_forward.9} parent=0 // pred_fallthru
    _
  // Predicated region
  $region30: #{netD2_forward.9} parent=0 // pred_check
    _
  $region31: #{netD2_forward.9} parent=0 // pred_check_branch
    %8578 = sbr.rel (0) target = $region33
  $region32: #{netD2_forward.9} parent=0 // pred_region
    _
  $region33: #{netD2_forward.9} parent=0 // pred_fallthru
    _

</llo_original>
